<compile_context>
chip_gen: v7x
topology: tpu7x:2x2x1
jax: 0.10.0
libtpu: 0.0.40
codegen_flags: <defaults>
</compile_context>

<pallas_src>
import jax
import jax.numpy as jnp
from jax.experimental import pallas as pl
from jax.experimental.pallas import tpu as pltpu

EPS = 1e-5


# ----------------------------------------------------------------------------
# Kernel 1: four conv branches (+bias) and per-branch BN stats, one M-tile.
# ----------------------------------------------------------------------------
def _make_branches_kernel(taps_list, TH, W, Cin, Cout):
    def kernel(x_ref, w1_ref, w2_ref, w3_ref, w4_ref, b_ref, y_ref, st_ref):
        n = pl.program_id(0)
        hb = pl.program_id(1)

        @pl.when((n == 0) & (hb == 0))
        def _init():                      # zero the cross-tile stats accumulator
            st_ref[...] = jnp.zeros_like(st_ref)

        h0 = pl.multiple_of(hb * TH, TH)
        bias = b_ref[...]                                   # (4, Cout)
        w_refs = (w1_ref, w2_ref, w3_ref, w4_ref)

        for bi in range(4):
            taps = taps_list[bi]
            wb_ref = w_refs[bi]
            acc = jnp.zeros((TH * W, Cout), jnp.float32)
            for ti, (ro, co) in enumerate(taps):
                # shifted view of the padded input (fused im2col tap)
                slab = x_ref[0, pl.ds(h0 + ro, TH), pl.ds(co, W), :]
                slab = slab.reshape(TH * W, Cin)
                acc = acc + jnp.dot(slab, wb_ref[ti],
                                    preferred_element_type=jnp.float32)
            acc = acc + bias[bi:bi + 1, :]
            y_ref[bi, 0] = acc.reshape(TH, W, Cout)
            # one-pass BN stats: sum (rows 0..3) and sum of squares (rows 4..7)
            st_ref[bi:bi + 1, :] += jnp.sum(acc, axis=0, keepdims=True)
            st_ref[4 + bi:5 + bi, :] += jnp.sum(acc * acc, axis=0, keepdims=True)

    return kernel


# ----------------------------------------------------------------------------
# Kernel 2: folded BN+ReLU of branches 1-4, add global-pool branch row,
#           1x1 concat conv (+bias), and BN stats for the concat-conv output.
# ----------------------------------------------------------------------------
def _make_cat_kernel(TH, W, Cout):
    def kernel(y_ref, ss_ref, gfz_ref, wcat_ref, z_ref, st_ref):
        n = pl.program_id(0)
        hb = pl.program_id(1)

        @pl.when((n == 0) & (hb == 0))
        def _init():
            st_ref[...] = jnp.zeros_like(st_ref)

        ss = ss_ref[...]                                    # (8, Cout) scale/shift
        gfz = gfz_ref[...]                                  # (N, Cout), incl. bias
        row_ids = jax.lax.broadcasted_iota(jnp.int32, gfz.shape, 0)
        gf_row = jnp.sum(jnp.where(row_ids == n, gfz, 0.0),
                         axis=0, keepdims=True)             # (1, Cout)

        z = jnp.zeros((TH * W, Cout), jnp.float32)
        for bi in range(4):
            yb = y_ref[bi, 0].reshape(TH * W, Cout)
            yb = jnp.maximum(yb * ss[bi:bi + 1, :] + ss[4 + bi:5 + bi, :], 0.0)
            z = z + jnp.dot(yb, wcat_ref[bi],
                            preferred_element_type=jnp.float32)
        z = z + gf_row

        z_ref[...] = z.reshape(1, TH, W, Cout)
        st_ref[0:1, :] += jnp.sum(z, axis=0, keepdims=True)
        st_ref[1:2, :] += jnp.sum(z * z, axis=0, keepdims=True)

    return kernel


# ----------------------------------------------------------------------------
# Kernel 3: final BN (folded scale/shift) + ReLU.  Pure elementwise -> parallel.
# ----------------------------------------------------------------------------
def _norm_relu_kernel(z_ref, ss_ref, o_ref):
    scale = ss_ref[0:1, :].reshape(1, 1, 1, -1)
    shift = ss_ref[1:2, :].reshape(1, 1, 1, -1)
    o_ref[...] = jnp.maximum(z_ref[...] * scale + shift, 0.0)


# ----------------------------------------------------------------------------
# Wrapper: full ASPP forward (NCHW in, NCHW out), PyTorch training-mode BN.
# ----------------------------------------------------------------------------
def aspp_forward(x_nchw, params, rate=1):
    N, Cin, H, W = x_nchw.shape
    Cout = params["w1"].shape[0]
    d2, d3, d4 = 6 * rate, 12 * rate, 18 * rate
    dmax = d4
    TH = 8 if H % 8 == 0 else H            # height tile (M-tile = TH*W rows)
    HB = H // TH
    Mtot = N * H * W

    x = jnp.transpose(x_nchw, (0, 2, 3, 1)).astype(jnp.float32)      # NHWC
    x_pad = jnp.pad(x, ((0, 0), (dmax, dmax), (dmax, dmax), (0, 0)))
    Hp, Wp = H + 2 * dmax, W + 2 * dmax

    def conv_w(w):   # (Cout, Cin, kh, kw) -> tap-major (kh*kw, Cin, Cout)
        kh, kw = w.shape[2], w.shape[3]
        return jnp.transpose(w, (2, 3, 1, 0)).reshape(kh * kw, w.shape[1],
                                                      w.shape[0])

    w1m = conv_w(params["w1"])                              # (1, Cin, Cout)
    w2m = conv_w(params["w2"])                              # (9, Cin, Cout)
    w3m = conv_w(params["w3"])
    w4m = conv_w(params["w4"])
    b_all = jnp.stack([params["b1"], params["b2"],
                       params["b3"], params["b4"]])          # (4, Cout)

    def taps(ksize, dil):
        if ksize == 1:
            return ((dmax, dmax),)
        return tuple((dmax + (ki - 1) * dil, dmax + (kj - 1) * dil)
                     for ki in range(3) for kj in range(3))

    taps_list = (taps(1, 1), taps(3, d2), taps(3, d3), taps(3, d4))

    # ---- kernel 1: 4 conv branches + bias + BN statistics -------------------
    y_pre, y_stats = pl.pallas_call(
        _make_branches_kernel(taps_list, TH, W, Cin, Cout),
        out_shape=(
            jax.ShapeDtypeStruct((4, N, H, W, Cout), jnp.float32),
            jax.ShapeDtypeStruct((8, Cout), jnp.float32),
        ),
        grid=(N, HB),
        in_specs=[
            pl.BlockSpec((1, Hp, Wp, Cin), lambda n, hb: (n, 0, 0, 0)),
            pl.BlockSpec((1, Cin, Cout), lambda n, hb: (0, 0, 0)),
            pl.BlockSpec((9, Cin, Cout), lambda n, hb: (0, 0, 0)),
            pl.BlockSpec((9, Cin, Cout), lambda n, hb: (0, 0, 0)),
            pl.BlockSpec((9, Cin, Cout), lambda n, hb: (0, 0, 0)),
            pl.BlockSpec((4, Cout), lambda n, hb: (0, 0)),
        ],
        out_specs=(
            pl.BlockSpec((4, 1, TH, W, Cout), lambda n, hb: (0, n, hb, 0, 0)),
            pl.BlockSpec((8, Cout), lambda n, hb: (0, 0)),
        ),
        # stats accumulator is revisited across both axes -> must be arbitrary
        compiler_params=pltpu.CompilerParams(
            dimension_semantics=("arbitrary", "arbitrary")),
    )(x_pad, w1m, w2m, w3m, w4m, b_all)

    # finalize per-branch BN: fold gamma/beta into one scale/shift FMA
    g_stack = jnp.stack([params["g1"], params["g2"], params["g3"], params["g4"]])
    be_stack = jnp.stack([params["be1"], params["be2"],
                          params["be3"], params["be4"]])
    mean = y_stats[0:4] / Mtot
    var = y_stats[4:8] / Mtot - mean * mean
    scale = g_stack * jax.lax.rsqrt(var + EPS)
    shift = be_stack - mean * scale
    ss = jnp.concatenate([scale, shift], axis=0)            # (8, Cout)

    # TODO(synk): branch-5 global-average-pool path ((N,Cin)->(N,Cout) matmul +
    # BN over the batch axis) is scalar-sized; done in plain JAX, not Pallas.
    w5m = jnp.transpose(params["w5"], (2, 3, 1, 0)).reshape(Cin, Cout)
    gf = jnp.mean(x, axis=(1, 2))                           # (N, Cin)
    gf = gf @ w5m + params["b5"][None, :]
    m5 = jnp.mean(gf, axis=0, keepdims=True)
    v5 = jnp.mean(gf * gf, axis=0, keepdims=True) - m5 * m5
    gf = (gf - m5) * jax.lax.rsqrt(v5 + EPS) * params["g5"][None, :] \
        + params["be5"][None, :]
    gf = jnp.maximum(gf, 0.0)
    # bilinear upsample of a 1x1 map (align_corners=True) == broadcast, so the
    # branch-5 contribution to the 1x1 concat conv is one row per image:
    wc_mat = params["wc"].reshape(Cout, 5 * Cout).T         # (5*Cout, Cout)
    wcat4 = wc_mat[:4 * Cout].reshape(4, Cout, Cout)
    gf_z = gf @ wc_mat[4 * Cout:] + params["bc"][None, :]   # (N, Cout) incl bias

    # ---- kernel 2: BN+ReLU of branches, concat 1x1 conv, stats for output ---
    z_pre, z_stats = pl.pallas_call(
        _make_cat_kernel(TH, W, Cout),
        out_shape=(
            jax.ShapeDtypeStruct((N, H, W, Cout), jnp.float32),
            jax.ShapeDtypeStruct((2, Cout), jnp.float32),
        ),
        grid=(N, HB),
        in_specs=[
            pl.BlockSpec((4, 1, TH, W, Cout), lambda n, hb: (0, n, hb, 0, 0)),
            pl.BlockSpec((8, Cout), lambda n, hb: (0, 0)),
            pl.BlockSpec((N, Cout), lambda n, hb: (0, 0)),
            pl.BlockSpec((4, Cout, Cout), lambda n, hb: (0, 0, 0)),
        ],
        out_specs=(
            pl.BlockSpec((1, TH, W, Cout), lambda n, hb: (n, hb, 0, 0)),
            pl.BlockSpec((2, Cout), lambda n, hb: (0, 0)),
        ),
        compiler_params=pltpu.CompilerParams(
            dimension_semantics=("arbitrary", "arbitrary")),
    )(y_pre, ss, gf_z, wcat4)

    mean_z = z_stats[0:1] / Mtot
    var_z = z_stats[1:2] / Mtot - mean_z * mean_z
    scale_z = params["gc"][None, :] * jax.lax.rsqrt(var_z + EPS)
    shift_z = params["bec"][None, :] - mean_z * scale_z
    ssz = jnp.concatenate([scale_z, shift_z], axis=0)       # (2, Cout)

    # ---- kernel 3: final BN + ReLU (no accumulators -> parallel grid) -------
    out_nhwc = pl.pallas_call(
        _norm_relu_kernel,
        out_shape=jax.ShapeDtypeStruct((N, H, W, Cout), jnp.float32),
        grid=(N, HB),
        in_specs=[
            pl.BlockSpec((1, TH, W, Cout), lambda n, hb: (n, hb, 0, 0)),
            pl.BlockSpec((2, Cout), lambda n, hb: (0, 0)),
        ],
        out_specs=pl.BlockSpec((1, TH, W, Cout), lambda n, hb: (n, hb, 0, 0)),
        compiler_params=pltpu.CompilerParams(
            dimension_semantics=("parallel", "parallel")),
    )(z_pre, ssz)

    return jnp.transpose(out_nhwc, (0, 3, 1, 2))            # NHWC -> NCHW


# ----------------------------------------------------------------------------
# Pure-JAX reference (lax.conv path) for correctness checking.
# ----------------------------------------------------------------------------
def _bn_relu_train(y, gamma, beta):
    mean = jnp.mean(y, axis=(0, 2, 3), keepdims=True)
    var = jnp.mean((y - mean) ** 2, axis=(0, 2, 3), keepdims=True)
    y = (y - mean) * jax.lax.rsqrt(var + EPS)
    return jnp.maximum(y * gamma[None, :, None, None]
                       + beta[None, :, None, None], 0.0)


def _conv_ref(x, w, b, dilation, padding):
    y = jax.lax.conv_general_dilated(
        x, w, window_strides=(1, 1),
        padding=((padding, padding), (padding, padding)),
        rhs_dilation=(dilation, dilation),
        dimension_numbers=("NCHW", "OIHW", "NCHW"))
    return y + b[None, :, None, None]


def aspp_ref(x, p, rate=1):
    N, _, H, W = x.shape
    Cout = p["w1"].shape[0]
    b1 = _bn_relu_train(_conv_ref(x, p["w1"], p["b1"], rate, 0), p["g1"], p["be1"])
    b2 = _bn_relu_train(_conv_ref(x, p["w2"], p["b2"], 6 * rate, 6 * rate),
                        p["g2"], p["be2"])
    b3 = _bn_relu_train(_conv_ref(x, p["w3"], p["b3"], 12 * rate, 12 * rate),
                        p["g3"], p["be3"])
    b4 = _bn_relu_train(_conv_ref(x, p["w4"], p["b4"], 18 * rate, 18 * rate),
                        p["g4"], p["be4"])
    gf = jnp.mean(x, axis=(2, 3), keepdims=True)
    gf = _bn_relu_train(_conv_ref(gf, p["w5"], p["b5"], 1, 0), p["g5"], p["be5"])
    gf = jnp.broadcast_to(gf, (N, Cout, H, W))
    cat = jnp.concatenate([b1, b2, b3, b4, gf], axis=1)
    z = _conv_ref(cat, p["wc"], p["bc"], 1, 0)
    return _bn_relu_train(z, p["gc"], p["bec"])


if __name__ == "__main__":
    N, Cin, Cout, H, W = 2, 4, 8, 16, 16
    kit = iter(jax.random.split(jax.random.PRNGKey(0), 32))

    x = jax.random.normal(next(kit), (N, Cin, H, W), jnp.float32)

    def cw(cout, cin, k):
        return 0.1 * jax.random.normal(next(kit), (cout, cin, k, k), jnp.float32)

    def cb(c):
        return 0.05 * jax.random.normal(next(kit), (c,), jnp.float32)

    def bg(c):
        return 1.0 + 0.1 * jax.random.normal(next(kit), (c,), jnp.float32)

    def bb(c):
        return 0.1 * jax.random.normal(next(kit), (c,), jnp.float32)

    params = {
        "w1": cw(Cout, Cin, 1), "b1": cb(Cout), "g1": bg(Cout), "be1": bb(Cout),
        "w2": cw(Cout, Cin, 3), "b2": cb(Cout), "g2": bg(Cout), "be2": bb(Cout),
        "w3": cw(Cout, Cin, 3), "b3": cb(Cout), "g3": bg(Cout), "be3": bb(Cout),
        "w4": cw(Cout, Cin, 3), "b4": cb(Cout), "g4": bg(Cout), "be4": bb(Cout),
        "w5": cw(Cout, Cin, 1), "b5": cb(Cout), "g5": bg(Cout), "be5": bb(Cout),
        "wc": cw(Cout, 5 * Cout, 1), "bc": cb(Cout),
        "gc": bg(Cout), "bec": bb(Cout),
    }

    out = jax.block_until_ready(jax.jit(aspp_forward)(x, params))
    ref = jax.block_until_ready(aspp_ref(x, params))

    assert out.shape == (N, Cout, H, W)
    max_err = float(jnp.max(jnp.abs(out - ref)))
    assert jnp.allclose(out, ref, rtol=1e-3, atol=1e-3), f"mismatch: {max_err}"

    print("KERNEL_OK")
</pallas_src>

<mosaic_0001>
module attributes {stable_mosaic.version = 11 : i64} {
  func.func @kernel(%arg0: i32, %arg1: i32, %arg2: memref<1x52x52x4xf32, #tpu.memory_space<vmem>>, %arg3: memref<1x4x8xf32, #tpu.memory_space<vmem>>, %arg4: memref<9x4x8xf32, #tpu.memory_space<vmem>>, %arg5: memref<9x4x8xf32, #tpu.memory_space<vmem>>, %arg6: memref<9x4x8xf32, #tpu.memory_space<vmem>>, %arg7: memref<4x8xf32, #tpu.memory_space<vmem>>, %arg8: memref<4x1x8x16x8xf32, #tpu.memory_space<vmem>>, %arg9: memref<8x8xf32, #tpu.memory_space<vmem>>) attributes {dimension_semantics = [#tpu.dimension_semantics<arbitrary>, #tpu.dimension_semantics<arbitrary>], iteration_bounds = array<i64: 2, 2>, scalar_prefetch = 0 : i64, scratch_operands = 0 : i64, tpu.core_type = #tpu.core_type<tc>, window_params = [{transform_indices = @transform_0, window_bounds = array<i64: 1, 52, 52, 4>}, {pipeline_mode = #tpu.pipeline_mode<synchronous>, transform_indices = @transform_1, window_bounds = array<i64: 1, 4, 8>}, {pipeline_mode = #tpu.pipeline_mode<synchronous>, transform_indices = @transform_2, window_bounds = array<i64: 9, 4, 8>}, {pipeline_mode = #tpu.pipeline_mode<synchronous>, transform_indices = @transform_3, window_bounds = array<i64: 9, 4, 8>}, {pipeline_mode = #tpu.pipeline_mode<synchronous>, transform_indices = @transform_4, window_bounds = array<i64: 9, 4, 8>}, {pipeline_mode = #tpu.pipeline_mode<synchronous>, transform_indices = @transform_5, window_bounds = array<i64: 4, 8>}, {transform_indices = @transform_6, window_bounds = array<i64: 4, 1, 8, 16, 8>}, {pipeline_mode = #tpu.pipeline_mode<synchronous>, transform_indices = @transform_7, window_bounds = array<i64: 8, 8>}]} {
    %c0_i32 = arith.constant 0 : i32
    %0 = arith.cmpi eq, %arg0, %c0_i32 : i32
    %c0_i32_0 = arith.constant 0 : i32
    %1 = arith.cmpi eq, %arg1, %c0_i32_0 : i32
    %2 = arith.andi %0, %1 : i1
    %3 = arith.extui %2 : i1 to i32
    %c0_i32_1 = arith.constant 0 : i32
    %4 = arith.cmpi ne, %3, %c0_i32_1 : i32
    scf.if %4 {
      %cst_271 = arith.constant 0.000000e+00 : f32
      %336 = vector.broadcast %cst_271 : f32 to vector<8x8xf32>
      %c0_272 = arith.constant 0 : index
      %c0_273 = arith.constant 0 : index
      %337 = vector.load %arg9[%c0_272, %c0_273] : memref<8x8xf32, #tpu.memory_space<vmem>>, vector<8x8xf32>
      tpu.vector_store %arg9[%c0_272, %c0_273], %336 {strides = array<i32>} : memref<8x8xf32, #tpu.memory_space<vmem>>, vector<8x8xf32>,
    } else {
    }
    %c8_i32 = arith.constant 8 : i32
    %5 = arith.muli %arg1, %c8_i32 : i32
    %6 = tpu.assume_multiple %5, 8 : i32
    %c0 = arith.constant 0 : index
    %c0_2 = arith.constant 0 : index
    %7 = vector.load %arg7[%c0, %c0_2] : memref<4x8xf32, #tpu.memory_space<vmem>>, vector<4x8xf32>
    %cst = arith.constant 0.000000e+00 : f32
    %8 = vector.broadcast %cst : f32 to vector<128x8xf32>
    %c18_i32 = arith.constant 18 : i32
    %9 = arith.addi %6, %c18_i32 : i32
    %c0_3 = arith.constant 0 : index
    %10 = arith.index_cast %9 : i32 to index
    %c18 = arith.constant 18 : index
    %c0_4 = arith.constant 0 : index
    %11 = vector.load %arg2[%c0_3, %10, %c18, %c0_4] : memref<1x52x52x4xf32, #tpu.memory_space<vmem>>, vector<1x8x16x4xf32>
    %12 = vector.shape_cast %11 : vector<1x8x16x4xf32> to vector<8x16x4xf32>
    %13 = vector.shape_cast %12 : vector<8x16x4xf32> to vector<128x4xf32>
    %c0_5 = arith.constant 0 : index
    %c0_6 = arith.constant 0 : index
    %c0_7 = arith.constant 0 : index
    %14 = vector.load %arg3[%c0_5, %c0_6, %c0_7] : memref<1x4x8xf32, #tpu.memory_space<vmem>>, vector<1x4x8xf32>
    %15 = vector.shape_cast %14 : vector<1x4x8xf32> to vector<4x8xf32>
    %cst_8 = arith.constant dense<0.000000e+00> : vector<128x8xf32>
    %16 = tpu.matmul %13, %15, %cst_8 {dimension_numbers = #tpu.dot_dimension_numbers<[1], [0], [0], [1], [0, 0, 1, 1], [], []>} : vector<128x4xf32>, vector<4x8xf32>, vector<128x8xf32> -> vector<128x8xf32>
    %17 = arith.addf %8, %16 : vector<128x8xf32>
    %18 = vector.extract_strided_slice %7 {offsets = [0, 0], sizes = [1, 8], strides = [1, 1]} : vector<4x8xf32> to vector<1x8xf32>
    %19 = vector.broadcast %18 : vector<1x8xf32> to vector<128x8xf32>
    %20 = arith.addf %17, %19 : vector<128x8xf32>
    %21 = vector.shape_cast %20 : vector<128x8xf32> to vector<8x16x8xf32>
    %c0_9 = arith.constant 0 : index
    %c0_10 = arith.constant 0 : index
    %c0_11 = arith.constant 0 : index
    %c0_12 = arith.constant 0 : index
    %c0_13 = arith.constant 0 : index
    %22 = vector.load %arg8[%c0_9, %c0_10, %c0_11, %c0_12, %c0_13] : memref<4x1x8x16x8xf32, #tpu.memory_space<vmem>>, vector<1x1x8x16x8xf32>
    %23 = vector.shape_cast %22 : vector<1x1x8x16x8xf32> to vector<8x16x8xf32>
    %24 = vector.shape_cast %21 : vector<8x16x8xf32> to vector<1x1x8x16x8xf32>
    tpu.vector_store %arg8[%c0_9, %c0_10, %c0_11, %c0_12, %c0_13], %24 {strides = array<i32>} : memref<4x1x8x16x8xf32, #tpu.memory_space<vmem>>, vector<1x1x8x16x8xf32>,
    %c0_14 = arith.constant 0 : index
    %c0_15 = arith.constant 0 : index
    %25 = vector.load %arg9[%c0_14, %c0_15] : memref<8x8xf32, #tpu.memory_space<vmem>>, vector<1x8xf32>
    %cst_16 = arith.constant dense<0.000000e+00> : vector<8xf32>
    %26 = vector.multi_reduction <add>, %20, %cst_16 [0] : vector<128x8xf32> to vector<8xf32>
    %27 = vector.shape_cast %26 : vector<8xf32> to vector<1x8xf32>
    %28 = arith.addf %25, %27 : vector<1x8xf32>
    %c0_17 = arith.constant 0 : index
    %c0_18 = arith.constant 0 : index
    %29 = vector.load %arg9[%c0_17, %c0_18] : memref<8x8xf32, #tpu.memory_space<vmem>>, vector<1x8xf32>
    tpu.vector_store %arg9[%c0_17, %c0_18], %28 {strides = array<i32>} : memref<8x8xf32, #tpu.memory_space<vmem>>, vector<1x8xf32>,
    %c4 = arith.constant 4 : index
    %c0_19 = arith.constant 0 : index
    %30 = vector.load %arg9[%c4, %c0_19] : memref<8x8xf32, #tpu.memory_space<vmem>>, vector<1x8xf32>
    %31 = arith.mulf %20, %20 : vector<128x8xf32>
    %cst_20 = arith.constant dense<0.000000e+00> : vector<8xf32>
    %32 = vector.multi_reduction <add>, %31, %cst_20 [0] : vector<128x8xf32> to vector<8xf32>
    %33 = vector.shape_cast %32 : vector<8xf32> to vector<1x8xf32>
    %34 = arith.addf %30, %33 : vector<1x8xf32>
    %c4_21 = arith.constant 4 : index
    %c0_22 = arith.constant 0 : index
    %35 = vector.load %arg9[%c4_21, %c0_22] : memref<8x8xf32, #tpu.memory_space<vmem>>, vector<1x8xf32>
    tpu.vector_store %arg9[%c4_21, %c0_22], %34 {strides = array<i32>} : memref<8x8xf32, #tpu.memory_space<vmem>>, vector<1x8xf32>,
    %cst_23 = arith.constant 0.000000e+00 : f32
    %36 = vector.broadcast %cst_23 : f32 to vector<128x8xf32>
    %c12_i32 = arith.constant 12 : i32
    %37 = arith.addi %6, %c12_i32 : i32
    %c0_24 = arith.constant 0 : index
    %38 = arith.index_cast %37 : i32 to index
    %c12 = arith.constant 12 : index
    %c0_25 = arith.constant 0 : index
    %39 = vector.load %arg2[%c0_24, %38, %c12, %c0_25] : memref<1x52x52x4xf32, #tpu.memory_space<vmem>>, vector<1x8x16x4xf32>
    %40 = vector.shape_cast %39 : vector<1x8x16x4xf32> to vector<8x16x4xf32>
    %41 = vector.shape_cast %40 : vector<8x16x4xf32> to vector<128x4xf32>
    %c0_26 = arith.constant 0 : index
    %c0_27 = arith.constant 0 : index
    %c0_28 = arith.constant 0 : index
    %42 = vector.load %arg4[%c0_26, %c0_27, %c0_28] : memref<9x4x8xf32, #tpu.memory_space<vmem>>, vector<1x4x8xf32>
    %43 = vector.shape_cast %42 : vector<1x4x8xf32> to vector<4x8xf32>
    %cst_29 = arith.constant dense<0.000000e+00> : vector<128x8xf32>
    %44 = tpu.matmul %41, %43, %cst_29 {dimension_numbers = #tpu.dot_dimension_numbers<[1], [0], [0], [1], [0, 0, 1, 1], [], []>} : vector<128x4xf32>, vector<4x8xf32>, vector<128x8xf32> -> vector<128x8xf32>
    %45 = arith.addf %36, %44 : vector<128x8xf32>
    %c12_i32_30 = arith.constant 12 : i32
    %46 = arith.addi %6, %c12_i32_30 : i32
    %c0_31 = arith.constant 0 : index
    %47 = arith.index_cast %46 : i32 to index
    %c18_32 = arith.constant 18 : index
    %c0_33 = arith.constant 0 : index
    %48 = vector.load %arg2[%c0_31, %47, %c18_32, %c0_33] : memref<1x52x52x4xf32, #tpu.memory_space<vmem>>, vector<1x8x16x4xf32>
    %49 = vector.shape_cast %48 : vector<1x8x16x4xf32> to vector<8x16x4xf32>
    %50 = vector.shape_cast %49 : vector<8x16x4xf32> to vector<128x4xf32>
    %c1 = arith.constant 1 : index
    %c0_34 = arith.constant 0 : index
    %c0_35 = arith.constant 0 : index
    %51 = vector.load %arg4[%c1, %c0_34, %c0_35] : memref<9x4x8xf32, #tpu.memory_space<vmem>>, vector<1x4x8xf32>
    %52 = vector.shape_cast %51 : vector<1x4x8xf32> to vector<4x8xf32>
    %cst_36 = arith.constant dense<0.000000e+00> : vector<128x8xf32>
    %53 = tpu.matmul %50, %52, %cst_36 {dimension_numbers = #tpu.dot_dimension_numbers<[1], [0], [0], [1], [0, 0, 1, 1], [], []>} : vector<128x4xf32>, vector<4x8xf32>, vector<128x8xf32> -> vector<128x8xf32>
    %54 = arith.addf %45, %53 : vector<128x8xf32>
    %c12_i32_37 = arith.constant 12 : i32
    %55 = arith.addi %6, %c12_i32_37 : i32
    %c0_38 = arith.constant 0 : index
    %56 = arith.index_cast %55 : i32 to index
    %c24 = arith.constant 24 : index
    %c0_39 = arith.constant 0 : index
    %57 = vector.load %arg2[%c0_38, %56, %c24, %c0_39] : memref<1x52x52x4xf32, #tpu.memory_space<vmem>>, vector<1x8x16x4xf32>
    %58 = vector.shape_cast %57 : vector<1x8x16x4xf32> to vector<8x16x4xf32>
    %59 = vector.shape_cast %58 : vector<8x16x4xf32> to vector<128x4xf32>
    %c2 = arith.constant 2 : index
    %c0_40 = arith.constant 0 : index
    %c0_41 = arith.constant 0 : index
    %60 = vector.load %arg4[%c2, %c0_40, %c0_41] : memref<9x4x8xf32, #tpu.memory_space<vmem>>, vector<1x4x8xf32>
    %61 = vector.shape_cast %60 : vector<1x4x8xf32> to vector<4x8xf32>
    %cst_42 = arith.constant dense<0.000000e+00> : vector<128x8xf32>
    %62 = tpu.matmul %59, %61, %cst_42 {dimension_numbers = #tpu.dot_dimension_numbers<[1], [0], [0], [1], [0, 0, 1, 1], [], []>} : vector<128x4xf32>, vector<4x8xf32>, vector<128x8xf32> -> vector<128x8xf32>
    %63 = arith.addf %54, %62 : vector<128x8xf32>
    %c18_i32_43 = arith.constant 18 : i32
    %64 = arith.addi %6, %c18_i32_43 : i32
    %c0_44 = arith.constant 0 : index
    %65 = arith.index_cast %64 : i32 to index
    %c12_45 = arith.constant 12 : index
    %c0_46 = arith.constant 0 : index
    %66 = vector.load %arg2[%c0_44, %65, %c12_45, %c0_46] : memref<1x52x52x4xf32, #tpu.memory_space<vmem>>, vector<1x8x16x4xf32>
    %67 = vector.shape_cast %66 : vector<1x8x16x4xf32> to vector<8x16x4xf32>
    %68 = vector.shape_cast %67 : vector<8x16x4xf32> to vector<128x4xf32>
    %c3 = arith.constant 3 : index
    %c0_47 = arith.constant 0 : index
    %c0_48 = arith.constant 0 : index
    %69 = vector.load %arg4[%c3, %c0_47, %c0_48] : memref<9x4x8xf32, #tpu.memory_space<vmem>>, vector<1x4x8xf32>
    %70 = vector.shape_cast %69 : vector<1x4x8xf32> to vector<4x8xf32>
    %cst_49 = arith.constant dense<0.000000e+00> : vector<128x8xf32>
    %71 = tpu.matmul %68, %70, %cst_49 {dimension_numbers = #tpu.dot_dimension_numbers<[1], [0], [0], [1], [0, 0, 1, 1], [], []>} : vector<128x4xf32>, vector<4x8xf32>, vector<128x8xf32> -> vector<128x8xf32>
    %72 = arith.addf %63, %71 : vector<128x8xf32>
    %c18_i32_50 = arith.constant 18 : i32
    %73 = arith.addi %6, %c18_i32_50 : i32
    %c0_51 = arith.constant 0 : index
    %74 = arith.index_cast %73 : i32 to index
    %c18_52 = arith.constant 18 : index
    %c0_53 = arith.constant 0 : index
    %75 = vector.load %arg2[%c0_51, %74, %c18_52, %c0_53] : memref<1x52x52x4xf32, #tpu.memory_space<vmem>>, vector<1x8x16x4xf32>
    %76 = vector.shape_cast %75 : vector<1x8x16x4xf32> to vector<8x16x4xf32>
    %77 = vector.shape_cast %76 : vector<8x16x4xf32> to vector<128x4xf32>
    %c4_54 = arith.constant 4 : index
    %c0_55 = arith.constant 0 : index
    %c0_56 = arith.constant 0 : index
    %78 = vector.load %arg4[%c4_54, %c0_55, %c0_56] : memref<9x4x8xf32, #tpu.memory_space<vmem>>, vector<1x4x8xf32>
    %79 = vector.shape_cast %78 : vector<1x4x8xf32> to vector<4x8xf32>
    %cst_57 = arith.constant dense<0.000000e+00> : vector<128x8xf32>
    %80 = tpu.matmul %77, %79, %cst_57 {dimension_numbers = #tpu.dot_dimension_numbers<[1], [0], [0], [1], [0, 0, 1, 1], [], []>} : vector<128x4xf32>, vector<4x8xf32>, vector<128x8xf32> -> vector<128x8xf32>
    %81 = arith.addf %72, %80 : vector<128x8xf32>
    %c18_i32_58 = arith.constant 18 : i32
    %82 = arith.addi %6, %c18_i32_58 : i32
    %c0_59 = arith.constant 0 : index
    %83 = arith.index_cast %82 : i32 to index
    %c24_60 = arith.constant 24 : index
    %c0_61 = arith.constant 0 : index
    %84 = vector.load %arg2[%c0_59, %83, %c24_60, %c0_61] : memref<1x52x52x4xf32, #tpu.memory_space<vmem>>, vector<1x8x16x4xf32>
    %85 = vector.shape_cast %84 : vector<1x8x16x4xf32> to vector<8x16x4xf32>
    %86 = vector.shape_cast %85 : vector<8x16x4xf32> to vector<128x4xf32>
    %c5 = arith.constant 5 : index
    %c0_62 = arith.constant 0 : index
    %c0_63 = arith.constant 0 : index
    %87 = vector.load %arg4[%c5, %c0_62, %c0_63] : memref<9x4x8xf32, #tpu.memory_space<vmem>>, vector<1x4x8xf32>
    %88 = vector.shape_cast %87 : vector<1x4x8xf32> to vector<4x8xf32>
    %cst_64 = arith.constant dense<0.000000e+00> : vector<128x8xf32>
    %89 = tpu.matmul %86, %88, %cst_64 {dimension_numbers = #tpu.dot_dimension_numbers<[1], [0], [0], [1], [0, 0, 1, 1], [], []>} : vector<128x4xf32>, vector<4x8xf32>, vector<128x8xf32> -> vector<128x8xf32>
    %90 = arith.addf %81, %89 : vector<128x8xf32>
    %c24_i32 = arith.constant 24 : i32
    %91 = arith.addi %6, %c24_i32 : i32
    %c0_65 = arith.constant 0 : index
    %92 = arith.index_cast %91 : i32 to index
    %c12_66 = arith.constant 12 : index
    %c0_67 = arith.constant 0 : index
    %93 = vector.load %arg2[%c0_65, %92, %c12_66, %c0_67] : memref<1x52x52x4xf32, #tpu.memory_space<vmem>>, vector<1x8x16x4xf32>
    %94 = vector.shape_cast %93 : vector<1x8x16x4xf32> to vector<8x16x4xf32>
    %95 = vector.shape_cast %94 : vector<8x16x4xf32> to vector<128x4xf32>
    %c6 = arith.constant 6 : index
    %c0_68 = arith.constant 0 : index
    %c0_69 = arith.constant 0 : index
    %96 = vector.load %arg4[%c6, %c0_68, %c0_69] : memref<9x4x8xf32, #tpu.memory_space<vmem>>, vector<1x4x8xf32>
    %97 = vector.shape_cast %96 : vector<1x4x8xf32> to vector<4x8xf32>
    %cst_70 = arith.constant dense<0.000000e+00> : vector<128x8xf32>
    %98 = tpu.matmul %95, %97, %cst_70 {dimension_numbers = #tpu.dot_dimension_numbers<[1], [0], [0], [1], [0, 0, 1, 1], [], []>} : vector<128x4xf32>, vector<4x8xf32>, vector<128x8xf32> -> vector<128x8xf32>
    %99 = arith.addf %90, %98 : vector<128x8xf32>
    %c24_i32_71 = arith.constant 24 : i32
    %100 = arith.addi %6, %c24_i32_71 : i32
    %c0_72 = arith.constant 0 : index
    %101 = arith.index_cast %100 : i32 to index
    %c18_73 = arith.constant 18 : index
    %c0_74 = arith.constant 0 : index
    %102 = vector.load %arg2[%c0_72, %101, %c18_73, %c0_74] : memref<1x52x52x4xf32, #tpu.memory_space<vmem>>, vector<1x8x16x4xf32>
    %103 = vector.shape_cast %102 : vector<1x8x16x4xf32> to vector<8x16x4xf32>
    %104 = vector.shape_cast %103 : vector<8x16x4xf32> to vector<128x4xf32>
    %c7 = arith.constant 7 : index
    %c0_75 = arith.constant 0 : index
    %c0_76 = arith.constant 0 : index
    %105 = vector.load %arg4[%c7, %c0_75, %c0_76] : memref<9x4x8xf32, #tpu.memory_space<vmem>>, vector<1x4x8xf32>
    %106 = vector.shape_cast %105 : vector<1x4x8xf32> to vector<4x8xf32>
    %cst_77 = arith.constant dense<0.000000e+00> : vector<128x8xf32>
    %107 = tpu.matmul %104, %106, %cst_77 {dimension_numbers = #tpu.dot_dimension_numbers<[1], [0], [0], [1], [0, 0, 1, 1], [], []>} : vector<128x4xf32>, vector<4x8xf32>, vector<128x8xf32> -> vector<128x8xf32>
    %108 = arith.addf %99, %107 : vector<128x8xf32>
    %c24_i32_78 = arith.constant 24 : i32
    %109 = arith.addi %6, %c24_i32_78 : i32
    %c0_79 = arith.constant 0 : index
    %110 = arith.index_cast %109 : i32 to index
    %c24_80 = arith.constant 24 : index
    %c0_81 = arith.constant 0 : index
    %111 = vector.load %arg2[%c0_79, %110, %c24_80, %c0_81] : memref<1x52x52x4xf32, #tpu.memory_space<vmem>>, vector<1x8x16x4xf32>
    %112 = vector.shape_cast %111 : vector<1x8x16x4xf32> to vector<8x16x4xf32>
    %113 = vector.shape_cast %112 : vector<8x16x4xf32> to vector<128x4xf32>
    %c8 = arith.constant 8 : index
    %c0_82 = arith.constant 0 : index
    %c0_83 = arith.constant 0 : index
    %114 = vector.load %arg4[%c8, %c0_82, %c0_83] : memref<9x4x8xf32, #tpu.memory_space<vmem>>, vector<1x4x8xf32>
    %115 = vector.shape_cast %114 : vector<1x4x8xf32> to vector<4x8xf32>
    %cst_84 = arith.constant dense<0.000000e+00> : vector<128x8xf32>
    %116 = tpu.matmul %113, %115, %cst_84 {dimension_numbers = #tpu.dot_dimension_numbers<[1], [0], [0], [1], [0, 0, 1, 1], [], []>} : vector<128x4xf32>, vector<4x8xf32>, vector<128x8xf32> -> vector<128x8xf32>
    %117 = arith.addf %108, %116 : vector<128x8xf32>
    %118 = vector.extract_strided_slice %7 {offsets = [1, 0], sizes = [1, 8], strides = [1, 1]} : vector<4x8xf32> to vector<1x8xf32>
    %119 = vector.broadcast %118 : vector<1x8xf32> to vector<128x8xf32>
    %120 = arith.addf %117, %119 : vector<128x8xf32>
    %121 = vector.shape_cast %120 : vector<128x8xf32> to vector<8x16x8xf32>
    %c1_85 = arith.constant 1 : index
    %c0_86 = arith.constant 0 : index
    %c0_87 = arith.constant 0 : index
    %c0_88 = arith.constant 0 : index
    %c0_89 = arith.constant 0 : index
    %122 = vector.load %arg8[%c1_85, %c0_86, %c0_87, %c0_88, %c0_89] : memref<4x1x8x16x8xf32, #tpu.memory_space<vmem>>, vector<1x1x8x16x8xf32>
    %123 = vector.shape_cast %122 : vector<1x1x8x16x8xf32> to vector<8x16x8xf32>
    %124 = vector.shape_cast %121 : vector<8x16x8xf32> to vector<1x1x8x16x8xf32>
    tpu.vector_store %arg8[%c1_85, %c0_86, %c0_87, %c0_88, %c0_89], %124 {strides = array<i32>} : memref<4x1x8x16x8xf32, #tpu.memory_space<vmem>>, vector<1x1x8x16x8xf32>,
    %c1_90 = arith.constant 1 : index
    %c0_91 = arith.constant 0 : index
    %125 = vector.load %arg9[%c1_90, %c0_91] : memref<8x8xf32, #tpu.memory_space<vmem>>, vector<1x8xf32>
    %cst_92 = arith.constant dense<0.000000e+00> : vector<8xf32>
    %126 = vector.multi_reduction <add>, %120, %cst_92 [0] : vector<128x8xf32> to vector<8xf32>
    %127 = vector.shape_cast %126 : vector<8xf32> to vector<1x8xf32>
    %128 = arith.addf %125, %127 : vector<1x8xf32>
    %c1_93 = arith.constant 1 : index
    %c0_94 = arith.constant 0 : index
    %129 = vector.load %arg9[%c1_93, %c0_94] : memref<8x8xf32, #tpu.memory_space<vmem>>, vector<1x8xf32>
    tpu.vector_store %arg9[%c1_93, %c0_94], %128 {strides = array<i32>} : memref<8x8xf32, #tpu.memory_space<vmem>>, vector<1x8xf32>,
    %c5_95 = arith.constant 5 : index
    %c0_96 = arith.constant 0 : index
    %130 = vector.load %arg9[%c5_95, %c0_96] : memref<8x8xf32, #tpu.memory_space<vmem>>, vector<1x8xf32>
    %131 = arith.mulf %120, %120 : vector<128x8xf32>
    %cst_97 = arith.constant dense<0.000000e+00> : vector<8xf32>
    %132 = vector.multi_reduction <add>, %131, %cst_97 [0] : vector<128x8xf32> to vector<8xf32>
    %133 = vector.shape_cast %132 : vector<8xf32> to vector<1x8xf32>
    %134 = arith.addf %130, %133 : vector<1x8xf32>
    %c5_98 = arith.constant 5 : index
    %c0_99 = arith.constant 0 : index
    %135 = vector.load %arg9[%c5_98, %c0_99] : memref<8x8xf32, #tpu.memory_space<vmem>>, vector<1x8xf32>
    tpu.vector_store %arg9[%c5_98, %c0_99], %134 {strides = array<i32>} : memref<8x8xf32, #tpu.memory_space<vmem>>, vector<1x8xf32>,
    %cst_100 = arith.constant 0.000000e+00 : f32
    %136 = vector.broadcast %cst_100 : f32 to vector<128x8xf32>
    %c6_i32 = arith.constant 6 : i32
    %137 = arith.addi %6, %c6_i32 : i32
    %c0_101 = arith.constant 0 : index
    %138 = arith.index_cast %137 : i32 to index
    %c6_102 = arith.constant 6 : index
    %c0_103 = arith.constant 0 : index
    %139 = vector.load %arg2[%c0_101, %138, %c6_102, %c0_103] : memref<1x52x52x4xf32, #tpu.memory_space<vmem>>, vector<1x8x16x4xf32>
    %140 = vector.shape_cast %139 : vector<1x8x16x4xf32> to vector<8x16x4xf32>
    %141 = vector.shape_cast %140 : vector<8x16x4xf32> to vector<128x4xf32>
    %c0_104 = arith.constant 0 : index
    %c0_105 = arith.constant 0 : index
    %c0_106 = arith.constant 0 : index
    %142 = vector.load %arg5[%c0_104, %c0_105, %c0_106] : memref<9x4x8xf32, #tpu.memory_space<vmem>>, vector<1x4x8xf32>
    %143 = vector.shape_cast %142 : vector<1x4x8xf32> to vector<4x8xf32>
    %cst_107 = arith.constant dense<0.000000e+00> : vector<128x8xf32>
    %144 = tpu.matmul %141, %143, %cst_107 {dimension_numbers = #tpu.dot_dimension_numbers<[1], [0], [0], [1], [0, 0, 1, 1], [], []>} : vector<128x4xf32>, vector<4x8xf32>, vector<128x8xf32> -> vector<128x8xf32>
    %145 = arith.addf %136, %144 : vector<128x8xf32>
    %c6_i32_108 = arith.constant 6 : i32
    %146 = arith.addi %6, %c6_i32_108 : i32
    %c0_109 = arith.constant 0 : index
    %147 = arith.index_cast %146 : i32 to index
    %c18_110 = arith.constant 18 : index
    %c0_111 = arith.constant 0 : index
    %148 = vector.load %arg2[%c0_109, %147, %c18_110, %c0_111] : memref<1x52x52x4xf32, #tpu.memory_space<vmem>>, vector<1x8x16x4xf32>
    %149 = vector.shape_cast %148 : vector<1x8x16x4xf32> to vector<8x16x4xf32>
    %150 = vector.shape_cast %149 : vector<8x16x4xf32> to vector<128x4xf32>
    %c1_112 = arith.constant 1 : index
    %c0_113 = arith.constant 0 : index
    %c0_114 = arith.constant 0 : index
    %151 = vector.load %arg5[%c1_112, %c0_113, %c0_114] : memref<9x4x8xf32, #tpu.memory_space<vmem>>, vector<1x4x8xf32>
    %152 = vector.shape_cast %151 : vector<1x4x8xf32> to vector<4x8xf32>
    %cst_115 = arith.constant dense<0.000000e+00> : vector<128x8xf32>
    %153 = tpu.matmul %150, %152, %cst_115 {dimension_numbers = #tpu.dot_dimension_numbers<[1], [0], [0], [1], [0, 0, 1, 1], [], []>} : vector<128x4xf32>, vector<4x8xf32>, vector<128x8xf32> -> vector<128x8xf32>
    %154 = arith.addf %145, %153 : vector<128x8xf32>
    %c6_i32_116 = arith.constant 6 : i32
    %155 = arith.addi %6, %c6_i32_116 : i32
    %c0_117 = arith.constant 0 : index
    %156 = arith.index_cast %155 : i32 to index
    %c30 = arith.constant 30 : index
    %c0_118 = arith.constant 0 : index
    %157 = vector.load %arg2[%c0_117, %156, %c30, %c0_118] : memref<1x52x52x4xf32, #tpu.memory_space<vmem>>, vector<1x8x16x4xf32>
    %158 = vector.shape_cast %157 : vector<1x8x16x4xf32> to vector<8x16x4xf32>
    %159 = vector.shape_cast %158 : vector<8x16x4xf32> to vector<128x4xf32>
    %c2_119 = arith.constant 2 : index
    %c0_120 = arith.constant 0 : index
    %c0_121 = arith.constant 0 : index
    %160 = vector.load %arg5[%c2_119, %c0_120, %c0_121] : memref<9x4x8xf32, #tpu.memory_space<vmem>>, vector<1x4x8xf32>
    %161 = vector.shape_cast %160 : vector<1x4x8xf32> to vector<4x8xf32>
    %cst_122 = arith.constant dense<0.000000e+00> : vector<128x8xf32>
    %162 = tpu.matmul %159, %161, %cst_122 {dimension_numbers = #tpu.dot_dimension_numbers<[1], [0], [0], [1], [0, 0, 1, 1], [], []>} : vector<128x4xf32>, vector<4x8xf32>, vector<128x8xf32> -> vector<128x8xf32>
    %163 = arith.addf %154, %162 : vector<128x8xf32>
    %c18_i32_123 = arith.constant 18 : i32
    %164 = arith.addi %6, %c18_i32_123 : i32
    %c0_124 = arith.constant 0 : index
    %165 = arith.index_cast %164 : i32 to index
    %c6_125 = arith.constant 6 : index
    %c0_126 = arith.constant 0 : index
    %166 = vector.load %arg2[%c0_124, %165, %c6_125, %c0_126] : memref<1x52x52x4xf32, #tpu.memory_space<vmem>>, vector<1x8x16x4xf32>
    %167 = vector.shape_cast %166 : vector<1x8x16x4xf32> to vector<8x16x4xf32>
    %168 = vector.shape_cast %167 : vector<8x16x4xf32> to vector<128x4xf32>
    %c3_127 = arith.constant 3 : index
    %c0_128 = arith.constant 0 : index
    %c0_129 = arith.constant 0 : index
    %169 = vector.load %arg5[%c3_127, %c0_128, %c0_129] : memref<9x4x8xf32, #tpu.memory_space<vmem>>, vector<1x4x8xf32>
    %170 = vector.shape_cast %169 : vector<1x4x8xf32> to vector<4x8xf32>
    %cst_130 = arith.constant dense<0.000000e+00> : vector<128x8xf32>
    %171 = tpu.matmul %168, %170, %cst_130 {dimension_numbers = #tpu.dot_dimension_numbers<[1], [0], [0], [1], [0, 0, 1, 1], [], []>} : vector<128x4xf32>, vector<4x8xf32>, vector<128x8xf32> -> vector<128x8xf32>
    %172 = arith.addf %163, %171 : vector<128x8xf32>
    %c18_i32_131 = arith.constant 18 : i32
    %173 = arith.addi %6, %c18_i32_131 : i32
    %c0_132 = arith.constant 0 : index
    %174 = arith.index_cast %173 : i32 to index
    %c18_133 = arith.constant 18 : index
    %c0_134 = arith.constant 0 : index
    %175 = vector.load %arg2[%c0_132, %174, %c18_133, %c0_134] : memref<1x52x52x4xf32, #tpu.memory_space<vmem>>, vector<1x8x16x4xf32>
    %176 = vector.shape_cast %175 : vector<1x8x16x4xf32> to vector<8x16x4xf32>
    %177 = vector.shape_cast %176 : vector<8x16x4xf32> to vector<128x4xf32>
    %c4_135 = arith.constant 4 : index
    %c0_136 = arith.constant 0 : index
    %c0_137 = arith.constant 0 : index
    %178 = vector.load %arg5[%c4_135, %c0_136, %c0_137] : memref<9x4x8xf32, #tpu.memory_space<vmem>>, vector<1x4x8xf32>
    %179 = vector.shape_cast %178 : vector<1x4x8xf32> to vector<4x8xf32>
    %cst_138 = arith.constant dense<0.000000e+00> : vector<128x8xf32>
    %180 = tpu.matmul %177, %179, %cst_138 {dimension_numbers = #tpu.dot_dimension_numbers<[1], [0], [0], [1], [0, 0, 1, 1], [], []>} : vector<128x4xf32>, vector<4x8xf32>, vector<128x8xf32> -> vector<128x8xf32>
    %181 = arith.addf %172, %180 : vector<128x8xf32>
    %c18_i32_139 = arith.constant 18 : i32
    %182 = arith.addi %6, %c18_i32_139 : i32
    %c0_140 = arith.constant 0 : index
    %183 = arith.index_cast %182 : i32 to index
    %c30_141 = arith.constant 30 : index
    %c0_142 = arith.constant 0 : index
    %184 = vector.load %arg2[%c0_140, %183, %c30_141, %c0_142] : memref<1x52x52x4xf32, #tpu.memory_space<vmem>>, vector<1x8x16x4xf32>
    %185 = vector.shape_cast %184 : vector<1x8x16x4xf32> to vector<8x16x4xf32>
    %186 = vector.shape_cast %185 : vector<8x16x4xf32> to vector<128x4xf32>
    %c5_143 = arith.constant 5 : index
    %c0_144 = arith.constant 0 : index
    %c0_145 = arith.constant 0 : index
    %187 = vector.load %arg5[%c5_143, %c0_144, %c0_145] : memref<9x4x8xf32, #tpu.memory_space<vmem>>, vector<1x4x8xf32>
    %188 = vector.shape_cast %187 : vector<1x4x8xf32> to vector<4x8xf32>
    %cst_146 = arith.constant dense<0.000000e+00> : vector<128x8xf32>
    %189 = tpu.matmul %186, %188, %cst_146 {dimension_numbers = #tpu.dot_dimension_numbers<[1], [0], [0], [1], [0, 0, 1, 1], [], []>} : vector<128x4xf32>, vector<4x8xf32>, vector<128x8xf32> -> vector<128x8xf32>
    %190 = arith.addf %181, %189 : vector<128x8xf32>
    %c30_i32 = arith.constant 30 : i32
    %191 = arith.addi %6, %c30_i32 : i32
    %c0_147 = arith.constant 0 : index
    %192 = arith.index_cast %191 : i32 to index
    %c6_148 = arith.constant 6 : index
    %c0_149 = arith.constant 0 : index
    %193 = vector.load %arg2[%c0_147, %192, %c6_148, %c0_149] : memref<1x52x52x4xf32, #tpu.memory_space<vmem>>, vector<1x8x16x4xf32>
    %194 = vector.shape_cast %193 : vector<1x8x16x4xf32> to vector<8x16x4xf32>
    %195 = vector.shape_cast %194 : vector<8x16x4xf32> to vector<128x4xf32>
    %c6_150 = arith.constant 6 : index
    %c0_151 = arith.constant 0 : index
    %c0_152 = arith.constant 0 : index
    %196 = vector.load %arg5[%c6_150, %c0_151, %c0_152] : memref<9x4x8xf32, #tpu.memory_space<vmem>>, vector<1x4x8xf32>
    %197 = vector.shape_cast %196 : vector<1x4x8xf32> to vector<4x8xf32>
    %cst_153 = arith.constant dense<0.000000e+00> : vector<128x8xf32>
    %198 = tpu.matmul %195, %197, %cst_153 {dimension_numbers = #tpu.dot_dimension_numbers<[1], [0], [0], [1], [0, 0, 1, 1], [], []>} : vector<128x4xf32>, vector<4x8xf32>, vector<128x8xf32> -> vector<128x8xf32>
    %199 = arith.addf %190, %198 : vector<128x8xf32>
    %c30_i32_154 = arith.constant 30 : i32
    %200 = arith.addi %6, %c30_i32_154 : i32
    %c0_155 = arith.constant 0 : index
    %201 = arith.index_cast %200 : i32 to index
    %c18_156 = arith.constant 18 : index
    %c0_157 = arith.constant 0 : index
    %202 = vector.load %arg2[%c0_155, %201, %c18_156, %c0_157] : memref<1x52x52x4xf32, #tpu.memory_space<vmem>>, vector<1x8x16x4xf32>
    %203 = vector.shape_cast %202 : vector<1x8x16x4xf32> to vector<8x16x4xf32>
    %204 = vector.shape_cast %203 : vector<8x16x4xf32> to vector<128x4xf32>
    %c7_158 = arith.constant 7 : index
    %c0_159 = arith.constant 0 : index
    %c0_160 = arith.constant 0 : index
    %205 = vector.load %arg5[%c7_158, %c0_159, %c0_160] : memref<9x4x8xf32, #tpu.memory_space<vmem>>, vector<1x4x8xf32>
    %206 = vector.shape_cast %205 : vector<1x4x8xf32> to vector<4x8xf32>
    %cst_161 = arith.constant dense<0.000000e+00> : vector<128x8xf32>
    %207 = tpu.matmul %204, %206, %cst_161 {dimension_numbers = #tpu.dot_dimension_numbers<[1], [0], [0], [1], [0, 0, 1, 1], [], []>} : vector<128x4xf32>, vector<4x8xf32>, vector<128x8xf32> -> vector<128x8xf32>
    %208 = arith.addf %199, %207 : vector<128x8xf32>
    %c30_i32_162 = arith.constant 30 : i32
    %209 = arith.addi %6, %c30_i32_162 : i32
    %c0_163 = arith.constant 0 : index
    %210 = arith.index_cast %209 : i32 to index
    %c30_164 = arith.constant 30 : index
    %c0_165 = arith.constant 0 : index
    %211 = vector.load %arg2[%c0_163, %210, %c30_164, %c0_165] : memref<1x52x52x4xf32, #tpu.memory_space<vmem>>, vector<1x8x16x4xf32>
    %212 = vector.shape_cast %211 : vector<1x8x16x4xf32> to vector<8x16x4xf32>
    %213 = vector.shape_cast %212 : vector<8x16x4xf32> to vector<128x4xf32>
    %c8_166 = arith.constant 8 : index
    %c0_167 = arith.constant 0 : index
    %c0_168 = arith.constant 0 : index
    %214 = vector.load %arg5[%c8_166, %c0_167, %c0_168] : memref<9x4x8xf32, #tpu.memory_space<vmem>>, vector<1x4x8xf32>
    %215 = vector.shape_cast %214 : vector<1x4x8xf32> to vector<4x8xf32>
    %cst_169 = arith.constant dense<0.000000e+00> : vector<128x8xf32>
    %216 = tpu.matmul %213, %215, %cst_169 {dimension_numbers = #tpu.dot_dimension_numbers<[1], [0], [0], [1], [0, 0, 1, 1], [], []>} : vector<128x4xf32>, vector<4x8xf32>, vector<128x8xf32> -> vector<128x8xf32>
    %217 = arith.addf %208, %216 : vector<128x8xf32>
    %218 = vector.extract_strided_slice %7 {offsets = [2, 0], sizes = [1, 8], strides = [1, 1]} : vector<4x8xf32> to vector<1x8xf32>
    %219 = vector.broadcast %218 : vector<1x8xf32> to vector<128x8xf32>
    %220 = arith.addf %217, %219 : vector<128x8xf32>
    %221 = vector.shape_cast %220 : vector<128x8xf32> to vector<8x16x8xf32>
    %c2_170 = arith.constant 2 : index
    %c0_171 = arith.constant 0 : index
    %c0_172 = arith.constant 0 : index
    %c0_173 = arith.constant 0 : index
    %c0_174 = arith.constant 0 : index
    %222 = vector.load %arg8[%c2_170, %c0_171, %c0_172, %c0_173, %c0_174] : memref<4x1x8x16x8xf32, #tpu.memory_space<vmem>>, vector<1x1x8x16x8xf32>
    %223 = vector.shape_cast %222 : vector<1x1x8x16x8xf32> to vector<8x16x8xf32>
    %224 = vector.shape_cast %221 : vector<8x16x8xf32> to vector<1x1x8x16x8xf32>
    tpu.vector_store %arg8[%c2_170, %c0_171, %c0_172, %c0_173, %c0_174], %224 {strides = array<i32>} : memref<4x1x8x16x8xf32, #tpu.memory_space<vmem>>, vector<1x1x8x16x8xf32>,
    %c2_175 = arith.constant 2 : index
    %c0_176 = arith.constant 0 : index
    %225 = vector.load %arg9[%c2_175, %c0_176] : memref<8x8xf32, #tpu.memory_space<vmem>>, vector<1x8xf32>
    %cst_177 = arith.constant dense<0.000000e+00> : vector<8xf32>
    %226 = vector.multi_reduction <add>, %220, %cst_177 [0] : vector<128x8xf32> to vector<8xf32>
    %227 = vector.shape_cast %226 : vector<8xf32> to vector<1x8xf32>
    %228 = arith.addf %225, %227 : vector<1x8xf32>
    %c2_178 = arith.constant 2 : index
    %c0_179 = arith.constant 0 : index
    %229 = vector.load %arg9[%c2_178, %c0_179] : memref<8x8xf32, #tpu.memory_space<vmem>>, vector<1x8xf32>
    tpu.vector_store %arg9[%c2_178, %c0_179], %228 {strides = array<i32>} : memref<8x8xf32, #tpu.memory_space<vmem>>, vector<1x8xf32>,
    %c6_180 = arith.constant 6 : index
    %c0_181 = arith.constant 0 : index
    %230 = vector.load %arg9[%c6_180, %c0_181] : memref<8x8xf32, #tpu.memory_space<vmem>>, vector<1x8xf32>
    %231 = arith.mulf %220, %220 : vector<128x8xf32>
    %cst_182 = arith.constant dense<0.000000e+00> : vector<8xf32>
    %232 = vector.multi_reduction <add>, %231, %cst_182 [0] : vector<128x8xf32> to vector<8xf32>
    %233 = vector.shape_cast %232 : vector<8xf32> to vector<1x8xf32>
    %234 = arith.addf %230, %233 : vector<1x8xf32>
    %c6_183 = arith.constant 6 : index
    %c0_184 = arith.constant 0 : index
    %235 = vector.load %arg9[%c6_183, %c0_184] : memref<8x8xf32, #tpu.memory_space<vmem>>, vector<1x8xf32>
    tpu.vector_store %arg9[%c6_183, %c0_184], %234 {strides = array<i32>} : memref<8x8xf32, #tpu.memory_space<vmem>>, vector<1x8xf32>,
    %cst_185 = arith.constant 0.000000e+00 : f32
    %236 = vector.broadcast %cst_185 : f32 to vector<128x8xf32>
    %c0_i32_186 = arith.constant 0 : i32
    %237 = arith.addi %6, %c0_i32_186 : i32
    %c0_187 = arith.constant 0 : index
    %238 = arith.index_cast %237 : i32 to index
    %c0_188 = arith.constant 0 : index
    %c0_189 = arith.constant 0 : index
    %239 = vector.load %arg2[%c0_187, %238, %c0_188, %c0_189] : memref<1x52x52x4xf32, #tpu.memory_space<vmem>>, vector<1x8x16x4xf32>
    %240 = vector.shape_cast %239 : vector<1x8x16x4xf32> to vector<8x16x4xf32>
    %241 = vector.shape_cast %240 : vector<8x16x4xf32> to vector<128x4xf32>
    %c0_190 = arith.constant 0 : index
    %c0_191 = arith.constant 0 : index
    %c0_192 = arith.constant 0 : index
    %242 = vector.load %arg6[%c0_190, %c0_191, %c0_192] : memref<9x4x8xf32, #tpu.memory_space<vmem>>, vector<1x4x8xf32>
    %243 = vector.shape_cast %242 : vector<1x4x8xf32> to vector<4x8xf32>
    %cst_193 = arith.constant dense<0.000000e+00> : vector<128x8xf32>
    %244 = tpu.matmul %241, %243, %cst_193 {dimension_numbers = #tpu.dot_dimension_numbers<[1], [0], [0], [1], [0, 0, 1, 1], [], []>} : vector<128x4xf32>, vector<4x8xf32>, vector<128x8xf32> -> vector<128x8xf32>
    %245 = arith.addf %236, %244 : vector<128x8xf32>
    %c0_i32_194 = arith.constant 0 : i32
    %246 = arith.addi %6, %c0_i32_194 : i32
    %c0_195 = arith.constant 0 : index
    %247 = arith.index_cast %246 : i32 to index
    %c18_196 = arith.constant 18 : index
    %c0_197 = arith.constant 0 : index
    %248 = vector.load %arg2[%c0_195, %247, %c18_196, %c0_197] : memref<1x52x52x4xf32, #tpu.memory_space<vmem>>, vector<1x8x16x4xf32>
    %249 = vector.shape_cast %248 : vector<1x8x16x4xf32> to vector<8x16x4xf32>
    %250 = vector.shape_cast %249 : vector<8x16x4xf32> to vector<128x4xf32>
    %c1_198 = arith.constant 1 : index
    %c0_199 = arith.constant 0 : index
    %c0_200 = arith.constant 0 : index
    %251 = vector.load %arg6[%c1_198, %c0_199, %c0_200] : memref<9x4x8xf32, #tpu.memory_space<vmem>>, vector<1x4x8xf32>
    %252 = vector.shape_cast %251 : vector<1x4x8xf32> to vector<4x8xf32>
    %cst_201 = arith.constant dense<0.000000e+00> : vector<128x8xf32>
    %253 = tpu.matmul %250, %252, %cst_201 {dimension_numbers = #tpu.dot_dimension_numbers<[1], [0], [0], [1], [0, 0, 1, 1], [], []>} : vector<128x4xf32>, vector<4x8xf32>, vector<128x8xf32> -> vector<128x8xf32>
    %254 = arith.addf %245, %253 : vector<128x8xf32>
    %c0_i32_202 = arith.constant 0 : i32
    %255 = arith.addi %6, %c0_i32_202 : i32
    %c0_203 = arith.constant 0 : index
    %256 = arith.index_cast %255 : i32 to index
    %c36 = arith.constant 36 : index
    %c0_204 = arith.constant 0 : index
    %257 = vector.load %arg2[%c0_203, %256, %c36, %c0_204] : memref<1x52x52x4xf32, #tpu.memory_space<vmem>>, vector<1x8x16x4xf32>
    %258 = vector.shape_cast %257 : vector<1x8x16x4xf32> to vector<8x16x4xf32>
    %259 = vector.shape_cast %258 : vector<8x16x4xf32> to vector<128x4xf32>
    %c2_205 = arith.constant 2 : index
    %c0_206 = arith.constant 0 : index
    %c0_207 = arith.constant 0 : index
    %260 = vector.load %arg6[%c2_205, %c0_206, %c0_207] : memref<9x4x8xf32, #tpu.memory_space<vmem>>, vector<1x4x8xf32>
    %261 = vector.shape_cast %260 : vector<1x4x8xf32> to vector<4x8xf32>
    %cst_208 = arith.constant dense<0.000000e+00> : vector<128x8xf32>
    %262 = tpu.matmul %259, %261, %cst_208 {dimension_numbers = #tpu.dot_dimension_numbers<[1], [0], [0], [1], [0, 0, 1, 1], [], []>} : vector<128x4xf32>, vector<4x8xf32>, vector<128x8xf32> -> vector<128x8xf32>
    %263 = arith.addf %254, %262 : vector<128x8xf32>
    %c18_i32_209 = arith.constant 18 : i32
    %264 = arith.addi %6, %c18_i32_209 : i32
    %c0_210 = arith.constant 0 : index
    %265 = arith.index_cast %264 : i32 to index
    %c0_211 = arith.constant 0 : index
    %c0_212 = arith.constant 0 : index
    %266 = vector.load %arg2[%c0_210, %265, %c0_211, %c0_212] : memref<1x52x52x4xf32, #tpu.memory_space<vmem>>, vector<1x8x16x4xf32>
    %267 = vector.shape_cast %266 : vector<1x8x16x4xf32> to vector<8x16x4xf32>
    %268 = vector.shape_cast %267 : vector<8x16x4xf32> to vector<128x4xf32>
    %c3_213 = arith.constant 3 : index
    %c0_214 = arith.constant 0 : index
    %c0_215 = arith.constant 0 : index
    %269 = vector.load %arg6[%c3_213, %c0_214, %c0_215] : memref<9x4x8xf32, #tpu.memory_space<vmem>>, vector<1x4x8xf32>
    %270 = vector.shape_cast %269 : vector<1x4x8xf32> to vector<4x8xf32>
    %cst_216 = arith.constant dense<0.000000e+00> : vector<128x8xf32>
    %271 = tpu.matmul %268, %270, %cst_216 {dimension_numbers = #tpu.dot_dimension_numbers<[1], [0], [0], [1], [0, 0, 1, 1], [], []>} : vector<128x4xf32>, vector<4x8xf32>, vector<128x8xf32> -> vector<128x8xf32>
    %272 = arith.addf %263, %271 : vector<128x8xf32>
    %c18_i32_217 = arith.constant 18 : i32
    %273 = arith.addi %6, %c18_i32_217 : i32
    %c0_218 = arith.constant 0 : index
    %274 = arith.index_cast %273 : i32 to index
    %c18_219 = arith.constant 18 : index
    %c0_220 = arith.constant 0 : index
    %275 = vector.load %arg2[%c0_218, %274, %c18_219, %c0_220] : memref<1x52x52x4xf32, #tpu.memory_space<vmem>>, vector<1x8x16x4xf32>
    %276 = vector.shape_cast %275 : vector<1x8x16x4xf32> to vector<8x16x4xf32>
    %277 = vector.shape_cast %276 : vector<8x16x4xf32> to vector<128x4xf32>
    %c4_221 = arith.constant 4 : index
    %c0_222 = arith.constant 0 : index
    %c0_223 = arith.constant 0 : index
    %278 = vector.load %arg6[%c4_221, %c0_222, %c0_223] : memref<9x4x8xf32, #tpu.memory_space<vmem>>, vector<1x4x8xf32>
    %279 = vector.shape_cast %278 : vector<1x4x8xf32> to vector<4x8xf32>
    %cst_224 = arith.constant dense<0.000000e+00> : vector<128x8xf32>
    %280 = tpu.matmul %277, %279, %cst_224 {dimension_numbers = #tpu.dot_dimension_numbers<[1], [0], [0], [1], [0, 0, 1, 1], [], []>} : vector<128x4xf32>, vector<4x8xf32>, vector<128x8xf32> -> vector<128x8xf32>
    %281 = arith.addf %272, %280 : vector<128x8xf32>
    %c18_i32_225 = arith.constant 18 : i32
    %282 = arith.addi %6, %c18_i32_225 : i32
    %c0_226 = arith.constant 0 : index
    %283 = arith.index_cast %282 : i32 to index
    %c36_227 = arith.constant 36 : index
    %c0_228 = arith.constant 0 : index
    %284 = vector.load %arg2[%c0_226, %283, %c36_227, %c0_228] : memref<1x52x52x4xf32, #tpu.memory_space<vmem>>, vector<1x8x16x4xf32>
    %285 = vector.shape_cast %284 : vector<1x8x16x4xf32> to vector<8x16x4xf32>
    %286 = vector.shape_cast %285 : vector<8x16x4xf32> to vector<128x4xf32>
    %c5_229 = arith.constant 5 : index
    %c0_230 = arith.constant 0 : index
    %c0_231 = arith.constant 0 : index
    %287 = vector.load %arg6[%c5_229, %c0_230, %c0_231] : memref<9x4x8xf32, #tpu.memory_space<vmem>>, vector<1x4x8xf32>
    %288 = vector.shape_cast %287 : vector<1x4x8xf32> to vector<4x8xf32>
    %cst_232 = arith.constant dense<0.000000e+00> : vector<128x8xf32>
    %289 = tpu.matmul %286, %288, %cst_232 {dimension_numbers = #tpu.dot_dimension_numbers<[1], [0], [0], [1], [0, 0, 1, 1], [], []>} : vector<128x4xf32>, vector<4x8xf32>, vector<128x8xf32> -> vector<128x8xf32>
    %290 = arith.addf %281, %289 : vector<128x8xf32>
    %c36_i32 = arith.constant 36 : i32
    %291 = arith.addi %6, %c36_i32 : i32
    %c0_233 = arith.constant 0 : index
    %292 = arith.index_cast %291 : i32 to index
    %c0_234 = arith.constant 0 : index
    %c0_235 = arith.constant 0 : index
    %293 = vector.load %arg2[%c0_233, %292, %c0_234, %c0_235] : memref<1x52x52x4xf32, #tpu.memory_space<vmem>>, vector<1x8x16x4xf32>
    %294 = vector.shape_cast %293 : vector<1x8x16x4xf32> to vector<8x16x4xf32>
    %295 = vector.shape_cast %294 : vector<8x16x4xf32> to vector<128x4xf32>
    %c6_236 = arith.constant 6 : index
    %c0_237 = arith.constant 0 : index
    %c0_238 = arith.constant 0 : index
    %296 = vector.load %arg6[%c6_236, %c0_237, %c0_238] : memref<9x4x8xf32, #tpu.memory_space<vmem>>, vector<1x4x8xf32>
    %297 = vector.shape_cast %296 : vector<1x4x8xf32> to vector<4x8xf32>
    %cst_239 = arith.constant dense<0.000000e+00> : vector<128x8xf32>
    %298 = tpu.matmul %295, %297, %cst_239 {dimension_numbers = #tpu.dot_dimension_numbers<[1], [0], [0], [1], [0, 0, 1, 1], [], []>} : vector<128x4xf32>, vector<4x8xf32>, vector<128x8xf32> -> vector<128x8xf32>
    %299 = arith.addf %290, %298 : vector<128x8xf32>
    %c36_i32_240 = arith.constant 36 : i32
    %300 = arith.addi %6, %c36_i32_240 : i32
    %c0_241 = arith.constant 0 : index
    %301 = arith.index_cast %300 : i32 to index
    %c18_242 = arith.constant 18 : index
    %c0_243 = arith.constant 0 : index
    %302 = vector.load %arg2[%c0_241, %301, %c18_242, %c0_243] : memref<1x52x52x4xf32, #tpu.memory_space<vmem>>, vector<1x8x16x4xf32>
    %303 = vector.shape_cast %302 : vector<1x8x16x4xf32> to vector<8x16x4xf32>
    %304 = vector.shape_cast %303 : vector<8x16x4xf32> to vector<128x4xf32>
    %c7_244 = arith.constant 7 : index
    %c0_245 = arith.constant 0 : index
    %c0_246 = arith.constant 0 : index
    %305 = vector.load %arg6[%c7_244, %c0_245, %c0_246] : memref<9x4x8xf32, #tpu.memory_space<vmem>>, vector<1x4x8xf32>
    %306 = vector.shape_cast %305 : vector<1x4x8xf32> to vector<4x8xf32>
    %cst_247 = arith.constant dense<0.000000e+00> : vector<128x8xf32>
    %307 = tpu.matmul %304, %306, %cst_247 {dimension_numbers = #tpu.dot_dimension_numbers<[1], [0], [0], [1], [0, 0, 1, 1], [], []>} : vector<128x4xf32>, vector<4x8xf32>, vector<128x8xf32> -> vector<128x8xf32>
    %308 = arith.addf %299, %307 : vector<128x8xf32>
    %c36_i32_248 = arith.constant 36 : i32
    %309 = arith.addi %6, %c36_i32_248 : i32
    %c0_249 = arith.constant 0 : index
    %310 = arith.index_cast %309 : i32 to index
    %c36_250 = arith.constant 36 : index
    %c0_251 = arith.constant 0 : index
    %311 = vector.load %arg2[%c0_249, %310, %c36_250, %c0_251] : memref<1x52x52x4xf32, #tpu.memory_space<vmem>>, vector<1x8x16x4xf32>
    %312 = vector.shape_cast %311 : vector<1x8x16x4xf32> to vector<8x16x4xf32>
    %313 = vector.shape_cast %312 : vector<8x16x4xf32> to vector<128x4xf32>
    %c8_252 = arith.constant 8 : index
    %c0_253 = arith.constant 0 : index
    %c0_254 = arith.constant 0 : index
    %314 = vector.load %arg6[%c8_252, %c0_253, %c0_254] : memref<9x4x8xf32, #tpu.memory_space<vmem>>, vector<1x4x8xf32>
    %315 = vector.shape_cast %314 : vector<1x4x8xf32> to vector<4x8xf32>
    %cst_255 = arith.constant dense<0.000000e+00> : vector<128x8xf32>
    %316 = tpu.matmul %313, %315, %cst_255 {dimension_numbers = #tpu.dot_dimension_numbers<[1], [0], [0], [1], [0, 0, 1, 1], [], []>} : vector<128x4xf32>, vector<4x8xf32>, vector<128x8xf32> -> vector<128x8xf32>
    %317 = arith.addf %308, %316 : vector<128x8xf32>
    %318 = vector.extract_strided_slice %7 {offsets = [3, 0], sizes = [1, 8], strides = [1, 1]} : vector<4x8xf32> to vector<1x8xf32>
    %319 = vector.broadcast %318 : vector<1x8xf32> to vector<128x8xf32>
    %320 = arith.addf %317, %319 : vector<128x8xf32>
    %321 = vector.shape_cast %320 : vector<128x8xf32> to vector<8x16x8xf32>
    %c3_256 = arith.constant 3 : index
    %c0_257 = arith.constant 0 : index
    %c0_258 = arith.constant 0 : index
    %c0_259 = arith.constant 0 : index
    %c0_260 = arith.constant 0 : index
    %322 = vector.load %arg8[%c3_256, %c0_257, %c0_258, %c0_259, %c0_260] : memref<4x1x8x16x8xf32, #tpu.memory_space<vmem>>, vector<1x1x8x16x8xf32>
    %323 = vector.shape_cast %322 : vector<1x1x8x16x8xf32> to vector<8x16x8xf32>
    %324 = vector.shape_cast %321 : vector<8x16x8xf32> to vector<1x1x8x16x8xf32>
    tpu.vector_store %arg8[%c3_256, %c0_257, %c0_258, %c0_259, %c0_260], %324 {strides = array<i32>} : memref<4x1x8x16x8xf32, #tpu.memory_space<vmem>>, vector<1x1x8x16x8xf32>,
    %c3_261 = arith.constant 3 : index
    %c0_262 = arith.constant 0 : index
    %325 = vector.load %arg9[%c3_261, %c0_262] : memref<8x8xf32, #tpu.memory_space<vmem>>, vector<1x8xf32>
    %cst_263 = arith.constant dense<0.000000e+00> : vector<8xf32>
    %326 = vector.multi_reduction <add>, %320, %cst_263 [0] : vector<128x8xf32> to vector<8xf32>
    %327 = vector.shape_cast %326 : vector<8xf32> to vector<1x8xf32>
    %328 = arith.addf %325, %327 : vector<1x8xf32>
    %c3_264 = arith.constant 3 : index
    %c0_265 = arith.constant 0 : index
    %329 = vector.load %arg9[%c3_264, %c0_265] : memref<8x8xf32, #tpu.memory_space<vmem>>, vector<1x8xf32>
    tpu.vector_store %arg9[%c3_264, %c0_265], %328 {strides = array<i32>} : memref<8x8xf32, #tpu.memory_space<vmem>>, vector<1x8xf32>,
    %c7_266 = arith.constant 7 : index
    %c0_267 = arith.constant 0 : index
    %330 = vector.load %arg9[%c7_266, %c0_267] : memref<8x8xf32, #tpu.memory_space<vmem>>, vector<1x8xf32>
    %331 = arith.mulf %320, %320 : vector<128x8xf32>
    %cst_268 = arith.constant dense<0.000000e+00> : vector<8xf32>
    %332 = vector.multi_reduction <add>, %331, %cst_268 [0] : vector<128x8xf32> to vector<8xf32>
    %333 = vector.shape_cast %332 : vector<8xf32> to vector<1x8xf32>
    %334 = arith.addf %330, %333 : vector<1x8xf32>
    %c7_269 = arith.constant 7 : index
    %c0_270 = arith.constant 0 : index
    %335 = vector.load %arg9[%c7_269, %c0_270] : memref<8x8xf32, #tpu.memory_space<vmem>>, vector<1x8xf32>
    tpu.vector_store %arg9[%c7_269, %c0_270], %334 {strides = array<i32>} : memref<8x8xf32, #tpu.memory_space<vmem>>, vector<1x8xf32>,
    return
  }
  func.func @transform_0(%arg0: i32, %arg1: i32) -> (i32, i32, i32, i32) {
    %c0_i32 = arith.constant 0 : i32
    %c0_i32_0 = arith.constant 0 : i32
    %c0_i32_1 = arith.constant 0 : i32
    %c0_i32_2 = arith.constant 0 : i32
    return %arg0, %c0_i32, %c0_i32_0, %c0_i32_1 : i32, i32, i32, i32
  }
  func.func @transform_1(%arg0: i32, %arg1: i32) -> (i32, i32, i32) {
    %c0_i32 = arith.constant 0 : i32
    %c0_i32_0 = arith.constant 0 : i32
    %c0_i32_1 = arith.constant 0 : i32
    %c0_i32_2 = arith.constant 0 : i32
    return %c0_i32, %c0_i32_0, %c0_i32_1 : i32, i32, i32
  }
  func.func @transform_2(%arg0: i32, %arg1: i32) -> (i32, i32, i32) {
    %c0_i32 = arith.constant 0 : i32
    %c0_i32_0 = arith.constant 0 : i32
    %c0_i32_1 = arith.constant 0 : i32
    %c0_i32_2 = arith.constant 0 : i32
    return %c0_i32, %c0_i32_0, %c0_i32_1 : i32, i32, i32
  }
  func.func @transform_3(%arg0: i32, %arg1: i32) -> (i32, i32, i32) {
    %c0_i32 = arith.constant 0 : i32
    %c0_i32_0 = arith.constant 0 : i32
    %c0_i32_1 = arith.constant 0 : i32
    %c0_i32_2 = arith.constant 0 : i32
    return %c0_i32, %c0_i32_0, %c0_i32_1 : i32, i32, i32
  }
  func.func @transform_4(%arg0: i32, %arg1: i32) -> (i32, i32, i32) {
    %c0_i32 = arith.constant 0 : i32
    %c0_i32_0 = arith.constant 0 : i32
    %c0_i32_1 = arith.constant 0 : i32
    %c0_i32_2 = arith.constant 0 : i32
    return %c0_i32, %c0_i32_0, %c0_i32_1 : i32, i32, i32
  }
  func.func @transform_5(%arg0: i32, %arg1: i32) -> (i32, i32) {
    %c0_i32 = arith.constant 0 : i32
    %c0_i32_0 = arith.constant 0 : i32
    %c0_i32_1 = arith.constant 0 : i32
    return %c0_i32, %c0_i32_0 : i32, i32
  }
  func.func @transform_6(%arg0: i32, %arg1: i32) -> (i32, i32, i32, i32, i32) {
    %c0_i32 = arith.constant 0 : i32
    %c0_i32_0 = arith.constant 0 : i32
    %c0_i32_1 = arith.constant 0 : i32
    %c0_i32_2 = arith.constant 0 : i32
    return %c0_i32, %arg0, %arg1, %c0_i32_0, %c0_i32_1 : i32, i32, i32, i32, i32
  }
  func.func @transform_7(%arg0: i32, %arg1: i32) -> (i32, i32) {
    %c0_i32 = arith.constant 0 : i32
    %c0_i32_0 = arith.constant 0 : i32
    %c0_i32_1 = arith.constant 0 : i32
    return %c0_i32, %c0_i32_0 : i32, i32
  }
}

module attributes {stable_mosaic.version = 11 : i64} {
  func.func @kernel(%arg0: i32, %arg1: i32, %arg2: memref<4x1x8x16x8xf32, #tpu.memory_space<vmem>>, %arg3: memref<8x8xf32, #tpu.memory_space<vmem>>, %arg4: memref<2x8xf32, #tpu.memory_space<vmem>>, %arg5: memref<4x8x8xf32, #tpu.memory_space<vmem>>, %arg6: memref<1x8x16x8xf32, #tpu.memory_space<vmem>>, %arg7: memref<2x8xf32, #tpu.memory_space<vmem>>) attributes {dimension_semantics = [#tpu.dimension_semantics<arbitrary>, #tpu.dimension_semantics<arbitrary>], iteration_bounds = array<i64: 2, 2>, scalar_prefetch = 0 : i64, scratch_operands = 0 : i64, tpu.core_type = #tpu.core_type<tc>, window_params = [{transform_indices = @transform_0, window_bounds = array<i64: 4, 1, 8, 16, 8>}, {pipeline_mode = #tpu.pipeline_mode<synchronous>, transform_indices = @transform_1, window_bounds = array<i64: 8, 8>}, {pipeline_mode = #tpu.pipeline_mode<synchronous>, transform_indices = @transform_2, window_bounds = array<i64: 2, 8>}, {pipeline_mode = #tpu.pipeline_mode<synchronous>, transform_indices = @transform_3, window_bounds = array<i64: 4, 8, 8>}, {transform_indices = @transform_4, window_bounds = array<i64: 1, 8, 16, 8>}, {pipeline_mode = #tpu.pipeline_mode<synchronous>, transform_indices = @transform_5, window_bounds = array<i64: 2, 8>}]} {
    %c0_i32 = arith.constant 0 : i32
    %0 = arith.cmpi eq, %arg0, %c0_i32 : i32
    %c0_i32_0 = arith.constant 0 : i32
    %1 = arith.cmpi eq, %arg1, %c0_i32_0 : i32
    %2 = arith.andi %0, %1 : i1
    %3 = arith.extui %2 : i1 to i32
    %c0_i32_1 = arith.constant 0 : i32
    %4 = arith.cmpi ne, %3, %c0_i32_1 : i32
    scf.if %4 {
      %cst_58 = arith.constant 0.000000e+00 : f32
      %90 = vector.broadcast %cst_58 : f32 to vector<2x8xf32>
      %c0_59 = arith.constant 0 : index
      %c0_60 = arith.constant 0 : index
      %91 = vector.load %arg7[%c0_59, %c0_60] : memref<2x8xf32, #tpu.memory_space<vmem>>, vector<2x8xf32>
      tpu.vector_store %arg7[%c0_59, %c0_60], %90 {strides = array<i32>} : memref<2x8xf32, #tpu.memory_space<vmem>>, vector<2x8xf32>,
    } else {
    }
    %c0 = arith.constant 0 : index
    %c0_2 = arith.constant 0 : index
    %5 = vector.load %arg3[%c0, %c0_2] : memref<8x8xf32, #tpu.memory_space<vmem>>, vector<8x8xf32>
    %c0_3 = arith.constant 0 : index
    %c0_4 = arith.constant 0 : index
    %6 = vector.load %arg4[%c0_3, %c0_4] : memref<2x8xf32, #tpu.memory_space<vmem>>, vector<2x8xf32>
    %7 = tpu.iota {dimensions = array<i32: 0>} : vector<2x8xi32>
    %8 = vector.broadcast %arg0 : i32 to vector<2x8xi32>
    %9 = arith.cmpi eq, %7, %8 : vector<2x8xi32>
    %cst = arith.constant 0.000000e+00 : f32
    %10 = vector.broadcast %cst : f32 to vector<2x8xf32>
    %11 = arith.select %9, %6, %10 : vector<2x8xi1>, vector<2x8xf32>
    %cst_5 = arith.constant dense<0.000000e+00> : vector<8xf32>
    %12 = vector.multi_reduction <add>, %11, %cst_5 [0] : vector<2x8xf32> to vector<8xf32>
    %13 = vector.shape_cast %12 : vector<8xf32> to vector<1x8xf32>
    %cst_6 = arith.constant 0.000000e+00 : f32
    %14 = vector.broadcast %cst_6 : f32 to vector<128x8xf32>
    %c0_7 = arith.constant 0 : index
    %c0_8 = arith.constant 0 : index
    %c0_9 = arith.constant 0 : index
    %c0_10 = arith.constant 0 : index
    %c0_11 = arith.constant 0 : index
    %15 = vector.load %arg2[%c0_7, %c0_8, %c0_9, %c0_10, %c0_11] : memref<4x1x8x16x8xf32, #tpu.memory_space<vmem>>, vector<1x1x8x16x8xf32>
    %16 = vector.shape_cast %15 : vector<1x1x8x16x8xf32> to vector<8x16x8xf32>
    %17 = vector.shape_cast %16 : vector<8x16x8xf32> to vector<128x8xf32>
    %18 = vector.extract_strided_slice %5 {offsets = [0, 0], sizes = [1, 8], strides = [1, 1]} : vector<8x8xf32> to vector<1x8xf32>
    %19 = vector.broadcast %18 : vector<1x8xf32> to vector<128x8xf32>
    %20 = arith.mulf %17, %19 : vector<128x8xf32>
    %21 = vector.extract_strided_slice %5 {offsets = [4, 0], sizes = [1, 8], strides = [1, 1]} : vector<8x8xf32> to vector<1x8xf32>
    %22 = vector.broadcast %21 : vector<1x8xf32> to vector<128x8xf32>
    %23 = arith.addf %20, %22 : vector<128x8xf32>
    %cst_12 = arith.constant 0.000000e+00 : f32
    %24 = vector.broadcast %cst_12 : f32 to vector<128x8xf32>
    %25 = arith.maximumf %23, %24 : vector<128x8xf32>
    %c0_13 = arith.constant 0 : index
    %c0_14 = arith.constant 0 : index
    %c0_15 = arith.constant 0 : index
    %26 = vector.load %arg5[%c0_13, %c0_14, %c0_15] : memref<4x8x8xf32, #tpu.memory_space<vmem>>, vector<1x8x8xf32>
    %27 = vector.shape_cast %26 : vector<1x8x8xf32> to vector<8x8xf32>
    %cst_16 = arith.constant dense<0.000000e+00> : vector<128x8xf32>
    %28 = tpu.matmul %25, %27, %cst_16 {dimension_numbers = #tpu.dot_dimension_numbers<[1], [0], [0], [1], [0, 0, 1, 1], [], []>} : vector<128x8xf32>, vector<8x8xf32>, vector<128x8xf32> -> vector<128x8xf32>
    %29 = arith.addf %14, %28 : vector<128x8xf32>
    %c1 = arith.constant 1 : index
    %c0_17 = arith.constant 0 : index
    %c0_18 = arith.constant 0 : index
    %c0_19 = arith.constant 0 : index
    %c0_20 = arith.constant 0 : index
    %30 = vector.load %arg2[%c1, %c0_17, %c0_18, %c0_19, %c0_20] : memref<4x1x8x16x8xf32, #tpu.memory_space<vmem>>, vector<1x1x8x16x8xf32>
    %31 = vector.shape_cast %30 : vector<1x1x8x16x8xf32> to vector<8x16x8xf32>
    %32 = vector.shape_cast %31 : vector<8x16x8xf32> to vector<128x8xf32>
    %33 = vector.extract_strided_slice %5 {offsets = [1, 0], sizes = [1, 8], strides = [1, 1]} : vector<8x8xf32> to vector<1x8xf32>
    %34 = vector.broadcast %33 : vector<1x8xf32> to vector<128x8xf32>
    %35 = arith.mulf %32, %34 : vector<128x8xf32>
    %36 = vector.extract_strided_slice %5 {offsets = [5, 0], sizes = [1, 8], strides = [1, 1]} : vector<8x8xf32> to vector<1x8xf32>
    %37 = vector.broadcast %36 : vector<1x8xf32> to vector<128x8xf32>
    %38 = arith.addf %35, %37 : vector<128x8xf32>
    %cst_21 = arith.constant 0.000000e+00 : f32
    %39 = vector.broadcast %cst_21 : f32 to vector<128x8xf32>
    %40 = arith.maximumf %38, %39 : vector<128x8xf32>
    %c1_22 = arith.constant 1 : index
    %c0_23 = arith.constant 0 : index
    %c0_24 = arith.constant 0 : index
    %41 = vector.load %arg5[%c1_22, %c0_23, %c0_24] : memref<4x8x8xf32, #tpu.memory_space<vmem>>, vector<1x8x8xf32>
    %42 = vector.shape_cast %41 : vector<1x8x8xf32> to vector<8x8xf32>
    %cst_25 = arith.constant dense<0.000000e+00> : vector<128x8xf32>
    %43 = tpu.matmul %40, %42, %cst_25 {dimension_numbers = #tpu.dot_dimension_numbers<[1], [0], [0], [1], [0, 0, 1, 1], [], []>} : vector<128x8xf32>, vector<8x8xf32>, vector<128x8xf32> -> vector<128x8xf32>
    %44 = arith.addf %29, %43 : vector<128x8xf32>
    %c2 = arith.constant 2 : index
    %c0_26 = arith.constant 0 : index
    %c0_27 = arith.constant 0 : index
    %c0_28 = arith.constant 0 : index
    %c0_29 = arith.constant 0 : index
    %45 = vector.load %arg2[%c2, %c0_26, %c0_27, %c0_28, %c0_29] : memref<4x1x8x16x8xf32, #tpu.memory_space<vmem>>, vector<1x1x8x16x8xf32>
    %46 = vector.shape_cast %45 : vector<1x1x8x16x8xf32> to vector<8x16x8xf32>
    %47 = vector.shape_cast %46 : vector<8x16x8xf32> to vector<128x8xf32>
    %48 = vector.extract_strided_slice %5 {offsets = [2, 0], sizes = [1, 8], strides = [1, 1]} : vector<8x8xf32> to vector<1x8xf32>
    %49 = vector.broadcast %48 : vector<1x8xf32> to vector<128x8xf32>
    %50 = arith.mulf %47, %49 : vector<128x8xf32>
    %51 = vector.extract_strided_slice %5 {offsets = [6, 0], sizes = [1, 8], strides = [1, 1]} : vector<8x8xf32> to vector<1x8xf32>
    %52 = vector.broadcast %51 : vector<1x8xf32> to vector<128x8xf32>
    %53 = arith.addf %50, %52 : vector<128x8xf32>
    %cst_30 = arith.constant 0.000000e+00 : f32
    %54 = vector.broadcast %cst_30 : f32 to vector<128x8xf32>
    %55 = arith.maximumf %53, %54 : vector<128x8xf32>
    %c2_31 = arith.constant 2 : index
    %c0_32 = arith.constant 0 : index
    %c0_33 = arith.constant 0 : index
    %56 = vector.load %arg5[%c2_31, %c0_32, %c0_33] : memref<4x8x8xf32, #tpu.memory_space<vmem>>, vector<1x8x8xf32>
    %57 = vector.shape_cast %56 : vector<1x8x8xf32> to vector<8x8xf32>
    %cst_34 = arith.constant dense<0.000000e+00> : vector<128x8xf32>
    %58 = tpu.matmul %55, %57, %cst_34 {dimension_numbers = #tpu.dot_dimension_numbers<[1], [0], [0], [1], [0, 0, 1, 1], [], []>} : vector<128x8xf32>, vector<8x8xf32>, vector<128x8xf32> -> vector<128x8xf32>
    %59 = arith.addf %44, %58 : vector<128x8xf32>
    %c3 = arith.constant 3 : index
    %c0_35 = arith.constant 0 : index
    %c0_36 = arith.constant 0 : index
    %c0_37 = arith.constant 0 : index
    %c0_38 = arith.constant 0 : index
    %60 = vector.load %arg2[%c3, %c0_35, %c0_36, %c0_37, %c0_38] : memref<4x1x8x16x8xf32, #tpu.memory_space<vmem>>, vector<1x1x8x16x8xf32>
    %61 = vector.shape_cast %60 : vector<1x1x8x16x8xf32> to vector<8x16x8xf32>
    %62 = vector.shape_cast %61 : vector<8x16x8xf32> to vector<128x8xf32>
    %63 = vector.extract_strided_slice %5 {offsets = [3, 0], sizes = [1, 8], strides = [1, 1]} : vector<8x8xf32> to vector<1x8xf32>
    %64 = vector.broadcast %63 : vector<1x8xf32> to vector<128x8xf32>
    %65 = arith.mulf %62, %64 : vector<128x8xf32>
    %66 = vector.extract_strided_slice %5 {offsets = [7, 0], sizes = [1, 8], strides = [1, 1]} : vector<8x8xf32> to vector<1x8xf32>
    %67 = vector.broadcast %66 : vector<1x8xf32> to vector<128x8xf32>
    %68 = arith.addf %65, %67 : vector<128x8xf32>
    %cst_39 = arith.constant 0.000000e+00 : f32
    %69 = vector.broadcast %cst_39 : f32 to vector<128x8xf32>
    %70 = arith.maximumf %68, %69 : vector<128x8xf32>
    %c3_40 = arith.constant 3 : index
    %c0_41 = arith.constant 0 : index
    %c0_42 = arith.constant 0 : index
    %71 = vector.load %arg5[%c3_40, %c0_41, %c0_42] : memref<4x8x8xf32, #tpu.memory_space<vmem>>, vector<1x8x8xf32>
    %72 = vector.shape_cast %71 : vector<1x8x8xf32> to vector<8x8xf32>
    %cst_43 = arith.constant dense<0.000000e+00> : vector<128x8xf32>
    %73 = tpu.matmul %70, %72, %cst_43 {dimension_numbers = #tpu.dot_dimension_numbers<[1], [0], [0], [1], [0, 0, 1, 1], [], []>} : vector<128x8xf32>, vector<8x8xf32>, vector<128x8xf32> -> vector<128x8xf32>
    %74 = arith.addf %59, %73 : vector<128x8xf32>
    %75 = vector.broadcast %13 : vector<1x8xf32> to vector<128x8xf32>
    %76 = arith.addf %74, %75 : vector<128x8xf32>
    %77 = vector.shape_cast %76 : vector<128x8xf32> to vector<1x8x16x8xf32>
    %c0_44 = arith.constant 0 : index
    %c0_45 = arith.constant 0 : index
    %c0_46 = arith.constant 0 : index
    %c0_47 = arith.constant 0 : index
    %78 = vector.load %arg6[%c0_44, %c0_45, %c0_46, %c0_47] : memref<1x8x16x8xf32, #tpu.memory_space<vmem>>, vector<1x8x16x8xf32>
    tpu.vector_store %arg6[%c0_44, %c0_45, %c0_46, %c0_47], %77 {strides = array<i32>} : memref<1x8x16x8xf32, #tpu.memory_space<vmem>>, vector<1x8x16x8xf32>,
    %c0_48 = arith.constant 0 : index
    %c0_49 = arith.constant 0 : index
    %79 = vector.load %arg7[%c0_48, %c0_49] : memref<2x8xf32, #tpu.memory_space<vmem>>, vector<1x8xf32>
    %cst_50 = arith.constant dense<0.000000e+00> : vector<8xf32>
    %80 = vector.multi_reduction <add>, %76, %cst_50 [0] : vector<128x8xf32> to vector<8xf32>
    %81 = vector.shape_cast %80 : vector<8xf32> to vector<1x8xf32>
    %82 = arith.addf %79, %81 : vector<1x8xf32>
    %c0_51 = arith.constant 0 : index
    %c0_52 = arith.constant 0 : index
    %83 = vector.load %arg7[%c0_51, %c0_52] : memref<2x8xf32, #tpu.memory_space<vmem>>, vector<1x8xf32>
    tpu.vector_store %arg7[%c0_51, %c0_52], %82 {strides = array<i32>} : memref<2x8xf32, #tpu.memory_space<vmem>>, vector<1x8xf32>,
    %c1_53 = arith.constant 1 : index
    %c0_54 = arith.constant 0 : index
    %84 = vector.load %arg7[%c1_53, %c0_54] : memref<2x8xf32, #tpu.memory_space<vmem>>, vector<1x8xf32>
    %85 = arith.mulf %76, %76 : vector<128x8xf32>
    %cst_55 = arith.constant dense<0.000000e+00> : vector<8xf32>
    %86 = vector.multi_reduction <add>, %85, %cst_55 [0] : vector<128x8xf32> to vector<8xf32>
    %87 = vector.shape_cast %86 : vector<8xf32> to vector<1x8xf32>
    %88 = arith.addf %84, %87 : vector<1x8xf32>
    %c1_56 = arith.constant 1 : index
    %c0_57 = arith.constant 0 : index
    %89 = vector.load %arg7[%c1_56, %c0_57] : memref<2x8xf32, #tpu.memory_space<vmem>>, vector<1x8xf32>
    tpu.vector_store %arg7[%c1_56, %c0_57], %88 {strides = array<i32>} : memref<2x8xf32, #tpu.memory_space<vmem>>, vector<1x8xf32>,
    return
  }
  func.func @transform_0(%arg0: i32, %arg1: i32) -> (i32, i32, i32, i32, i32) {
    %c0_i32 = arith.constant 0 : i32
    %c0_i32_0 = arith.constant 0 : i32
    %c0_i32_1 = arith.constant 0 : i32
    %c0_i32_2 = arith.constant 0 : i32
    return %c0_i32, %arg0, %arg1, %c0_i32_0, %c0_i32_1 : i32, i32, i32, i32, i32
  }
  func.func @transform_1(%arg0: i32, %arg1: i32) -> (i32, i32) {
    %c0_i32 = arith.constant 0 : i32
    %c0_i32_0 = arith.constant 0 : i32
    %c0_i32_1 = arith.constant 0 : i32
    return %c0_i32, %c0_i32_0 : i32, i32
  }
  func.func @transform_2(%arg0: i32, %arg1: i32) -> (i32, i32) {
    %c0_i32 = arith.constant 0 : i32
    %c0_i32_0 = arith.constant 0 : i32
    %c0_i32_1 = arith.constant 0 : i32
    return %c0_i32, %c0_i32_0 : i32, i32
  }
  func.func @transform_3(%arg0: i32, %arg1: i32) -> (i32, i32, i32) {
    %c0_i32 = arith.constant 0 : i32
    %c0_i32_0 = arith.constant 0 : i32
    %c0_i32_1 = arith.constant 0 : i32
    %c0_i32_2 = arith.constant 0 : i32
    return %c0_i32, %c0_i32_0, %c0_i32_1 : i32, i32, i32
  }
  func.func @transform_4(%arg0: i32, %arg1: i32) -> (i32, i32, i32, i32) {
    %c0_i32 = arith.constant 0 : i32
    %c0_i32_0 = arith.constant 0 : i32
    %c0_i32_1 = arith.constant 0 : i32
    return %arg0, %arg1, %c0_i32, %c0_i32_0 : i32, i32, i32, i32
  }
  func.func @transform_5(%arg0: i32, %arg1: i32) -> (i32, i32) {
    %c0_i32 = arith.constant 0 : i32
    %c0_i32_0 = arith.constant 0 : i32
    %c0_i32_1 = arith.constant 0 : i32
    return %c0_i32, %c0_i32_0 : i32, i32
  }
}

module attributes {stable_mosaic.version = 11 : i64} {
  func.func @_norm_relu_kernel(%arg0: i32, %arg1: i32, %arg2: memref<1x8x16x8xf32, #tpu.memory_space<vmem>>, %arg3: memref<2x8xf32, #tpu.memory_space<vmem>>, %arg4: memref<1x8x16x8xf32, #tpu.memory_space<vmem>>) attributes {dimension_semantics = [#tpu.dimension_semantics<parallel>, #tpu.dimension_semantics<parallel>], iteration_bounds = array<i64: 2, 2>, scalar_prefetch = 0 : i64, scratch_operands = 0 : i64, tpu.core_type = #tpu.core_type<tc>, window_params = [{transform_indices = @transform_0, window_bounds = array<i64: 1, 8, 16, 8>}, {pipeline_mode = #tpu.pipeline_mode<synchronous>, transform_indices = @transform_1, window_bounds = array<i64: 2, 8>}, {transform_indices = @transform_2, window_bounds = array<i64: 1, 8, 16, 8>}]} {
    %c0 = arith.constant 0 : index
    %c0_0 = arith.constant 0 : index
    %0 = vector.load %arg3[%c0, %c0_0] : memref<2x8xf32, #tpu.memory_space<vmem>>, vector<1x8xf32>
    %1 = vector.shape_cast %0 : vector<1x8xf32> to vector<1x1x1x8xf32>
    %c1 = arith.constant 1 : index
    %c0_1 = arith.constant 0 : index
    %2 = vector.load %arg3[%c1, %c0_1] : memref<2x8xf32, #tpu.memory_space<vmem>>, vector<1x8xf32>
    %3 = vector.shape_cast %2 : vector<1x8xf32> to vector<1x1x1x8xf32>
    %c0_2 = arith.constant 0 : index
    %c0_3 = arith.constant 0 : index
    %c0_4 = arith.constant 0 : index
    %c0_5 = arith.constant 0 : index
    %4 = vector.load %arg2[%c0_2, %c0_3, %c0_4, %c0_5] : memref<1x8x16x8xf32, #tpu.memory_space<vmem>>, vector<1x8x16x8xf32>
    %5 = vector.broadcast %1 : vector<1x1x1x8xf32> to vector<1x8x16x8xf32>
    %6 = arith.mulf %4, %5 : vector<1x8x16x8xf32>
    %7 = vector.broadcast %3 : vector<1x1x1x8xf32> to vector<1x8x16x8xf32>
    %8 = arith.addf %6, %7 : vector<1x8x16x8xf32>
    %cst = arith.constant 0.000000e+00 : f32
    %9 = vector.broadcast %cst : f32 to vector<1x8x16x8xf32>
    %10 = arith.maximumf %8, %9 : vector<1x8x16x8xf32>
    %c0_6 = arith.constant 0 : index
    %c0_7 = arith.constant 0 : index
    %c0_8 = arith.constant 0 : index
    %c0_9 = arith.constant 0 : index
    %11 = vector.load %arg4[%c0_6, %c0_7, %c0_8, %c0_9] : memref<1x8x16x8xf32, #tpu.memory_space<vmem>>, vector<1x8x16x8xf32>
    tpu.vector_store %arg4[%c0_6, %c0_7, %c0_8, %c0_9], %10 {strides = array<i32>} : memref<1x8x16x8xf32, #tpu.memory_space<vmem>>, vector<1x8x16x8xf32>,
    return
  }
  func.func @transform_0(%arg0: i32, %arg1: i32) -> (i32, i32, i32, i32) {
    %c0_i32 = arith.constant 0 : i32
    %c0_i32_0 = arith.constant 0 : i32
    %c0_i32_1 = arith.constant 0 : i32
    return %arg0, %arg1, %c0_i32, %c0_i32_0 : i32, i32, i32, i32
  }
  func.func @transform_1(%arg0: i32, %arg1: i32) -> (i32, i32) {
    %c0_i32 = arith.constant 0 : i32
    %c0_i32_0 = arith.constant 0 : i32
    %c0_i32_1 = arith.constant 0 : i32
    return %c0_i32, %c0_i32_0 : i32, i32
  }
  func.func @transform_2(%arg0: i32, %arg1: i32) -> (i32, i32, i32, i32) {
    %c0_i32 = arith.constant 0 : i32
    %c0_i32_0 = arith.constant 0 : i32
    %c0_i32_1 = arith.constant 0 : i32
    return %arg0, %arg1, %c0_i32, %c0_i32_0 : i32, i32, i32, i32
  }
}

</mosaic_0001>

<llo_original>
// kernel: aspp_forward.5
$region0: #{aspp_forward.5}
  #allocation0 [shape = 'u32[]', space=smem, size = 0x4, offset = 0x4, fixed_abs, tag = 'smem constant byte address 0x4 - core index']
  #allocation1 [shape = 'u32[144,128]{1,0:T(1,128)}', space=vmem, size = 0x12000, scoped, tag = 'internal scratch']
  %s0 = inlined_call_operand.vmem [shape: f32[2,16,16,8], index: 0, kind: input, shape index: {}]
  %s1 = inlined_call_operand.vmem [shape: f32[2,8], index: 1, kind: input, shape index: {}]
  %s2 = inlined_call_operand.vmem [shape: f32[2,16,16,8], index: 2, kind: output, shape index: {}]
  %s3 = sld [smem:[#allocation0]]
  $region41: #{aspp_forward.5} parent=0
    _
  %s5 = ssub.s32 1, %s3
  %s6 = scalar_select 0, %s5, %s3
  loop: start=0, step=1, limit=6
  $region2: #{aspp_forward.5} parent=0 // loop_pre_header
    _
  $region3: #{aspp_forward.5} parent=0 // loop_header
    %s8 = sphi 0, %s12
    %p9 = scmp.ge.s32.totalorder %s8, 6
    %s15 = sphi 0, %s27
    %s16 = sphi 0, %s23
    %s17 = sphi 0, %s15
    %s18 = sphi 0, %s16
    %s19 = sphi 0, %s17
    %s20 = sphi 0, %s18
    %s32 = sphi 0, %s34
    %s35 = sphi 0, %s32
    %s36 = sphi 0, %s35
    %s52 = sphi 0, %s36
    %s56 = sphi 0, %s56
    %s58 = sphi 0, %s56
    %s59 = sphi 0, %s58
    %s73 = sphi 0, %s59
    %s81 = sphi 0, %s83
    %s84 = sphi 0, %s81
    %s85 = sphi 0, %s84
    %s101 = sphi 0, %s85
  $region4: #{aspp_forward.5} parent=0 // loop_header_branch
    %11 = sbr.rel (%p9) target = $region8
  $region5: #{aspp_forward.5} parent=0 // loop_body
    %s13 = ssub.s32 %s8, 1
    %s14 = ssub.s32 %s8, 2
    %s21 = sadd.s32 1, %s16
    %p22 = scmp.ge.s32.totalorder %s21, 2
    %s23 = scalar_select %p22, 0, %s21
    %s24 = sadd.s32 1, %s15
    %s25 = scalar_select %p22, %s24, %s15
    %p26 = scmp.ge.s32.totalorder %s25, 2
    %s27 = scalar_select %p26, 0, %s25
    %s28 = ssub.s32 %s15, %s27
    %s29 = ssub.s32 %s16, %s23
    %s30 = sor.u32 %s28, %s29
    %p31 = scmp.eq.s32.totalorder %s30, 0
    %s33 = sadd.s32 %s32, 1
    %s34 = scalar_select %p31, %s32, %s33
    %p37 = pneg %p31
    %p38 = scmp.eq.s32.totalorder %s8, 3
    %p39 = por %p37, %p38
    %p40 = scmp.ne.s32.totalorder %s32, %s35
    %p41 = scmp.eq.s32.totalorder %s8, 0
    %p42 = por %p40, %p41
    %p43 = scmp.ne.s32.totalorder %s32, %s35
    %p44 = scmp.eq.s32.totalorder %s13, 3
    %p45 = por %p43, %p44
    %p46 = scmp.ne.s32.totalorder %s35, %s36
    %p47 = scmp.eq.s32.totalorder %s13, 0
    %p48 = por %p46, %p47
    %p49 = scmp.ne.s32.totalorder %s35, %s36
    %p50 = scmp.eq.s32.totalorder %s14, 3
    %p51 = por %p49, %p50
    %p53 = scmp.ne.s32.totalorder %s36, %s52
    %p54 = scmp.eq.s32.totalorder %s14, 0
    %p55 = por %p53, %p54
    %s57 = sadd.s32 %s56, 1
    %p60 = scmp.eq.s32.totalorder %s8, 3
    %p61 = scmp.ne.s32.totalorder %s56, %s58
    %p62 = scmp.eq.s32.totalorder %s8, 0
    %p63 = por %p61, %p62
    %p64 = scmp.ne.s32.totalorder %s56, %s58
    %p65 = scmp.eq.s32.totalorder %s13, 3
    %p66 = por %p64, %p65
    %p67 = scmp.ne.s32.totalorder %s58, %s59
    %p68 = scmp.eq.s32.totalorder %s13, 0
    %p69 = por %p67, %p68
    %p70 = scmp.ne.s32.totalorder %s58, %s59
    %p71 = scmp.eq.s32.totalorder %s14, 3
    %p72 = por %p70, %p71
    %p74 = scmp.ne.s32.totalorder %s59, %s73
    %p75 = scmp.eq.s32.totalorder %s14, 0
    %p76 = por %p74, %p75
    %s77 = ssub.s32 %s15, %s27
    %s78 = ssub.s32 %s16, %s23
    %s79 = sor.u32 %s77, %s78
    %p80 = scmp.eq.s32.totalorder %s79, 0
    %s82 = sadd.s32 %s81, 1
    %s83 = scalar_select %p80, %s81, %s82
    %p86 = pneg %p80
    %p87 = scmp.eq.s32.totalorder %s8, 3
    %p88 = por %p86, %p87
    %p89 = scmp.ne.s32.totalorder %s81, %s84
    %p90 = scmp.eq.s32.totalorder %s8, 0
    %p91 = por %p89, %p90
    %p92 = scmp.ne.s32.totalorder %s81, %s84
    %p93 = scmp.eq.s32.totalorder %s13, 3
    %p94 = por %p92, %p93
    %p95 = scmp.ne.s32.totalorder %s84, %s85
    %p96 = scmp.eq.s32.totalorder %s13, 0
    %p97 = por %p95, %p96
    %p98 = scmp.ne.s32.totalorder %s84, %s85
    %p99 = scmp.eq.s32.totalorder %s14, 3
    %p100 = por %p98, %p99
    %p102 = scmp.ne.s32.totalorder %s85, %s101
    %p103 = scmp.eq.s32.totalorder %s14, 0
    %p104 = por %p102, %p103
    %p105 = scmp.le.s32.totalorder 1, %s8
    %p106 = scmp.lt.s32.totalorder %s8, 5
    %p107 = pnand %p105, %p106
    %p108 = pneg %p107
    // Predicated region
    $region9: #{aspp_forward.5} parent=5 // pred_check
      _
    $region10: #{aspp_forward.5} parent=5 // pred_check_branch
      %110 = sbr.rel (%p107) target = $region12
    $region11: #{aspp_forward.5} parent=5 // pred_region
      %s111 = ssub.s32 %s8, 1
      // Predicated region
      $region13: #{aspp_forward.5} parent=11 // pred_check
        %p112 = pneg %p69
      $region14: #{aspp_forward.5} parent=11 // pred_check_branch
        %114 = sbr.rel (%p112) target = $region16
      $region15: #{aspp_forward.5} parent=11 // pred_region
        _
      $region16: #{aspp_forward.5} parent=11 // pred_fallthru
        _
    $region12: #{aspp_forward.5} parent=5 // pred_fallthru
      _
    %p115 = scmp.lt.s32.totalorder %s8, 4
    // Predicated region
    $region17: #{aspp_forward.5} parent=5 // pred_check
      %p116 = pneg %p115
    $region18: #{aspp_forward.5} parent=5 // pred_check_branch
      %118 = sbr.rel (%p116) target = $region20
    $region19: #{aspp_forward.5} parent=5 // pred_region
      // Predicated region
      $region21: #{aspp_forward.5} parent=19 // pred_check
        %p119 = pneg %p42
      $region22: #{aspp_forward.5} parent=19 // pred_check_branch
        %121 = sbr.rel (%p119) target = $region24
      $region23: #{aspp_forward.5} parent=19 // pred_region
        %s122 = smul.u32 8, %s16
        %p123 = scmp.lt.s32.totalorder %s15, 1
        %s124 = scalar_select %p123, %s15, 1
        %p125 = scmp.lt.s32.totalorder %s122, 15
        %s126 = scalar_select %p125, %s122, 15
        %s127 = smul.addr %s126, 2
        %s128 = smul.addr %s124, 32
        %s129 = sadd.s32 %s127, %s128
        %s130 = smul.addr %s129, 8
        %s131 = scalar_lea.vmem %s0, %s130
        %s132 = smul.u32 8, %s16
      $region24: #{aspp_forward.5} parent=19 // pred_fallthru
        _
    $region20: #{aspp_forward.5} parent=5 // pred_fallthru
      _
    %p133 = scmp.le.s32.totalorder 1, %s8
    %p134 = scmp.lt.s32.totalorder %s8, 5
    %p135 = pnand %p133, %p134
    %p136 = pneg %p135
    // Predicated region
    $region25: #{aspp_forward.5} parent=5 // pred_check
      _
    $region26: #{aspp_forward.5} parent=5 // pred_check_branch
      %138 = sbr.rel (%p135) target = $region28
    $region27: #{aspp_forward.5} parent=5 // pred_region
      %s139 = ssub.s32 %s8, 1
      %s140 = smul.u32 8, %s18
      %p141 = scmp.lt.s32.totalorder %s17, 1
      %s142 = scalar_select %p141, %s17, 1
      %p143 = scmp.lt.s32.totalorder %s140, 15
      %s144 = scalar_select %p143, %s140, 15
      %s145 = smul.addr %s144, 2
      %s146 = smul.addr %s142, 32
      %s147 = sadd.s32 %s145, %s146
      %s148 = smul.addr %s147, 8
      %s149 = scalar_lea.vmem %s0, %s148
      %p150 = pneg %p48
      %p151 = pneg %p45
      %p152 = pneg %p69
      %p153 = pneg %p66
      %p154 = pneg %p97
      %p155 = pneg %p94
      %s156 = smul.u32 8, %s18
      %p157 = scmp.lt.s32.totalorder %s17, 1
      %s158 = scalar_select %p157, %s17, 1
      %p159 = scmp.lt.s32.totalorder %s156, 15
      %s160 = scalar_select %p159, %s156, 15
      %s161 = smul.addr %s160, 2
      %s162 = smul.addr %s158, 32
      %s163 = sadd.s32 %s161, %s162
      %s164 = smul.addr %s163, 8
      %s165 = scalar_lea.vmem %s2, %s164
      %s166 = smul.u32 8, %s18
      %p167 = scmp.lt.s32.totalorder %s17, 1
      %s168 = scalar_select %p167, %s17, 1
      %p169 = scmp.lt.s32.totalorder %s166, 15
      %s170 = scalar_select %p169, %s166, 15
      %s171 = smul.addr %s170, 2
      %s172 = smul.addr %s168, 32
      %s173 = sadd.s32 %s171, %s172
      %s174 = smul.addr %s173, 8
      %s175 = scalar_lea.vmem %s0, %s174
      %s176 = smul.u32 8, %s18
      %s177 = smul.u32 8, %s18
      %p178 = scmp.lt.s32.totalorder %s17, 1
      %s179 = scalar_select %p178, %s17, 1
      %p180 = scmp.lt.s32.totalorder %s177, 15
      %s181 = scalar_select %p180, %s177, 15
      %s182 = smul.addr %s181, 2
      %s183 = smul.addr %s179, 32
      %s184 = sadd.s32 %s182, %s183
      %s185 = smul.addr %s184, 8
      %s186 = scalar_lea.vmem %s2, %s185
      %s187 = smul.u32 8, %s18
      %v188 = vld [vmem:[%s1] sm:$0x1]
      %v189 = vld [vmem:[%s1 + $0x1] sm:$0x1]
      %v190 = vld [vmem:[%s175] sm:$0xff]
      %v191 = vld [vmem:[%s175 + $0x8] sm:$0xff]
      %v192 = vld [vmem:[%s175 + $0x10] sm:$0xff]
      %v193 = vld [vmem:[%s175 + $0x18] sm:$0xff]
      %v194 = vld [vmem:[%s175 + $0x20] sm:$0xff]
      %v195 = vld [vmem:[%s175 + $0x28] sm:$0xff]
      %v196 = vld [vmem:[%s175 + $0x30] sm:$0xff]
      %v197 = vld [vmem:[%s175 + $0x38] sm:$0xff]
      %v198 = vld [vmem:[%s175 + $0x40] sm:$0xff]
      %v199 = vld [vmem:[%s175 + $0x48] sm:$0xff]
      %v200 = vld [vmem:[%s175 + $0x50] sm:$0xff]
      %v201 = vld [vmem:[%s175 + $0x58] sm:$0xff]
      %v202 = vld [vmem:[%s175 + $0x60] sm:$0xff]
      %v203 = vld [vmem:[%s175 + $0x68] sm:$0xff]
      %v204 = vld [vmem:[%s175 + $0x70] sm:$0xff]
      %v205 = vld [vmem:[%s175 + $0x78] sm:$0xff]
      %v206 = vlaneseq
      %v207 = vshrl.u32 %v206, 7
      %v208 = vsub.s32 0, %v207
      %v209 = vrot.slane %v188, %v208
      %v210 = vmul.f32 %v190, %v209
      %v211 = vmul.f32 %v191, %v209
      %v212 = vmul.f32 %v192, %v209
      %v213 = vmul.f32 %v193, %v209
      %v214 = vmul.f32 %v194, %v209
      %v215 = vmul.f32 %v195, %v209
      %v216 = vmul.f32 %v196, %v209
      %v217 = vmul.f32 %v197, %v209
      %v218 = vmul.f32 %v198, %v209
      %v219 = vmul.f32 %v199, %v209
      %v220 = vmul.f32 %v200, %v209
      %v221 = vmul.f32 %v201, %v209
      %v222 = vmul.f32 %v202, %v209
      %v223 = vmul.f32 %v203, %v209
      %v224 = vmul.f32 %v204, %v209
      %v225 = vmul.f32 %v205, %v209
      %v226 = vlaneseq
      %v227 = vshrl.u32 %v226, 7
      %v228 = vsub.s32 0, %v227
      %v229 = vrot.slane %v189, %v228
      %v230 = vadd.f32 %v210, %v229
      %v231 = vadd.f32 %v211, %v229
      %v232 = vadd.f32 %v212, %v229
      %v233 = vadd.f32 %v213, %v229
      %v234 = vadd.f32 %v214, %v229
      %v235 = vadd.f32 %v215, %v229
      %v236 = vadd.f32 %v216, %v229
      %v237 = vadd.f32 %v217, %v229
      %v238 = vadd.f32 %v218, %v229
      %v239 = vadd.f32 %v219, %v229
      %v240 = vadd.f32 %v220, %v229
      %v241 = vadd.f32 %v221, %v229
      %v242 = vadd.f32 %v222, %v229
      %v243 = vadd.f32 %v223, %v229
      %v244 = vadd.f32 %v224, %v229
      %v245 = vadd.f32 %v225, %v229
      %v246 = vmax.f32 %v230, 0.0
      %v247 = vmax.f32 %v231, 0.0
      %v248 = vmax.f32 %v232, 0.0
      %v249 = vmax.f32 %v233, 0.0
      %v250 = vmax.f32 %v234, 0.0
      %v251 = vmax.f32 %v235, 0.0
      %v252 = vmax.f32 %v236, 0.0
      %v253 = vmax.f32 %v237, 0.0
      %v254 = vmax.f32 %v238, 0.0
      %v255 = vmax.f32 %v239, 0.0
      %v256 = vmax.f32 %v240, 0.0
      %v257 = vmax.f32 %v241, 0.0
      %v258 = vmax.f32 %v242, 0.0
      %v259 = vmax.f32 %v243, 0.0
      %v260 = vmax.f32 %v244, 0.0
      %v261 = vmax.f32 %v245, 0.0
      %vm262 = vcmask 64512
      %263 = vst.msk [vmem:[%s186] sm:$0xff] %vm262, %v246
      %264 = vst.msk [vmem:[%s186 + $0x8] sm:$0xff] %vm262, %v247
      %265 = vst.msk [vmem:[%s186 + $0x10] sm:$0xff] %vm262, %v248
      %266 = vst.msk [vmem:[%s186 + $0x18] sm:$0xff] %vm262, %v249
      %267 = vst.msk [vmem:[%s186 + $0x20] sm:$0xff] %vm262, %v250
      %268 = vst.msk [vmem:[%s186 + $0x28] sm:$0xff] %vm262, %v251
      %269 = vst.msk [vmem:[%s186 + $0x30] sm:$0xff] %vm262, %v252
      %270 = vst.msk [vmem:[%s186 + $0x38] sm:$0xff] %vm262, %v253
      %271 = vst.msk [vmem:[%s186 + $0x40] sm:$0xff] %vm262, %v254
      %272 = vst.msk [vmem:[%s186 + $0x48] sm:$0xff] %vm262, %v255
      %273 = vst.msk [vmem:[%s186 + $0x50] sm:$0xff] %vm262, %v256
      %274 = vst.msk [vmem:[%s186 + $0x58] sm:$0xff] %vm262, %v257
      %275 = vst.msk [vmem:[%s186 + $0x60] sm:$0xff] %vm262, %v258
      %276 = vst.msk [vmem:[%s186 + $0x68] sm:$0xff] %vm262, %v259
      %277 = vst.msk [vmem:[%s186 + $0x70] sm:$0xff] %vm262, %v260
      %278 = vst.msk [vmem:[%s186 + $0x78] sm:$0xff] %vm262, %v261
      %s279 = smul.u32 8, %s18
      %p280 = scmp.lt.s32.totalorder %s17, 1
      %s281 = scalar_select %p280, %s17, 1
      %p282 = scmp.lt.s32.totalorder %s279, 15
      %s283 = scalar_select %p282, %s279, 15
      %s284 = smul.addr %s283, 2
      %s285 = smul.addr %s281, 32
      %s286 = sadd.s32 %s284, %s285
      %s287 = smul.addr %s286, 8
      %s288 = scalar_lea.vmem %s2, %s287
      // Predicated region
      $region29: #{aspp_forward.5} parent=27 // pred_check
        %p289 = pneg %p94
      $region30: #{aspp_forward.5} parent=27 // pred_check_branch
        %291 = sbr.rel (%p289) target = $region32
      $region31: #{aspp_forward.5} parent=27 // pred_region
        %s292 = smul.u32 8, %s18
      $region32: #{aspp_forward.5} parent=27 // pred_fallthru
        _
    $region28: #{aspp_forward.5} parent=5 // pred_fallthru
      _
    %p293 = scmp.le.s32.totalorder 2, %s8
    // Predicated region
    $region33: #{aspp_forward.5} parent=5 // pred_check
      %p294 = pneg %p293
    $region34: #{aspp_forward.5} parent=5 // pred_check_branch
      %296 = sbr.rel (%p294) target = $region36
    $region35: #{aspp_forward.5} parent=5 // pred_region
      %s297 = ssub.s32 %s8, 2
      // Predicated region
      $region37: #{aspp_forward.5} parent=35 // pred_check
        %p298 = pneg %p100
      $region38: #{aspp_forward.5} parent=35 // pred_check_branch
        %300 = sbr.rel (%p298) target = $region40
      $region39: #{aspp_forward.5} parent=35 // pred_region
        %s301 = smul.u32 8, %s20
        %p302 = scmp.lt.s32.totalorder %s19, 1
        %s303 = scalar_select %p302, %s19, 1
        %p304 = scmp.lt.s32.totalorder %s301, 15
        %s305 = scalar_select %p304, %s301, 15
        %s306 = smul.addr %s305, 2
        %s307 = smul.addr %s303, 32
        %s308 = sadd.s32 %s306, %s307
        %s309 = smul.addr %s308, 8
        %s310 = scalar_lea.vmem %s2, %s309
      $region40: #{aspp_forward.5} parent=35 // pred_fallthru
        _
    $region36: #{aspp_forward.5} parent=5 // pred_fallthru
      _
  $region6: #{aspp_forward.5} parent=0 // loop_footer
    %s12 = sadd.s32 1, %s8
  $region7: #{aspp_forward.5} parent=0 // loop_footer_branch
    %7 = sbr.rel target = $region3
  $region8: #{aspp_forward.5} parent=0 // loop_exit
    _

// kernel: aspp_forward.4
$region0: #{aspp_forward.4}
  #allocation0 [shape = 'u32[]', space=smem, size = 0x4, offset = 0x4, fixed_abs, tag = 'smem constant byte address 0x4 - core index']
  #allocation1 [shape = 'u32[144,128]{1,0:T(1,128)}', space=vmem, size = 0x12000, scoped, tag = 'internal scratch']
  %s0 = inlined_call_operand.vmem [shape: f32[4,2,16,16,8], index: 0, kind: input, shape index: {}]
  %s1 = inlined_call_operand.vmem [shape: f32[8,8], index: 1, kind: input, shape index: {}]
  %s2 = inlined_call_operand.vmem [shape: f32[2,8], index: 2, kind: input, shape index: {}]
  %s3 = inlined_call_operand.vmem [shape: f32[4,8,8], index: 3, kind: input, shape index: {}]
  %s4 = inlined_call_operand.vmem [shape: f32[2,16,16,8], index: 4, kind: output, shape index: {0}]
  %s5 = inlined_call_operand.vmem [shape: f32[2,8], index: 5, kind: output, shape index: {1}]
  %6 = xla_tuple %s4, %s5
  %s7 = sld [smem:[#allocation0]]
  $region99: #{aspp_forward.4} parent=0
    _
  %s9 = ssub.s32 1, %s7
  %s10 = scalar_select 0, %s9, %s7
  $region1: #{aspp_forward.4} parent=0
    #allocation2 [shape = 'u8[524288]{0}', space=vmem, size = 0x80000, scoped, tag = 'input window, operand 0']
    loop: start=0, step=1, limit=6
    $region2: #{aspp_forward.4} parent=1 // loop_pre_header
      _
    $region3: #{aspp_forward.4} parent=1 // loop_header
      %s12 = sphi 0, %s16
      %p13 = scmp.ge.s32.totalorder %s12, 6
      %s19 = sphi 0, %s31
      %s20 = sphi 0, %s27
      %s21 = sphi 0, %s19
      %s22 = sphi 0, %s20
      %s23 = sphi 0, %s21
      %s24 = sphi 0, %s22
      %s36 = sphi 0, %s38
      %s39 = sphi 0, %s36
      %s40 = sphi 0, %s39
      %s56 = sphi 0, %s40
      %s60 = sphi 0, %s60
      %s62 = sphi 0, %s60
      %s63 = sphi 0, %s62
      %s77 = sphi 0, %s63
      %s81 = sphi 0, %s81
      %s83 = sphi 0, %s81
      %s84 = sphi 0, %s83
      %s98 = sphi 0, %s84
      %s102 = sphi 0, %s102
      %s104 = sphi 0, %s102
      %s105 = sphi 0, %s104
      %s119 = sphi 0, %s105
      %s127 = sphi 0, %s129
      %s130 = sphi 0, %s127
      %s131 = sphi 0, %s130
      %s147 = sphi 0, %s131
      %s151 = sphi 0, %s151
      %s153 = sphi 0, %s151
      %s154 = sphi 0, %s153
      %s168 = sphi 0, %s154
    $region4: #{aspp_forward.4} parent=1 // loop_header_branch
      %15 = sbr.rel (%p13) target = $region8
    $region5: #{aspp_forward.4} parent=1 // loop_body
      %s17 = ssub.s32 %s12, 1
      %s18 = ssub.s32 %s12, 2
      %s25 = sadd.s32 1, %s20
      %p26 = scmp.ge.s32.totalorder %s25, 2
      %s27 = scalar_select %p26, 0, %s25
      %s28 = sadd.s32 1, %s19
      %s29 = scalar_select %p26, %s28, %s19
      %p30 = scmp.ge.s32.totalorder %s29, 2
      %s31 = scalar_select %p30, 0, %s29
      %s32 = ssub.s32 %s19, %s31
      %s33 = ssub.s32 %s20, %s27
      %s34 = sor.u32 %s32, %s33
      %p35 = scmp.eq.s32.totalorder %s34, 0
      %s37 = sadd.s32 %s36, 1
      %s38 = scalar_select %p35, %s36, %s37
      %p41 = pneg %p35
      %p42 = scmp.eq.s32.totalorder %s12, 3
      %p43 = por %p41, %p42
      %p44 = scmp.ne.s32.totalorder %s36, %s39
      %p45 = scmp.eq.s32.totalorder %s12, 0
      %p46 = por %p44, %p45
      %p47 = scmp.ne.s32.totalorder %s36, %s39
      %p48 = scmp.eq.s32.totalorder %s17, 3
      %p49 = por %p47, %p48
      %p50 = scmp.ne.s32.totalorder %s39, %s40
      %p51 = scmp.eq.s32.totalorder %s17, 0
      %p52 = por %p50, %p51
      %p53 = scmp.ne.s32.totalorder %s39, %s40
      %p54 = scmp.eq.s32.totalorder %s18, 3
      %p55 = por %p53, %p54
      %p57 = scmp.ne.s32.totalorder %s40, %s56
      %p58 = scmp.eq.s32.totalorder %s18, 0
      %p59 = por %p57, %p58
      %s61 = sadd.s32 %s60, 1
      %p64 = scmp.eq.s32.totalorder %s12, 3
      %p65 = scmp.ne.s32.totalorder %s60, %s62
      %p66 = scmp.eq.s32.totalorder %s12, 0
      %p67 = por %p65, %p66
      %p68 = scmp.ne.s32.totalorder %s60, %s62
      %p69 = scmp.eq.s32.totalorder %s17, 3
      %p70 = por %p68, %p69
      %p71 = scmp.ne.s32.totalorder %s62, %s63
      %p72 = scmp.eq.s32.totalorder %s17, 0
      %p73 = por %p71, %p72
      %p74 = scmp.ne.s32.totalorder %s62, %s63
      %p75 = scmp.eq.s32.totalorder %s18, 3
      %p76 = por %p74, %p75
      %p78 = scmp.ne.s32.totalorder %s63, %s77
      %p79 = scmp.eq.s32.totalorder %s18, 0
      %p80 = por %p78, %p79
      %s82 = sadd.s32 %s81, 1
      %p85 = scmp.eq.s32.totalorder %s12, 3
      %p86 = scmp.ne.s32.totalorder %s81, %s83
      %p87 = scmp.eq.s32.totalorder %s12, 0
      %p88 = por %p86, %p87
      %p89 = scmp.ne.s32.totalorder %s81, %s83
      %p90 = scmp.eq.s32.totalorder %s17, 3
      %p91 = por %p89, %p90
      %p92 = scmp.ne.s32.totalorder %s83, %s84
      %p93 = scmp.eq.s32.totalorder %s17, 0
      %p94 = por %p92, %p93
      %p95 = scmp.ne.s32.totalorder %s83, %s84
      %p96 = scmp.eq.s32.totalorder %s18, 3
      %p97 = por %p95, %p96
      %p99 = scmp.ne.s32.totalorder %s84, %s98
      %p100 = scmp.eq.s32.totalorder %s18, 0
      %p101 = por %p99, %p100
      %s103 = sadd.s32 %s102, 1
      %p106 = scmp.eq.s32.totalorder %s12, 3
      %p107 = scmp.ne.s32.totalorder %s102, %s104
      %p108 = scmp.eq.s32.totalorder %s12, 0
      %p109 = por %p107, %p108
      %p110 = scmp.ne.s32.totalorder %s102, %s104
      %p111 = scmp.eq.s32.totalorder %s17, 3
      %p112 = por %p110, %p111
      %p113 = scmp.ne.s32.totalorder %s104, %s105
      %p114 = scmp.eq.s32.totalorder %s17, 0
      %p115 = por %p113, %p114
      %p116 = scmp.ne.s32.totalorder %s104, %s105
      %p117 = scmp.eq.s32.totalorder %s18, 3
      %p118 = por %p116, %p117
      %p120 = scmp.ne.s32.totalorder %s105, %s119
      %p121 = scmp.eq.s32.totalorder %s18, 0
      %p122 = por %p120, %p121
      %s123 = ssub.s32 %s19, %s31
      %s124 = ssub.s32 %s20, %s27
      %s125 = sor.u32 %s123, %s124
      %p126 = scmp.eq.s32.totalorder %s125, 0
      %s128 = sadd.s32 %s127, 1
      %s129 = scalar_select %p126, %s127, %s128
      %p132 = pneg %p126
      %p133 = scmp.eq.s32.totalorder %s12, 3
      %p134 = por %p132, %p133
      %p135 = scmp.ne.s32.totalorder %s127, %s130
      %p136 = scmp.eq.s32.totalorder %s12, 0
      %p137 = por %p135, %p136
      %p138 = scmp.ne.s32.totalorder %s127, %s130
      %p139 = scmp.eq.s32.totalorder %s17, 3
      %p140 = por %p138, %p139
      %p141 = scmp.ne.s32.totalorder %s130, %s131
      %p142 = scmp.eq.s32.totalorder %s17, 0
      %p143 = por %p141, %p142
      %p144 = scmp.ne.s32.totalorder %s130, %s131
      %p145 = scmp.eq.s32.totalorder %s18, 3
      %p146 = por %p144, %p145
      %p148 = scmp.ne.s32.totalorder %s131, %s147
      %p149 = scmp.eq.s32.totalorder %s18, 0
      %p150 = por %p148, %p149
      %s152 = sadd.s32 %s151, 1
      %p155 = scmp.eq.s32.totalorder %s12, 3
      %p156 = scmp.ne.s32.totalorder %s151, %s153
      %p157 = scmp.eq.s32.totalorder %s12, 0
      %p158 = por %p156, %p157
      %p159 = scmp.ne.s32.totalorder %s151, %s153
      %p160 = scmp.eq.s32.totalorder %s17, 3
      %p161 = por %p159, %p160
      %p162 = scmp.ne.s32.totalorder %s153, %s154
      %p163 = scmp.eq.s32.totalorder %s17, 0
      %p164 = por %p162, %p163
      %p165 = scmp.ne.s32.totalorder %s153, %s154
      %p166 = scmp.eq.s32.totalorder %s18, 3
      %p167 = por %p165, %p166
      %p169 = scmp.ne.s32.totalorder %s154, %s168
      %p170 = scmp.eq.s32.totalorder %s18, 0
      %p171 = por %p169, %p170
      %p172 = scmp.le.s32.totalorder 1, %s12
      %p173 = scmp.lt.s32.totalorder %s12, 5
      %p174 = pnand %p172, %p173
      %p175 = pneg %p174
      // Predicated region
      $region9: #{aspp_forward.4} parent=5 // pred_check
        _
      $region10: #{aspp_forward.4} parent=5 // pred_check_branch
        %177 = sbr.rel (%p174) target = $region12
      $region11: #{aspp_forward.4} parent=5 // pred_region
        %s178 = ssub.s32 %s12, 1
        // Predicated region
        $region13: #{aspp_forward.4} parent=11 // pred_check
          %p179 = pneg %p73
        $region14: #{aspp_forward.4} parent=11 // pred_check_branch
          %181 = sbr.rel (%p179) target = $region16
        $region15: #{aspp_forward.4} parent=11 // pred_region
          _
        $region16: #{aspp_forward.4} parent=11 // pred_fallthru
          _
        // Predicated region
        $region17: #{aspp_forward.4} parent=11 // pred_check
          %p182 = pneg %p94
        $region18: #{aspp_forward.4} parent=11 // pred_check_branch
          %184 = sbr.rel (%p182) target = $region20
        $region19: #{aspp_forward.4} parent=11 // pred_region
          _
        $region20: #{aspp_forward.4} parent=11 // pred_fallthru
          _
        // Predicated region
        $region21: #{aspp_forward.4} parent=11 // pred_check
          %p185 = pneg %p115
        $region22: #{aspp_forward.4} parent=11 // pred_check_branch
          %187 = sbr.rel (%p185) target = $region24
        $region23: #{aspp_forward.4} parent=11 // pred_region
          _
        $region24: #{aspp_forward.4} parent=11 // pred_fallthru
          _
      $region12: #{aspp_forward.4} parent=5 // pred_fallthru
        _
      %p188 = scmp.lt.s32.totalorder %s12, 4
      // Predicated region
      $region25: #{aspp_forward.4} parent=5 // pred_check
        %p189 = pneg %p188
      $region26: #{aspp_forward.4} parent=5 // pred_check_branch
        %191 = sbr.rel (%p189) target = $region28
      $region27: #{aspp_forward.4} parent=5 // pred_region
        // Predicated region
        $region29: #{aspp_forward.4} parent=27 // pred_check
          %p192 = pneg %p46
        $region30: #{aspp_forward.4} parent=27 // pred_check_branch
          %194 = sbr.rel (%p192) target = $region32
        $region31: #{aspp_forward.4} parent=27 // pred_region
          %s195 = sand.u32 %s36, 1
          %s196 = sand.u32 %s36, 1
          %s197 = smul.addr %s196, 512
          %s198 = scalar_lea.vmem [#allocation2], %s197
          %s199 = smul.u32 8, %s20
          %s200 = smul.addr %s199, 2
          %s201 = smul.addr %s19, 32
          %s202 = sadd.s32 %s200, %s201
          %s203 = smul.addr %s202, 8
          %s204 = scalar_lea.vmem %s0, %s203
          // Predicated region
          $region33: #{aspp_forward.4} parent=31 // pred_check
            _
          $region34: #{aspp_forward.4} parent=31 // pred_check_branch
            %206 = sbr.rel (0) target = $region36
          $region35: #{aspp_forward.4} parent=31 // pred_region
            // Predicated region
            $region37: #{aspp_forward.4} parent=35 // pred_check
              _
            $region38: #{aspp_forward.4} parent=35 // pred_check_branch
              %208 = sbr.rel (0) target = $region40
            $region39: #{aspp_forward.4} parent=35 // pred_region
              // Predicated region
              $region52: #{aspp_forward.4} parent=39 // pred_check
                _
              $region53: #{aspp_forward.4} parent=39 // pred_check_branch
                %349 = sbr.rel (0) target = $region55
              $region54: #{aspp_forward.4} parent=39 // pred_region
                loop: start=0, step=1, limit=1
                $region56: #{aspp_forward.4} parent=54 // loop_pre_header
                  _
                $region57: #{aspp_forward.4} parent=54 // loop_header
                  %s351 = sphi 0, %s355
                  %p352 = scmp.ge.s32.totalorder %s351, 1
                  %s356 = sphi %s204, %s204
                  %s357 = sphi %s198, %s198
                $region58: #{aspp_forward.4} parent=54 // loop_header_branch
                  %354 = sbr.rel (%p352) target = $region62
                $region59: #{aspp_forward.4} parent=54 // loop_body
                  %v358 = vld [vmem:[%s356] sm:$0xff]
                  %359 = vst [vmem:[%s357] sm:$0xff] %v358
                  %v360 = vld [vmem:[%s356 + $0x8] sm:$0xff]
                  %361 = vst [vmem:[%s357 + $0x8] sm:$0xff] %v360
                  %v362 = vld [vmem:[%s356 + $0x10] sm:$0xff]
                  %363 = vst [vmem:[%s357 + $0x10] sm:$0xff] %v362
                  %v364 = vld [vmem:[%s356 + $0x18] sm:$0xff]
                  %365 = vst [vmem:[%s357 + $0x18] sm:$0xff] %v364
                  %v366 = vld [vmem:[%s356 + $0x20] sm:$0xff]
                  %367 = vst [vmem:[%s357 + $0x20] sm:$0xff] %v366
                  %v368 = vld [vmem:[%s356 + $0x28] sm:$0xff]
                  %369 = vst [vmem:[%s357 + $0x28] sm:$0xff] %v368
                  %v370 = vld [vmem:[%s356 + $0x30] sm:$0xff]
                  %371 = vst [vmem:[%s357 + $0x30] sm:$0xff] %v370
                  %v372 = vld [vmem:[%s356 + $0x38] sm:$0xff]
                  %373 = vst [vmem:[%s357 + $0x38] sm:$0xff] %v372
                  %v374 = vld [vmem:[%s356 + $0x40] sm:$0xff]
                  %375 = vst [vmem:[%s357 + $0x40] sm:$0xff] %v374
                  %v376 = vld [vmem:[%s356 + $0x48] sm:$0xff]
                  %377 = vst [vmem:[%s357 + $0x48] sm:$0xff] %v376
                  %v378 = vld [vmem:[%s356 + $0x50] sm:$0xff]
                  %379 = vst [vmem:[%s357 + $0x50] sm:$0xff] %v378
                  %v380 = vld [vmem:[%s356 + $0x58] sm:$0xff]
                  %381 = vst [vmem:[%s357 + $0x58] sm:$0xff] %v380
                  %v382 = vld [vmem:[%s356 + $0x60] sm:$0xff]
                  %383 = vst [vmem:[%s357 + $0x60] sm:$0xff] %v382
                  %v384 = vld [vmem:[%s356 + $0x68] sm:$0xff]
                  %385 = vst [vmem:[%s357 + $0x68] sm:$0xff] %v384
                  %v386 = vld [vmem:[%s356 + $0x70] sm:$0xff]
                  %387 = vst [vmem:[%s357 + $0x70] sm:$0xff] %v386
                  %v388 = vld [vmem:[%s356 + $0x78] sm:$0xff]
                  %389 = vst [vmem:[%s357 + $0x78] sm:$0xff] %v388
                  %v390 = vld [vmem:[%s356 + $0x200] sm:$0xff]
                  %391 = vst [vmem:[%s357 + $0x80] sm:$0xff] %v390
                  %v392 = vld [vmem:[%s356 + $0x208] sm:$0xff]
                  %393 = vst [vmem:[%s357 + $0x88] sm:$0xff] %v392
                  %v394 = vld [vmem:[%s356 + $0x210] sm:$0xff]
                  %395 = vst [vmem:[%s357 + $0x90] sm:$0xff] %v394
                  %v396 = vld [vmem:[%s356 + $0x218] sm:$0xff]
                  %397 = vst [vmem:[%s357 + $0x98] sm:$0xff] %v396
                  %v398 = vld [vmem:[%s356 + $0x220] sm:$0xff]
                  %399 = vst [vmem:[%s357 + $0xa0] sm:$0xff] %v398
                  %v400 = vld [vmem:[%s356 + $0x228] sm:$0xff]
                  %401 = vst [vmem:[%s357 + $0xa8] sm:$0xff] %v400
                  %v402 = vld [vmem:[%s356 + $0x230] sm:$0xff]
                  %403 = vst [vmem:[%s357 + $0xb0] sm:$0xff] %v402
                  %v404 = vld [vmem:[%s356 + $0x238] sm:$0xff]
                  %405 = vst [vmem:[%s357 + $0xb8] sm:$0xff] %v404
                  %v406 = vld [vmem:[%s356 + $0x240] sm:$0xff]
                  %407 = vst [vmem:[%s357 + $0xc0] sm:$0xff] %v406
                  %v408 = vld [vmem:[%s356 + $0x248] sm:$0xff]
                  %409 = vst [vmem:[%s357 + $0xc8] sm:$0xff] %v408
                  %v410 = vld [vmem:[%s356 + $0x250] sm:$0xff]
                  %411 = vst [vmem:[%s357 + $0xd0] sm:$0xff] %v410
                  %v412 = vld [vmem:[%s356 + $0x258] sm:$0xff]
                  %413 = vst [vmem:[%s357 + $0xd8] sm:$0xff] %v412
                  %v414 = vld [vmem:[%s356 + $0x260] sm:$0xff]
                  %415 = vst [vmem:[%s357 + $0xe0] sm:$0xff] %v414
                  %v416 = vld [vmem:[%s356 + $0x268] sm:$0xff]
                  %417 = vst [vmem:[%s357 + $0xe8] sm:$0xff] %v416
                  %v418 = vld [vmem:[%s356 + $0x270] sm:$0xff]
                  %419 = vst [vmem:[%s357 + $0xf0] sm:$0xff] %v418
                  %v420 = vld [vmem:[%s356 + $0x278] sm:$0xff]
                  %421 = vst [vmem:[%s357 + $0xf8] sm:$0xff] %v420
                  %v422 = vld [vmem:[%s356 + $0x400] sm:$0xff]
                  %423 = vst [vmem:[%s357 + $0x100] sm:$0xff] %v422
                  %v424 = vld [vmem:[%s356 + $0x408] sm:$0xff]
                  %425 = vst [vmem:[%s357 + $0x108] sm:$0xff] %v424
                  %v426 = vld [vmem:[%s356 + $0x410] sm:$0xff]
                  %427 = vst [vmem:[%s357 + $0x110] sm:$0xff] %v426
                  %v428 = vld [vmem:[%s356 + $0x418] sm:$0xff]
                  %429 = vst [vmem:[%s357 + $0x118] sm:$0xff] %v428
                  %v430 = vld [vmem:[%s356 + $0x420] sm:$0xff]
                  %431 = vst [vmem:[%s357 + $0x120] sm:$0xff] %v430
                  %v432 = vld [vmem:[%s356 + $0x428] sm:$0xff]
                  %433 = vst [vmem:[%s357 + $0x128] sm:$0xff] %v432
                  %v434 = vld [vmem:[%s356 + $0x430] sm:$0xff]
                  %435 = vst [vmem:[%s357 + $0x130] sm:$0xff] %v434
                  %v436 = vld [vmem:[%s356 + $0x438] sm:$0xff]
                  %437 = vst [vmem:[%s357 + $0x138] sm:$0xff] %v436
                  %v438 = vld [vmem:[%s356 + $0x440] sm:$0xff]
                  %439 = vst [vmem:[%s357 + $0x140] sm:$0xff] %v438
                  %v440 = vld [vmem:[%s356 + $0x448] sm:$0xff]
                  %441 = vst [vmem:[%s357 + $0x148] sm:$0xff] %v440
                  %v442 = vld [vmem:[%s356 + $0x450] sm:$0xff]
                  %443 = vst [vmem:[%s357 + $0x150] sm:$0xff] %v442
                  %v444 = vld [vmem:[%s356 + $0x458] sm:$0xff]
                  %445 = vst [vmem:[%s357 + $0x158] sm:$0xff] %v444
                  %v446 = vld [vmem:[%s356 + $0x460] sm:$0xff]
                  %447 = vst [vmem:[%s357 + $0x160] sm:$0xff] %v446
                  %v448 = vld [vmem:[%s356 + $0x468] sm:$0xff]
                  %449 = vst [vmem:[%s357 + $0x168] sm:$0xff] %v448
                  %v450 = vld [vmem:[%s356 + $0x470] sm:$0xff]
                  %451 = vst [vmem:[%s357 + $0x170] sm:$0xff] %v450
                  %v452 = vld [vmem:[%s356 + $0x478] sm:$0xff]
                  %453 = vst [vmem:[%s357 + $0x178] sm:$0xff] %v452
                  %v454 = vld [vmem:[%s356 + $0x600] sm:$0xff]
                  %455 = vst [vmem:[%s357 + $0x180] sm:$0xff] %v454
                  %v456 = vld [vmem:[%s356 + $0x608] sm:$0xff]
                  %457 = vst [vmem:[%s357 + $0x188] sm:$0xff] %v456
                  %v458 = vld [vmem:[%s356 + $0x610] sm:$0xff]
                  %459 = vst [vmem:[%s357 + $0x190] sm:$0xff] %v458
                  %v460 = vld [vmem:[%s356 + $0x618] sm:$0xff]
                  %461 = vst [vmem:[%s357 + $0x198] sm:$0xff] %v460
                  %v462 = vld [vmem:[%s356 + $0x620] sm:$0xff]
                  %463 = vst [vmem:[%s357 + $0x1a0] sm:$0xff] %v462
                  %v464 = vld [vmem:[%s356 + $0x628] sm:$0xff]
                  %465 = vst [vmem:[%s357 + $0x1a8] sm:$0xff] %v464
                  %v466 = vld [vmem:[%s356 + $0x630] sm:$0xff]
                  %467 = vst [vmem:[%s357 + $0x1b0] sm:$0xff] %v466
                  %v468 = vld [vmem:[%s356 + $0x638] sm:$0xff]
                  %469 = vst [vmem:[%s357 + $0x1b8] sm:$0xff] %v468
                  %v470 = vld [vmem:[%s356 + $0x640] sm:$0xff]
                  %471 = vst [vmem:[%s357 + $0x1c0] sm:$0xff] %v470
                  %v472 = vld [vmem:[%s356 + $0x648] sm:$0xff]
                  %473 = vst [vmem:[%s357 + $0x1c8] sm:$0xff] %v472
                  %v474 = vld [vmem:[%s356 + $0x650] sm:$0xff]
                  %475 = vst [vmem:[%s357 + $0x1d0] sm:$0xff] %v474
                  %v476 = vld [vmem:[%s356 + $0x658] sm:$0xff]
                  %477 = vst [vmem:[%s357 + $0x1d8] sm:$0xff] %v476
                  %v478 = vld [vmem:[%s356 + $0x660] sm:$0xff]
                  %479 = vst [vmem:[%s357 + $0x1e0] sm:$0xff] %v478
                  %v480 = vld [vmem:[%s356 + $0x668] sm:$0xff]
                  %481 = vst [vmem:[%s357 + $0x1e8] sm:$0xff] %v480
                  %v482 = vld [vmem:[%s356 + $0x670] sm:$0xff]
                  %483 = vst [vmem:[%s357 + $0x1f0] sm:$0xff] %v482
                  %v484 = vld [vmem:[%s356 + $0x678] sm:$0xff]
                  %485 = vst [vmem:[%s357 + $0x1f8] sm:$0xff] %v484
                $region60: #{aspp_forward.4} parent=54 // loop_footer
                  %s355 = sadd.s32 1, %s351
                $region61: #{aspp_forward.4} parent=54 // loop_footer_branch
                  %350 = sbr.rel target = $region57
                $region62: #{aspp_forward.4} parent=54 // loop_exit
                  _
              $region55: #{aspp_forward.4} parent=39 // pred_fallthru
                _
              // Predicated region
              $region63: #{aspp_forward.4} parent=39 // pred_check
                _
              $region64: #{aspp_forward.4} parent=39 // pred_check_branch
                %487 = sbr.rel target = $region66
              $region65: #{aspp_forward.4} parent=39 // pred_region
                _
              $region66: #{aspp_forward.4} parent=39 // pred_fallthru
                _
            $region40: #{aspp_forward.4} parent=35 // pred_fallthru
              _
            // Predicated region
            $region41: #{aspp_forward.4} parent=35 // pred_check
              _
            $region42: #{aspp_forward.4} parent=35 // pred_check_branch
              %210 = sbr.rel target = $region44
            $region43: #{aspp_forward.4} parent=35 // pred_region
              loop: start=0, step=1, limit=1
              $region45: #{aspp_forward.4} parent=43 // loop_pre_header
                _
              $region46: #{aspp_forward.4} parent=43 // loop_header
                %s213 = sphi 0, %s217
                %p214 = scmp.ge.s32.totalorder %s213, 1
                %s218 = sphi %s204, %s204
                %s219 = sphi %s198, %s198
              $region47: #{aspp_forward.4} parent=43 // loop_header_branch
                %216 = sbr.rel (%p214) target = $region51
              $region48: #{aspp_forward.4} parent=43 // loop_body
                %v220 = vld [vmem:[%s218] sm:$0xff]
                %221 = vst [vmem:[%s219] sm:$0xff] %v220
                %v222 = vld [vmem:[%s218 + $0x8] sm:$0xff]
                %223 = vst [vmem:[%s219 + $0x8] sm:$0xff] %v222
                %v224 = vld [vmem:[%s218 + $0x10] sm:$0xff]
                %225 = vst [vmem:[%s219 + $0x10] sm:$0xff] %v224
                %v226 = vld [vmem:[%s218 + $0x18] sm:$0xff]
                %227 = vst [vmem:[%s219 + $0x18] sm:$0xff] %v226
                %v228 = vld [vmem:[%s218 + $0x20] sm:$0xff]
                %229 = vst [vmem:[%s219 + $0x20] sm:$0xff] %v228
                %v230 = vld [vmem:[%s218 + $0x28] sm:$0xff]
                %231 = vst [vmem:[%s219 + $0x28] sm:$0xff] %v230
                %v232 = vld [vmem:[%s218 + $0x30] sm:$0xff]
                %233 = vst [vmem:[%s219 + $0x30] sm:$0xff] %v232
                %v234 = vld [vmem:[%s218 + $0x38] sm:$0xff]
                %235 = vst [vmem:[%s219 + $0x38] sm:$0xff] %v234
                %v236 = vld [vmem:[%s218 + $0x40] sm:$0xff]
                %237 = vst [vmem:[%s219 + $0x40] sm:$0xff] %v236
                %v238 = vld [vmem:[%s218 + $0x48] sm:$0xff]
                %239 = vst [vmem:[%s219 + $0x48] sm:$0xff] %v238
                %v240 = vld [vmem:[%s218 + $0x50] sm:$0xff]
                %241 = vst [vmem:[%s219 + $0x50] sm:$0xff] %v240
                %v242 = vld [vmem:[%s218 + $0x58] sm:$0xff]
                %243 = vst [vmem:[%s219 + $0x58] sm:$0xff] %v242
                %v244 = vld [vmem:[%s218 + $0x60] sm:$0xff]
                %245 = vst [vmem:[%s219 + $0x60] sm:$0xff] %v244
                %v246 = vld [vmem:[%s218 + $0x68] sm:$0xff]
                %247 = vst [vmem:[%s219 + $0x68] sm:$0xff] %v246
                %v248 = vld [vmem:[%s218 + $0x70] sm:$0xff]
                %249 = vst [vmem:[%s219 + $0x70] sm:$0xff] %v248
                %v250 = vld [vmem:[%s218 + $0x78] sm:$0xff]
                %251 = vst [vmem:[%s219 + $0x78] sm:$0xff] %v250
                %v252 = vld [vmem:[%s218 + $0x200] sm:$0xff]
                %253 = vst [vmem:[%s219 + $0x80] sm:$0xff] %v252
                %v254 = vld [vmem:[%s218 + $0x208] sm:$0xff]
                %255 = vst [vmem:[%s219 + $0x88] sm:$0xff] %v254
                %v256 = vld [vmem:[%s218 + $0x210] sm:$0xff]
                %257 = vst [vmem:[%s219 + $0x90] sm:$0xff] %v256
                %v258 = vld [vmem:[%s218 + $0x218] sm:$0xff]
                %259 = vst [vmem:[%s219 + $0x98] sm:$0xff] %v258
                %v260 = vld [vmem:[%s218 + $0x220] sm:$0xff]
                %261 = vst [vmem:[%s219 + $0xa0] sm:$0xff] %v260
                %v262 = vld [vmem:[%s218 + $0x228] sm:$0xff]
                %263 = vst [vmem:[%s219 + $0xa8] sm:$0xff] %v262
                %v264 = vld [vmem:[%s218 + $0x230] sm:$0xff]
                %265 = vst [vmem:[%s219 + $0xb0] sm:$0xff] %v264
                %v266 = vld [vmem:[%s218 + $0x238] sm:$0xff]
                %267 = vst [vmem:[%s219 + $0xb8] sm:$0xff] %v266
                %v268 = vld [vmem:[%s218 + $0x240] sm:$0xff]
                %269 = vst [vmem:[%s219 + $0xc0] sm:$0xff] %v268
                %v270 = vld [vmem:[%s218 + $0x248] sm:$0xff]
                %271 = vst [vmem:[%s219 + $0xc8] sm:$0xff] %v270
                %v272 = vld [vmem:[%s218 + $0x250] sm:$0xff]
                %273 = vst [vmem:[%s219 + $0xd0] sm:$0xff] %v272
                %v274 = vld [vmem:[%s218 + $0x258] sm:$0xff]
                %275 = vst [vmem:[%s219 + $0xd8] sm:$0xff] %v274
                %v276 = vld [vmem:[%s218 + $0x260] sm:$0xff]
                %277 = vst [vmem:[%s219 + $0xe0] sm:$0xff] %v276
                %v278 = vld [vmem:[%s218 + $0x268] sm:$0xff]
                %279 = vst [vmem:[%s219 + $0xe8] sm:$0xff] %v278
                %v280 = vld [vmem:[%s218 + $0x270] sm:$0xff]
                %281 = vst [vmem:[%s219 + $0xf0] sm:$0xff] %v280
                %v282 = vld [vmem:[%s218 + $0x278] sm:$0xff]
                %283 = vst [vmem:[%s219 + $0xf8] sm:$0xff] %v282
                %v284 = vld [vmem:[%s218 + $0x400] sm:$0xff]
                %285 = vst [vmem:[%s219 + $0x100] sm:$0xff] %v284
                %v286 = vld [vmem:[%s218 + $0x408] sm:$0xff]
                %287 = vst [vmem:[%s219 + $0x108] sm:$0xff] %v286
                %v288 = vld [vmem:[%s218 + $0x410] sm:$0xff]
                %289 = vst [vmem:[%s219 + $0x110] sm:$0xff] %v288
                %v290 = vld [vmem:[%s218 + $0x418] sm:$0xff]
                %291 = vst [vmem:[%s219 + $0x118] sm:$0xff] %v290
                %v292 = vld [vmem:[%s218 + $0x420] sm:$0xff]
                %293 = vst [vmem:[%s219 + $0x120] sm:$0xff] %v292
                %v294 = vld [vmem:[%s218 + $0x428] sm:$0xff]
                %295 = vst [vmem:[%s219 + $0x128] sm:$0xff] %v294
                %v296 = vld [vmem:[%s218 + $0x430] sm:$0xff]
                %297 = vst [vmem:[%s219 + $0x130] sm:$0xff] %v296
                %v298 = vld [vmem:[%s218 + $0x438] sm:$0xff]
                %299 = vst [vmem:[%s219 + $0x138] sm:$0xff] %v298
                %v300 = vld [vmem:[%s218 + $0x440] sm:$0xff]
                %301 = vst [vmem:[%s219 + $0x140] sm:$0xff] %v300
                %v302 = vld [vmem:[%s218 + $0x448] sm:$0xff]
                %303 = vst [vmem:[%s219 + $0x148] sm:$0xff] %v302
                %v304 = vld [vmem:[%s218 + $0x450] sm:$0xff]
                %305 = vst [vmem:[%s219 + $0x150] sm:$0xff] %v304
                %v306 = vld [vmem:[%s218 + $0x458] sm:$0xff]
                %307 = vst [vmem:[%s219 + $0x158] sm:$0xff] %v306
                %v308 = vld [vmem:[%s218 + $0x460] sm:$0xff]
                %309 = vst [vmem:[%s219 + $0x160] sm:$0xff] %v308
                %v310 = vld [vmem:[%s218 + $0x468] sm:$0xff]
                %311 = vst [vmem:[%s219 + $0x168] sm:$0xff] %v310
                %v312 = vld [vmem:[%s218 + $0x470] sm:$0xff]
                %313 = vst [vmem:[%s219 + $0x170] sm:$0xff] %v312
                %v314 = vld [vmem:[%s218 + $0x478] sm:$0xff]
                %315 = vst [vmem:[%s219 + $0x178] sm:$0xff] %v314
                %v316 = vld [vmem:[%s218 + $0x600] sm:$0xff]
                %317 = vst [vmem:[%s219 + $0x180] sm:$0xff] %v316
                %v318 = vld [vmem:[%s218 + $0x608] sm:$0xff]
                %319 = vst [vmem:[%s219 + $0x188] sm:$0xff] %v318
                %v320 = vld [vmem:[%s218 + $0x610] sm:$0xff]
                %321 = vst [vmem:[%s219 + $0x190] sm:$0xff] %v320
                %v322 = vld [vmem:[%s218 + $0x618] sm:$0xff]
                %323 = vst [vmem:[%s219 + $0x198] sm:$0xff] %v322
                %v324 = vld [vmem:[%s218 + $0x620] sm:$0xff]
                %325 = vst [vmem:[%s219 + $0x1a0] sm:$0xff] %v324
                %v326 = vld [vmem:[%s218 + $0x628] sm:$0xff]
                %327 = vst [vmem:[%s219 + $0x1a8] sm:$0xff] %v326
                %v328 = vld [vmem:[%s218 + $0x630] sm:$0xff]
                %329 = vst [vmem:[%s219 + $0x1b0] sm:$0xff] %v328
                %v330 = vld [vmem:[%s218 + $0x638] sm:$0xff]
                %331 = vst [vmem:[%s219 + $0x1b8] sm:$0xff] %v330
                %v332 = vld [vmem:[%s218 + $0x640] sm:$0xff]
                %333 = vst [vmem:[%s219 + $0x1c0] sm:$0xff] %v332
                %v334 = vld [vmem:[%s218 + $0x648] sm:$0xff]
                %335 = vst [vmem:[%s219 + $0x1c8] sm:$0xff] %v334
                %v336 = vld [vmem:[%s218 + $0x650] sm:$0xff]
                %337 = vst [vmem:[%s219 + $0x1d0] sm:$0xff] %v336
                %v338 = vld [vmem:[%s218 + $0x658] sm:$0xff]
                %339 = vst [vmem:[%s219 + $0x1d8] sm:$0xff] %v338
                %v340 = vld [vmem:[%s218 + $0x660] sm:$0xff]
                %341 = vst [vmem:[%s219 + $0x1e0] sm:$0xff] %v340
                %v342 = vld [vmem:[%s218 + $0x668] sm:$0xff]
                %343 = vst [vmem:[%s219 + $0x1e8] sm:$0xff] %v342
                %v344 = vld [vmem:[%s218 + $0x670] sm:$0xff]
                %345 = vst [vmem:[%s219 + $0x1f0] sm:$0xff] %v344
                %v346 = vld [vmem:[%s218 + $0x678] sm:$0xff]
                %347 = vst [vmem:[%s219 + $0x1f8] sm:$0xff] %v346
              $region49: #{aspp_forward.4} parent=43 // loop_footer
                %s217 = sadd.s32 1, %s213
              $region50: #{aspp_forward.4} parent=43 // loop_footer_branch
                %212 = sbr.rel target = $region46
              $region51: #{aspp_forward.4} parent=43 // loop_exit
                _
            $region44: #{aspp_forward.4} parent=35 // pred_fallthru
              _
          $region36: #{aspp_forward.4} parent=31 // pred_fallthru
            _
          %488 = vnop
        $region32: #{aspp_forward.4} parent=27 // pred_fallthru
          _
      $region28: #{aspp_forward.4} parent=5 // pred_fallthru
        _
      %p489 = scmp.le.s32.totalorder 1, %s12
      %p490 = scmp.lt.s32.totalorder %s12, 5
      %p491 = pnand %p489, %p490
      %p492 = pneg %p491
      // Predicated region
      $region67: #{aspp_forward.4} parent=5 // pred_check
        _
      $region68: #{aspp_forward.4} parent=5 // pred_check_branch
        %494 = sbr.rel (%p491) target = $region70
      $region69: #{aspp_forward.4} parent=5 // pred_region
        %s495 = ssub.s32 %s12, 1
        %s496 = sand.u32 %s39, 1
        %s497 = sand.u32 %s39, 1
        %s498 = smul.addr %s497, 512
        %s499 = scalar_lea.vmem [#allocation2], %s498
        // Predicated region
        $region71: #{aspp_forward.4} parent=69 // pred_check
          %p500 = pneg %p52
        $region72: #{aspp_forward.4} parent=69 // pred_check_branch
          %502 = sbr.rel (%p500) target = $region74
        $region73: #{aspp_forward.4} parent=69 // pred_region
          _
        $region74: #{aspp_forward.4} parent=69 // pred_fallthru
          _
        %s503 = sand.u32 %s39, 1
        %s504 = sand.u32 %s39, 1
        %s505 = smul.addr %s504, 512
        %s506 = scalar_lea.vmem [#allocation2], %s505
        %p507 = pneg %p52
        %p508 = pneg %p49
        %p509 = pneg %p73
        %p510 = pneg %p70
        %p511 = pneg %p94
        %p512 = pneg %p91
        %p513 = pneg %p115
        %p514 = pneg %p112
        %p515 = pneg %p143
        %p516 = pneg %p140
        %s517 = smul.u32 8, %s22
        %p518 = scmp.lt.s32.totalorder %s21, 1
        %s519 = scalar_select %p518, %s21, 1
        %p520 = scmp.lt.s32.totalorder %s517, 15
        %s521 = scalar_select %p520, %s517, 15
        %s522 = smul.addr %s521, 2
        %s523 = smul.addr %s519, 32
        %s524 = sadd.s32 %s522, %s523
        %s525 = smul.addr %s524, 8
        %s526 = scalar_lea.vmem %s4, %s525
        %p527 = pneg %p164
        %p528 = pneg %p161
        %s529 = smul.u32 8, %s22
        %s530 = smul.u32 8, %s22
        %p531 = scmp.lt.s32.totalorder %s21, 1
        %s532 = scalar_select %p531, %s21, 1
        %p533 = scmp.lt.s32.totalorder %s530, 15
        %s534 = scalar_select %p533, %s530, 15
        %s535 = smul.addr %s534, 2
        %s536 = smul.addr %s532, 32
        %s537 = sadd.s32 %s535, %s536
        %s538 = smul.addr %s537, 8
        %s539 = scalar_lea.vmem %s4, %s538
        %s540 = smul.u32 8, %s22
        %p541 = scmp.eq.s32.totalorder %s21, 0
        %p542 = scmp.eq.s32.totalorder %s22, 0
        %p543 = pnand %p541, %p542
        %p544 = pneg %p543
        // Predicated region
        $region75: #{aspp_forward.4} parent=69 // pred_check
          _
        $region76: #{aspp_forward.4} parent=69 // pred_check_branch
          %546 = sbr.rel (%p543) target = $region78
        $region77: #{aspp_forward.4} parent=69 // pred_region
          %vm547 = vcmask 58368
          %548 = vst.msk [vmem:[%s5] sm:$0x3] %vm547, 0.0
        $region78: #{aspp_forward.4} parent=69 // pred_fallthru
          _
        %v549 = vld [vmem:[%s1] sm:$0xff]
        %v550 = vld [vmem:[%s2] sm:$0x3]
        %v551 = vlaneseq
        %v552 = vshrl.u32 %v551, 7
        %v553 = vstv %s21
        %vm554 = vcmp.eq.s32.totalorder %v552, %v553
        %v555 = vsel %vm554, %v550, 0.0
        %vm556 = vcmask 58368
        %v557 = vsel %vm556, %v555, 0.0
        %v558 = vrot.slane %v557, 4
        %v559 = vadd.f32 %v557, %v558
        %v560 = vrot.slane %v559, 2
        %v561 = vadd.f32 %v559, %v560
        %v562 = vrot.slane %v561, 1
        %v563 = vadd.f32 %v561, %v562
        %v564 = vld [vmem:[%s499] sm:$0xff]
        %v565 = vld [vmem:[%s499 + $0x8] sm:$0xff]
        %v566 = vld [vmem:[%s499 + $0x10] sm:$0xff]
        %v567 = vld [vmem:[%s499 + $0x18] sm:$0xff]
        %v568 = vld [vmem:[%s499 + $0x20] sm:$0xff]
        %v569 = vld [vmem:[%s499 + $0x28] sm:$0xff]
        %v570 = vld [vmem:[%s499 + $0x30] sm:$0xff]
        %v571 = vld [vmem:[%s499 + $0x38] sm:$0xff]
        %v572 = vld [vmem:[%s499 + $0x40] sm:$0xff]
        %v573 = vld [vmem:[%s499 + $0x48] sm:$0xff]
        %v574 = vld [vmem:[%s499 + $0x50] sm:$0xff]
        %v575 = vld [vmem:[%s499 + $0x58] sm:$0xff]
        %v576 = vld [vmem:[%s499 + $0x60] sm:$0xff]
        %v577 = vld [vmem:[%s499 + $0x68] sm:$0xff]
        %v578 = vld [vmem:[%s499 + $0x70] sm:$0xff]
        %v579 = vld [vmem:[%s499 + $0x78] sm:$0xff]
        %v580 = vlaneseq
        %v581 = vshrl.u32 %v580, 7
        %v582 = vsub.s32 0, %v581
        %v583 = vrot.slane %v549, %v582
        %v584 = vmul.f32 %v564, %v583
        %v585 = vmul.f32 %v565, %v583
        %v586 = vmul.f32 %v566, %v583
        %v587 = vmul.f32 %v567, %v583
        %v588 = vmul.f32 %v568, %v583
        %v589 = vmul.f32 %v569, %v583
        %v590 = vmul.f32 %v570, %v583
        %v591 = vmul.f32 %v571, %v583
        %v592 = vmul.f32 %v572, %v583
        %v593 = vmul.f32 %v573, %v583
        %v594 = vmul.f32 %v574, %v583
        %v595 = vmul.f32 %v575, %v583
        %v596 = vmul.f32 %v576, %v583
        %v597 = vmul.f32 %v577, %v583
        %v598 = vmul.f32 %v578, %v583
        %v599 = vmul.f32 %v579, %v583
        %v600 = vlaneseq
        %v601 = vshrl.u32 %v600, 7
        %v602 = vsub.s32 4, %v601
        %v603 = vrot.slane %v549, %v602
        %v604 = vadd.f32 %v584, %v603
        %v605 = vadd.f32 %v585, %v603
        %v606 = vadd.f32 %v586, %v603
        %v607 = vadd.f32 %v587, %v603
        %v608 = vadd.f32 %v588, %v603
        %v609 = vadd.f32 %v589, %v603
        %v610 = vadd.f32 %v590, %v603
        %v611 = vadd.f32 %v591, %v603
        %v612 = vadd.f32 %v592, %v603
        %v613 = vadd.f32 %v593, %v603
        %v614 = vadd.f32 %v594, %v603
        %v615 = vadd.f32 %v595, %v603
        %v616 = vadd.f32 %v596, %v603
        %v617 = vadd.f32 %v597, %v603
        %v618 = vadd.f32 %v598, %v603
        %v619 = vadd.f32 %v599, %v603
        %v620 = vmax.f32 %v604, 0.0
        %v621 = vmax.f32 %v605, 0.0
        %v622 = vmax.f32 %v606, 0.0
        %v623 = vmax.f32 %v607, 0.0
        %v624 = vmax.f32 %v608, 0.0
        %v625 = vmax.f32 %v609, 0.0
        %v626 = vmax.f32 %v610, 0.0
        %v627 = vmax.f32 %v611, 0.0
        %v628 = vmax.f32 %v612, 0.0
        %v629 = vmax.f32 %v613, 0.0
        %v630 = vmax.f32 %v614, 0.0
        %v631 = vmax.f32 %v615, 0.0
        %v632 = vmax.f32 %v616, 0.0
        %v633 = vmax.f32 %v617, 0.0
        %v634 = vmax.f32 %v618, 0.0
        %v635 = vmax.f32 %v619, 0.0
        %v636 = vld [vmem:[%s3] sm:$0xff]
        %s637 = scalar_lea.vmem %s499, 128 [#allocation2]
        %v638 = vld [vmem:[%s637] sm:$0xff]
        %v639 = vld [vmem:[%s637 + $0x8] sm:$0xff]
        %v640 = vld [vmem:[%s637 + $0x10] sm:$0xff]
        %v641 = vld [vmem:[%s637 + $0x18] sm:$0xff]
        %v642 = vld [vmem:[%s637 + $0x20] sm:$0xff]
        %v643 = vld [vmem:[%s637 + $0x28] sm:$0xff]
        %v644 = vld [vmem:[%s637 + $0x30] sm:$0xff]
        %v645 = vld [vmem:[%s637 + $0x38] sm:$0xff]
        %v646 = vld [vmem:[%s637 + $0x40] sm:$0xff]
        %v647 = vld [vmem:[%s637 + $0x48] sm:$0xff]
        %v648 = vld [vmem:[%s637 + $0x50] sm:$0xff]
        %v649 = vld [vmem:[%s637 + $0x58] sm:$0xff]
        %v650 = vld [vmem:[%s637 + $0x60] sm:$0xff]
        %v651 = vld [vmem:[%s637 + $0x68] sm:$0xff]
        %v652 = vld [vmem:[%s637 + $0x70] sm:$0xff]
        %v653 = vld [vmem:[%s637 + $0x78] sm:$0xff]
        %v654 = vlaneseq
        %v655 = vshrl.u32 %v654, 7
        %v656 = vsub.s32 1, %v655
        %v657 = vrot.slane %v549, %v656
        %v658 = vmul.f32 %v638, %v657
        %v659 = vmul.f32 %v639, %v657
        %v660 = vmul.f32 %v640, %v657
        %v661 = vmul.f32 %v641, %v657
        %v662 = vmul.f32 %v642, %v657
        %v663 = vmul.f32 %v643, %v657
        %v664 = vmul.f32 %v644, %v657
        %v665 = vmul.f32 %v645, %v657
        %v666 = vmul.f32 %v646, %v657
        %v667 = vmul.f32 %v647, %v657
        %v668 = vmul.f32 %v648, %v657
        %v669 = vmul.f32 %v649, %v657
        %v670 = vmul.f32 %v650, %v657
        %v671 = vmul.f32 %v651, %v657
        %v672 = vmul.f32 %v652, %v657
        %v673 = vmul.f32 %v653, %v657
        %v674 = vlaneseq
        %v675 = vshrl.u32 %v674, 7
        %v676 = vsub.s32 5, %v675
        %v677 = vrot.slane %v549, %v676
        %v678 = vadd.f32 %v658, %v677
        %v679 = vadd.f32 %v659, %v677
        %v680 = vadd.f32 %v660, %v677
        %v681 = vadd.f32 %v661, %v677
        %v682 = vadd.f32 %v662, %v677
        %v683 = vadd.f32 %v663, %v677
        %v684 = vadd.f32 %v664, %v677
        %v685 = vadd.f32 %v665, %v677
        %v686 = vadd.f32 %v666, %v677
        %v687 = vadd.f32 %v667, %v677
        %v688 = vadd.f32 %v668, %v677
        %v689 = vadd.f32 %v669, %v677
        %v690 = vadd.f32 %v670, %v677
        %v691 = vadd.f32 %v671, %v677
        %v692 = vadd.f32 %v672, %v677
        %v693 = vadd.f32 %v673, %v677
        %v694 = vmax.f32 %v678, 0.0
        %v695 = vmax.f32 %v679, 0.0
        %v696 = vmax.f32 %v680, 0.0
        %v697 = vmax.f32 %v681, 0.0
        %v698 = vmax.f32 %v682, 0.0
        %v699 = vmax.f32 %v683, 0.0
        %v700 = vmax.f32 %v684, 0.0
        %v701 = vmax.f32 %v685, 0.0
        %v702 = vmax.f32 %v686, 0.0
        %v703 = vmax.f32 %v687, 0.0
        %v704 = vmax.f32 %v688, 0.0
        %v705 = vmax.f32 %v689, 0.0
        %v706 = vmax.f32 %v690, 0.0
        %v707 = vmax.f32 %v691, 0.0
        %v708 = vmax.f32 %v692, 0.0
        %v709 = vmax.f32 %v693, 0.0
        %s710 = scalar_lea.vmem %s3, 8
        %v711 = vld [vmem:[%s710] sm:$0xff]
        %vm712 = vcmask 64512
        %v714 = vsel %vm712, %v694, 0
        %v717 = vsel %vm712, %v695, 0
        %v720 = vsel %vm712, %v696, 0
        %v723 = vsel %vm712, %v697, 0
        %v726 = vsel %vm712, %v698, 0
        %v729 = vsel %vm712, %v699, 0
        %v732 = vsel %vm712, %v700, 0
        %v735 = vsel %vm712, %v701, 0
        %v738 = vsel %vm712, %v702, 0
        %v741 = vsel %vm712, %v703, 0
        %v744 = vsel %vm712, %v704, 0
        %v747 = vsel %vm712, %v705, 0
        %v750 = vsel %vm712, %v706, 0
        %v753 = vsel %vm712, %v707, 0
        %v756 = vsel %vm712, %v708, 0
        %v759 = vsel %vm712, %v709, 0
        %761 = vmatprep.subr.mxu0 0.0
        %762 = vmatpush1.msra.mxu0 %v711
        %763 = vmatprep.subr.mxu0 0.0
        %764 = vmatpush1.msra.mxu0 0.0
        %765 = vmatprep.subr.mxu0 0.0
        %766 = vmatpush1.msra.mxu0 0.0
        %767 = vmatprep.subr.mxu0 0.0
        %768 = vmatpush1.msra.mxu0 0.0
        %769 = vmatprep.subr.mxu0 0.0
        %770 = vmatpush1.msra.mxu0 0.0
        %771 = vmatprep.subr.mxu0 0.0
        %772 = vmatpush1.msra.mxu0 0.0
        %773 = vmatprep.subr.mxu0 0.0
        %774 = vmatpush1.msra.mxu0 0.0
        %775 = vmatprep.subr.mxu0 0.0
        %776 = vmatpush1.msra.mxu0 0.0
        %777 = vmatprep.subr.mxu0 0.0
        %778 = vmatpush1.msra.mxu0 0.0
        %779 = vmatprep.subr.mxu0 0.0
        %780 = vmatpush1.msra.mxu0 0.0
        %781 = vmatprep.subr.mxu0 0.0
        %782 = vmatpush1.msra.mxu0 0.0
        %783 = vmatprep.subr.mxu0 0.0
        %784 = vmatpush1.msra.mxu0 0.0
        %785 = vmatprep.subr.mxu0 0.0
        %786 = vmatpush1.msra.mxu0 0.0
        %787 = vmatprep.subr.mxu0 0.0
        %788 = vmatpush1.msra.mxu0 0.0
        %789 = vmatprep.subr.mxu0 0.0
        %790 = vmatpush1.msra.mxu0 0.0
        %791 = vmatprep.subr.mxu0 0.0
        %792 = vmatpush1.msra.mxu0 0.0
        %793 = vmatprep.subr.mxu0 0.0
        %794 = vmatpush1.msra.mxu0 0.0
        %795 = vmatprep.subr.mxu0 0.0
        %796 = vmatpush1.msra.mxu0 0.0
        %797 = vmatprep.subr.mxu0 0.0
        %798 = vmatpush1.msra.mxu0 0.0
        %799 = vmatprep.subr.mxu0 0.0
        %800 = vmatpush1.msra.mxu0 0.0
        %801 = vmatprep.subr.mxu0 0.0
        %802 = vmatpush1.msra.mxu0 0.0
        %803 = vmatprep.subr.mxu0 0.0
        %804 = vmatpush1.msra.mxu0 0.0
        %805 = vmatprep.subr.mxu0 0.0
        %806 = vmatpush1.msra.mxu0 0.0
        %807 = vmatprep.subr.mxu0 0.0
        %808 = vmatpush1.msra.mxu0 0.0
        %809 = vmatprep.subr.mxu0 0.0
        %810 = vmatpush1.msra.mxu0 0.0
        %811 = vmatprep.subr.mxu0 0.0
        %812 = vmatpush1.msra.mxu0 0.0
        %813 = vmatprep.subr.mxu0 0.0
        %814 = vmatpush1.msra.mxu0 0.0
        %815 = vmatprep.subr.mxu0 0.0
        %816 = vmatpush1.msra.mxu0 0.0
        %817 = vmatprep.subr.mxu0 0.0
        %818 = vmatpush1.msra.mxu0 0.0
        %819 = vmatprep.subr.mxu0 0.0
        %820 = vmatpush1.msra.mxu0 0.0
        %821 = vmatprep.subr.mxu0 0.0
        %822 = vmatpush1.msra.mxu0 0.0
        %823 = vmatprep.subr.mxu0 0.0
        %824 = vmatpush1.msra.mxu0 0.0
        %825 = vmatprep.mubr.f32.mxu0 0.0
        %826 = vmatmul.mubr.f32.gmra.mrb[0].mxu0 %v714
        %v827 = vpop.f32.mrb[0].mxu0
        %v828 = vadd.f32 0.0, %v827
        %v829 = vpop.f32.mrb[0].mxu0
        %830 = vmatprep.mubr.f32.mxu0 0.0
        %831 = vmatmul.mubr.f32.gmra.mrb[0].mxu0 %v717
        %v832 = vpop.f32.mrb[0].mxu0
        %v833 = vadd.f32 0.0, %v832
        %v834 = vpop.f32.mrb[0].mxu0
        %835 = vmatprep.mubr.f32.mxu0 0.0
        %836 = vmatmul.mubr.f32.gmra.mrb[0].mxu0 %v720
        %v837 = vpop.f32.mrb[0].mxu0
        %v838 = vadd.f32 0.0, %v837
        %v839 = vpop.f32.mrb[0].mxu0
        %840 = vmatprep.mubr.f32.mxu0 0.0
        %841 = vmatmul.mubr.f32.gmra.mrb[0].mxu0 %v723
        %v842 = vpop.f32.mrb[0].mxu0
        %v843 = vadd.f32 0.0, %v842
        %v844 = vpop.f32.mrb[0].mxu0
        %845 = vmatprep.mubr.f32.mxu0 0.0
        %846 = vmatmul.mubr.f32.gmra.mrb[0].mxu0 %v726
        %v847 = vpop.f32.mrb[0].mxu0
        %v848 = vadd.f32 0.0, %v847
        %v849 = vpop.f32.mrb[0].mxu0
        %850 = vmatprep.mubr.f32.mxu0 0.0
        %851 = vmatmul.mubr.f32.gmra.mrb[0].mxu0 %v729
        %v852 = vpop.f32.mrb[0].mxu0
        %v853 = vadd.f32 0.0, %v852
        %v854 = vpop.f32.mrb[0].mxu0
        %855 = vmatprep.mubr.f32.mxu0 0.0
        %856 = vmatmul.mubr.f32.gmra.mrb[0].mxu0 %v732
        %v857 = vpop.f32.mrb[0].mxu0
        %v858 = vadd.f32 0.0, %v857
        %v859 = vpop.f32.mrb[0].mxu0
        %860 = vmatprep.mubr.f32.mxu0 0.0
        %861 = vmatmul.mubr.f32.gmra.mrb[0].mxu0 %v735
        %v862 = vpop.f32.mrb[0].mxu0
        %v863 = vadd.f32 0.0, %v862
        %v864 = vpop.f32.mrb[0].mxu0
        %865 = vmatprep.mubr.f32.mxu0 0.0
        %866 = vmatmul.mubr.f32.gmra.mrb[0].mxu0 %v738
        %v867 = vpop.f32.mrb[0].mxu0
        %v868 = vadd.f32 0.0, %v867
        %v869 = vpop.f32.mrb[0].mxu0
        %870 = vmatprep.mubr.f32.mxu0 0.0
        %871 = vmatmul.mubr.f32.gmra.mrb[0].mxu0 %v741
        %v872 = vpop.f32.mrb[0].mxu0
        %v873 = vadd.f32 0.0, %v872
        %v874 = vpop.f32.mrb[0].mxu0
        %875 = vmatprep.mubr.f32.mxu0 0.0
        %876 = vmatmul.mubr.f32.gmra.mrb[0].mxu0 %v744
        %v877 = vpop.f32.mrb[0].mxu0
        %v878 = vadd.f32 0.0, %v877
        %v879 = vpop.f32.mrb[0].mxu0
        %880 = vmatprep.mubr.f32.mxu0 0.0
        %881 = vmatmul.mubr.f32.gmra.mrb[0].mxu0 %v747
        %v882 = vpop.f32.mrb[0].mxu0
        %v883 = vadd.f32 0.0, %v882
        %v884 = vpop.f32.mrb[0].mxu0
        %885 = vmatprep.mubr.f32.mxu0 0.0
        %886 = vmatmul.mubr.f32.gmra.mrb[0].mxu0 %v750
        %v887 = vpop.f32.mrb[0].mxu0
        %v888 = vadd.f32 0.0, %v887
        %v889 = vpop.f32.mrb[0].mxu0
        %890 = vmatprep.mubr.f32.mxu0 0.0
        %891 = vmatmul.mubr.f32.gmra.mrb[0].mxu0 %v753
        %v892 = vpop.f32.mrb[0].mxu0
        %v893 = vadd.f32 0.0, %v892
        %v894 = vpop.f32.mrb[0].mxu0
        %895 = vmatprep.mubr.f32.mxu0 0.0
        %896 = vmatmul.mubr.f32.gmra.mrb[0].mxu0 %v756
        %v897 = vpop.f32.mrb[0].mxu0
        %v898 = vadd.f32 0.0, %v897
        %v899 = vpop.f32.mrb[0].mxu0
        %900 = vmatprep.mubr.f32.mxu0 0.0
        %901 = vmatmul.mubr.f32.gmra.mrb[0].mxu0 %v759
        %v902 = vpop.f32.mrb[0].mxu0
        %v903 = vadd.f32 0.0, %v902
        %v904 = vpop.f32.mrb[0].mxu0
        %905 = vdwg.mxu0
        %v907 = vsel %vm712, %v620, 0
        %v910 = vsel %vm712, %v621, 0
        %v913 = vsel %vm712, %v622, 0
        %v916 = vsel %vm712, %v623, 0
        %v919 = vsel %vm712, %v624, 0
        %v922 = vsel %vm712, %v625, 0
        %v925 = vsel %vm712, %v626, 0
        %v928 = vsel %vm712, %v627, 0
        %v931 = vsel %vm712, %v628, 0
        %v934 = vsel %vm712, %v629, 0
        %v937 = vsel %vm712, %v630, 0
        %v940 = vsel %vm712, %v631, 0
        %v943 = vsel %vm712, %v632, 0
        %v946 = vsel %vm712, %v633, 0
        %v949 = vsel %vm712, %v634, 0
        %v952 = vsel %vm712, %v635, 0
        %954 = vmatprep.subr.mxu0 0.0
        %955 = vmatpush1.msra.mxu0 %v636
        %956 = vmatprep.subr.mxu0 0.0
        %957 = vmatpush1.msra.mxu0 0.0
        %958 = vmatprep.subr.mxu0 0.0
        %959 = vmatpush1.msra.mxu0 0.0
        %960 = vmatprep.subr.mxu0 0.0
        %961 = vmatpush1.msra.mxu0 0.0
        %962 = vmatprep.subr.mxu0 0.0
        %963 = vmatpush1.msra.mxu0 0.0
        %964 = vmatprep.subr.mxu0 0.0
        %965 = vmatpush1.msra.mxu0 0.0
        %966 = vmatprep.subr.mxu0 0.0
        %967 = vmatpush1.msra.mxu0 0.0
        %968 = vmatprep.subr.mxu0 0.0
        %969 = vmatpush1.msra.mxu0 0.0
        %970 = vmatprep.subr.mxu0 0.0
        %971 = vmatpush1.msra.mxu0 0.0
        %972 = vmatprep.subr.mxu0 0.0
        %973 = vmatpush1.msra.mxu0 0.0
        %974 = vmatprep.subr.mxu0 0.0
        %975 = vmatpush1.msra.mxu0 0.0
        %976 = vmatprep.subr.mxu0 0.0
        %977 = vmatpush1.msra.mxu0 0.0
        %978 = vmatprep.subr.mxu0 0.0
        %979 = vmatpush1.msra.mxu0 0.0
        %980 = vmatprep.subr.mxu0 0.0
        %981 = vmatpush1.msra.mxu0 0.0
        %982 = vmatprep.subr.mxu0 0.0
        %983 = vmatpush1.msra.mxu0 0.0
        %984 = vmatprep.subr.mxu0 0.0
        %985 = vmatpush1.msra.mxu0 0.0
        %986 = vmatprep.subr.mxu0 0.0
        %987 = vmatpush1.msra.mxu0 0.0
        %988 = vmatprep.subr.mxu0 0.0
        %989 = vmatpush1.msra.mxu0 0.0
        %990 = vmatprep.subr.mxu0 0.0
        %991 = vmatpush1.msra.mxu0 0.0
        %992 = vmatprep.subr.mxu0 0.0
        %993 = vmatpush1.msra.mxu0 0.0
        %994 = vmatprep.subr.mxu0 0.0
        %995 = vmatpush1.msra.mxu0 0.0
        %996 = vmatprep.subr.mxu0 0.0
        %997 = vmatpush1.msra.mxu0 0.0
        %998 = vmatprep.subr.mxu0 0.0
        %999 = vmatpush1.msra.mxu0 0.0
        %1000 = vmatprep.subr.mxu0 0.0
        %1001 = vmatpush1.msra.mxu0 0.0
        %1002 = vmatprep.subr.mxu0 0.0
        %1003 = vmatpush1.msra.mxu0 0.0
        %1004 = vmatprep.subr.mxu0 0.0
        %1005 = vmatpush1.msra.mxu0 0.0
        %1006 = vmatprep.subr.mxu0 0.0
        %1007 = vmatpush1.msra.mxu0 0.0
        %1008 = vmatprep.subr.mxu0 0.0
        %1009 = vmatpush1.msra.mxu0 0.0
        %1010 = vmatprep.subr.mxu0 0.0
        %1011 = vmatpush1.msra.mxu0 0.0
        %1012 = vmatprep.subr.mxu0 0.0
        %1013 = vmatpush1.msra.mxu0 0.0
        %1014 = vmatprep.subr.mxu0 0.0
        %1015 = vmatpush1.msra.mxu0 0.0
        %1016 = vmatprep.subr.mxu0 0.0
        %1017 = vmatpush1.msra.mxu0 0.0
        %1018 = vmatprep.mubr.f32.mxu0 0.0
        %1019 = vmatmul.mubr.f32.gmra.mrb[0].mxu0 %v907
        %v1020 = vpop.f32.mrb[0].mxu0
        %v1021 = vadd.f32 %v828, %v1020
        %v1022 = vpop.f32.mrb[0].mxu0
        %1023 = vmatprep.mubr.f32.mxu0 0.0
        %1024 = vmatmul.mubr.f32.gmra.mrb[0].mxu0 %v910
        %v1025 = vpop.f32.mrb[0].mxu0
        %v1026 = vadd.f32 %v833, %v1025
        %v1027 = vpop.f32.mrb[0].mxu0
        %1028 = vmatprep.mubr.f32.mxu0 0.0
        %1029 = vmatmul.mubr.f32.gmra.mrb[0].mxu0 %v913
        %v1030 = vpop.f32.mrb[0].mxu0
        %v1031 = vadd.f32 %v838, %v1030
        %v1032 = vpop.f32.mrb[0].mxu0
        %1033 = vmatprep.mubr.f32.mxu0 0.0
        %1034 = vmatmul.mubr.f32.gmra.mrb[0].mxu0 %v916
        %v1035 = vpop.f32.mrb[0].mxu0
        %v1036 = vadd.f32 %v843, %v1035
        %v1037 = vpop.f32.mrb[0].mxu0
        %1038 = vmatprep.mubr.f32.mxu0 0.0
        %1039 = vmatmul.mubr.f32.gmra.mrb[0].mxu0 %v919
        %v1040 = vpop.f32.mrb[0].mxu0
        %v1041 = vadd.f32 %v848, %v1040
        %v1042 = vpop.f32.mrb[0].mxu0
        %1043 = vmatprep.mubr.f32.mxu0 0.0
        %1044 = vmatmul.mubr.f32.gmra.mrb[0].mxu0 %v922
        %v1045 = vpop.f32.mrb[0].mxu0
        %v1046 = vadd.f32 %v853, %v1045
        %v1047 = vpop.f32.mrb[0].mxu0
        %1048 = vmatprep.mubr.f32.mxu0 0.0
        %1049 = vmatmul.mubr.f32.gmra.mrb[0].mxu0 %v925
        %v1050 = vpop.f32.mrb[0].mxu0
        %v1051 = vadd.f32 %v858, %v1050
        %v1052 = vpop.f32.mrb[0].mxu0
        %1053 = vmatprep.mubr.f32.mxu0 0.0
        %1054 = vmatmul.mubr.f32.gmra.mrb[0].mxu0 %v928
        %v1055 = vpop.f32.mrb[0].mxu0
        %v1056 = vadd.f32 %v863, %v1055
        %v1057 = vpop.f32.mrb[0].mxu0
        %1058 = vmatprep.mubr.f32.mxu0 0.0
        %1059 = vmatmul.mubr.f32.gmra.mrb[0].mxu0 %v931
        %v1060 = vpop.f32.mrb[0].mxu0
        %v1061 = vadd.f32 %v868, %v1060
        %v1062 = vpop.f32.mrb[0].mxu0
        %1063 = vmatprep.mubr.f32.mxu0 0.0
        %1064 = vmatmul.mubr.f32.gmra.mrb[0].mxu0 %v934
        %v1065 = vpop.f32.mrb[0].mxu0
        %v1066 = vadd.f32 %v873, %v1065
        %v1067 = vpop.f32.mrb[0].mxu0
        %1068 = vmatprep.mubr.f32.mxu0 0.0
        %1069 = vmatmul.mubr.f32.gmra.mrb[0].mxu0 %v937
        %v1070 = vpop.f32.mrb[0].mxu0
        %v1071 = vadd.f32 %v878, %v1070
        %v1072 = vpop.f32.mrb[0].mxu0
        %1073 = vmatprep.mubr.f32.mxu0 0.0
        %1074 = vmatmul.mubr.f32.gmra.mrb[0].mxu0 %v940
        %v1075 = vpop.f32.mrb[0].mxu0
        %v1076 = vadd.f32 %v883, %v1075
        %v1077 = vpop.f32.mrb[0].mxu0
        %1078 = vmatprep.mubr.f32.mxu0 0.0
        %1079 = vmatmul.mubr.f32.gmra.mrb[0].mxu0 %v943
        %v1080 = vpop.f32.mrb[0].mxu0
        %v1081 = vadd.f32 %v888, %v1080
        %v1082 = vpop.f32.mrb[0].mxu0
        %1083 = vmatprep.mubr.f32.mxu0 0.0
        %1084 = vmatmul.mubr.f32.gmra.mrb[0].mxu0 %v946
        %v1085 = vpop.f32.mrb[0].mxu0
        %v1086 = vadd.f32 %v893, %v1085
        %v1087 = vpop.f32.mrb[0].mxu0
        %1088 = vmatprep.mubr.f32.mxu0 0.0
        %1089 = vmatmul.mubr.f32.gmra.mrb[0].mxu0 %v949
        %v1090 = vpop.f32.mrb[0].mxu0
        %v1091 = vadd.f32 %v898, %v1090
        %v1092 = vpop.f32.mrb[0].mxu0
        %1093 = vmatprep.mubr.f32.mxu0 0.0
        %1094 = vmatmul.mubr.f32.gmra.mrb[0].mxu0 %v952
        %v1095 = vpop.f32.mrb[0].mxu0
        %v1096 = vadd.f32 %v903, %v1095
        %v1097 = vpop.f32.mrb[0].mxu0
        %1098 = vdwg.mxu0
        %s1099 = scalar_lea.vmem %s499, 256 [#allocation2]
        %v1100 = vld [vmem:[%s1099] sm:$0xff]
        %v1101 = vld [vmem:[%s1099 + $0x8] sm:$0xff]
        %v1102 = vld [vmem:[%s1099 + $0x10] sm:$0xff]
        %v1103 = vld [vmem:[%s1099 + $0x18] sm:$0xff]
        %v1104 = vld [vmem:[%s1099 + $0x20] sm:$0xff]
        %v1105 = vld [vmem:[%s1099 + $0x28] sm:$0xff]
        %v1106 = vld [vmem:[%s1099 + $0x30] sm:$0xff]
        %v1107 = vld [vmem:[%s1099 + $0x38] sm:$0xff]
        %v1108 = vld [vmem:[%s1099 + $0x40] sm:$0xff]
        %v1109 = vld [vmem:[%s1099 + $0x48] sm:$0xff]
        %v1110 = vld [vmem:[%s1099 + $0x50] sm:$0xff]
        %v1111 = vld [vmem:[%s1099 + $0x58] sm:$0xff]
        %v1112 = vld [vmem:[%s1099 + $0x60] sm:$0xff]
        %v1113 = vld [vmem:[%s1099 + $0x68] sm:$0xff]
        %v1114 = vld [vmem:[%s1099 + $0x70] sm:$0xff]
        %v1115 = vld [vmem:[%s1099 + $0x78] sm:$0xff]
        %v1116 = vlaneseq
        %v1117 = vshrl.u32 %v1116, 7
        %v1118 = vsub.s32 2, %v1117
        %v1119 = vrot.slane %v549, %v1118
        %v1120 = vmul.f32 %v1100, %v1119
        %v1121 = vmul.f32 %v1101, %v1119
        %v1122 = vmul.f32 %v1102, %v1119
        %v1123 = vmul.f32 %v1103, %v1119
        %v1124 = vmul.f32 %v1104, %v1119
        %v1125 = vmul.f32 %v1105, %v1119
        %v1126 = vmul.f32 %v1106, %v1119
        %v1127 = vmul.f32 %v1107, %v1119
        %v1128 = vmul.f32 %v1108, %v1119
        %v1129 = vmul.f32 %v1109, %v1119
        %v1130 = vmul.f32 %v1110, %v1119
        %v1131 = vmul.f32 %v1111, %v1119
        %v1132 = vmul.f32 %v1112, %v1119
        %v1133 = vmul.f32 %v1113, %v1119
        %v1134 = vmul.f32 %v1114, %v1119
        %v1135 = vmul.f32 %v1115, %v1119
        %v1136 = vlaneseq
        %v1137 = vshrl.u32 %v1136, 7
        %v1138 = vsub.s32 6, %v1137
        %v1139 = vrot.slane %v549, %v1138
        %v1140 = vadd.f32 %v1120, %v1139
        %v1141 = vadd.f32 %v1121, %v1139
        %v1142 = vadd.f32 %v1122, %v1139
        %v1143 = vadd.f32 %v1123, %v1139
        %v1144 = vadd.f32 %v1124, %v1139
        %v1145 = vadd.f32 %v1125, %v1139
        %v1146 = vadd.f32 %v1126, %v1139
        %v1147 = vadd.f32 %v1127, %v1139
        %v1148 = vadd.f32 %v1128, %v1139
        %v1149 = vadd.f32 %v1129, %v1139
        %v1150 = vadd.f32 %v1130, %v1139
        %v1151 = vadd.f32 %v1131, %v1139
        %v1152 = vadd.f32 %v1132, %v1139
        %v1153 = vadd.f32 %v1133, %v1139
        %v1154 = vadd.f32 %v1134, %v1139
        %v1155 = vadd.f32 %v1135, %v1139
        %v1156 = vmax.f32 %v1140, 0.0
        %v1157 = vmax.f32 %v1141, 0.0
        %v1158 = vmax.f32 %v1142, 0.0
        %v1159 = vmax.f32 %v1143, 0.0
        %v1160 = vmax.f32 %v1144, 0.0
        %v1161 = vmax.f32 %v1145, 0.0
        %v1162 = vmax.f32 %v1146, 0.0
        %v1163 = vmax.f32 %v1147, 0.0
        %v1164 = vmax.f32 %v1148, 0.0
        %v1165 = vmax.f32 %v1149, 0.0
        %v1166 = vmax.f32 %v1150, 0.0
        %v1167 = vmax.f32 %v1151, 0.0
        %v1168 = vmax.f32 %v1152, 0.0
        %v1169 = vmax.f32 %v1153, 0.0
        %v1170 = vmax.f32 %v1154, 0.0
        %v1171 = vmax.f32 %v1155, 0.0
        %s1172 = scalar_lea.vmem %s3, 16
        %v1173 = vld [vmem:[%s1172] sm:$0xff]
        %v1175 = vsel %vm712, %v1156, 0
        %v1178 = vsel %vm712, %v1157, 0
        %v1181 = vsel %vm712, %v1158, 0
        %v1184 = vsel %vm712, %v1159, 0
        %v1187 = vsel %vm712, %v1160, 0
        %v1190 = vsel %vm712, %v1161, 0
        %v1193 = vsel %vm712, %v1162, 0
        %v1196 = vsel %vm712, %v1163, 0
        %v1199 = vsel %vm712, %v1164, 0
        %v1202 = vsel %vm712, %v1165, 0
        %v1205 = vsel %vm712, %v1166, 0
        %v1208 = vsel %vm712, %v1167, 0
        %v1211 = vsel %vm712, %v1168, 0
        %v1214 = vsel %vm712, %v1169, 0
        %v1217 = vsel %vm712, %v1170, 0
        %v1220 = vsel %vm712, %v1171, 0
        %1222 = vmatprep.subr.mxu0 0.0
        %1223 = vmatpush1.msra.mxu0 %v1173
        %1224 = vmatprep.subr.mxu0 0.0
        %1225 = vmatpush1.msra.mxu0 0.0
        %1226 = vmatprep.subr.mxu0 0.0
        %1227 = vmatpush1.msra.mxu0 0.0
        %1228 = vmatprep.subr.mxu0 0.0
        %1229 = vmatpush1.msra.mxu0 0.0
        %1230 = vmatprep.subr.mxu0 0.0
        %1231 = vmatpush1.msra.mxu0 0.0
        %1232 = vmatprep.subr.mxu0 0.0
        %1233 = vmatpush1.msra.mxu0 0.0
        %1234 = vmatprep.subr.mxu0 0.0
        %1235 = vmatpush1.msra.mxu0 0.0
        %1236 = vmatprep.subr.mxu0 0.0
        %1237 = vmatpush1.msra.mxu0 0.0
        %1238 = vmatprep.subr.mxu0 0.0
        %1239 = vmatpush1.msra.mxu0 0.0
        %1240 = vmatprep.subr.mxu0 0.0
        %1241 = vmatpush1.msra.mxu0 0.0
        %1242 = vmatprep.subr.mxu0 0.0
        %1243 = vmatpush1.msra.mxu0 0.0
        %1244 = vmatprep.subr.mxu0 0.0
        %1245 = vmatpush1.msra.mxu0 0.0
        %1246 = vmatprep.subr.mxu0 0.0
        %1247 = vmatpush1.msra.mxu0 0.0
        %1248 = vmatprep.subr.mxu0 0.0
        %1249 = vmatpush1.msra.mxu0 0.0
        %1250 = vmatprep.subr.mxu0 0.0
        %1251 = vmatpush1.msra.mxu0 0.0
        %1252 = vmatprep.subr.mxu0 0.0
        %1253 = vmatpush1.msra.mxu0 0.0
        %1254 = vmatprep.subr.mxu0 0.0
        %1255 = vmatpush1.msra.mxu0 0.0
        %1256 = vmatprep.subr.mxu0 0.0
        %1257 = vmatpush1.msra.mxu0 0.0
        %1258 = vmatprep.subr.mxu0 0.0
        %1259 = vmatpush1.msra.mxu0 0.0
        %1260 = vmatprep.subr.mxu0 0.0
        %1261 = vmatpush1.msra.mxu0 0.0
        %1262 = vmatprep.subr.mxu0 0.0
        %1263 = vmatpush1.msra.mxu0 0.0
        %1264 = vmatprep.subr.mxu0 0.0
        %1265 = vmatpush1.msra.mxu0 0.0
        %1266 = vmatprep.subr.mxu0 0.0
        %1267 = vmatpush1.msra.mxu0 0.0
        %1268 = vmatprep.subr.mxu0 0.0
        %1269 = vmatpush1.msra.mxu0 0.0
        %1270 = vmatprep.subr.mxu0 0.0
        %1271 = vmatpush1.msra.mxu0 0.0
        %1272 = vmatprep.subr.mxu0 0.0
        %1273 = vmatpush1.msra.mxu0 0.0
        %1274 = vmatprep.subr.mxu0 0.0
        %1275 = vmatpush1.msra.mxu0 0.0
        %1276 = vmatprep.subr.mxu0 0.0
        %1277 = vmatpush1.msra.mxu0 0.0
        %1278 = vmatprep.subr.mxu0 0.0
        %1279 = vmatpush1.msra.mxu0 0.0
        %1280 = vmatprep.subr.mxu0 0.0
        %1281 = vmatpush1.msra.mxu0 0.0
        %1282 = vmatprep.subr.mxu0 0.0
        %1283 = vmatpush1.msra.mxu0 0.0
        %1284 = vmatprep.subr.mxu0 0.0
        %1285 = vmatpush1.msra.mxu0 0.0
        %1286 = vmatprep.mubr.f32.mxu0 0.0
        %1287 = vmatmul.mubr.f32.gmra.mrb[0].mxu0 %v1175
        %v1288 = vpop.f32.mrb[0].mxu0
        %v1289 = vadd.f32 0.0, %v1288
        %v1290 = vpop.f32.mrb[0].mxu0
        %1291 = vmatprep.mubr.f32.mxu0 0.0
        %1292 = vmatmul.mubr.f32.gmra.mrb[0].mxu0 %v1178
        %v1293 = vpop.f32.mrb[0].mxu0
        %v1294 = vadd.f32 0.0, %v1293
        %v1295 = vpop.f32.mrb[0].mxu0
        %1296 = vmatprep.mubr.f32.mxu0 0.0
        %1297 = vmatmul.mubr.f32.gmra.mrb[0].mxu0 %v1181
        %v1298 = vpop.f32.mrb[0].mxu0
        %v1299 = vadd.f32 0.0, %v1298
        %v1300 = vpop.f32.mrb[0].mxu0
        %1301 = vmatprep.mubr.f32.mxu0 0.0
        %1302 = vmatmul.mubr.f32.gmra.mrb[0].mxu0 %v1184
        %v1303 = vpop.f32.mrb[0].mxu0
        %v1304 = vadd.f32 0.0, %v1303
        %v1305 = vpop.f32.mrb[0].mxu0
        %1306 = vmatprep.mubr.f32.mxu0 0.0
        %1307 = vmatmul.mubr.f32.gmra.mrb[0].mxu0 %v1187
        %v1308 = vpop.f32.mrb[0].mxu0
        %v1309 = vadd.f32 0.0, %v1308
        %v1310 = vpop.f32.mrb[0].mxu0
        %1311 = vmatprep.mubr.f32.mxu0 0.0
        %1312 = vmatmul.mubr.f32.gmra.mrb[0].mxu0 %v1190
        %v1313 = vpop.f32.mrb[0].mxu0
        %v1314 = vadd.f32 0.0, %v1313
        %v1315 = vpop.f32.mrb[0].mxu0
        %1316 = vmatprep.mubr.f32.mxu0 0.0
        %1317 = vmatmul.mubr.f32.gmra.mrb[0].mxu0 %v1193
        %v1318 = vpop.f32.mrb[0].mxu0
        %v1319 = vadd.f32 0.0, %v1318
        %v1320 = vpop.f32.mrb[0].mxu0
        %1321 = vmatprep.mubr.f32.mxu0 0.0
        %1322 = vmatmul.mubr.f32.gmra.mrb[0].mxu0 %v1196
        %v1323 = vpop.f32.mrb[0].mxu0
        %v1324 = vadd.f32 0.0, %v1323
        %v1325 = vpop.f32.mrb[0].mxu0
        %1326 = vmatprep.mubr.f32.mxu0 0.0
        %1327 = vmatmul.mubr.f32.gmra.mrb[0].mxu0 %v1199
        %v1328 = vpop.f32.mrb[0].mxu0
        %v1329 = vadd.f32 0.0, %v1328
        %v1330 = vpop.f32.mrb[0].mxu0
        %1331 = vmatprep.mubr.f32.mxu0 0.0
        %1332 = vmatmul.mubr.f32.gmra.mrb[0].mxu0 %v1202
        %v1333 = vpop.f32.mrb[0].mxu0
        %v1334 = vadd.f32 0.0, %v1333
        %v1335 = vpop.f32.mrb[0].mxu0
        %1336 = vmatprep.mubr.f32.mxu0 0.0
        %1337 = vmatmul.mubr.f32.gmra.mrb[0].mxu0 %v1205
        %v1338 = vpop.f32.mrb[0].mxu0
        %v1339 = vadd.f32 0.0, %v1338
        %v1340 = vpop.f32.mrb[0].mxu0
        %1341 = vmatprep.mubr.f32.mxu0 0.0
        %1342 = vmatmul.mubr.f32.gmra.mrb[0].mxu0 %v1208
        %v1343 = vpop.f32.mrb[0].mxu0
        %v1344 = vadd.f32 0.0, %v1343
        %v1345 = vpop.f32.mrb[0].mxu0
        %1346 = vmatprep.mubr.f32.mxu0 0.0
        %1347 = vmatmul.mubr.f32.gmra.mrb[0].mxu0 %v1211
        %v1348 = vpop.f32.mrb[0].mxu0
        %v1349 = vadd.f32 0.0, %v1348
        %v1350 = vpop.f32.mrb[0].mxu0
        %1351 = vmatprep.mubr.f32.mxu0 0.0
        %1352 = vmatmul.mubr.f32.gmra.mrb[0].mxu0 %v1214
        %v1353 = vpop.f32.mrb[0].mxu0
        %v1354 = vadd.f32 0.0, %v1353
        %v1355 = vpop.f32.mrb[0].mxu0
        %1356 = vmatprep.mubr.f32.mxu0 0.0
        %1357 = vmatmul.mubr.f32.gmra.mrb[0].mxu0 %v1217
        %v1358 = vpop.f32.mrb[0].mxu0
        %v1359 = vadd.f32 0.0, %v1358
        %v1360 = vpop.f32.mrb[0].mxu0
        %1361 = vmatprep.mubr.f32.mxu0 0.0
        %1362 = vmatmul.mubr.f32.gmra.mrb[0].mxu0 %v1220
        %v1363 = vpop.f32.mrb[0].mxu0
        %v1364 = vadd.f32 0.0, %v1363
        %v1365 = vpop.f32.mrb[0].mxu0
        %1366 = vdwg.mxu0
        %v1367 = vadd.f32 %v1021, %v1289
        %v1368 = vadd.f32 %v1026, %v1294
        %v1369 = vadd.f32 %v1031, %v1299
        %v1370 = vadd.f32 %v1036, %v1304
        %v1371 = vadd.f32 %v1041, %v1309
        %v1372 = vadd.f32 %v1046, %v1314
        %v1373 = vadd.f32 %v1051, %v1319
        %v1374 = vadd.f32 %v1056, %v1324
        %v1375 = vadd.f32 %v1061, %v1329
        %v1376 = vadd.f32 %v1066, %v1334
        %v1377 = vadd.f32 %v1071, %v1339
        %v1378 = vadd.f32 %v1076, %v1344
        %v1379 = vadd.f32 %v1081, %v1349
        %v1380 = vadd.f32 %v1086, %v1354
        %v1381 = vadd.f32 %v1091, %v1359
        %v1382 = vadd.f32 %v1096, %v1364
        %s1383 = scalar_lea.vmem %s499, 384 [#allocation2]
        %v1384 = vld [vmem:[%s1383] sm:$0xff]
        %v1385 = vld [vmem:[%s1383 + $0x8] sm:$0xff]
        %v1386 = vld [vmem:[%s1383 + $0x10] sm:$0xff]
        %v1387 = vld [vmem:[%s1383 + $0x18] sm:$0xff]
        %v1388 = vld [vmem:[%s1383 + $0x20] sm:$0xff]
        %v1389 = vld [vmem:[%s1383 + $0x28] sm:$0xff]
        %v1390 = vld [vmem:[%s1383 + $0x30] sm:$0xff]
        %v1391 = vld [vmem:[%s1383 + $0x38] sm:$0xff]
        %v1392 = vld [vmem:[%s1383 + $0x40] sm:$0xff]
        %v1393 = vld [vmem:[%s1383 + $0x48] sm:$0xff]
        %v1394 = vld [vmem:[%s1383 + $0x50] sm:$0xff]
        %v1395 = vld [vmem:[%s1383 + $0x58] sm:$0xff]
        %v1396 = vld [vmem:[%s1383 + $0x60] sm:$0xff]
        %v1397 = vld [vmem:[%s1383 + $0x68] sm:$0xff]
        %v1398 = vld [vmem:[%s1383 + $0x70] sm:$0xff]
        %v1399 = vld [vmem:[%s1383 + $0x78] sm:$0xff]
        %v1400 = vlaneseq
        %v1401 = vshrl.u32 %v1400, 7
        %v1402 = vsub.s32 3, %v1401
        %v1403 = vrot.slane %v549, %v1402
        %v1404 = vmul.f32 %v1384, %v1403
        %v1405 = vmul.f32 %v1385, %v1403
        %v1406 = vmul.f32 %v1386, %v1403
        %v1407 = vmul.f32 %v1387, %v1403
        %v1408 = vmul.f32 %v1388, %v1403
        %v1409 = vmul.f32 %v1389, %v1403
        %v1410 = vmul.f32 %v1390, %v1403
        %v1411 = vmul.f32 %v1391, %v1403
        %v1412 = vmul.f32 %v1392, %v1403
        %v1413 = vmul.f32 %v1393, %v1403
        %v1414 = vmul.f32 %v1394, %v1403
        %v1415 = vmul.f32 %v1395, %v1403
        %v1416 = vmul.f32 %v1396, %v1403
        %v1417 = vmul.f32 %v1397, %v1403
        %v1418 = vmul.f32 %v1398, %v1403
        %v1419 = vmul.f32 %v1399, %v1403
        %v1420 = vlaneseq
        %v1421 = vshrl.u32 %v1420, 7
        %v1422 = vsub.s32 7, %v1421
        %v1423 = vrot.slane %v549, %v1422
        %v1424 = vadd.f32 %v1404, %v1423
        %v1425 = vadd.f32 %v1405, %v1423
        %v1426 = vadd.f32 %v1406, %v1423
        %v1427 = vadd.f32 %v1407, %v1423
        %v1428 = vadd.f32 %v1408, %v1423
        %v1429 = vadd.f32 %v1409, %v1423
        %v1430 = vadd.f32 %v1410, %v1423
        %v1431 = vadd.f32 %v1411, %v1423
        %v1432 = vadd.f32 %v1412, %v1423
        %v1433 = vadd.f32 %v1413, %v1423
        %v1434 = vadd.f32 %v1414, %v1423
        %v1435 = vadd.f32 %v1415, %v1423
        %v1436 = vadd.f32 %v1416, %v1423
        %v1437 = vadd.f32 %v1417, %v1423
        %v1438 = vadd.f32 %v1418, %v1423
        %v1439 = vadd.f32 %v1419, %v1423
        %v1440 = vmax.f32 %v1424, 0.0
        %v1441 = vmax.f32 %v1425, 0.0
        %v1442 = vmax.f32 %v1426, 0.0
        %v1443 = vmax.f32 %v1427, 0.0
        %v1444 = vmax.f32 %v1428, 0.0
        %v1445 = vmax.f32 %v1429, 0.0
        %v1446 = vmax.f32 %v1430, 0.0
        %v1447 = vmax.f32 %v1431, 0.0
        %v1448 = vmax.f32 %v1432, 0.0
        %v1449 = vmax.f32 %v1433, 0.0
        %v1450 = vmax.f32 %v1434, 0.0
        %v1451 = vmax.f32 %v1435, 0.0
        %v1452 = vmax.f32 %v1436, 0.0
        %v1453 = vmax.f32 %v1437, 0.0
        %v1454 = vmax.f32 %v1438, 0.0
        %v1455 = vmax.f32 %v1439, 0.0
        %s1456 = scalar_lea.vmem %s3, 24
        %v1457 = vld [vmem:[%s1456] sm:$0xff]
        %v1459 = vsel %vm712, %v1440, 0
        %v1462 = vsel %vm712, %v1441, 0
        %v1465 = vsel %vm712, %v1442, 0
        %v1468 = vsel %vm712, %v1443, 0
        %v1471 = vsel %vm712, %v1444, 0
        %v1474 = vsel %vm712, %v1445, 0
        %v1477 = vsel %vm712, %v1446, 0
        %v1480 = vsel %vm712, %v1447, 0
        %v1483 = vsel %vm712, %v1448, 0
        %v1486 = vsel %vm712, %v1449, 0
        %v1489 = vsel %vm712, %v1450, 0
        %v1492 = vsel %vm712, %v1451, 0
        %v1495 = vsel %vm712, %v1452, 0
        %v1498 = vsel %vm712, %v1453, 0
        %v1501 = vsel %vm712, %v1454, 0
        %v1504 = vsel %vm712, %v1455, 0
        %1506 = vmatprep.subr.mxu0 0.0
        %1507 = vmatpush1.msra.mxu0 %v1457
        %1508 = vmatprep.subr.mxu0 0.0
        %1509 = vmatpush1.msra.mxu0 0.0
        %1510 = vmatprep.subr.mxu0 0.0
        %1511 = vmatpush1.msra.mxu0 0.0
        %1512 = vmatprep.subr.mxu0 0.0
        %1513 = vmatpush1.msra.mxu0 0.0
        %1514 = vmatprep.subr.mxu0 0.0
        %1515 = vmatpush1.msra.mxu0 0.0
        %1516 = vmatprep.subr.mxu0 0.0
        %1517 = vmatpush1.msra.mxu0 0.0
        %1518 = vmatprep.subr.mxu0 0.0
        %1519 = vmatpush1.msra.mxu0 0.0
        %1520 = vmatprep.subr.mxu0 0.0
        %1521 = vmatpush1.msra.mxu0 0.0
        %1522 = vmatprep.subr.mxu0 0.0
        %1523 = vmatpush1.msra.mxu0 0.0
        %1524 = vmatprep.subr.mxu0 0.0
        %1525 = vmatpush1.msra.mxu0 0.0
        %1526 = vmatprep.subr.mxu0 0.0
        %1527 = vmatpush1.msra.mxu0 0.0
        %1528 = vmatprep.subr.mxu0 0.0
        %1529 = vmatpush1.msra.mxu0 0.0
        %1530 = vmatprep.subr.mxu0 0.0
        %1531 = vmatpush1.msra.mxu0 0.0
        %1532 = vmatprep.subr.mxu0 0.0
        %1533 = vmatpush1.msra.mxu0 0.0
        %1534 = vmatprep.subr.mxu0 0.0
        %1535 = vmatpush1.msra.mxu0 0.0
        %1536 = vmatprep.subr.mxu0 0.0
        %1537 = vmatpush1.msra.mxu0 0.0
        %1538 = vmatprep.subr.mxu0 0.0
        %1539 = vmatpush1.msra.mxu0 0.0
        %1540 = vmatprep.subr.mxu0 0.0
        %1541 = vmatpush1.msra.mxu0 0.0
        %1542 = vmatprep.subr.mxu0 0.0
        %1543 = vmatpush1.msra.mxu0 0.0
        %1544 = vmatprep.subr.mxu0 0.0
        %1545 = vmatpush1.msra.mxu0 0.0
        %1546 = vmatprep.subr.mxu0 0.0
        %1547 = vmatpush1.msra.mxu0 0.0
        %1548 = vmatprep.subr.mxu0 0.0
        %1549 = vmatpush1.msra.mxu0 0.0
        %1550 = vmatprep.subr.mxu0 0.0
        %1551 = vmatpush1.msra.mxu0 0.0
        %1552 = vmatprep.subr.mxu0 0.0
        %1553 = vmatpush1.msra.mxu0 0.0
        %1554 = vmatprep.subr.mxu0 0.0
        %1555 = vmatpush1.msra.mxu0 0.0
        %1556 = vmatprep.subr.mxu0 0.0
        %1557 = vmatpush1.msra.mxu0 0.0
        %1558 = vmatprep.subr.mxu0 0.0
        %1559 = vmatpush1.msra.mxu0 0.0
        %1560 = vmatprep.subr.mxu0 0.0
        %1561 = vmatpush1.msra.mxu0 0.0
        %1562 = vmatprep.subr.mxu0 0.0
        %1563 = vmatpush1.msra.mxu0 0.0
        %1564 = vmatprep.subr.mxu0 0.0
        %1565 = vmatpush1.msra.mxu0 0.0
        %1566 = vmatprep.subr.mxu0 0.0
        %1567 = vmatpush1.msra.mxu0 0.0
        %1568 = vmatprep.subr.mxu0 0.0
        %1569 = vmatpush1.msra.mxu0 0.0
        %1570 = vmatprep.mubr.f32.mxu0 0.0
        %1571 = vmatmul.mubr.f32.gmra.mrb[0].mxu0 %v1459
        %v1572 = vpop.f32.mrb[0].mxu0
        %v1573 = vadd.f32 0.0, %v1572
        %v1574 = vpop.f32.mrb[0].mxu0
        %1575 = vmatprep.mubr.f32.mxu0 0.0
        %1576 = vmatmul.mubr.f32.gmra.mrb[0].mxu0 %v1462
        %v1577 = vpop.f32.mrb[0].mxu0
        %v1578 = vadd.f32 0.0, %v1577
        %v1579 = vpop.f32.mrb[0].mxu0
        %1580 = vmatprep.mubr.f32.mxu0 0.0
        %1581 = vmatmul.mubr.f32.gmra.mrb[0].mxu0 %v1465
        %v1582 = vpop.f32.mrb[0].mxu0
        %v1583 = vadd.f32 0.0, %v1582
        %v1584 = vpop.f32.mrb[0].mxu0
        %1585 = vmatprep.mubr.f32.mxu0 0.0
        %1586 = vmatmul.mubr.f32.gmra.mrb[0].mxu0 %v1468
        %v1587 = vpop.f32.mrb[0].mxu0
        %v1588 = vadd.f32 0.0, %v1587
        %v1589 = vpop.f32.mrb[0].mxu0
        %1590 = vmatprep.mubr.f32.mxu0 0.0
        %1591 = vmatmul.mubr.f32.gmra.mrb[0].mxu0 %v1471
        %v1592 = vpop.f32.mrb[0].mxu0
        %v1593 = vadd.f32 0.0, %v1592
        %v1594 = vpop.f32.mrb[0].mxu0
        %1595 = vmatprep.mubr.f32.mxu0 0.0
        %1596 = vmatmul.mubr.f32.gmra.mrb[0].mxu0 %v1474
        %v1597 = vpop.f32.mrb[0].mxu0
        %v1598 = vadd.f32 0.0, %v1597
        %v1599 = vpop.f32.mrb[0].mxu0
        %1600 = vmatprep.mubr.f32.mxu0 0.0
        %1601 = vmatmul.mubr.f32.gmra.mrb[0].mxu0 %v1477
        %v1602 = vpop.f32.mrb[0].mxu0
        %v1603 = vadd.f32 0.0, %v1602
        %v1604 = vpop.f32.mrb[0].mxu0
        %1605 = vmatprep.mubr.f32.mxu0 0.0
        %1606 = vmatmul.mubr.f32.gmra.mrb[0].mxu0 %v1480
        %v1607 = vpop.f32.mrb[0].mxu0
        %v1608 = vadd.f32 0.0, %v1607
        %v1609 = vpop.f32.mrb[0].mxu0
        %1610 = vmatprep.mubr.f32.mxu0 0.0
        %1611 = vmatmul.mubr.f32.gmra.mrb[0].mxu0 %v1483
        %v1612 = vpop.f32.mrb[0].mxu0
        %v1613 = vadd.f32 0.0, %v1612
        %v1614 = vpop.f32.mrb[0].mxu0
        %1615 = vmatprep.mubr.f32.mxu0 0.0
        %1616 = vmatmul.mubr.f32.gmra.mrb[0].mxu0 %v1486
        %v1617 = vpop.f32.mrb[0].mxu0
        %v1618 = vadd.f32 0.0, %v1617
        %v1619 = vpop.f32.mrb[0].mxu0
        %1620 = vmatprep.mubr.f32.mxu0 0.0
        %1621 = vmatmul.mubr.f32.gmra.mrb[0].mxu0 %v1489
        %v1622 = vpop.f32.mrb[0].mxu0
        %v1623 = vadd.f32 0.0, %v1622
        %v1624 = vpop.f32.mrb[0].mxu0
        %1625 = vmatprep.mubr.f32.mxu0 0.0
        %1626 = vmatmul.mubr.f32.gmra.mrb[0].mxu0 %v1492
        %v1627 = vpop.f32.mrb[0].mxu0
        %v1628 = vadd.f32 0.0, %v1627
        %v1629 = vpop.f32.mrb[0].mxu0
        %1630 = vmatprep.mubr.f32.mxu0 0.0
        %1631 = vmatmul.mubr.f32.gmra.mrb[0].mxu0 %v1495
        %v1632 = vpop.f32.mrb[0].mxu0
        %v1633 = vadd.f32 0.0, %v1632
        %v1634 = vpop.f32.mrb[0].mxu0
        %1635 = vmatprep.mubr.f32.mxu0 0.0
        %1636 = vmatmul.mubr.f32.gmra.mrb[0].mxu0 %v1498
        %v1637 = vpop.f32.mrb[0].mxu0
        %v1638 = vadd.f32 0.0, %v1637
        %v1639 = vpop.f32.mrb[0].mxu0
        %1640 = vmatprep.mubr.f32.mxu0 0.0
        %1641 = vmatmul.mubr.f32.gmra.mrb[0].mxu0 %v1501
        %v1642 = vpop.f32.mrb[0].mxu0
        %v1643 = vadd.f32 0.0, %v1642
        %v1644 = vpop.f32.mrb[0].mxu0
        %1645 = vmatprep.mubr.f32.mxu0 0.0
        %1646 = vmatmul.mubr.f32.gmra.mrb[0].mxu0 %v1504
        %v1647 = vpop.f32.mrb[0].mxu0
        %v1648 = vadd.f32 0.0, %v1647
        %v1649 = vpop.f32.mrb[0].mxu0
        %1650 = vdwg.mxu0
        %v1651 = vadd.f32 %v1367, %v1573
        %v1652 = vadd.f32 %v1368, %v1578
        %v1653 = vadd.f32 %v1369, %v1583
        %v1654 = vadd.f32 %v1370, %v1588
        %v1655 = vadd.f32 %v1371, %v1593
        %v1656 = vadd.f32 %v1372, %v1598
        %v1657 = vadd.f32 %v1373, %v1603
        %v1658 = vadd.f32 %v1374, %v1608
        %v1659 = vadd.f32 %v1375, %v1613
        %v1660 = vadd.f32 %v1376, %v1618
        %v1661 = vadd.f32 %v1377, %v1623
        %v1662 = vadd.f32 %v1378, %v1628
        %v1663 = vadd.f32 %v1379, %v1633
        %v1664 = vadd.f32 %v1380, %v1638
        %v1665 = vadd.f32 %v1381, %v1643
        %v1666 = vadd.f32 %v1382, %v1648
        %v1667 = vadd.f32 %v1651, %v563
        %v1668 = vadd.f32 %v1652, %v563
        %v1669 = vadd.f32 %v1653, %v563
        %v1670 = vadd.f32 %v1654, %v563
        %v1671 = vadd.f32 %v1655, %v563
        %v1672 = vadd.f32 %v1656, %v563
        %v1673 = vadd.f32 %v1657, %v563
        %v1674 = vadd.f32 %v1658, %v563
        %v1675 = vadd.f32 %v1659, %v563
        %v1676 = vadd.f32 %v1660, %v563
        %v1677 = vadd.f32 %v1661, %v563
        %v1678 = vadd.f32 %v1662, %v563
        %v1679 = vadd.f32 %v1663, %v563
        %v1680 = vadd.f32 %v1664, %v563
        %v1681 = vadd.f32 %v1665, %v563
        %v1682 = vadd.f32 %v1666, %v563
        %1683 = vst.msk [vmem:[%s539] sm:$0xff] %vm712, %v1667
        %1684 = vst.msk [vmem:[%s539 + $0x8] sm:$0xff] %vm712, %v1668
        %1685 = vst.msk [vmem:[%s539 + $0x10] sm:$0xff] %vm712, %v1669
        %1686 = vst.msk [vmem:[%s539 + $0x18] sm:$0xff] %vm712, %v1670
        %1687 = vst.msk [vmem:[%s539 + $0x20] sm:$0xff] %vm712, %v1671
        %1688 = vst.msk [vmem:[%s539 + $0x28] sm:$0xff] %vm712, %v1672
        %1689 = vst.msk [vmem:[%s539 + $0x30] sm:$0xff] %vm712, %v1673
        %1690 = vst.msk [vmem:[%s539 + $0x38] sm:$0xff] %vm712, %v1674
        %1691 = vst.msk [vmem:[%s539 + $0x40] sm:$0xff] %vm712, %v1675
        %1692 = vst.msk [vmem:[%s539 + $0x48] sm:$0xff] %vm712, %v1676
        %1693 = vst.msk [vmem:[%s539 + $0x50] sm:$0xff] %vm712, %v1677
        %1694 = vst.msk [vmem:[%s539 + $0x58] sm:$0xff] %vm712, %v1678
        %1695 = vst.msk [vmem:[%s539 + $0x60] sm:$0xff] %vm712, %v1679
        %1696 = vst.msk [vmem:[%s539 + $0x68] sm:$0xff] %vm712, %v1680
        %1697 = vst.msk [vmem:[%s539 + $0x70] sm:$0xff] %vm712, %v1681
        %1698 = vst.msk [vmem:[%s539 + $0x78] sm:$0xff] %vm712, %v1682
        %v1699 = vld [vmem:[%s5] sm:$0x1]
        %v1700 = vsel %vm712, %v1667, 0.0
        %v1701 = vsel %vm712, %v1668, 0.0
        %v1702 = vadd.f32 %v1700, %v1701
        %v1703 = vsel %vm712, %v1669, 0.0
        %v1704 = vadd.f32 %v1702, %v1703
        %v1705 = vsel %vm712, %v1670, 0.0
        %v1706 = vadd.f32 %v1704, %v1705
        %v1707 = vsel %vm712, %v1671, 0.0
        %v1708 = vadd.f32 %v1706, %v1707
        %v1709 = vsel %vm712, %v1672, 0.0
        %v1710 = vadd.f32 %v1708, %v1709
        %v1711 = vsel %vm712, %v1673, 0.0
        %v1712 = vadd.f32 %v1710, %v1711
        %v1713 = vsel %vm712, %v1674, 0.0
        %v1714 = vadd.f32 %v1712, %v1713
        %v1715 = vsel %vm712, %v1675, 0.0
        %v1716 = vadd.f32 %v1714, %v1715
        %v1717 = vsel %vm712, %v1676, 0.0
        %v1718 = vadd.f32 %v1716, %v1717
        %v1719 = vsel %vm712, %v1677, 0.0
        %v1720 = vadd.f32 %v1718, %v1719
        %v1721 = vsel %vm712, %v1678, 0.0
        %v1722 = vadd.f32 %v1720, %v1721
        %v1723 = vsel %vm712, %v1679, 0.0
        %v1724 = vadd.f32 %v1722, %v1723
        %v1725 = vsel %vm712, %v1680, 0.0
        %v1726 = vadd.f32 %v1724, %v1725
        %v1727 = vsel %vm712, %v1681, 0.0
        %v1728 = vadd.f32 %v1726, %v1727
        %v1729 = vsel %vm712, %v1682, 0.0
        %v1730 = vadd.f32 %v1728, %v1729
        %v1731 = vrot.slane %v1730, 4
        %v1732 = vadd.f32 %v1730, %v1731
        %v1733 = vrot.slane %v1732, 2
        %v1734 = vadd.f32 %v1732, %v1733
        %v1735 = vrot.slane %v1734, 1
        %v1736 = vadd.f32 %v1734, %v1735
        %v1737 = vadd.f32 %v1699, %v1736
        %vm1738 = vcmask 57344
        %1739 = vst.msk [vmem:[%s5] sm:$0x1] %vm1738, %v1737
        %v1740 = vld [vmem:[%s5 + $0x1] sm:$0x1]
        %v1741 = vmul.f32 %v1667, %v1667
        %v1742 = vmul.f32 %v1668, %v1668
        %v1743 = vmul.f32 %v1669, %v1669
        %v1744 = vmul.f32 %v1670, %v1670
        %v1745 = vmul.f32 %v1671, %v1671
        %v1746 = vmul.f32 %v1672, %v1672
        %v1747 = vmul.f32 %v1673, %v1673
        %v1748 = vmul.f32 %v1674, %v1674
        %v1749 = vmul.f32 %v1675, %v1675
        %v1750 = vmul.f32 %v1676, %v1676
        %v1751 = vmul.f32 %v1677, %v1677
        %v1752 = vmul.f32 %v1678, %v1678
        %v1753 = vmul.f32 %v1679, %v1679
        %v1754 = vmul.f32 %v1680, %v1680
        %v1755 = vmul.f32 %v1681, %v1681
        %v1756 = vmul.f32 %v1682, %v1682
        %v1757 = vsel %vm712, %v1741, 0.0
        %v1758 = vsel %vm712, %v1742, 0.0
        %v1759 = vadd.f32 %v1757, %v1758
        %v1760 = vsel %vm712, %v1743, 0.0
        %v1761 = vadd.f32 %v1759, %v1760
        %v1762 = vsel %vm712, %v1744, 0.0
        %v1763 = vadd.f32 %v1761, %v1762
        %v1764 = vsel %vm712, %v1745, 0.0
        %v1765 = vadd.f32 %v1763, %v1764
        %v1766 = vsel %vm712, %v1746, 0.0
        %v1767 = vadd.f32 %v1765, %v1766
        %v1768 = vsel %vm712, %v1747, 0.0
        %v1769 = vadd.f32 %v1767, %v1768
        %v1770 = vsel %vm712, %v1748, 0.0
        %v1771 = vadd.f32 %v1769, %v1770
        %v1772 = vsel %vm712, %v1749, 0.0
        %v1773 = vadd.f32 %v1771, %v1772
        %v1774 = vsel %vm712, %v1750, 0.0
        %v1775 = vadd.f32 %v1773, %v1774
        %v1776 = vsel %vm712, %v1751, 0.0
        %v1777 = vadd.f32 %v1775, %v1776
        %v1778 = vsel %vm712, %v1752, 0.0
        %v1779 = vadd.f32 %v1777, %v1778
        %v1780 = vsel %vm712, %v1753, 0.0
        %v1781 = vadd.f32 %v1779, %v1780
        %v1782 = vsel %vm712, %v1754, 0.0
        %v1783 = vadd.f32 %v1781, %v1782
        %v1784 = vsel %vm712, %v1755, 0.0
        %v1785 = vadd.f32 %v1783, %v1784
        %v1786 = vsel %vm712, %v1756, 0.0
        %v1787 = vadd.f32 %v1785, %v1786
        %v1788 = vrot.slane %v1787, 4
        %v1789 = vadd.f32 %v1787, %v1788
        %v1790 = vrot.slane %v1789, 2
        %v1791 = vadd.f32 %v1789, %v1790
        %v1792 = vrot.slane %v1791, 1
        %v1793 = vadd.f32 %v1791, %v1792
        %v1794 = vadd.f32 %v1740, %v1793
        %1795 = vst.msk [vmem:[%s5 + $0x1] sm:$0x1] %vm1738, %v1794
        %s1796 = smul.u32 8, %s22
        %p1797 = scmp.lt.s32.totalorder %s21, 1
        %s1798 = scalar_select %p1797, %s21, 1
        %p1799 = scmp.lt.s32.totalorder %s1796, 15
        %s1800 = scalar_select %p1799, %s1796, 15
        %s1801 = smul.addr %s1800, 2
        %s1802 = smul.addr %s1798, 32
        %s1803 = sadd.s32 %s1801, %s1802
        %s1804 = smul.addr %s1803, 8
        %s1805 = scalar_lea.vmem %s4, %s1804
        // Predicated region
        $region79: #{aspp_forward.4} parent=69 // pred_check
          %p1806 = pneg %p140
        $region80: #{aspp_forward.4} parent=69 // pred_check_branch
          %1808 = sbr.rel (%p1806) target = $region82
        $region81: #{aspp_forward.4} parent=69 // pred_region
          %s1809 = smul.u32 8, %s22
        $region82: #{aspp_forward.4} parent=69 // pred_fallthru
          _
        // Predicated region
        $region83: #{aspp_forward.4} parent=69 // pred_check
          %p1810 = pneg %p161
        $region84: #{aspp_forward.4} parent=69 // pred_check_branch
          %1812 = sbr.rel (%p1810) target = $region86
        $region85: #{aspp_forward.4} parent=69 // pred_region
          _
        $region86: #{aspp_forward.4} parent=69 // pred_fallthru
          _
        // Predicated region
        $region87: #{aspp_forward.4} parent=69 // pred_check
          %p1813 = pneg %p161
        $region88: #{aspp_forward.4} parent=69 // pred_check_branch
          %1815 = sbr.rel (%p1813) target = $region90
        $region89: #{aspp_forward.4} parent=69 // pred_region
          _
        $region90: #{aspp_forward.4} parent=69 // pred_fallthru
          _
      $region70: #{aspp_forward.4} parent=5 // pred_fallthru
        _
      %p1816 = scmp.le.s32.totalorder 2, %s12
      // Predicated region
      $region91: #{aspp_forward.4} parent=5 // pred_check
        %p1817 = pneg %p1816
      $region92: #{aspp_forward.4} parent=5 // pred_check_branch
        %1819 = sbr.rel (%p1817) target = $region94
      $region93: #{aspp_forward.4} parent=5 // pred_region
        %s1820 = ssub.s32 %s12, 2
        // Predicated region
        $region95: #{aspp_forward.4} parent=93 // pred_check
          %p1821 = pneg %p146
        $region96: #{aspp_forward.4} parent=93 // pred_check_branch
          %1823 = sbr.rel (%p1821) target = $region98
        $region97: #{aspp_forward.4} parent=93 // pred_region
          %s1824 = smul.u32 8, %s24
          %p1825 = scmp.lt.s32.totalorder %s23, 1
          %s1826 = scalar_select %p1825, %s23, 1
          %p1827 = scmp.lt.s32.totalorder %s1824, 15
          %s1828 = scalar_select %p1827, %s1824, 15
          %s1829 = smul.addr %s1828, 2
          %s1830 = smul.addr %s1826, 32
          %s1831 = sadd.s32 %s1829, %s1830
          %s1832 = smul.addr %s1831, 8
          %s1833 = scalar_lea.vmem %s4, %s1832
        $region98: #{aspp_forward.4} parent=93 // pred_fallthru
          _
      $region94: #{aspp_forward.4} parent=5 // pred_fallthru
        _
    $region6: #{aspp_forward.4} parent=1 // loop_footer
      %s16 = sadd.s32 1, %s12
    $region7: #{aspp_forward.4} parent=1 // loop_footer_branch
      %11 = sbr.rel target = $region3
    $region8: #{aspp_forward.4} parent=1 // loop_exit
      _

// kernel: aspp_forward.3
$region0: #{aspp_forward.3}
  #allocation0 [shape = 'u32[]', space=smem, size = 0x4, offset = 0x4, fixed_abs, tag = 'smem constant byte address 0x4 - core index']
  #allocation1 [shape = 'u32[144,128]{1,0:T(1,128)}', space=vmem, size = 0x12000, scoped, tag = 'internal scratch']
  %s0 = inlined_call_operand.vmem [shape: f32[2,52,52,4], index: 0, kind: input, shape index: {}]
  %s1 = inlined_call_operand.vmem [shape: f32[1,4,8], index: 1, kind: input, shape index: {}]
  %s2 = inlined_call_operand.vmem [shape: f32[9,4,8], index: 2, kind: input, shape index: {}]
  %s3 = inlined_call_operand.vmem [shape: f32[9,4,8], index: 3, kind: input, shape index: {}]
  %s4 = inlined_call_operand.vmem [shape: f32[9,4,8], index: 4, kind: input, shape index: {}]
  %s5 = inlined_call_operand.vmem [shape: f32[4,8], index: 5, kind: input, shape index: {}]
  %s6 = inlined_call_operand.vmem [shape: f32[4,2,16,16,8], index: 6, kind: output, shape index: {0}]
  %s7 = inlined_call_operand.vmem [shape: f32[8,8], index: 7, kind: output, shape index: {1}]
  %8 = xla_tuple %s6, %s7
  %s9 = sld [smem:[#allocation0]]
  $region103: #{aspp_forward.3} parent=0
    _
  %s11 = ssub.s32 1, %s9
  %s12 = scalar_select 0, %s11, %s9
  $region1: #{aspp_forward.3} parent=0
    #allocation2 [shape = 'u8[524288]{0}', space=vmem, size = 0x80000, scoped, tag = 'output window, operand 0']
    loop: start=0, step=1, limit=6
    $region2: #{aspp_forward.3} parent=1 // loop_pre_header
      _
    $region3: #{aspp_forward.3} parent=1 // loop_header
      %s14 = sphi 0, %s18
      %p15 = scmp.ge.s32.totalorder %s14, 6
      %s21 = sphi 0, %s33
      %s22 = sphi 0, %s29
      %s23 = sphi 0, %s21
      %s24 = sphi 0, %s22
      %s25 = sphi 0, %s23
      %s26 = sphi 0, %s24
      %s36 = sphi 0, %s38
      %s39 = sphi 0, %s36
      %s40 = sphi 0, %s39
      %s56 = sphi 0, %s40
      %s60 = sphi 0, %s60
      %s62 = sphi 0, %s60
      %s63 = sphi 0, %s62
      %s77 = sphi 0, %s63
      %s81 = sphi 0, %s81
      %s83 = sphi 0, %s81
      %s84 = sphi 0, %s83
      %s98 = sphi 0, %s84
      %s102 = sphi 0, %s102
      %s104 = sphi 0, %s102
      %s105 = sphi 0, %s104
      %s119 = sphi 0, %s105
      %s123 = sphi 0, %s123
      %s125 = sphi 0, %s123
      %s126 = sphi 0, %s125
      %s140 = sphi 0, %s126
      %s144 = sphi 0, %s144
      %s146 = sphi 0, %s144
      %s147 = sphi 0, %s146
      %s161 = sphi 0, %s147
      %s169 = sphi 0, %s171
      %s172 = sphi 0, %s169
      %s173 = sphi 0, %s172
      %s189 = sphi 0, %s173
      %s193 = sphi 0, %s193
      %s195 = sphi 0, %s193
      %s196 = sphi 0, %s195
      %s210 = sphi 0, %s196
    $region4: #{aspp_forward.3} parent=1 // loop_header_branch
      %17 = sbr.rel (%p15) target = $region8
    $region5: #{aspp_forward.3} parent=1 // loop_body
      %s19 = ssub.s32 %s14, 1
      %s20 = ssub.s32 %s14, 2
      %s27 = sadd.s32 1, %s22
      %p28 = scmp.ge.s32.totalorder %s27, 2
      %s29 = scalar_select %p28, 0, %s27
      %s30 = sadd.s32 1, %s21
      %s31 = scalar_select %p28, %s30, %s21
      %p32 = scmp.ge.s32.totalorder %s31, 2
      %s33 = scalar_select %p32, 0, %s31
      %s34 = ssub.s32 %s21, %s33
      %p35 = scmp.eq.s32.totalorder %s34, 0
      %s37 = sadd.s32 %s36, 1
      %s38 = scalar_select %p35, %s36, %s37
      %p41 = pneg %p35
      %p42 = scmp.eq.s32.totalorder %s14, 3
      %p43 = por %p41, %p42
      %p44 = scmp.ne.s32.totalorder %s36, %s39
      %p45 = scmp.eq.s32.totalorder %s14, 0
      %p46 = por %p44, %p45
      %p47 = scmp.ne.s32.totalorder %s36, %s39
      %p48 = scmp.eq.s32.totalorder %s19, 3
      %p49 = por %p47, %p48
      %p50 = scmp.ne.s32.totalorder %s39, %s40
      %p51 = scmp.eq.s32.totalorder %s19, 0
      %p52 = por %p50, %p51
      %p53 = scmp.ne.s32.totalorder %s39, %s40
      %p54 = scmp.eq.s32.totalorder %s20, 3
      %p55 = por %p53, %p54
      %p57 = scmp.ne.s32.totalorder %s40, %s56
      %p58 = scmp.eq.s32.totalorder %s20, 0
      %p59 = por %p57, %p58
      %s61 = sadd.s32 %s60, 1
      %p64 = scmp.eq.s32.totalorder %s14, 3
      %p65 = scmp.ne.s32.totalorder %s60, %s62
      %p66 = scmp.eq.s32.totalorder %s14, 0
      %p67 = por %p65, %p66
      %p68 = scmp.ne.s32.totalorder %s60, %s62
      %p69 = scmp.eq.s32.totalorder %s19, 3
      %p70 = por %p68, %p69
      %p71 = scmp.ne.s32.totalorder %s62, %s63
      %p72 = scmp.eq.s32.totalorder %s19, 0
      %p73 = por %p71, %p72
      %p74 = scmp.ne.s32.totalorder %s62, %s63
      %p75 = scmp.eq.s32.totalorder %s20, 3
      %p76 = por %p74, %p75
      %p78 = scmp.ne.s32.totalorder %s63, %s77
      %p79 = scmp.eq.s32.totalorder %s20, 0
      %p80 = por %p78, %p79
      %s82 = sadd.s32 %s81, 1
      %p85 = scmp.eq.s32.totalorder %s14, 3
      %p86 = scmp.ne.s32.totalorder %s81, %s83
      %p87 = scmp.eq.s32.totalorder %s14, 0
      %p88 = por %p86, %p87
      %p89 = scmp.ne.s32.totalorder %s81, %s83
      %p90 = scmp.eq.s32.totalorder %s19, 3
      %p91 = por %p89, %p90
      %p92 = scmp.ne.s32.totalorder %s83, %s84
      %p93 = scmp.eq.s32.totalorder %s19, 0
      %p94 = por %p92, %p93
      %p95 = scmp.ne.s32.totalorder %s83, %s84
      %p96 = scmp.eq.s32.totalorder %s20, 3
      %p97 = por %p95, %p96
      %p99 = scmp.ne.s32.totalorder %s84, %s98
      %p100 = scmp.eq.s32.totalorder %s20, 0
      %p101 = por %p99, %p100
      %s103 = sadd.s32 %s102, 1
      %p106 = scmp.eq.s32.totalorder %s14, 3
      %p107 = scmp.ne.s32.totalorder %s102, %s104
      %p108 = scmp.eq.s32.totalorder %s14, 0
      %p109 = por %p107, %p108
      %p110 = scmp.ne.s32.totalorder %s102, %s104
      %p111 = scmp.eq.s32.totalorder %s19, 3
      %p112 = por %p110, %p111
      %p113 = scmp.ne.s32.totalorder %s104, %s105
      %p114 = scmp.eq.s32.totalorder %s19, 0
      %p115 = por %p113, %p114
      %p116 = scmp.ne.s32.totalorder %s104, %s105
      %p117 = scmp.eq.s32.totalorder %s20, 3
      %p118 = por %p116, %p117
      %p120 = scmp.ne.s32.totalorder %s105, %s119
      %p121 = scmp.eq.s32.totalorder %s20, 0
      %p122 = por %p120, %p121
      %s124 = sadd.s32 %s123, 1
      %p127 = scmp.eq.s32.totalorder %s14, 3
      %p128 = scmp.ne.s32.totalorder %s123, %s125
      %p129 = scmp.eq.s32.totalorder %s14, 0
      %p130 = por %p128, %p129
      %p131 = scmp.ne.s32.totalorder %s123, %s125
      %p132 = scmp.eq.s32.totalorder %s19, 3
      %p133 = por %p131, %p132
      %p134 = scmp.ne.s32.totalorder %s125, %s126
      %p135 = scmp.eq.s32.totalorder %s19, 0
      %p136 = por %p134, %p135
      %p137 = scmp.ne.s32.totalorder %s125, %s126
      %p138 = scmp.eq.s32.totalorder %s20, 3
      %p139 = por %p137, %p138
      %p141 = scmp.ne.s32.totalorder %s126, %s140
      %p142 = scmp.eq.s32.totalorder %s20, 0
      %p143 = por %p141, %p142
      %s145 = sadd.s32 %s144, 1
      %p148 = scmp.eq.s32.totalorder %s14, 3
      %p149 = scmp.ne.s32.totalorder %s144, %s146
      %p150 = scmp.eq.s32.totalorder %s14, 0
      %p151 = por %p149, %p150
      %p152 = scmp.ne.s32.totalorder %s144, %s146
      %p153 = scmp.eq.s32.totalorder %s19, 3
      %p154 = por %p152, %p153
      %p155 = scmp.ne.s32.totalorder %s146, %s147
      %p156 = scmp.eq.s32.totalorder %s19, 0
      %p157 = por %p155, %p156
      %p158 = scmp.ne.s32.totalorder %s146, %s147
      %p159 = scmp.eq.s32.totalorder %s20, 3
      %p160 = por %p158, %p159
      %p162 = scmp.ne.s32.totalorder %s147, %s161
      %p163 = scmp.eq.s32.totalorder %s20, 0
      %p164 = por %p162, %p163
      %s165 = ssub.s32 %s21, %s33
      %s166 = ssub.s32 %s22, %s29
      %s167 = sor.u32 %s165, %s166
      %p168 = scmp.eq.s32.totalorder %s167, 0
      %s170 = sadd.s32 %s169, 1
      %s171 = scalar_select %p168, %s169, %s170
      %p174 = pneg %p168
      %p175 = scmp.eq.s32.totalorder %s14, 3
      %p176 = por %p174, %p175
      %p177 = scmp.ne.s32.totalorder %s169, %s172
      %p178 = scmp.eq.s32.totalorder %s14, 0
      %p179 = por %p177, %p178
      %p180 = scmp.ne.s32.totalorder %s169, %s172
      %p181 = scmp.eq.s32.totalorder %s19, 3
      %p182 = por %p180, %p181
      %p183 = scmp.ne.s32.totalorder %s172, %s173
      %p184 = scmp.eq.s32.totalorder %s19, 0
      %p185 = por %p183, %p184
      %p186 = scmp.ne.s32.totalorder %s172, %s173
      %p187 = scmp.eq.s32.totalorder %s20, 3
      %p188 = por %p186, %p187
      %p190 = scmp.ne.s32.totalorder %s173, %s189
      %p191 = scmp.eq.s32.totalorder %s20, 0
      %p192 = por %p190, %p191
      %s194 = sadd.s32 %s193, 1
      %p197 = scmp.eq.s32.totalorder %s14, 3
      %p198 = scmp.ne.s32.totalorder %s193, %s195
      %p199 = scmp.eq.s32.totalorder %s14, 0
      %p200 = por %p198, %p199
      %p201 = scmp.ne.s32.totalorder %s193, %s195
      %p202 = scmp.eq.s32.totalorder %s19, 3
      %p203 = por %p201, %p202
      %p204 = scmp.ne.s32.totalorder %s195, %s196
      %p205 = scmp.eq.s32.totalorder %s19, 0
      %p206 = por %p204, %p205
      %p207 = scmp.ne.s32.totalorder %s195, %s196
      %p208 = scmp.eq.s32.totalorder %s20, 3
      %p209 = por %p207, %p208
      %p211 = scmp.ne.s32.totalorder %s196, %s210
      %p212 = scmp.eq.s32.totalorder %s20, 0
      %p213 = por %p211, %p212
      %p214 = scmp.le.s32.totalorder 1, %s14
      %p215 = scmp.lt.s32.totalorder %s14, 5
      %p216 = pnand %p214, %p215
      %p217 = pneg %p216
      // Predicated region
      $region9: #{aspp_forward.3} parent=5 // pred_check
        _
      $region10: #{aspp_forward.3} parent=5 // pred_check_branch
        %219 = sbr.rel (%p216) target = $region12
      $region11: #{aspp_forward.3} parent=5 // pred_region
        %s220 = ssub.s32 %s14, 1
        // Predicated region
        $region13: #{aspp_forward.3} parent=11 // pred_check
          %p221 = pneg %p73
        $region14: #{aspp_forward.3} parent=11 // pred_check_branch
          %223 = sbr.rel (%p221) target = $region16
        $region15: #{aspp_forward.3} parent=11 // pred_region
          _
        $region16: #{aspp_forward.3} parent=11 // pred_fallthru
          _
        // Predicated region
        $region17: #{aspp_forward.3} parent=11 // pred_check
          %p224 = pneg %p94
        $region18: #{aspp_forward.3} parent=11 // pred_check_branch
          %226 = sbr.rel (%p224) target = $region20
        $region19: #{aspp_forward.3} parent=11 // pred_region
          _
        $region20: #{aspp_forward.3} parent=11 // pred_fallthru
          _
        // Predicated region
        $region21: #{aspp_forward.3} parent=11 // pred_check
          %p227 = pneg %p115
        $region22: #{aspp_forward.3} parent=11 // pred_check_branch
          %229 = sbr.rel (%p227) target = $region24
        $region23: #{aspp_forward.3} parent=11 // pred_region
          _
        $region24: #{aspp_forward.3} parent=11 // pred_fallthru
          _
        // Predicated region
        $region25: #{aspp_forward.3} parent=11 // pred_check
          %p230 = pneg %p136
        $region26: #{aspp_forward.3} parent=11 // pred_check_branch
          %232 = sbr.rel (%p230) target = $region28
        $region27: #{aspp_forward.3} parent=11 // pred_region
          _
        $region28: #{aspp_forward.3} parent=11 // pred_fallthru
          _
        // Predicated region
        $region29: #{aspp_forward.3} parent=11 // pred_check
          %p233 = pneg %p157
        $region30: #{aspp_forward.3} parent=11 // pred_check_branch
          %235 = sbr.rel (%p233) target = $region32
        $region31: #{aspp_forward.3} parent=11 // pred_region
          _
        $region32: #{aspp_forward.3} parent=11 // pred_fallthru
          _
      $region12: #{aspp_forward.3} parent=5 // pred_fallthru
        _
      %p236 = scmp.lt.s32.totalorder %s14, 4
      // Predicated region
      $region33: #{aspp_forward.3} parent=5 // pred_check
        %p237 = pneg %p236
      $region34: #{aspp_forward.3} parent=5 // pred_check_branch
        %239 = sbr.rel (%p237) target = $region36
      $region35: #{aspp_forward.3} parent=5 // pred_region
        // Predicated region
        $region37: #{aspp_forward.3} parent=35 // pred_check
          %p240 = pneg %p46
        $region38: #{aspp_forward.3} parent=35 // pred_check_branch
          %242 = sbr.rel (%p240) target = $region40
        $region39: #{aspp_forward.3} parent=35 // pred_region
          %p243 = scmp.lt.s32.totalorder %s21, 1
          %s244 = scalar_select %p243, %s21, 1
          %s245 = smul.addr %s244, 364
          %s246 = smul.addr %s245, 8
          %s247 = scalar_lea.vmem %s0, %s246
        $region40: #{aspp_forward.3} parent=35 // pred_fallthru
          _
      $region36: #{aspp_forward.3} parent=5 // pred_fallthru
        _
      %p248 = scmp.le.s32.totalorder 1, %s14
      %p249 = scmp.lt.s32.totalorder %s14, 5
      %p250 = pnand %p248, %p249
      %p251 = pneg %p250
      // Predicated region
      $region41: #{aspp_forward.3} parent=5 // pred_check
        _
      $region42: #{aspp_forward.3} parent=5 // pred_check_branch
        %253 = sbr.rel (%p250) target = $region44
      $region43: #{aspp_forward.3} parent=5 // pred_region
        %s254 = ssub.s32 %s14, 1
        %p255 = scmp.lt.s32.totalorder %s23, 1
        %s256 = scalar_select %p255, %s23, 1
        %s257 = smul.addr %s256, 364
        %s258 = smul.addr %s257, 8
        %s259 = scalar_lea.vmem %s0, %s258
        %p260 = pneg %p52
        %p261 = pneg %p49
        %p262 = pneg %p73
        %p263 = pneg %p70
        %p264 = pneg %p94
        %p265 = pneg %p91
        %p266 = pneg %p115
        %p267 = pneg %p112
        %p268 = pneg %p136
        %p269 = pneg %p133
        %p270 = pneg %p157
        %p271 = pneg %p154
        %p272 = pneg %p185
        %p273 = pneg %p182
        %s274 = sand.u32 %s172, 1
        %s275 = sand.u32 %s172, 1
        %s276 = smul.addr %s275, 512
        %s277 = scalar_lea.vmem [#allocation2], %s276
        %p278 = pneg %p206
        %p279 = pneg %p203
        %p280 = scmp.lt.s32.totalorder %s23, 1
        %s281 = scalar_select %p280, %s23, 1
        %s282 = smul.addr %s281, 364
        %s283 = smul.addr %s282, 8
        %s284 = scalar_lea.vmem %s0, %s283
        %s285 = smul.u32 8, %s24
        %p286 = scmp.eq.s32.totalorder %s23, 0
        %p287 = scmp.eq.s32.totalorder %s24, 0
        %p288 = pnand %p286, %p287
        %p289 = pneg %p288
        // Predicated region
        $region45: #{aspp_forward.3} parent=43 // pred_check
          _
        $region46: #{aspp_forward.3} parent=43 // pred_check_branch
          %291 = sbr.rel (%p288) target = $region48
        $region47: #{aspp_forward.3} parent=43 // pred_region
          %vm292 = vcmask 64512
          %293 = vst.msk [vmem:[%s7] sm:$0xff] %vm292, 0.0
        $region48: #{aspp_forward.3} parent=43 // pred_fallthru
          _
        %s294 = smul.u32 %s24, 8
        %v295 = vld [vmem:[%s5] sm:$0xf]
        %s296 = sadd.s32 %s294, 18
        %s297 = smul.u32 %s296, 56
        %s298 = scalar_lea.vmem %s284, %s297
        %v299 = vld [vmem:[%s298 + $0x12] sm:$0xff]
        %v300 = vld [vmem:[%s298 + $0x1a] sm:$0xff]
        %v301 = vld [vmem:[%s298 + $0x4a] sm:$0xff]
        %v302 = vld [vmem:[%s298 + $0x52] sm:$0xff]
        %v303 = vld [vmem:[%s298 + $0x82] sm:$0xff]
        %v304 = vld [vmem:[%s298 + $0x8a] sm:$0xff]
        %v305 = vld [vmem:[%s298 + $0xba] sm:$0xff]
        %v306 = vld [vmem:[%s298 + $0xc2] sm:$0xff]
        %v307 = vld [vmem:[%s298 + $0xf2] sm:$0xff]
        %v308 = vld [vmem:[%s298 + $0xfa] sm:$0xff]
        %v309 = vld [vmem:[%s298 + $0x12a] sm:$0xff]
        %v310 = vld [vmem:[%s298 + $0x132] sm:$0xff]
        %v311 = vld [vmem:[%s298 + $0x162] sm:$0xff]
        %v312 = vld [vmem:[%s298 + $0x16a] sm:$0xff]
        %v313 = vld [vmem:[%s298 + $0x19a] sm:$0xff]
        %v314 = vld [vmem:[%s298 + $0x1a2] sm:$0xff]
        %v315 = vld [vmem:[%s1] sm:$0xf]
        %v316 = vlaneseq
        %v317 = vshrl.u32 %v316, 7
        %v318 = vsub.s32 0, %v317
        %v319 = vrot.slane %v295, %v318
        %vm320 = vcmask 31744
        %v322 = vsel %vm320, %v299, 0
        %v325 = vsel %vm320, %v300, 0
        %v328 = vsel %vm320, %v301, 0
        %v331 = vsel %vm320, %v302, 0
        %v334 = vsel %vm320, %v303, 0
        %v337 = vsel %vm320, %v304, 0
        %v340 = vsel %vm320, %v305, 0
        %v343 = vsel %vm320, %v306, 0
        %v346 = vsel %vm320, %v307, 0
        %v349 = vsel %vm320, %v308, 0
        %v352 = vsel %vm320, %v309, 0
        %v355 = vsel %vm320, %v310, 0
        %v358 = vsel %vm320, %v311, 0
        %v361 = vsel %vm320, %v312, 0
        %v364 = vsel %vm320, %v313, 0
        %v367 = vsel %vm320, %v314, 0
        %vm369 = vcmask 1043456
        %v371 = vsel %vm369, %v315, 0
        %373 = vmatprep.subr.mxu0 0.0
        %374 = vmatpush1.msra.mxu0 %v371
        %375 = vmatprep.subr.mxu0 0.0
        %376 = vmatpush1.msra.mxu0 0.0
        %377 = vmatprep.subr.mxu0 0.0
        %378 = vmatpush1.msra.mxu0 0.0
        %379 = vmatprep.subr.mxu0 0.0
        %380 = vmatpush1.msra.mxu0 0.0
        %381 = vmatprep.subr.mxu0 0.0
        %382 = vmatpush1.msra.mxu0 0.0
        %383 = vmatprep.subr.mxu0 0.0
        %384 = vmatpush1.msra.mxu0 0.0
        %385 = vmatprep.subr.mxu0 0.0
        %386 = vmatpush1.msra.mxu0 0.0
        %387 = vmatprep.subr.mxu0 0.0
        %388 = vmatpush1.msra.mxu0 0.0
        %389 = vmatprep.subr.mxu0 0.0
        %390 = vmatpush1.msra.mxu0 0.0
        %391 = vmatprep.subr.mxu0 0.0
        %392 = vmatpush1.msra.mxu0 0.0
        %393 = vmatprep.subr.mxu0 0.0
        %394 = vmatpush1.msra.mxu0 0.0
        %395 = vmatprep.subr.mxu0 0.0
        %396 = vmatpush1.msra.mxu0 0.0
        %397 = vmatprep.subr.mxu0 0.0
        %398 = vmatpush1.msra.mxu0 0.0
        %399 = vmatprep.subr.mxu0 0.0
        %400 = vmatpush1.msra.mxu0 0.0
        %401 = vmatprep.subr.mxu0 0.0
        %402 = vmatpush1.msra.mxu0 0.0
        %403 = vmatprep.subr.mxu0 0.0
        %404 = vmatpush1.msra.mxu0 0.0
        %405 = vmatprep.subr.mxu0 0.0
        %406 = vmatpush1.msra.mxu0 0.0
        %407 = vmatprep.subr.mxu0 0.0
        %408 = vmatpush1.msra.mxu0 0.0
        %409 = vmatprep.subr.mxu0 0.0
        %410 = vmatpush1.msra.mxu0 0.0
        %411 = vmatprep.subr.mxu0 0.0
        %412 = vmatpush1.msra.mxu0 0.0
        %413 = vmatprep.subr.mxu0 0.0
        %414 = vmatpush1.msra.mxu0 0.0
        %415 = vmatprep.subr.mxu0 0.0
        %416 = vmatpush1.msra.mxu0 0.0
        %417 = vmatprep.subr.mxu0 0.0
        %418 = vmatpush1.msra.mxu0 0.0
        %419 = vmatprep.subr.mxu0 0.0
        %420 = vmatpush1.msra.mxu0 0.0
        %421 = vmatprep.subr.mxu0 0.0
        %422 = vmatpush1.msra.mxu0 0.0
        %423 = vmatprep.subr.mxu0 0.0
        %424 = vmatpush1.msra.mxu0 0.0
        %425 = vmatprep.subr.mxu0 0.0
        %426 = vmatpush1.msra.mxu0 0.0
        %427 = vmatprep.subr.mxu0 0.0
        %428 = vmatpush1.msra.mxu0 0.0
        %429 = vmatprep.subr.mxu0 0.0
        %430 = vmatpush1.msra.mxu0 0.0
        %431 = vmatprep.subr.mxu0 0.0
        %432 = vmatpush1.msra.mxu0 0.0
        %433 = vmatprep.subr.mxu0 0.0
        %434 = vmatpush1.msra.mxu0 0.0
        %435 = vmatprep.subr.mxu0 0.0
        %436 = vmatpush1.msra.mxu0 0.0
        %437 = vmatprep.mubr.f32.mxu0 0.0
        %438 = vmatmul.mubr.f32.gmra.mrb[0].mxu0 %v322
        %v439 = vpop.f32.mrb[0].mxu0
        %v440 = vadd.f32 %v319, %v439
        %v441 = vpop.f32.mrb[0].mxu0
        %442 = vmatprep.mubr.f32.mxu0 0.0
        %443 = vmatmul.mubr.f32.gmra.mrb[0].mxu0 %v325
        %v444 = vpop.f32.mrb[0].mxu0
        %v445 = vadd.f32 %v319, %v444
        %v446 = vpop.f32.mrb[0].mxu0
        %447 = vmatprep.mubr.f32.mxu0 0.0
        %448 = vmatmul.mubr.f32.gmra.mrb[0].mxu0 %v328
        %v449 = vpop.f32.mrb[0].mxu0
        %v450 = vadd.f32 %v319, %v449
        %v451 = vpop.f32.mrb[0].mxu0
        %452 = vmatprep.mubr.f32.mxu0 0.0
        %453 = vmatmul.mubr.f32.gmra.mrb[0].mxu0 %v331
        %v454 = vpop.f32.mrb[0].mxu0
        %v455 = vadd.f32 %v319, %v454
        %v456 = vpop.f32.mrb[0].mxu0
        %457 = vmatprep.mubr.f32.mxu0 0.0
        %458 = vmatmul.mubr.f32.gmra.mrb[0].mxu0 %v334
        %v459 = vpop.f32.mrb[0].mxu0
        %v460 = vadd.f32 %v319, %v459
        %v461 = vpop.f32.mrb[0].mxu0
        %462 = vmatprep.mubr.f32.mxu0 0.0
        %463 = vmatmul.mubr.f32.gmra.mrb[0].mxu0 %v337
        %v464 = vpop.f32.mrb[0].mxu0
        %v465 = vadd.f32 %v319, %v464
        %v466 = vpop.f32.mrb[0].mxu0
        %467 = vmatprep.mubr.f32.mxu0 0.0
        %468 = vmatmul.mubr.f32.gmra.mrb[0].mxu0 %v340
        %v469 = vpop.f32.mrb[0].mxu0
        %v470 = vadd.f32 %v319, %v469
        %v471 = vpop.f32.mrb[0].mxu0
        %472 = vmatprep.mubr.f32.mxu0 0.0
        %473 = vmatmul.mubr.f32.gmra.mrb[0].mxu0 %v343
        %v474 = vpop.f32.mrb[0].mxu0
        %v475 = vadd.f32 %v319, %v474
        %v476 = vpop.f32.mrb[0].mxu0
        %477 = vmatprep.mubr.f32.mxu0 0.0
        %478 = vmatmul.mubr.f32.gmra.mrb[0].mxu0 %v346
        %v479 = vpop.f32.mrb[0].mxu0
        %v480 = vadd.f32 %v319, %v479
        %v481 = vpop.f32.mrb[0].mxu0
        %482 = vmatprep.mubr.f32.mxu0 0.0
        %483 = vmatmul.mubr.f32.gmra.mrb[0].mxu0 %v349
        %v484 = vpop.f32.mrb[0].mxu0
        %v485 = vadd.f32 %v319, %v484
        %v486 = vpop.f32.mrb[0].mxu0
        %487 = vmatprep.mubr.f32.mxu0 0.0
        %488 = vmatmul.mubr.f32.gmra.mrb[0].mxu0 %v352
        %v489 = vpop.f32.mrb[0].mxu0
        %v490 = vadd.f32 %v319, %v489
        %v491 = vpop.f32.mrb[0].mxu0
        %492 = vmatprep.mubr.f32.mxu0 0.0
        %493 = vmatmul.mubr.f32.gmra.mrb[0].mxu0 %v355
        %v494 = vpop.f32.mrb[0].mxu0
        %v495 = vadd.f32 %v319, %v494
        %v496 = vpop.f32.mrb[0].mxu0
        %497 = vmatprep.mubr.f32.mxu0 0.0
        %498 = vmatmul.mubr.f32.gmra.mrb[0].mxu0 %v358
        %v499 = vpop.f32.mrb[0].mxu0
        %v500 = vadd.f32 %v319, %v499
        %v501 = vpop.f32.mrb[0].mxu0
        %502 = vmatprep.mubr.f32.mxu0 0.0
        %503 = vmatmul.mubr.f32.gmra.mrb[0].mxu0 %v361
        %v504 = vpop.f32.mrb[0].mxu0
        %v505 = vadd.f32 %v319, %v504
        %v506 = vpop.f32.mrb[0].mxu0
        %507 = vmatprep.mubr.f32.mxu0 0.0
        %508 = vmatmul.mubr.f32.gmra.mrb[0].mxu0 %v364
        %v509 = vpop.f32.mrb[0].mxu0
        %v510 = vadd.f32 %v319, %v509
        %v511 = vpop.f32.mrb[0].mxu0
        %512 = vmatprep.mubr.f32.mxu0 0.0
        %513 = vmatmul.mubr.f32.gmra.mrb[0].mxu0 %v367
        %v514 = vpop.f32.mrb[0].mxu0
        %v515 = vadd.f32 %v319, %v514
        %v516 = vpop.f32.mrb[0].mxu0
        %517 = vdwg.mxu0
        %vm518 = vcmask 64512
        %519 = vst.msk [vmem:[%s277] sm:$0xff] %vm518, %v440
        %520 = vst.msk [vmem:[%s277 + $0x8] sm:$0xff] %vm518, %v445
        %521 = vst.msk [vmem:[%s277 + $0x10] sm:$0xff] %vm518, %v450
        %522 = vst.msk [vmem:[%s277 + $0x18] sm:$0xff] %vm518, %v455
        %523 = vst.msk [vmem:[%s277 + $0x20] sm:$0xff] %vm518, %v460
        %524 = vst.msk [vmem:[%s277 + $0x28] sm:$0xff] %vm518, %v465
        %525 = vst.msk [vmem:[%s277 + $0x30] sm:$0xff] %vm518, %v470
        %526 = vst.msk [vmem:[%s277 + $0x38] sm:$0xff] %vm518, %v475
        %527 = vst.msk [vmem:[%s277 + $0x40] sm:$0xff] %vm518, %v480
        %528 = vst.msk [vmem:[%s277 + $0x48] sm:$0xff] %vm518, %v485
        %529 = vst.msk [vmem:[%s277 + $0x50] sm:$0xff] %vm518, %v490
        %530 = vst.msk [vmem:[%s277 + $0x58] sm:$0xff] %vm518, %v495
        %531 = vst.msk [vmem:[%s277 + $0x60] sm:$0xff] %vm518, %v500
        %532 = vst.msk [vmem:[%s277 + $0x68] sm:$0xff] %vm518, %v505
        %533 = vst.msk [vmem:[%s277 + $0x70] sm:$0xff] %vm518, %v510
        %534 = vst.msk [vmem:[%s277 + $0x78] sm:$0xff] %vm518, %v515
        %v535 = vld [vmem:[%s7] sm:$0x1]
        %v536 = vsel %vm518, %v440, 0.0
        %v537 = vsel %vm518, %v445, 0.0
        %v538 = vadd.f32 %v536, %v537
        %v539 = vsel %vm518, %v450, 0.0
        %v540 = vadd.f32 %v538, %v539
        %v541 = vsel %vm518, %v455, 0.0
        %v542 = vadd.f32 %v540, %v541
        %v543 = vsel %vm518, %v460, 0.0
        %v544 = vadd.f32 %v542, %v543
        %v545 = vsel %vm518, %v465, 0.0
        %v546 = vadd.f32 %v544, %v545
        %v547 = vsel %vm518, %v470, 0.0
        %v548 = vadd.f32 %v546, %v547
        %v549 = vsel %vm518, %v475, 0.0
        %v550 = vadd.f32 %v548, %v549
        %v551 = vsel %vm518, %v480, 0.0
        %v552 = vadd.f32 %v550, %v551
        %v553 = vsel %vm518, %v485, 0.0
        %v554 = vadd.f32 %v552, %v553
        %v555 = vsel %vm518, %v490, 0.0
        %v556 = vadd.f32 %v554, %v555
        %v557 = vsel %vm518, %v495, 0.0
        %v558 = vadd.f32 %v556, %v557
        %v559 = vsel %vm518, %v500, 0.0
        %v560 = vadd.f32 %v558, %v559
        %v561 = vsel %vm518, %v505, 0.0
        %v562 = vadd.f32 %v560, %v561
        %v563 = vsel %vm518, %v510, 0.0
        %v564 = vadd.f32 %v562, %v563
        %v565 = vsel %vm518, %v515, 0.0
        %v566 = vadd.f32 %v564, %v565
        %v567 = vrot.slane %v566, 4
        %v568 = vadd.f32 %v566, %v567
        %v569 = vrot.slane %v568, 2
        %v570 = vadd.f32 %v568, %v569
        %v571 = vrot.slane %v570, 1
        %v572 = vadd.f32 %v570, %v571
        %v573 = vadd.f32 %v535, %v572
        %vm574 = vcmask 57344
        %575 = vst.msk [vmem:[%s7] sm:$0x1] %vm574, %v573
        %v576 = vld [vmem:[%s7 + $0x4] sm:$0x1]
        %v577 = vmul.f32 %v440, %v440
        %v578 = vmul.f32 %v445, %v445
        %v579 = vmul.f32 %v450, %v450
        %v580 = vmul.f32 %v455, %v455
        %v581 = vmul.f32 %v460, %v460
        %v582 = vmul.f32 %v465, %v465
        %v583 = vmul.f32 %v470, %v470
        %v584 = vmul.f32 %v475, %v475
        %v585 = vmul.f32 %v480, %v480
        %v586 = vmul.f32 %v485, %v485
        %v587 = vmul.f32 %v490, %v490
        %v588 = vmul.f32 %v495, %v495
        %v589 = vmul.f32 %v500, %v500
        %v590 = vmul.f32 %v505, %v505
        %v591 = vmul.f32 %v510, %v510
        %v592 = vmul.f32 %v515, %v515
        %v593 = vsel %vm518, %v577, 0.0
        %v594 = vsel %vm518, %v578, 0.0
        %v595 = vadd.f32 %v593, %v594
        %v596 = vsel %vm518, %v579, 0.0
        %v597 = vadd.f32 %v595, %v596
        %v598 = vsel %vm518, %v580, 0.0
        %v599 = vadd.f32 %v597, %v598
        %v600 = vsel %vm518, %v581, 0.0
        %v601 = vadd.f32 %v599, %v600
        %v602 = vsel %vm518, %v582, 0.0
        %v603 = vadd.f32 %v601, %v602
        %v604 = vsel %vm518, %v583, 0.0
        %v605 = vadd.f32 %v603, %v604
        %v606 = vsel %vm518, %v584, 0.0
        %v607 = vadd.f32 %v605, %v606
        %v608 = vsel %vm518, %v585, 0.0
        %v609 = vadd.f32 %v607, %v608
        %v610 = vsel %vm518, %v586, 0.0
        %v611 = vadd.f32 %v609, %v610
        %v612 = vsel %vm518, %v587, 0.0
        %v613 = vadd.f32 %v611, %v612
        %v614 = vsel %vm518, %v588, 0.0
        %v615 = vadd.f32 %v613, %v614
        %v616 = vsel %vm518, %v589, 0.0
        %v617 = vadd.f32 %v615, %v616
        %v618 = vsel %vm518, %v590, 0.0
        %v619 = vadd.f32 %v617, %v618
        %v620 = vsel %vm518, %v591, 0.0
        %v621 = vadd.f32 %v619, %v620
        %v622 = vsel %vm518, %v592, 0.0
        %v623 = vadd.f32 %v621, %v622
        %v624 = vrot.slane %v623, 4
        %v625 = vadd.f32 %v623, %v624
        %v626 = vrot.slane %v625, 2
        %v627 = vadd.f32 %v625, %v626
        %v628 = vrot.slane %v627, 1
        %v629 = vadd.f32 %v627, %v628
        %v630 = vadd.f32 %v576, %v629
        %631 = vst.msk [vmem:[%s7 + $0x4] sm:$0x1] %vm574, %v630
        %s632 = sadd.s32 %s294, 12
        %s633 = smul.u32 %s632, 56
        %s634 = scalar_lea.vmem %s284, %s633
        %v635 = vld [vmem:[%s634 + $0xc] sm:$0xff]
        %v636 = vld [vmem:[%s634 + $0x14] sm:$0xff]
        %v637 = vld [vmem:[%s634 + $0x44] sm:$0xff]
        %v638 = vld [vmem:[%s634 + $0x4c] sm:$0xff]
        %v639 = vld [vmem:[%s634 + $0x7c] sm:$0xff]
        %v640 = vld [vmem:[%s634 + $0x84] sm:$0xff]
        %v641 = vld [vmem:[%s634 + $0xb4] sm:$0xff]
        %v642 = vld [vmem:[%s634 + $0xbc] sm:$0xff]
        %v643 = vld [vmem:[%s634 + $0xec] sm:$0xff]
        %v644 = vld [vmem:[%s634 + $0xf4] sm:$0xff]
        %v645 = vld [vmem:[%s634 + $0x124] sm:$0xff]
        %v646 = vld [vmem:[%s634 + $0x12c] sm:$0xff]
        %v647 = vld [vmem:[%s634 + $0x15c] sm:$0xff]
        %v648 = vld [vmem:[%s634 + $0x164] sm:$0xff]
        %v649 = vld [vmem:[%s634 + $0x194] sm:$0xff]
        %v650 = vld [vmem:[%s634 + $0x19c] sm:$0xff]
        %v651 = vld [vmem:[%s2] sm:$0xf]
        %v652 = vld [vmem:[%s634 + $0x12] sm:$0xff]
        %v653 = vld [vmem:[%s634 + $0x1a] sm:$0xff]
        %v654 = vld [vmem:[%s634 + $0x4a] sm:$0xff]
        %v655 = vld [vmem:[%s634 + $0x52] sm:$0xff]
        %v656 = vld [vmem:[%s634 + $0x82] sm:$0xff]
        %v657 = vld [vmem:[%s634 + $0x8a] sm:$0xff]
        %v658 = vld [vmem:[%s634 + $0xba] sm:$0xff]
        %v659 = vld [vmem:[%s634 + $0xc2] sm:$0xff]
        %v660 = vld [vmem:[%s634 + $0xf2] sm:$0xff]
        %v661 = vld [vmem:[%s634 + $0xfa] sm:$0xff]
        %v662 = vld [vmem:[%s634 + $0x12a] sm:$0xff]
        %v663 = vld [vmem:[%s634 + $0x132] sm:$0xff]
        %v664 = vld [vmem:[%s634 + $0x162] sm:$0xff]
        %v665 = vld [vmem:[%s634 + $0x16a] sm:$0xff]
        %v666 = vld [vmem:[%s634 + $0x19a] sm:$0xff]
        %v667 = vld [vmem:[%s634 + $0x1a2] sm:$0xff]
        %s668 = scalar_lea.vmem %s2, 4
        %v669 = vld [vmem:[%s668] sm:$0xf]
        %v671 = vsel %vm320, %v652, 0
        %v674 = vsel %vm320, %v653, 0
        %v677 = vsel %vm320, %v654, 0
        %v680 = vsel %vm320, %v655, 0
        %v683 = vsel %vm320, %v656, 0
        %v686 = vsel %vm320, %v657, 0
        %v689 = vsel %vm320, %v658, 0
        %v692 = vsel %vm320, %v659, 0
        %v695 = vsel %vm320, %v660, 0
        %v698 = vsel %vm320, %v661, 0
        %v701 = vsel %vm320, %v662, 0
        %v704 = vsel %vm320, %v663, 0
        %v707 = vsel %vm320, %v664, 0
        %v710 = vsel %vm320, %v665, 0
        %v713 = vsel %vm320, %v666, 0
        %v716 = vsel %vm320, %v667, 0
        %v719 = vsel %vm369, %v669, 0
        %721 = vmatprep.subr.mxu0 0.0
        %722 = vmatpush1.msra.mxu0 %v719
        %723 = vmatprep.subr.mxu0 0.0
        %724 = vmatpush1.msra.mxu0 0.0
        %725 = vmatprep.subr.mxu0 0.0
        %726 = vmatpush1.msra.mxu0 0.0
        %727 = vmatprep.subr.mxu0 0.0
        %728 = vmatpush1.msra.mxu0 0.0
        %729 = vmatprep.subr.mxu0 0.0
        %730 = vmatpush1.msra.mxu0 0.0
        %731 = vmatprep.subr.mxu0 0.0
        %732 = vmatpush1.msra.mxu0 0.0
        %733 = vmatprep.subr.mxu0 0.0
        %734 = vmatpush1.msra.mxu0 0.0
        %735 = vmatprep.subr.mxu0 0.0
        %736 = vmatpush1.msra.mxu0 0.0
        %737 = vmatprep.subr.mxu0 0.0
        %738 = vmatpush1.msra.mxu0 0.0
        %739 = vmatprep.subr.mxu0 0.0
        %740 = vmatpush1.msra.mxu0 0.0
        %741 = vmatprep.subr.mxu0 0.0
        %742 = vmatpush1.msra.mxu0 0.0
        %743 = vmatprep.subr.mxu0 0.0
        %744 = vmatpush1.msra.mxu0 0.0
        %745 = vmatprep.subr.mxu0 0.0
        %746 = vmatpush1.msra.mxu0 0.0
        %747 = vmatprep.subr.mxu0 0.0
        %748 = vmatpush1.msra.mxu0 0.0
        %749 = vmatprep.subr.mxu0 0.0
        %750 = vmatpush1.msra.mxu0 0.0
        %751 = vmatprep.subr.mxu0 0.0
        %752 = vmatpush1.msra.mxu0 0.0
        %753 = vmatprep.subr.mxu0 0.0
        %754 = vmatpush1.msra.mxu0 0.0
        %755 = vmatprep.subr.mxu0 0.0
        %756 = vmatpush1.msra.mxu0 0.0
        %757 = vmatprep.subr.mxu0 0.0
        %758 = vmatpush1.msra.mxu0 0.0
        %759 = vmatprep.subr.mxu0 0.0
        %760 = vmatpush1.msra.mxu0 0.0
        %761 = vmatprep.subr.mxu0 0.0
        %762 = vmatpush1.msra.mxu0 0.0
        %763 = vmatprep.subr.mxu0 0.0
        %764 = vmatpush1.msra.mxu0 0.0
        %765 = vmatprep.subr.mxu0 0.0
        %766 = vmatpush1.msra.mxu0 0.0
        %767 = vmatprep.subr.mxu0 0.0
        %768 = vmatpush1.msra.mxu0 0.0
        %769 = vmatprep.subr.mxu0 0.0
        %770 = vmatpush1.msra.mxu0 0.0
        %771 = vmatprep.subr.mxu0 0.0
        %772 = vmatpush1.msra.mxu0 0.0
        %773 = vmatprep.subr.mxu0 0.0
        %774 = vmatpush1.msra.mxu0 0.0
        %775 = vmatprep.subr.mxu0 0.0
        %776 = vmatpush1.msra.mxu0 0.0
        %777 = vmatprep.subr.mxu0 0.0
        %778 = vmatpush1.msra.mxu0 0.0
        %779 = vmatprep.subr.mxu0 0.0
        %780 = vmatpush1.msra.mxu0 0.0
        %781 = vmatprep.subr.mxu0 0.0
        %782 = vmatpush1.msra.mxu0 0.0
        %783 = vmatprep.subr.mxu0 0.0
        %784 = vmatpush1.msra.mxu0 0.0
        %785 = vmatprep.mubr.f32.mxu0 0.0
        %786 = vmatmul.mubr.f32.gmra.mrb[0].mxu0 %v671
        %v787 = vpop.f32.mrb[0].mxu0
        %v788 = vadd.f32 0.0, %v787
        %v789 = vpop.f32.mrb[0].mxu0
        %790 = vmatprep.mubr.f32.mxu0 0.0
        %791 = vmatmul.mubr.f32.gmra.mrb[0].mxu0 %v674
        %v792 = vpop.f32.mrb[0].mxu0
        %v793 = vadd.f32 0.0, %v792
        %v794 = vpop.f32.mrb[0].mxu0
        %795 = vmatprep.mubr.f32.mxu0 0.0
        %796 = vmatmul.mubr.f32.gmra.mrb[0].mxu0 %v677
        %v797 = vpop.f32.mrb[0].mxu0
        %v798 = vadd.f32 0.0, %v797
        %v799 = vpop.f32.mrb[0].mxu0
        %800 = vmatprep.mubr.f32.mxu0 0.0
        %801 = vmatmul.mubr.f32.gmra.mrb[0].mxu0 %v680
        %v802 = vpop.f32.mrb[0].mxu0
        %v803 = vadd.f32 0.0, %v802
        %v804 = vpop.f32.mrb[0].mxu0
        %805 = vmatprep.mubr.f32.mxu0 0.0
        %806 = vmatmul.mubr.f32.gmra.mrb[0].mxu0 %v683
        %v807 = vpop.f32.mrb[0].mxu0
        %v808 = vadd.f32 0.0, %v807
        %v809 = vpop.f32.mrb[0].mxu0
        %810 = vmatprep.mubr.f32.mxu0 0.0
        %811 = vmatmul.mubr.f32.gmra.mrb[0].mxu0 %v686
        %v812 = vpop.f32.mrb[0].mxu0
        %v813 = vadd.f32 0.0, %v812
        %v814 = vpop.f32.mrb[0].mxu0
        %815 = vmatprep.mubr.f32.mxu0 0.0
        %816 = vmatmul.mubr.f32.gmra.mrb[0].mxu0 %v689
        %v817 = vpop.f32.mrb[0].mxu0
        %v818 = vadd.f32 0.0, %v817
        %v819 = vpop.f32.mrb[0].mxu0
        %820 = vmatprep.mubr.f32.mxu0 0.0
        %821 = vmatmul.mubr.f32.gmra.mrb[0].mxu0 %v692
        %v822 = vpop.f32.mrb[0].mxu0
        %v823 = vadd.f32 0.0, %v822
        %v824 = vpop.f32.mrb[0].mxu0
        %825 = vmatprep.mubr.f32.mxu0 0.0
        %826 = vmatmul.mubr.f32.gmra.mrb[0].mxu0 %v695
        %v827 = vpop.f32.mrb[0].mxu0
        %v828 = vadd.f32 0.0, %v827
        %v829 = vpop.f32.mrb[0].mxu0
        %830 = vmatprep.mubr.f32.mxu0 0.0
        %831 = vmatmul.mubr.f32.gmra.mrb[0].mxu0 %v698
        %v832 = vpop.f32.mrb[0].mxu0
        %v833 = vadd.f32 0.0, %v832
        %v834 = vpop.f32.mrb[0].mxu0
        %835 = vmatprep.mubr.f32.mxu0 0.0
        %836 = vmatmul.mubr.f32.gmra.mrb[0].mxu0 %v701
        %v837 = vpop.f32.mrb[0].mxu0
        %v838 = vadd.f32 0.0, %v837
        %v839 = vpop.f32.mrb[0].mxu0
        %840 = vmatprep.mubr.f32.mxu0 0.0
        %841 = vmatmul.mubr.f32.gmra.mrb[0].mxu0 %v704
        %v842 = vpop.f32.mrb[0].mxu0
        %v843 = vadd.f32 0.0, %v842
        %v844 = vpop.f32.mrb[0].mxu0
        %845 = vmatprep.mubr.f32.mxu0 0.0
        %846 = vmatmul.mubr.f32.gmra.mrb[0].mxu0 %v707
        %v847 = vpop.f32.mrb[0].mxu0
        %v848 = vadd.f32 0.0, %v847
        %v849 = vpop.f32.mrb[0].mxu0
        %850 = vmatprep.mubr.f32.mxu0 0.0
        %851 = vmatmul.mubr.f32.gmra.mrb[0].mxu0 %v710
        %v852 = vpop.f32.mrb[0].mxu0
        %v853 = vadd.f32 0.0, %v852
        %v854 = vpop.f32.mrb[0].mxu0
        %855 = vmatprep.mubr.f32.mxu0 0.0
        %856 = vmatmul.mubr.f32.gmra.mrb[0].mxu0 %v713
        %v857 = vpop.f32.mrb[0].mxu0
        %v858 = vadd.f32 0.0, %v857
        %v859 = vpop.f32.mrb[0].mxu0
        %860 = vmatprep.mubr.f32.mxu0 0.0
        %861 = vmatmul.mubr.f32.gmra.mrb[0].mxu0 %v716
        %v862 = vpop.f32.mrb[0].mxu0
        %v863 = vadd.f32 0.0, %v862
        %v864 = vpop.f32.mrb[0].mxu0
        %865 = vdwg.mxu0
        %v867 = vsel %vm320, %v635, 0
        %v870 = vsel %vm320, %v636, 0
        %v873 = vsel %vm320, %v637, 0
        %v876 = vsel %vm320, %v638, 0
        %v879 = vsel %vm320, %v639, 0
        %v882 = vsel %vm320, %v640, 0
        %v885 = vsel %vm320, %v641, 0
        %v888 = vsel %vm320, %v642, 0
        %v891 = vsel %vm320, %v643, 0
        %v894 = vsel %vm320, %v644, 0
        %v897 = vsel %vm320, %v645, 0
        %v900 = vsel %vm320, %v646, 0
        %v903 = vsel %vm320, %v647, 0
        %v906 = vsel %vm320, %v648, 0
        %v909 = vsel %vm320, %v649, 0
        %v912 = vsel %vm320, %v650, 0
        %v915 = vsel %vm369, %v651, 0
        %917 = vmatprep.subr.mxu0 0.0
        %918 = vmatpush1.msra.mxu0 %v915
        %919 = vmatprep.subr.mxu0 0.0
        %920 = vmatpush1.msra.mxu0 0.0
        %921 = vmatprep.subr.mxu0 0.0
        %922 = vmatpush1.msra.mxu0 0.0
        %923 = vmatprep.subr.mxu0 0.0
        %924 = vmatpush1.msra.mxu0 0.0
        %925 = vmatprep.subr.mxu0 0.0
        %926 = vmatpush1.msra.mxu0 0.0
        %927 = vmatprep.subr.mxu0 0.0
        %928 = vmatpush1.msra.mxu0 0.0
        %929 = vmatprep.subr.mxu0 0.0
        %930 = vmatpush1.msra.mxu0 0.0
        %931 = vmatprep.subr.mxu0 0.0
        %932 = vmatpush1.msra.mxu0 0.0
        %933 = vmatprep.subr.mxu0 0.0
        %934 = vmatpush1.msra.mxu0 0.0
        %935 = vmatprep.subr.mxu0 0.0
        %936 = vmatpush1.msra.mxu0 0.0
        %937 = vmatprep.subr.mxu0 0.0
        %938 = vmatpush1.msra.mxu0 0.0
        %939 = vmatprep.subr.mxu0 0.0
        %940 = vmatpush1.msra.mxu0 0.0
        %941 = vmatprep.subr.mxu0 0.0
        %942 = vmatpush1.msra.mxu0 0.0
        %943 = vmatprep.subr.mxu0 0.0
        %944 = vmatpush1.msra.mxu0 0.0
        %945 = vmatprep.subr.mxu0 0.0
        %946 = vmatpush1.msra.mxu0 0.0
        %947 = vmatprep.subr.mxu0 0.0
        %948 = vmatpush1.msra.mxu0 0.0
        %949 = vmatprep.subr.mxu0 0.0
        %950 = vmatpush1.msra.mxu0 0.0
        %951 = vmatprep.subr.mxu0 0.0
        %952 = vmatpush1.msra.mxu0 0.0
        %953 = vmatprep.subr.mxu0 0.0
        %954 = vmatpush1.msra.mxu0 0.0
        %955 = vmatprep.subr.mxu0 0.0
        %956 = vmatpush1.msra.mxu0 0.0
        %957 = vmatprep.subr.mxu0 0.0
        %958 = vmatpush1.msra.mxu0 0.0
        %959 = vmatprep.subr.mxu0 0.0
        %960 = vmatpush1.msra.mxu0 0.0
        %961 = vmatprep.subr.mxu0 0.0
        %962 = vmatpush1.msra.mxu0 0.0
        %963 = vmatprep.subr.mxu0 0.0
        %964 = vmatpush1.msra.mxu0 0.0
        %965 = vmatprep.subr.mxu0 0.0
        %966 = vmatpush1.msra.mxu0 0.0
        %967 = vmatprep.subr.mxu0 0.0
        %968 = vmatpush1.msra.mxu0 0.0
        %969 = vmatprep.subr.mxu0 0.0
        %970 = vmatpush1.msra.mxu0 0.0
        %971 = vmatprep.subr.mxu0 0.0
        %972 = vmatpush1.msra.mxu0 0.0
        %973 = vmatprep.subr.mxu0 0.0
        %974 = vmatpush1.msra.mxu0 0.0
        %975 = vmatprep.subr.mxu0 0.0
        %976 = vmatpush1.msra.mxu0 0.0
        %977 = vmatprep.subr.mxu0 0.0
        %978 = vmatpush1.msra.mxu0 0.0
        %979 = vmatprep.subr.mxu0 0.0
        %980 = vmatpush1.msra.mxu0 0.0
        %981 = vmatprep.mubr.f32.mxu0 0.0
        %982 = vmatmul.mubr.f32.gmra.mrb[0].mxu0 %v867
        %v983 = vpop.f32.mrb[0].mxu0
        %v984 = vadd.f32 %v788, %v983
        %v985 = vpop.f32.mrb[0].mxu0
        %986 = vmatprep.mubr.f32.mxu0 0.0
        %987 = vmatmul.mubr.f32.gmra.mrb[0].mxu0 %v870
        %v988 = vpop.f32.mrb[0].mxu0
        %v989 = vadd.f32 %v793, %v988
        %v990 = vpop.f32.mrb[0].mxu0
        %991 = vmatprep.mubr.f32.mxu0 0.0
        %992 = vmatmul.mubr.f32.gmra.mrb[0].mxu0 %v873
        %v993 = vpop.f32.mrb[0].mxu0
        %v994 = vadd.f32 %v798, %v993
        %v995 = vpop.f32.mrb[0].mxu0
        %996 = vmatprep.mubr.f32.mxu0 0.0
        %997 = vmatmul.mubr.f32.gmra.mrb[0].mxu0 %v876
        %v998 = vpop.f32.mrb[0].mxu0
        %v999 = vadd.f32 %v803, %v998
        %v1000 = vpop.f32.mrb[0].mxu0
        %1001 = vmatprep.mubr.f32.mxu0 0.0
        %1002 = vmatmul.mubr.f32.gmra.mrb[0].mxu0 %v879
        %v1003 = vpop.f32.mrb[0].mxu0
        %v1004 = vadd.f32 %v808, %v1003
        %v1005 = vpop.f32.mrb[0].mxu0
        %1006 = vmatprep.mubr.f32.mxu0 0.0
        %1007 = vmatmul.mubr.f32.gmra.mrb[0].mxu0 %v882
        %v1008 = vpop.f32.mrb[0].mxu0
        %v1009 = vadd.f32 %v813, %v1008
        %v1010 = vpop.f32.mrb[0].mxu0
        %1011 = vmatprep.mubr.f32.mxu0 0.0
        %1012 = vmatmul.mubr.f32.gmra.mrb[0].mxu0 %v885
        %v1013 = vpop.f32.mrb[0].mxu0
        %v1014 = vadd.f32 %v818, %v1013
        %v1015 = vpop.f32.mrb[0].mxu0
        %1016 = vmatprep.mubr.f32.mxu0 0.0
        %1017 = vmatmul.mubr.f32.gmra.mrb[0].mxu0 %v888
        %v1018 = vpop.f32.mrb[0].mxu0
        %v1019 = vadd.f32 %v823, %v1018
        %v1020 = vpop.f32.mrb[0].mxu0
        %1021 = vmatprep.mubr.f32.mxu0 0.0
        %1022 = vmatmul.mubr.f32.gmra.mrb[0].mxu0 %v891
        %v1023 = vpop.f32.mrb[0].mxu0
        %v1024 = vadd.f32 %v828, %v1023
        %v1025 = vpop.f32.mrb[0].mxu0
        %1026 = vmatprep.mubr.f32.mxu0 0.0
        %1027 = vmatmul.mubr.f32.gmra.mrb[0].mxu0 %v894
        %v1028 = vpop.f32.mrb[0].mxu0
        %v1029 = vadd.f32 %v833, %v1028
        %v1030 = vpop.f32.mrb[0].mxu0
        %1031 = vmatprep.mubr.f32.mxu0 0.0
        %1032 = vmatmul.mubr.f32.gmra.mrb[0].mxu0 %v897
        %v1033 = vpop.f32.mrb[0].mxu0
        %v1034 = vadd.f32 %v838, %v1033
        %v1035 = vpop.f32.mrb[0].mxu0
        %1036 = vmatprep.mubr.f32.mxu0 0.0
        %1037 = vmatmul.mubr.f32.gmra.mrb[0].mxu0 %v900
        %v1038 = vpop.f32.mrb[0].mxu0
        %v1039 = vadd.f32 %v843, %v1038
        %v1040 = vpop.f32.mrb[0].mxu0
        %1041 = vmatprep.mubr.f32.mxu0 0.0
        %1042 = vmatmul.mubr.f32.gmra.mrb[0].mxu0 %v903
        %v1043 = vpop.f32.mrb[0].mxu0
        %v1044 = vadd.f32 %v848, %v1043
        %v1045 = vpop.f32.mrb[0].mxu0
        %1046 = vmatprep.mubr.f32.mxu0 0.0
        %1047 = vmatmul.mubr.f32.gmra.mrb[0].mxu0 %v906
        %v1048 = vpop.f32.mrb[0].mxu0
        %v1049 = vadd.f32 %v853, %v1048
        %v1050 = vpop.f32.mrb[0].mxu0
        %1051 = vmatprep.mubr.f32.mxu0 0.0
        %1052 = vmatmul.mubr.f32.gmra.mrb[0].mxu0 %v909
        %v1053 = vpop.f32.mrb[0].mxu0
        %v1054 = vadd.f32 %v858, %v1053
        %v1055 = vpop.f32.mrb[0].mxu0
        %1056 = vmatprep.mubr.f32.mxu0 0.0
        %1057 = vmatmul.mubr.f32.gmra.mrb[0].mxu0 %v912
        %v1058 = vpop.f32.mrb[0].mxu0
        %v1059 = vadd.f32 %v863, %v1058
        %v1060 = vpop.f32.mrb[0].mxu0
        %1061 = vdwg.mxu0
        %v1062 = vld [vmem:[%s634 + $0x18] sm:$0xff]
        %v1063 = vld [vmem:[%s634 + $0x20] sm:$0xff]
        %v1064 = vld [vmem:[%s634 + $0x50] sm:$0xff]
        %v1065 = vld [vmem:[%s634 + $0x58] sm:$0xff]
        %v1066 = vld [vmem:[%s634 + $0x88] sm:$0xff]
        %v1067 = vld [vmem:[%s634 + $0x90] sm:$0xff]
        %v1068 = vld [vmem:[%s634 + $0xc0] sm:$0xff]
        %v1069 = vld [vmem:[%s634 + $0xc8] sm:$0xff]
        %v1070 = vld [vmem:[%s634 + $0xf8] sm:$0xff]
        %v1071 = vld [vmem:[%s634 + $0x100] sm:$0xff]
        %v1072 = vld [vmem:[%s634 + $0x130] sm:$0xff]
        %v1073 = vld [vmem:[%s634 + $0x138] sm:$0xff]
        %v1074 = vld [vmem:[%s634 + $0x168] sm:$0xff]
        %v1075 = vld [vmem:[%s634 + $0x170] sm:$0xff]
        %v1076 = vld [vmem:[%s634 + $0x1a0] sm:$0xff]
        %v1077 = vld [vmem:[%s634 + $0x1a8] sm:$0xff]
        %s1078 = scalar_lea.vmem %s2, 8
        %v1079 = vld [vmem:[%s1078] sm:$0xf]
        %v1081 = vsel %vm320, %v1062, 0
        %v1084 = vsel %vm320, %v1063, 0
        %v1087 = vsel %vm320, %v1064, 0
        %v1090 = vsel %vm320, %v1065, 0
        %v1093 = vsel %vm320, %v1066, 0
        %v1096 = vsel %vm320, %v1067, 0
        %v1099 = vsel %vm320, %v1068, 0
        %v1102 = vsel %vm320, %v1069, 0
        %v1105 = vsel %vm320, %v1070, 0
        %v1108 = vsel %vm320, %v1071, 0
        %v1111 = vsel %vm320, %v1072, 0
        %v1114 = vsel %vm320, %v1073, 0
        %v1117 = vsel %vm320, %v1074, 0
        %v1120 = vsel %vm320, %v1075, 0
        %v1123 = vsel %vm320, %v1076, 0
        %v1126 = vsel %vm320, %v1077, 0
        %v1129 = vsel %vm369, %v1079, 0
        %1131 = vmatprep.subr.mxu0 0.0
        %1132 = vmatpush1.msra.mxu0 %v1129
        %1133 = vmatprep.subr.mxu0 0.0
        %1134 = vmatpush1.msra.mxu0 0.0
        %1135 = vmatprep.subr.mxu0 0.0
        %1136 = vmatpush1.msra.mxu0 0.0
        %1137 = vmatprep.subr.mxu0 0.0
        %1138 = vmatpush1.msra.mxu0 0.0
        %1139 = vmatprep.subr.mxu0 0.0
        %1140 = vmatpush1.msra.mxu0 0.0
        %1141 = vmatprep.subr.mxu0 0.0
        %1142 = vmatpush1.msra.mxu0 0.0
        %1143 = vmatprep.subr.mxu0 0.0
        %1144 = vmatpush1.msra.mxu0 0.0
        %1145 = vmatprep.subr.mxu0 0.0
        %1146 = vmatpush1.msra.mxu0 0.0
        %1147 = vmatprep.subr.mxu0 0.0
        %1148 = vmatpush1.msra.mxu0 0.0
        %1149 = vmatprep.subr.mxu0 0.0
        %1150 = vmatpush1.msra.mxu0 0.0
        %1151 = vmatprep.subr.mxu0 0.0
        %1152 = vmatpush1.msra.mxu0 0.0
        %1153 = vmatprep.subr.mxu0 0.0
        %1154 = vmatpush1.msra.mxu0 0.0
        %1155 = vmatprep.subr.mxu0 0.0
        %1156 = vmatpush1.msra.mxu0 0.0
        %1157 = vmatprep.subr.mxu0 0.0
        %1158 = vmatpush1.msra.mxu0 0.0
        %1159 = vmatprep.subr.mxu0 0.0
        %1160 = vmatpush1.msra.mxu0 0.0
        %1161 = vmatprep.subr.mxu0 0.0
        %1162 = vmatpush1.msra.mxu0 0.0
        %1163 = vmatprep.subr.mxu0 0.0
        %1164 = vmatpush1.msra.mxu0 0.0
        %1165 = vmatprep.subr.mxu0 0.0
        %1166 = vmatpush1.msra.mxu0 0.0
        %1167 = vmatprep.subr.mxu0 0.0
        %1168 = vmatpush1.msra.mxu0 0.0
        %1169 = vmatprep.subr.mxu0 0.0
        %1170 = vmatpush1.msra.mxu0 0.0
        %1171 = vmatprep.subr.mxu0 0.0
        %1172 = vmatpush1.msra.mxu0 0.0
        %1173 = vmatprep.subr.mxu0 0.0
        %1174 = vmatpush1.msra.mxu0 0.0
        %1175 = vmatprep.subr.mxu0 0.0
        %1176 = vmatpush1.msra.mxu0 0.0
        %1177 = vmatprep.subr.mxu0 0.0
        %1178 = vmatpush1.msra.mxu0 0.0
        %1179 = vmatprep.subr.mxu0 0.0
        %1180 = vmatpush1.msra.mxu0 0.0
        %1181 = vmatprep.subr.mxu0 0.0
        %1182 = vmatpush1.msra.mxu0 0.0
        %1183 = vmatprep.subr.mxu0 0.0
        %1184 = vmatpush1.msra.mxu0 0.0
        %1185 = vmatprep.subr.mxu0 0.0
        %1186 = vmatpush1.msra.mxu0 0.0
        %1187 = vmatprep.subr.mxu0 0.0
        %1188 = vmatpush1.msra.mxu0 0.0
        %1189 = vmatprep.subr.mxu0 0.0
        %1190 = vmatpush1.msra.mxu0 0.0
        %1191 = vmatprep.subr.mxu0 0.0
        %1192 = vmatpush1.msra.mxu0 0.0
        %1193 = vmatprep.subr.mxu0 0.0
        %1194 = vmatpush1.msra.mxu0 0.0
        %1195 = vmatprep.mubr.f32.mxu0 0.0
        %1196 = vmatmul.mubr.f32.gmra.mrb[0].mxu0 %v1081
        %v1197 = vpop.f32.mrb[0].mxu0
        %v1198 = vadd.f32 0.0, %v1197
        %v1199 = vpop.f32.mrb[0].mxu0
        %1200 = vmatprep.mubr.f32.mxu0 0.0
        %1201 = vmatmul.mubr.f32.gmra.mrb[0].mxu0 %v1084
        %v1202 = vpop.f32.mrb[0].mxu0
        %v1203 = vadd.f32 0.0, %v1202
        %v1204 = vpop.f32.mrb[0].mxu0
        %1205 = vmatprep.mubr.f32.mxu0 0.0
        %1206 = vmatmul.mubr.f32.gmra.mrb[0].mxu0 %v1087
        %v1207 = vpop.f32.mrb[0].mxu0
        %v1208 = vadd.f32 0.0, %v1207
        %v1209 = vpop.f32.mrb[0].mxu0
        %1210 = vmatprep.mubr.f32.mxu0 0.0
        %1211 = vmatmul.mubr.f32.gmra.mrb[0].mxu0 %v1090
        %v1212 = vpop.f32.mrb[0].mxu0
        %v1213 = vadd.f32 0.0, %v1212
        %v1214 = vpop.f32.mrb[0].mxu0
        %1215 = vmatprep.mubr.f32.mxu0 0.0
        %1216 = vmatmul.mubr.f32.gmra.mrb[0].mxu0 %v1093
        %v1217 = vpop.f32.mrb[0].mxu0
        %v1218 = vadd.f32 0.0, %v1217
        %v1219 = vpop.f32.mrb[0].mxu0
        %1220 = vmatprep.mubr.f32.mxu0 0.0
        %1221 = vmatmul.mubr.f32.gmra.mrb[0].mxu0 %v1096
        %v1222 = vpop.f32.mrb[0].mxu0
        %v1223 = vadd.f32 0.0, %v1222
        %v1224 = vpop.f32.mrb[0].mxu0
        %1225 = vmatprep.mubr.f32.mxu0 0.0
        %1226 = vmatmul.mubr.f32.gmra.mrb[0].mxu0 %v1099
        %v1227 = vpop.f32.mrb[0].mxu0
        %v1228 = vadd.f32 0.0, %v1227
        %v1229 = vpop.f32.mrb[0].mxu0
        %1230 = vmatprep.mubr.f32.mxu0 0.0
        %1231 = vmatmul.mubr.f32.gmra.mrb[0].mxu0 %v1102
        %v1232 = vpop.f32.mrb[0].mxu0
        %v1233 = vadd.f32 0.0, %v1232
        %v1234 = vpop.f32.mrb[0].mxu0
        %1235 = vmatprep.mubr.f32.mxu0 0.0
        %1236 = vmatmul.mubr.f32.gmra.mrb[0].mxu0 %v1105
        %v1237 = vpop.f32.mrb[0].mxu0
        %v1238 = vadd.f32 0.0, %v1237
        %v1239 = vpop.f32.mrb[0].mxu0
        %1240 = vmatprep.mubr.f32.mxu0 0.0
        %1241 = vmatmul.mubr.f32.gmra.mrb[0].mxu0 %v1108
        %v1242 = vpop.f32.mrb[0].mxu0
        %v1243 = vadd.f32 0.0, %v1242
        %v1244 = vpop.f32.mrb[0].mxu0
        %1245 = vmatprep.mubr.f32.mxu0 0.0
        %1246 = vmatmul.mubr.f32.gmra.mrb[0].mxu0 %v1111
        %v1247 = vpop.f32.mrb[0].mxu0
        %v1248 = vadd.f32 0.0, %v1247
        %v1249 = vpop.f32.mrb[0].mxu0
        %1250 = vmatprep.mubr.f32.mxu0 0.0
        %1251 = vmatmul.mubr.f32.gmra.mrb[0].mxu0 %v1114
        %v1252 = vpop.f32.mrb[0].mxu0
        %v1253 = vadd.f32 0.0, %v1252
        %v1254 = vpop.f32.mrb[0].mxu0
        %1255 = vmatprep.mubr.f32.mxu0 0.0
        %1256 = vmatmul.mubr.f32.gmra.mrb[0].mxu0 %v1117
        %v1257 = vpop.f32.mrb[0].mxu0
        %v1258 = vadd.f32 0.0, %v1257
        %v1259 = vpop.f32.mrb[0].mxu0
        %1260 = vmatprep.mubr.f32.mxu0 0.0
        %1261 = vmatmul.mubr.f32.gmra.mrb[0].mxu0 %v1120
        %v1262 = vpop.f32.mrb[0].mxu0
        %v1263 = vadd.f32 0.0, %v1262
        %v1264 = vpop.f32.mrb[0].mxu0
        %1265 = vmatprep.mubr.f32.mxu0 0.0
        %1266 = vmatmul.mubr.f32.gmra.mrb[0].mxu0 %v1123
        %v1267 = vpop.f32.mrb[0].mxu0
        %v1268 = vadd.f32 0.0, %v1267
        %v1269 = vpop.f32.mrb[0].mxu0
        %1270 = vmatprep.mubr.f32.mxu0 0.0
        %1271 = vmatmul.mubr.f32.gmra.mrb[0].mxu0 %v1126
        %v1272 = vpop.f32.mrb[0].mxu0
        %v1273 = vadd.f32 0.0, %v1272
        %v1274 = vpop.f32.mrb[0].mxu0
        %1275 = vdwg.mxu0
        %v1276 = vadd.f32 %v984, %v1198
        %v1277 = vadd.f32 %v989, %v1203
        %v1278 = vadd.f32 %v994, %v1208
        %v1279 = vadd.f32 %v999, %v1213
        %v1280 = vadd.f32 %v1004, %v1218
        %v1281 = vadd.f32 %v1009, %v1223
        %v1282 = vadd.f32 %v1014, %v1228
        %v1283 = vadd.f32 %v1019, %v1233
        %v1284 = vadd.f32 %v1024, %v1238
        %v1285 = vadd.f32 %v1029, %v1243
        %v1286 = vadd.f32 %v1034, %v1248
        %v1287 = vadd.f32 %v1039, %v1253
        %v1288 = vadd.f32 %v1044, %v1258
        %v1289 = vadd.f32 %v1049, %v1263
        %v1290 = vadd.f32 %v1054, %v1268
        %v1291 = vadd.f32 %v1059, %v1273
        %v1292 = vld [vmem:[%s298 + $0xc] sm:$0xff]
        %v1293 = vld [vmem:[%s298 + $0x14] sm:$0xff]
        %v1294 = vld [vmem:[%s298 + $0x44] sm:$0xff]
        %v1295 = vld [vmem:[%s298 + $0x4c] sm:$0xff]
        %v1296 = vld [vmem:[%s298 + $0x7c] sm:$0xff]
        %v1297 = vld [vmem:[%s298 + $0x84] sm:$0xff]
        %v1298 = vld [vmem:[%s298 + $0xb4] sm:$0xff]
        %v1299 = vld [vmem:[%s298 + $0xbc] sm:$0xff]
        %v1300 = vld [vmem:[%s298 + $0xec] sm:$0xff]
        %v1301 = vld [vmem:[%s298 + $0xf4] sm:$0xff]
        %v1302 = vld [vmem:[%s298 + $0x124] sm:$0xff]
        %v1303 = vld [vmem:[%s298 + $0x12c] sm:$0xff]
        %v1304 = vld [vmem:[%s298 + $0x15c] sm:$0xff]
        %v1305 = vld [vmem:[%s298 + $0x164] sm:$0xff]
        %v1306 = vld [vmem:[%s298 + $0x194] sm:$0xff]
        %v1307 = vld [vmem:[%s298 + $0x19c] sm:$0xff]
        %s1308 = scalar_lea.vmem %s2, 12
        %v1309 = vld [vmem:[%s1308] sm:$0xf]
        %v1311 = vsel %vm320, %v1292, 0
        %v1314 = vsel %vm320, %v1293, 0
        %v1317 = vsel %vm320, %v1294, 0
        %v1320 = vsel %vm320, %v1295, 0
        %v1323 = vsel %vm320, %v1296, 0
        %v1326 = vsel %vm320, %v1297, 0
        %v1329 = vsel %vm320, %v1298, 0
        %v1332 = vsel %vm320, %v1299, 0
        %v1335 = vsel %vm320, %v1300, 0
        %v1338 = vsel %vm320, %v1301, 0
        %v1341 = vsel %vm320, %v1302, 0
        %v1344 = vsel %vm320, %v1303, 0
        %v1347 = vsel %vm320, %v1304, 0
        %v1350 = vsel %vm320, %v1305, 0
        %v1353 = vsel %vm320, %v1306, 0
        %v1356 = vsel %vm320, %v1307, 0
        %v1359 = vsel %vm369, %v1309, 0
        %1361 = vmatprep.subr.mxu0 0.0
        %1362 = vmatpush1.msra.mxu0 %v1359
        %1363 = vmatprep.subr.mxu0 0.0
        %1364 = vmatpush1.msra.mxu0 0.0
        %1365 = vmatprep.subr.mxu0 0.0
        %1366 = vmatpush1.msra.mxu0 0.0
        %1367 = vmatprep.subr.mxu0 0.0
        %1368 = vmatpush1.msra.mxu0 0.0
        %1369 = vmatprep.subr.mxu0 0.0
        %1370 = vmatpush1.msra.mxu0 0.0
        %1371 = vmatprep.subr.mxu0 0.0
        %1372 = vmatpush1.msra.mxu0 0.0
        %1373 = vmatprep.subr.mxu0 0.0
        %1374 = vmatpush1.msra.mxu0 0.0
        %1375 = vmatprep.subr.mxu0 0.0
        %1376 = vmatpush1.msra.mxu0 0.0
        %1377 = vmatprep.subr.mxu0 0.0
        %1378 = vmatpush1.msra.mxu0 0.0
        %1379 = vmatprep.subr.mxu0 0.0
        %1380 = vmatpush1.msra.mxu0 0.0
        %1381 = vmatprep.subr.mxu0 0.0
        %1382 = vmatpush1.msra.mxu0 0.0
        %1383 = vmatprep.subr.mxu0 0.0
        %1384 = vmatpush1.msra.mxu0 0.0
        %1385 = vmatprep.subr.mxu0 0.0
        %1386 = vmatpush1.msra.mxu0 0.0
        %1387 = vmatprep.subr.mxu0 0.0
        %1388 = vmatpush1.msra.mxu0 0.0
        %1389 = vmatprep.subr.mxu0 0.0
        %1390 = vmatpush1.msra.mxu0 0.0
        %1391 = vmatprep.subr.mxu0 0.0
        %1392 = vmatpush1.msra.mxu0 0.0
        %1393 = vmatprep.subr.mxu0 0.0
        %1394 = vmatpush1.msra.mxu0 0.0
        %1395 = vmatprep.subr.mxu0 0.0
        %1396 = vmatpush1.msra.mxu0 0.0
        %1397 = vmatprep.subr.mxu0 0.0
        %1398 = vmatpush1.msra.mxu0 0.0
        %1399 = vmatprep.subr.mxu0 0.0
        %1400 = vmatpush1.msra.mxu0 0.0
        %1401 = vmatprep.subr.mxu0 0.0
        %1402 = vmatpush1.msra.mxu0 0.0
        %1403 = vmatprep.subr.mxu0 0.0
        %1404 = vmatpush1.msra.mxu0 0.0
        %1405 = vmatprep.subr.mxu0 0.0
        %1406 = vmatpush1.msra.mxu0 0.0
        %1407 = vmatprep.subr.mxu0 0.0
        %1408 = vmatpush1.msra.mxu0 0.0
        %1409 = vmatprep.subr.mxu0 0.0
        %1410 = vmatpush1.msra.mxu0 0.0
        %1411 = vmatprep.subr.mxu0 0.0
        %1412 = vmatpush1.msra.mxu0 0.0
        %1413 = vmatprep.subr.mxu0 0.0
        %1414 = vmatpush1.msra.mxu0 0.0
        %1415 = vmatprep.subr.mxu0 0.0
        %1416 = vmatpush1.msra.mxu0 0.0
        %1417 = vmatprep.subr.mxu0 0.0
        %1418 = vmatpush1.msra.mxu0 0.0
        %1419 = vmatprep.subr.mxu0 0.0
        %1420 = vmatpush1.msra.mxu0 0.0
        %1421 = vmatprep.subr.mxu0 0.0
        %1422 = vmatpush1.msra.mxu0 0.0
        %1423 = vmatprep.subr.mxu0 0.0
        %1424 = vmatpush1.msra.mxu0 0.0
        %1425 = vmatprep.mubr.f32.mxu0 0.0
        %1426 = vmatmul.mubr.f32.gmra.mrb[0].mxu0 %v1311
        %v1427 = vpop.f32.mrb[0].mxu0
        %v1428 = vadd.f32 0.0, %v1427
        %v1429 = vpop.f32.mrb[0].mxu0
        %1430 = vmatprep.mubr.f32.mxu0 0.0
        %1431 = vmatmul.mubr.f32.gmra.mrb[0].mxu0 %v1314
        %v1432 = vpop.f32.mrb[0].mxu0
        %v1433 = vadd.f32 0.0, %v1432
        %v1434 = vpop.f32.mrb[0].mxu0
        %1435 = vmatprep.mubr.f32.mxu0 0.0
        %1436 = vmatmul.mubr.f32.gmra.mrb[0].mxu0 %v1317
        %v1437 = vpop.f32.mrb[0].mxu0
        %v1438 = vadd.f32 0.0, %v1437
        %v1439 = vpop.f32.mrb[0].mxu0
        %1440 = vmatprep.mubr.f32.mxu0 0.0
        %1441 = vmatmul.mubr.f32.gmra.mrb[0].mxu0 %v1320
        %v1442 = vpop.f32.mrb[0].mxu0
        %v1443 = vadd.f32 0.0, %v1442
        %v1444 = vpop.f32.mrb[0].mxu0
        %1445 = vmatprep.mubr.f32.mxu0 0.0
        %1446 = vmatmul.mubr.f32.gmra.mrb[0].mxu0 %v1323
        %v1447 = vpop.f32.mrb[0].mxu0
        %v1448 = vadd.f32 0.0, %v1447
        %v1449 = vpop.f32.mrb[0].mxu0
        %1450 = vmatprep.mubr.f32.mxu0 0.0
        %1451 = vmatmul.mubr.f32.gmra.mrb[0].mxu0 %v1326
        %v1452 = vpop.f32.mrb[0].mxu0
        %v1453 = vadd.f32 0.0, %v1452
        %v1454 = vpop.f32.mrb[0].mxu0
        %1455 = vmatprep.mubr.f32.mxu0 0.0
        %1456 = vmatmul.mubr.f32.gmra.mrb[0].mxu0 %v1329
        %v1457 = vpop.f32.mrb[0].mxu0
        %v1458 = vadd.f32 0.0, %v1457
        %v1459 = vpop.f32.mrb[0].mxu0
        %1460 = vmatprep.mubr.f32.mxu0 0.0
        %1461 = vmatmul.mubr.f32.gmra.mrb[0].mxu0 %v1332
        %v1462 = vpop.f32.mrb[0].mxu0
        %v1463 = vadd.f32 0.0, %v1462
        %v1464 = vpop.f32.mrb[0].mxu0
        %1465 = vmatprep.mubr.f32.mxu0 0.0
        %1466 = vmatmul.mubr.f32.gmra.mrb[0].mxu0 %v1335
        %v1467 = vpop.f32.mrb[0].mxu0
        %v1468 = vadd.f32 0.0, %v1467
        %v1469 = vpop.f32.mrb[0].mxu0
        %1470 = vmatprep.mubr.f32.mxu0 0.0
        %1471 = vmatmul.mubr.f32.gmra.mrb[0].mxu0 %v1338
        %v1472 = vpop.f32.mrb[0].mxu0
        %v1473 = vadd.f32 0.0, %v1472
        %v1474 = vpop.f32.mrb[0].mxu0
        %1475 = vmatprep.mubr.f32.mxu0 0.0
        %1476 = vmatmul.mubr.f32.gmra.mrb[0].mxu0 %v1341
        %v1477 = vpop.f32.mrb[0].mxu0
        %v1478 = vadd.f32 0.0, %v1477
        %v1479 = vpop.f32.mrb[0].mxu0
        %1480 = vmatprep.mubr.f32.mxu0 0.0
        %1481 = vmatmul.mubr.f32.gmra.mrb[0].mxu0 %v1344
        %v1482 = vpop.f32.mrb[0].mxu0
        %v1483 = vadd.f32 0.0, %v1482
        %v1484 = vpop.f32.mrb[0].mxu0
        %1485 = vmatprep.mubr.f32.mxu0 0.0
        %1486 = vmatmul.mubr.f32.gmra.mrb[0].mxu0 %v1347
        %v1487 = vpop.f32.mrb[0].mxu0
        %v1488 = vadd.f32 0.0, %v1487
        %v1489 = vpop.f32.mrb[0].mxu0
        %1490 = vmatprep.mubr.f32.mxu0 0.0
        %1491 = vmatmul.mubr.f32.gmra.mrb[0].mxu0 %v1350
        %v1492 = vpop.f32.mrb[0].mxu0
        %v1493 = vadd.f32 0.0, %v1492
        %v1494 = vpop.f32.mrb[0].mxu0
        %1495 = vmatprep.mubr.f32.mxu0 0.0
        %1496 = vmatmul.mubr.f32.gmra.mrb[0].mxu0 %v1353
        %v1497 = vpop.f32.mrb[0].mxu0
        %v1498 = vadd.f32 0.0, %v1497
        %v1499 = vpop.f32.mrb[0].mxu0
        %1500 = vmatprep.mubr.f32.mxu0 0.0
        %1501 = vmatmul.mubr.f32.gmra.mrb[0].mxu0 %v1356
        %v1502 = vpop.f32.mrb[0].mxu0
        %v1503 = vadd.f32 0.0, %v1502
        %v1504 = vpop.f32.mrb[0].mxu0
        %1505 = vdwg.mxu0
        %v1506 = vadd.f32 %v1276, %v1428
        %v1507 = vadd.f32 %v1277, %v1433
        %v1508 = vadd.f32 %v1278, %v1438
        %v1509 = vadd.f32 %v1279, %v1443
        %v1510 = vadd.f32 %v1280, %v1448
        %v1511 = vadd.f32 %v1281, %v1453
        %v1512 = vadd.f32 %v1282, %v1458
        %v1513 = vadd.f32 %v1283, %v1463
        %v1514 = vadd.f32 %v1284, %v1468
        %v1515 = vadd.f32 %v1285, %v1473
        %v1516 = vadd.f32 %v1286, %v1478
        %v1517 = vadd.f32 %v1287, %v1483
        %v1518 = vadd.f32 %v1288, %v1488
        %v1519 = vadd.f32 %v1289, %v1493
        %v1520 = vadd.f32 %v1290, %v1498
        %v1521 = vadd.f32 %v1291, %v1503
        %v1522 = vld [vmem:[%s298 + $0x12] sm:$0xff]
        %v1523 = vld [vmem:[%s298 + $0x1a] sm:$0xff]
        %v1524 = vld [vmem:[%s298 + $0x4a] sm:$0xff]
        %v1525 = vld [vmem:[%s298 + $0x52] sm:$0xff]
        %v1526 = vld [vmem:[%s298 + $0x82] sm:$0xff]
        %v1527 = vld [vmem:[%s298 + $0x8a] sm:$0xff]
        %v1528 = vld [vmem:[%s298 + $0xba] sm:$0xff]
        %v1529 = vld [vmem:[%s298 + $0xc2] sm:$0xff]
        %v1530 = vld [vmem:[%s298 + $0xf2] sm:$0xff]
        %v1531 = vld [vmem:[%s298 + $0xfa] sm:$0xff]
        %v1532 = vld [vmem:[%s298 + $0x12a] sm:$0xff]
        %v1533 = vld [vmem:[%s298 + $0x132] sm:$0xff]
        %v1534 = vld [vmem:[%s298 + $0x162] sm:$0xff]
        %v1535 = vld [vmem:[%s298 + $0x16a] sm:$0xff]
        %v1536 = vld [vmem:[%s298 + $0x19a] sm:$0xff]
        %v1537 = vld [vmem:[%s298 + $0x1a2] sm:$0xff]
        %s1538 = scalar_lea.vmem %s2, 16
        %v1539 = vld [vmem:[%s1538] sm:$0xf]
        %v1541 = vsel %vm320, %v1522, 0
        %v1544 = vsel %vm320, %v1523, 0
        %v1547 = vsel %vm320, %v1524, 0
        %v1550 = vsel %vm320, %v1525, 0
        %v1553 = vsel %vm320, %v1526, 0
        %v1556 = vsel %vm320, %v1527, 0
        %v1559 = vsel %vm320, %v1528, 0
        %v1562 = vsel %vm320, %v1529, 0
        %v1565 = vsel %vm320, %v1530, 0
        %v1568 = vsel %vm320, %v1531, 0
        %v1571 = vsel %vm320, %v1532, 0
        %v1574 = vsel %vm320, %v1533, 0
        %v1577 = vsel %vm320, %v1534, 0
        %v1580 = vsel %vm320, %v1535, 0
        %v1583 = vsel %vm320, %v1536, 0
        %v1586 = vsel %vm320, %v1537, 0
        %v1589 = vsel %vm369, %v1539, 0
        %1591 = vmatprep.subr.mxu0 0.0
        %1592 = vmatpush1.msra.mxu0 %v1589
        %1593 = vmatprep.subr.mxu0 0.0
        %1594 = vmatpush1.msra.mxu0 0.0
        %1595 = vmatprep.subr.mxu0 0.0
        %1596 = vmatpush1.msra.mxu0 0.0
        %1597 = vmatprep.subr.mxu0 0.0
        %1598 = vmatpush1.msra.mxu0 0.0
        %1599 = vmatprep.subr.mxu0 0.0
        %1600 = vmatpush1.msra.mxu0 0.0
        %1601 = vmatprep.subr.mxu0 0.0
        %1602 = vmatpush1.msra.mxu0 0.0
        %1603 = vmatprep.subr.mxu0 0.0
        %1604 = vmatpush1.msra.mxu0 0.0
        %1605 = vmatprep.subr.mxu0 0.0
        %1606 = vmatpush1.msra.mxu0 0.0
        %1607 = vmatprep.subr.mxu0 0.0
        %1608 = vmatpush1.msra.mxu0 0.0
        %1609 = vmatprep.subr.mxu0 0.0
        %1610 = vmatpush1.msra.mxu0 0.0
        %1611 = vmatprep.subr.mxu0 0.0
        %1612 = vmatpush1.msra.mxu0 0.0
        %1613 = vmatprep.subr.mxu0 0.0
        %1614 = vmatpush1.msra.mxu0 0.0
        %1615 = vmatprep.subr.mxu0 0.0
        %1616 = vmatpush1.msra.mxu0 0.0
        %1617 = vmatprep.subr.mxu0 0.0
        %1618 = vmatpush1.msra.mxu0 0.0
        %1619 = vmatprep.subr.mxu0 0.0
        %1620 = vmatpush1.msra.mxu0 0.0
        %1621 = vmatprep.subr.mxu0 0.0
        %1622 = vmatpush1.msra.mxu0 0.0
        %1623 = vmatprep.subr.mxu0 0.0
        %1624 = vmatpush1.msra.mxu0 0.0
        %1625 = vmatprep.subr.mxu0 0.0
        %1626 = vmatpush1.msra.mxu0 0.0
        %1627 = vmatprep.subr.mxu0 0.0
        %1628 = vmatpush1.msra.mxu0 0.0
        %1629 = vmatprep.subr.mxu0 0.0
        %1630 = vmatpush1.msra.mxu0 0.0
        %1631 = vmatprep.subr.mxu0 0.0
        %1632 = vmatpush1.msra.mxu0 0.0
        %1633 = vmatprep.subr.mxu0 0.0
        %1634 = vmatpush1.msra.mxu0 0.0
        %1635 = vmatprep.subr.mxu0 0.0
        %1636 = vmatpush1.msra.mxu0 0.0
        %1637 = vmatprep.subr.mxu0 0.0
        %1638 = vmatpush1.msra.mxu0 0.0
        %1639 = vmatprep.subr.mxu0 0.0
        %1640 = vmatpush1.msra.mxu0 0.0
        %1641 = vmatprep.subr.mxu0 0.0
        %1642 = vmatpush1.msra.mxu0 0.0
        %1643 = vmatprep.subr.mxu0 0.0
        %1644 = vmatpush1.msra.mxu0 0.0
        %1645 = vmatprep.subr.mxu0 0.0
        %1646 = vmatpush1.msra.mxu0 0.0
        %1647 = vmatprep.subr.mxu0 0.0
        %1648 = vmatpush1.msra.mxu0 0.0
        %1649 = vmatprep.subr.mxu0 0.0
        %1650 = vmatpush1.msra.mxu0 0.0
        %1651 = vmatprep.subr.mxu0 0.0
        %1652 = vmatpush1.msra.mxu0 0.0
        %1653 = vmatprep.subr.mxu0 0.0
        %1654 = vmatpush1.msra.mxu0 0.0
        %1655 = vmatprep.mubr.f32.mxu0 0.0
        %1656 = vmatmul.mubr.f32.gmra.mrb[0].mxu0 %v1541
        %v1657 = vpop.f32.mrb[0].mxu0
        %v1658 = vadd.f32 0.0, %v1657
        %v1659 = vpop.f32.mrb[0].mxu0
        %1660 = vmatprep.mubr.f32.mxu0 0.0
        %1661 = vmatmul.mubr.f32.gmra.mrb[0].mxu0 %v1544
        %v1662 = vpop.f32.mrb[0].mxu0
        %v1663 = vadd.f32 0.0, %v1662
        %v1664 = vpop.f32.mrb[0].mxu0
        %1665 = vmatprep.mubr.f32.mxu0 0.0
        %1666 = vmatmul.mubr.f32.gmra.mrb[0].mxu0 %v1547
        %v1667 = vpop.f32.mrb[0].mxu0
        %v1668 = vadd.f32 0.0, %v1667
        %v1669 = vpop.f32.mrb[0].mxu0
        %1670 = vmatprep.mubr.f32.mxu0 0.0
        %1671 = vmatmul.mubr.f32.gmra.mrb[0].mxu0 %v1550
        %v1672 = vpop.f32.mrb[0].mxu0
        %v1673 = vadd.f32 0.0, %v1672
        %v1674 = vpop.f32.mrb[0].mxu0
        %1675 = vmatprep.mubr.f32.mxu0 0.0
        %1676 = vmatmul.mubr.f32.gmra.mrb[0].mxu0 %v1553
        %v1677 = vpop.f32.mrb[0].mxu0
        %v1678 = vadd.f32 0.0, %v1677
        %v1679 = vpop.f32.mrb[0].mxu0
        %1680 = vmatprep.mubr.f32.mxu0 0.0
        %1681 = vmatmul.mubr.f32.gmra.mrb[0].mxu0 %v1556
        %v1682 = vpop.f32.mrb[0].mxu0
        %v1683 = vadd.f32 0.0, %v1682
        %v1684 = vpop.f32.mrb[0].mxu0
        %1685 = vmatprep.mubr.f32.mxu0 0.0
        %1686 = vmatmul.mubr.f32.gmra.mrb[0].mxu0 %v1559
        %v1687 = vpop.f32.mrb[0].mxu0
        %v1688 = vadd.f32 0.0, %v1687
        %v1689 = vpop.f32.mrb[0].mxu0
        %1690 = vmatprep.mubr.f32.mxu0 0.0
        %1691 = vmatmul.mubr.f32.gmra.mrb[0].mxu0 %v1562
        %v1692 = vpop.f32.mrb[0].mxu0
        %v1693 = vadd.f32 0.0, %v1692
        %v1694 = vpop.f32.mrb[0].mxu0
        %1695 = vmatprep.mubr.f32.mxu0 0.0
        %1696 = vmatmul.mubr.f32.gmra.mrb[0].mxu0 %v1565
        %v1697 = vpop.f32.mrb[0].mxu0
        %v1698 = vadd.f32 0.0, %v1697
        %v1699 = vpop.f32.mrb[0].mxu0
        %1700 = vmatprep.mubr.f32.mxu0 0.0
        %1701 = vmatmul.mubr.f32.gmra.mrb[0].mxu0 %v1568
        %v1702 = vpop.f32.mrb[0].mxu0
        %v1703 = vadd.f32 0.0, %v1702
        %v1704 = vpop.f32.mrb[0].mxu0
        %1705 = vmatprep.mubr.f32.mxu0 0.0
        %1706 = vmatmul.mubr.f32.gmra.mrb[0].mxu0 %v1571
        %v1707 = vpop.f32.mrb[0].mxu0
        %v1708 = vadd.f32 0.0, %v1707
        %v1709 = vpop.f32.mrb[0].mxu0
        %1710 = vmatprep.mubr.f32.mxu0 0.0
        %1711 = vmatmul.mubr.f32.gmra.mrb[0].mxu0 %v1574
        %v1712 = vpop.f32.mrb[0].mxu0
        %v1713 = vadd.f32 0.0, %v1712
        %v1714 = vpop.f32.mrb[0].mxu0
        %1715 = vmatprep.mubr.f32.mxu0 0.0
        %1716 = vmatmul.mubr.f32.gmra.mrb[0].mxu0 %v1577
        %v1717 = vpop.f32.mrb[0].mxu0
        %v1718 = vadd.f32 0.0, %v1717
        %v1719 = vpop.f32.mrb[0].mxu0
        %1720 = vmatprep.mubr.f32.mxu0 0.0
        %1721 = vmatmul.mubr.f32.gmra.mrb[0].mxu0 %v1580
        %v1722 = vpop.f32.mrb[0].mxu0
        %v1723 = vadd.f32 0.0, %v1722
        %v1724 = vpop.f32.mrb[0].mxu0
        %1725 = vmatprep.mubr.f32.mxu0 0.0
        %1726 = vmatmul.mubr.f32.gmra.mrb[0].mxu0 %v1583
        %v1727 = vpop.f32.mrb[0].mxu0
        %v1728 = vadd.f32 0.0, %v1727
        %v1729 = vpop.f32.mrb[0].mxu0
        %1730 = vmatprep.mubr.f32.mxu0 0.0
        %1731 = vmatmul.mubr.f32.gmra.mrb[0].mxu0 %v1586
        %v1732 = vpop.f32.mrb[0].mxu0
        %v1733 = vadd.f32 0.0, %v1732
        %v1734 = vpop.f32.mrb[0].mxu0
        %1735 = vdwg.mxu0
        %v1736 = vadd.f32 %v1506, %v1658
        %v1737 = vadd.f32 %v1507, %v1663
        %v1738 = vadd.f32 %v1508, %v1668
        %v1739 = vadd.f32 %v1509, %v1673
        %v1740 = vadd.f32 %v1510, %v1678
        %v1741 = vadd.f32 %v1511, %v1683
        %v1742 = vadd.f32 %v1512, %v1688
        %v1743 = vadd.f32 %v1513, %v1693
        %v1744 = vadd.f32 %v1514, %v1698
        %v1745 = vadd.f32 %v1515, %v1703
        %v1746 = vadd.f32 %v1516, %v1708
        %v1747 = vadd.f32 %v1517, %v1713
        %v1748 = vadd.f32 %v1518, %v1718
        %v1749 = vadd.f32 %v1519, %v1723
        %v1750 = vadd.f32 %v1520, %v1728
        %v1751 = vadd.f32 %v1521, %v1733
        %v1752 = vld [vmem:[%s298 + $0x18] sm:$0xff]
        %v1753 = vld [vmem:[%s298 + $0x20] sm:$0xff]
        %v1754 = vld [vmem:[%s298 + $0x50] sm:$0xff]
        %v1755 = vld [vmem:[%s298 + $0x58] sm:$0xff]
        %v1756 = vld [vmem:[%s298 + $0x88] sm:$0xff]
        %v1757 = vld [vmem:[%s298 + $0x90] sm:$0xff]
        %v1758 = vld [vmem:[%s298 + $0xc0] sm:$0xff]
        %v1759 = vld [vmem:[%s298 + $0xc8] sm:$0xff]
        %v1760 = vld [vmem:[%s298 + $0xf8] sm:$0xff]
        %v1761 = vld [vmem:[%s298 + $0x100] sm:$0xff]
        %v1762 = vld [vmem:[%s298 + $0x130] sm:$0xff]
        %v1763 = vld [vmem:[%s298 + $0x138] sm:$0xff]
        %v1764 = vld [vmem:[%s298 + $0x168] sm:$0xff]
        %v1765 = vld [vmem:[%s298 + $0x170] sm:$0xff]
        %v1766 = vld [vmem:[%s298 + $0x1a0] sm:$0xff]
        %v1767 = vld [vmem:[%s298 + $0x1a8] sm:$0xff]
        %s1768 = scalar_lea.vmem %s2, 20
        %v1769 = vld [vmem:[%s1768] sm:$0xf]
        %v1771 = vsel %vm320, %v1752, 0
        %v1774 = vsel %vm320, %v1753, 0
        %v1777 = vsel %vm320, %v1754, 0
        %v1780 = vsel %vm320, %v1755, 0
        %v1783 = vsel %vm320, %v1756, 0
        %v1786 = vsel %vm320, %v1757, 0
        %v1789 = vsel %vm320, %v1758, 0
        %v1792 = vsel %vm320, %v1759, 0
        %v1795 = vsel %vm320, %v1760, 0
        %v1798 = vsel %vm320, %v1761, 0
        %v1801 = vsel %vm320, %v1762, 0
        %v1804 = vsel %vm320, %v1763, 0
        %v1807 = vsel %vm320, %v1764, 0
        %v1810 = vsel %vm320, %v1765, 0
        %v1813 = vsel %vm320, %v1766, 0
        %v1816 = vsel %vm320, %v1767, 0
        %v1819 = vsel %vm369, %v1769, 0
        %1821 = vmatprep.subr.mxu0 0.0
        %1822 = vmatpush1.msra.mxu0 %v1819
        %1823 = vmatprep.subr.mxu0 0.0
        %1824 = vmatpush1.msra.mxu0 0.0
        %1825 = vmatprep.subr.mxu0 0.0
        %1826 = vmatpush1.msra.mxu0 0.0
        %1827 = vmatprep.subr.mxu0 0.0
        %1828 = vmatpush1.msra.mxu0 0.0
        %1829 = vmatprep.subr.mxu0 0.0
        %1830 = vmatpush1.msra.mxu0 0.0
        %1831 = vmatprep.subr.mxu0 0.0
        %1832 = vmatpush1.msra.mxu0 0.0
        %1833 = vmatprep.subr.mxu0 0.0
        %1834 = vmatpush1.msra.mxu0 0.0
        %1835 = vmatprep.subr.mxu0 0.0
        %1836 = vmatpush1.msra.mxu0 0.0
        %1837 = vmatprep.subr.mxu0 0.0
        %1838 = vmatpush1.msra.mxu0 0.0
        %1839 = vmatprep.subr.mxu0 0.0
        %1840 = vmatpush1.msra.mxu0 0.0
        %1841 = vmatprep.subr.mxu0 0.0
        %1842 = vmatpush1.msra.mxu0 0.0
        %1843 = vmatprep.subr.mxu0 0.0
        %1844 = vmatpush1.msra.mxu0 0.0
        %1845 = vmatprep.subr.mxu0 0.0
        %1846 = vmatpush1.msra.mxu0 0.0
        %1847 = vmatprep.subr.mxu0 0.0
        %1848 = vmatpush1.msra.mxu0 0.0
        %1849 = vmatprep.subr.mxu0 0.0
        %1850 = vmatpush1.msra.mxu0 0.0
        %1851 = vmatprep.subr.mxu0 0.0
        %1852 = vmatpush1.msra.mxu0 0.0
        %1853 = vmatprep.subr.mxu0 0.0
        %1854 = vmatpush1.msra.mxu0 0.0
        %1855 = vmatprep.subr.mxu0 0.0
        %1856 = vmatpush1.msra.mxu0 0.0
        %1857 = vmatprep.subr.mxu0 0.0
        %1858 = vmatpush1.msra.mxu0 0.0
        %1859 = vmatprep.subr.mxu0 0.0
        %1860 = vmatpush1.msra.mxu0 0.0
        %1861 = vmatprep.subr.mxu0 0.0
        %1862 = vmatpush1.msra.mxu0 0.0
        %1863 = vmatprep.subr.mxu0 0.0
        %1864 = vmatpush1.msra.mxu0 0.0
        %1865 = vmatprep.subr.mxu0 0.0
        %1866 = vmatpush1.msra.mxu0 0.0
        %1867 = vmatprep.subr.mxu0 0.0
        %1868 = vmatpush1.msra.mxu0 0.0
        %1869 = vmatprep.subr.mxu0 0.0
        %1870 = vmatpush1.msra.mxu0 0.0
        %1871 = vmatprep.subr.mxu0 0.0
        %1872 = vmatpush1.msra.mxu0 0.0
        %1873 = vmatprep.subr.mxu0 0.0
        %1874 = vmatpush1.msra.mxu0 0.0
        %1875 = vmatprep.subr.mxu0 0.0
        %1876 = vmatpush1.msra.mxu0 0.0
        %1877 = vmatprep.subr.mxu0 0.0
        %1878 = vmatpush1.msra.mxu0 0.0
        %1879 = vmatprep.subr.mxu0 0.0
        %1880 = vmatpush1.msra.mxu0 0.0
        %1881 = vmatprep.subr.mxu0 0.0
        %1882 = vmatpush1.msra.mxu0 0.0
        %1883 = vmatprep.subr.mxu0 0.0
        %1884 = vmatpush1.msra.mxu0 0.0
        %1885 = vmatprep.mubr.f32.mxu0 0.0
        %1886 = vmatmul.mubr.f32.gmra.mrb[0].mxu0 %v1771
        %v1887 = vpop.f32.mrb[0].mxu0
        %v1888 = vadd.f32 0.0, %v1887
        %v1889 = vpop.f32.mrb[0].mxu0
        %1890 = vmatprep.mubr.f32.mxu0 0.0
        %1891 = vmatmul.mubr.f32.gmra.mrb[0].mxu0 %v1774
        %v1892 = vpop.f32.mrb[0].mxu0
        %v1893 = vadd.f32 0.0, %v1892
        %v1894 = vpop.f32.mrb[0].mxu0
        %1895 = vmatprep.mubr.f32.mxu0 0.0
        %1896 = vmatmul.mubr.f32.gmra.mrb[0].mxu0 %v1777
        %v1897 = vpop.f32.mrb[0].mxu0
        %v1898 = vadd.f32 0.0, %v1897
        %v1899 = vpop.f32.mrb[0].mxu0
        %1900 = vmatprep.mubr.f32.mxu0 0.0
        %1901 = vmatmul.mubr.f32.gmra.mrb[0].mxu0 %v1780
        %v1902 = vpop.f32.mrb[0].mxu0
        %v1903 = vadd.f32 0.0, %v1902
        %v1904 = vpop.f32.mrb[0].mxu0
        %1905 = vmatprep.mubr.f32.mxu0 0.0
        %1906 = vmatmul.mubr.f32.gmra.mrb[0].mxu0 %v1783
        %v1907 = vpop.f32.mrb[0].mxu0
        %v1908 = vadd.f32 0.0, %v1907
        %v1909 = vpop.f32.mrb[0].mxu0
        %1910 = vmatprep.mubr.f32.mxu0 0.0
        %1911 = vmatmul.mubr.f32.gmra.mrb[0].mxu0 %v1786
        %v1912 = vpop.f32.mrb[0].mxu0
        %v1913 = vadd.f32 0.0, %v1912
        %v1914 = vpop.f32.mrb[0].mxu0
        %1915 = vmatprep.mubr.f32.mxu0 0.0
        %1916 = vmatmul.mubr.f32.gmra.mrb[0].mxu0 %v1789
        %v1917 = vpop.f32.mrb[0].mxu0
        %v1918 = vadd.f32 0.0, %v1917
        %v1919 = vpop.f32.mrb[0].mxu0
        %1920 = vmatprep.mubr.f32.mxu0 0.0
        %1921 = vmatmul.mubr.f32.gmra.mrb[0].mxu0 %v1792
        %v1922 = vpop.f32.mrb[0].mxu0
        %v1923 = vadd.f32 0.0, %v1922
        %v1924 = vpop.f32.mrb[0].mxu0
        %1925 = vmatprep.mubr.f32.mxu0 0.0
        %1926 = vmatmul.mubr.f32.gmra.mrb[0].mxu0 %v1795
        %v1927 = vpop.f32.mrb[0].mxu0
        %v1928 = vadd.f32 0.0, %v1927
        %v1929 = vpop.f32.mrb[0].mxu0
        %1930 = vmatprep.mubr.f32.mxu0 0.0
        %1931 = vmatmul.mubr.f32.gmra.mrb[0].mxu0 %v1798
        %v1932 = vpop.f32.mrb[0].mxu0
        %v1933 = vadd.f32 0.0, %v1932
        %v1934 = vpop.f32.mrb[0].mxu0
        %1935 = vmatprep.mubr.f32.mxu0 0.0
        %1936 = vmatmul.mubr.f32.gmra.mrb[0].mxu0 %v1801
        %v1937 = vpop.f32.mrb[0].mxu0
        %v1938 = vadd.f32 0.0, %v1937
        %v1939 = vpop.f32.mrb[0].mxu0
        %1940 = vmatprep.mubr.f32.mxu0 0.0
        %1941 = vmatmul.mubr.f32.gmra.mrb[0].mxu0 %v1804
        %v1942 = vpop.f32.mrb[0].mxu0
        %v1943 = vadd.f32 0.0, %v1942
        %v1944 = vpop.f32.mrb[0].mxu0
        %1945 = vmatprep.mubr.f32.mxu0 0.0
        %1946 = vmatmul.mubr.f32.gmra.mrb[0].mxu0 %v1807
        %v1947 = vpop.f32.mrb[0].mxu0
        %v1948 = vadd.f32 0.0, %v1947
        %v1949 = vpop.f32.mrb[0].mxu0
        %1950 = vmatprep.mubr.f32.mxu0 0.0
        %1951 = vmatmul.mubr.f32.gmra.mrb[0].mxu0 %v1810
        %v1952 = vpop.f32.mrb[0].mxu0
        %v1953 = vadd.f32 0.0, %v1952
        %v1954 = vpop.f32.mrb[0].mxu0
        %1955 = vmatprep.mubr.f32.mxu0 0.0
        %1956 = vmatmul.mubr.f32.gmra.mrb[0].mxu0 %v1813
        %v1957 = vpop.f32.mrb[0].mxu0
        %v1958 = vadd.f32 0.0, %v1957
        %v1959 = vpop.f32.mrb[0].mxu0
        %1960 = vmatprep.mubr.f32.mxu0 0.0
        %1961 = vmatmul.mubr.f32.gmra.mrb[0].mxu0 %v1816
        %v1962 = vpop.f32.mrb[0].mxu0
        %v1963 = vadd.f32 0.0, %v1962
        %v1964 = vpop.f32.mrb[0].mxu0
        %1965 = vdwg.mxu0
        %v1966 = vadd.f32 %v1736, %v1888
        %v1967 = vadd.f32 %v1737, %v1893
        %v1968 = vadd.f32 %v1738, %v1898
        %v1969 = vadd.f32 %v1739, %v1903
        %v1970 = vadd.f32 %v1740, %v1908
        %v1971 = vadd.f32 %v1741, %v1913
        %v1972 = vadd.f32 %v1742, %v1918
        %v1973 = vadd.f32 %v1743, %v1923
        %v1974 = vadd.f32 %v1744, %v1928
        %v1975 = vadd.f32 %v1745, %v1933
        %v1976 = vadd.f32 %v1746, %v1938
        %v1977 = vadd.f32 %v1747, %v1943
        %v1978 = vadd.f32 %v1748, %v1948
        %v1979 = vadd.f32 %v1749, %v1953
        %v1980 = vadd.f32 %v1750, %v1958
        %v1981 = vadd.f32 %v1751, %v1963
        %s1982 = sadd.s32 %s294, 24
        %s1983 = smul.u32 %s1982, 56
        %s1984 = scalar_lea.vmem %s284, %s1983
        %v1985 = vld [vmem:[%s1984 + $0xc] sm:$0xff]
        %v1986 = vld [vmem:[%s1984 + $0x14] sm:$0xff]
        %v1987 = vld [vmem:[%s1984 + $0x44] sm:$0xff]
        %v1988 = vld [vmem:[%s1984 + $0x4c] sm:$0xff]
        %v1989 = vld [vmem:[%s1984 + $0x7c] sm:$0xff]
        %v1990 = vld [vmem:[%s1984 + $0x84] sm:$0xff]
        %v1991 = vld [vmem:[%s1984 + $0xb4] sm:$0xff]
        %v1992 = vld [vmem:[%s1984 + $0xbc] sm:$0xff]
        %v1993 = vld [vmem:[%s1984 + $0xec] sm:$0xff]
        %v1994 = vld [vmem:[%s1984 + $0xf4] sm:$0xff]
        %v1995 = vld [vmem:[%s1984 + $0x124] sm:$0xff]
        %v1996 = vld [vmem:[%s1984 + $0x12c] sm:$0xff]
        %v1997 = vld [vmem:[%s1984 + $0x15c] sm:$0xff]
        %v1998 = vld [vmem:[%s1984 + $0x164] sm:$0xff]
        %v1999 = vld [vmem:[%s1984 + $0x194] sm:$0xff]
        %v2000 = vld [vmem:[%s1984 + $0x19c] sm:$0xff]
        %s2001 = scalar_lea.vmem %s2, 24
        %v2002 = vld [vmem:[%s2001] sm:$0xf]
        %v2004 = vsel %vm320, %v1985, 0
        %v2007 = vsel %vm320, %v1986, 0
        %v2010 = vsel %vm320, %v1987, 0
        %v2013 = vsel %vm320, %v1988, 0
        %v2016 = vsel %vm320, %v1989, 0
        %v2019 = vsel %vm320, %v1990, 0
        %v2022 = vsel %vm320, %v1991, 0
        %v2025 = vsel %vm320, %v1992, 0
        %v2028 = vsel %vm320, %v1993, 0
        %v2031 = vsel %vm320, %v1994, 0
        %v2034 = vsel %vm320, %v1995, 0
        %v2037 = vsel %vm320, %v1996, 0
        %v2040 = vsel %vm320, %v1997, 0
        %v2043 = vsel %vm320, %v1998, 0
        %v2046 = vsel %vm320, %v1999, 0
        %v2049 = vsel %vm320, %v2000, 0
        %v2052 = vsel %vm369, %v2002, 0
        %2054 = vmatprep.subr.mxu0 0.0
        %2055 = vmatpush1.msra.mxu0 %v2052
        %2056 = vmatprep.subr.mxu0 0.0
        %2057 = vmatpush1.msra.mxu0 0.0
        %2058 = vmatprep.subr.mxu0 0.0
        %2059 = vmatpush1.msra.mxu0 0.0
        %2060 = vmatprep.subr.mxu0 0.0
        %2061 = vmatpush1.msra.mxu0 0.0
        %2062 = vmatprep.subr.mxu0 0.0
        %2063 = vmatpush1.msra.mxu0 0.0
        %2064 = vmatprep.subr.mxu0 0.0
        %2065 = vmatpush1.msra.mxu0 0.0
        %2066 = vmatprep.subr.mxu0 0.0
        %2067 = vmatpush1.msra.mxu0 0.0
        %2068 = vmatprep.subr.mxu0 0.0
        %2069 = vmatpush1.msra.mxu0 0.0
        %2070 = vmatprep.subr.mxu0 0.0
        %2071 = vmatpush1.msra.mxu0 0.0
        %2072 = vmatprep.subr.mxu0 0.0
        %2073 = vmatpush1.msra.mxu0 0.0
        %2074 = vmatprep.subr.mxu0 0.0
        %2075 = vmatpush1.msra.mxu0 0.0
        %2076 = vmatprep.subr.mxu0 0.0
        %2077 = vmatpush1.msra.mxu0 0.0
        %2078 = vmatprep.subr.mxu0 0.0
        %2079 = vmatpush1.msra.mxu0 0.0
        %2080 = vmatprep.subr.mxu0 0.0
        %2081 = vmatpush1.msra.mxu0 0.0
        %2082 = vmatprep.subr.mxu0 0.0
        %2083 = vmatpush1.msra.mxu0 0.0
        %2084 = vmatprep.subr.mxu0 0.0
        %2085 = vmatpush1.msra.mxu0 0.0
        %2086 = vmatprep.subr.mxu0 0.0
        %2087 = vmatpush1.msra.mxu0 0.0
        %2088 = vmatprep.subr.mxu0 0.0
        %2089 = vmatpush1.msra.mxu0 0.0
        %2090 = vmatprep.subr.mxu0 0.0
        %2091 = vmatpush1.msra.mxu0 0.0
        %2092 = vmatprep.subr.mxu0 0.0
        %2093 = vmatpush1.msra.mxu0 0.0
        %2094 = vmatprep.subr.mxu0 0.0
        %2095 = vmatpush1.msra.mxu0 0.0
        %2096 = vmatprep.subr.mxu0 0.0
        %2097 = vmatpush1.msra.mxu0 0.0
        %2098 = vmatprep.subr.mxu0 0.0
        %2099 = vmatpush1.msra.mxu0 0.0
        %2100 = vmatprep.subr.mxu0 0.0
        %2101 = vmatpush1.msra.mxu0 0.0
        %2102 = vmatprep.subr.mxu0 0.0
        %2103 = vmatpush1.msra.mxu0 0.0
        %2104 = vmatprep.subr.mxu0 0.0
        %2105 = vmatpush1.msra.mxu0 0.0
        %2106 = vmatprep.subr.mxu0 0.0
        %2107 = vmatpush1.msra.mxu0 0.0
        %2108 = vmatprep.subr.mxu0 0.0
        %2109 = vmatpush1.msra.mxu0 0.0
        %2110 = vmatprep.subr.mxu0 0.0
        %2111 = vmatpush1.msra.mxu0 0.0
        %2112 = vmatprep.subr.mxu0 0.0
        %2113 = vmatpush1.msra.mxu0 0.0
        %2114 = vmatprep.subr.mxu0 0.0
        %2115 = vmatpush1.msra.mxu0 0.0
        %2116 = vmatprep.subr.mxu0 0.0
        %2117 = vmatpush1.msra.mxu0 0.0
        %2118 = vmatprep.mubr.f32.mxu0 0.0
        %2119 = vmatmul.mubr.f32.gmra.mrb[0].mxu0 %v2004
        %v2120 = vpop.f32.mrb[0].mxu0
        %v2121 = vadd.f32 0.0, %v2120
        %v2122 = vpop.f32.mrb[0].mxu0
        %2123 = vmatprep.mubr.f32.mxu0 0.0
        %2124 = vmatmul.mubr.f32.gmra.mrb[0].mxu0 %v2007
        %v2125 = vpop.f32.mrb[0].mxu0
        %v2126 = vadd.f32 0.0, %v2125
        %v2127 = vpop.f32.mrb[0].mxu0
        %2128 = vmatprep.mubr.f32.mxu0 0.0
        %2129 = vmatmul.mubr.f32.gmra.mrb[0].mxu0 %v2010
        %v2130 = vpop.f32.mrb[0].mxu0
        %v2131 = vadd.f32 0.0, %v2130
        %v2132 = vpop.f32.mrb[0].mxu0
        %2133 = vmatprep.mubr.f32.mxu0 0.0
        %2134 = vmatmul.mubr.f32.gmra.mrb[0].mxu0 %v2013
        %v2135 = vpop.f32.mrb[0].mxu0
        %v2136 = vadd.f32 0.0, %v2135
        %v2137 = vpop.f32.mrb[0].mxu0
        %2138 = vmatprep.mubr.f32.mxu0 0.0
        %2139 = vmatmul.mubr.f32.gmra.mrb[0].mxu0 %v2016
        %v2140 = vpop.f32.mrb[0].mxu0
        %v2141 = vadd.f32 0.0, %v2140
        %v2142 = vpop.f32.mrb[0].mxu0
        %2143 = vmatprep.mubr.f32.mxu0 0.0
        %2144 = vmatmul.mubr.f32.gmra.mrb[0].mxu0 %v2019
        %v2145 = vpop.f32.mrb[0].mxu0
        %v2146 = vadd.f32 0.0, %v2145
        %v2147 = vpop.f32.mrb[0].mxu0
        %2148 = vmatprep.mubr.f32.mxu0 0.0
        %2149 = vmatmul.mubr.f32.gmra.mrb[0].mxu0 %v2022
        %v2150 = vpop.f32.mrb[0].mxu0
        %v2151 = vadd.f32 0.0, %v2150
        %v2152 = vpop.f32.mrb[0].mxu0
        %2153 = vmatprep.mubr.f32.mxu0 0.0
        %2154 = vmatmul.mubr.f32.gmra.mrb[0].mxu0 %v2025
        %v2155 = vpop.f32.mrb[0].mxu0
        %v2156 = vadd.f32 0.0, %v2155
        %v2157 = vpop.f32.mrb[0].mxu0
        %2158 = vmatprep.mubr.f32.mxu0 0.0
        %2159 = vmatmul.mubr.f32.gmra.mrb[0].mxu0 %v2028
        %v2160 = vpop.f32.mrb[0].mxu0
        %v2161 = vadd.f32 0.0, %v2160
        %v2162 = vpop.f32.mrb[0].mxu0
        %2163 = vmatprep.mubr.f32.mxu0 0.0
        %2164 = vmatmul.mubr.f32.gmra.mrb[0].mxu0 %v2031
        %v2165 = vpop.f32.mrb[0].mxu0
        %v2166 = vadd.f32 0.0, %v2165
        %v2167 = vpop.f32.mrb[0].mxu0
        %2168 = vmatprep.mubr.f32.mxu0 0.0
        %2169 = vmatmul.mubr.f32.gmra.mrb[0].mxu0 %v2034
        %v2170 = vpop.f32.mrb[0].mxu0
        %v2171 = vadd.f32 0.0, %v2170
        %v2172 = vpop.f32.mrb[0].mxu0
        %2173 = vmatprep.mubr.f32.mxu0 0.0
        %2174 = vmatmul.mubr.f32.gmra.mrb[0].mxu0 %v2037
        %v2175 = vpop.f32.mrb[0].mxu0
        %v2176 = vadd.f32 0.0, %v2175
        %v2177 = vpop.f32.mrb[0].mxu0
        %2178 = vmatprep.mubr.f32.mxu0 0.0
        %2179 = vmatmul.mubr.f32.gmra.mrb[0].mxu0 %v2040
        %v2180 = vpop.f32.mrb[0].mxu0
        %v2181 = vadd.f32 0.0, %v2180
        %v2182 = vpop.f32.mrb[0].mxu0
        %2183 = vmatprep.mubr.f32.mxu0 0.0
        %2184 = vmatmul.mubr.f32.gmra.mrb[0].mxu0 %v2043
        %v2185 = vpop.f32.mrb[0].mxu0
        %v2186 = vadd.f32 0.0, %v2185
        %v2187 = vpop.f32.mrb[0].mxu0
        %2188 = vmatprep.mubr.f32.mxu0 0.0
        %2189 = vmatmul.mubr.f32.gmra.mrb[0].mxu0 %v2046
        %v2190 = vpop.f32.mrb[0].mxu0
        %v2191 = vadd.f32 0.0, %v2190
        %v2192 = vpop.f32.mrb[0].mxu0
        %2193 = vmatprep.mubr.f32.mxu0 0.0
        %2194 = vmatmul.mubr.f32.gmra.mrb[0].mxu0 %v2049
        %v2195 = vpop.f32.mrb[0].mxu0
        %v2196 = vadd.f32 0.0, %v2195
        %v2197 = vpop.f32.mrb[0].mxu0
        %2198 = vdwg.mxu0
        %v2199 = vadd.f32 %v1966, %v2121
        %v2200 = vadd.f32 %v1967, %v2126
        %v2201 = vadd.f32 %v1968, %v2131
        %v2202 = vadd.f32 %v1969, %v2136
        %v2203 = vadd.f32 %v1970, %v2141
        %v2204 = vadd.f32 %v1971, %v2146
        %v2205 = vadd.f32 %v1972, %v2151
        %v2206 = vadd.f32 %v1973, %v2156
        %v2207 = vadd.f32 %v1974, %v2161
        %v2208 = vadd.f32 %v1975, %v2166
        %v2209 = vadd.f32 %v1976, %v2171
        %v2210 = vadd.f32 %v1977, %v2176
        %v2211 = vadd.f32 %v1978, %v2181
        %v2212 = vadd.f32 %v1979, %v2186
        %v2213 = vadd.f32 %v1980, %v2191
        %v2214 = vadd.f32 %v1981, %v2196
        %v2215 = vld [vmem:[%s1984 + $0x12] sm:$0xff]
        %v2216 = vld [vmem:[%s1984 + $0x1a] sm:$0xff]
        %v2217 = vld [vmem:[%s1984 + $0x4a] sm:$0xff]
        %v2218 = vld [vmem:[%s1984 + $0x52] sm:$0xff]
        %v2219 = vld [vmem:[%s1984 + $0x82] sm:$0xff]
        %v2220 = vld [vmem:[%s1984 + $0x8a] sm:$0xff]
        %v2221 = vld [vmem:[%s1984 + $0xba] sm:$0xff]
        %v2222 = vld [vmem:[%s1984 + $0xc2] sm:$0xff]
        %v2223 = vld [vmem:[%s1984 + $0xf2] sm:$0xff]
        %v2224 = vld [vmem:[%s1984 + $0xfa] sm:$0xff]
        %v2225 = vld [vmem:[%s1984 + $0x12a] sm:$0xff]
        %v2226 = vld [vmem:[%s1984 + $0x132] sm:$0xff]
        %v2227 = vld [vmem:[%s1984 + $0x162] sm:$0xff]
        %v2228 = vld [vmem:[%s1984 + $0x16a] sm:$0xff]
        %v2229 = vld [vmem:[%s1984 + $0x19a] sm:$0xff]
        %v2230 = vld [vmem:[%s1984 + $0x1a2] sm:$0xff]
        %s2231 = scalar_lea.vmem %s2, 28
        %v2232 = vld [vmem:[%s2231] sm:$0xf]
        %v2234 = vsel %vm320, %v2215, 0
        %v2237 = vsel %vm320, %v2216, 0
        %v2240 = vsel %vm320, %v2217, 0
        %v2243 = vsel %vm320, %v2218, 0
        %v2246 = vsel %vm320, %v2219, 0
        %v2249 = vsel %vm320, %v2220, 0
        %v2252 = vsel %vm320, %v2221, 0
        %v2255 = vsel %vm320, %v2222, 0
        %v2258 = vsel %vm320, %v2223, 0
        %v2261 = vsel %vm320, %v2224, 0
        %v2264 = vsel %vm320, %v2225, 0
        %v2267 = vsel %vm320, %v2226, 0
        %v2270 = vsel %vm320, %v2227, 0
        %v2273 = vsel %vm320, %v2228, 0
        %v2276 = vsel %vm320, %v2229, 0
        %v2279 = vsel %vm320, %v2230, 0
        %v2282 = vsel %vm369, %v2232, 0
        %2284 = vmatprep.subr.mxu0 0.0
        %2285 = vmatpush1.msra.mxu0 %v2282
        %2286 = vmatprep.subr.mxu0 0.0
        %2287 = vmatpush1.msra.mxu0 0.0
        %2288 = vmatprep.subr.mxu0 0.0
        %2289 = vmatpush1.msra.mxu0 0.0
        %2290 = vmatprep.subr.mxu0 0.0
        %2291 = vmatpush1.msra.mxu0 0.0
        %2292 = vmatprep.subr.mxu0 0.0
        %2293 = vmatpush1.msra.mxu0 0.0
        %2294 = vmatprep.subr.mxu0 0.0
        %2295 = vmatpush1.msra.mxu0 0.0
        %2296 = vmatprep.subr.mxu0 0.0
        %2297 = vmatpush1.msra.mxu0 0.0
        %2298 = vmatprep.subr.mxu0 0.0
        %2299 = vmatpush1.msra.mxu0 0.0
        %2300 = vmatprep.subr.mxu0 0.0
        %2301 = vmatpush1.msra.mxu0 0.0
        %2302 = vmatprep.subr.mxu0 0.0
        %2303 = vmatpush1.msra.mxu0 0.0
        %2304 = vmatprep.subr.mxu0 0.0
        %2305 = vmatpush1.msra.mxu0 0.0
        %2306 = vmatprep.subr.mxu0 0.0
        %2307 = vmatpush1.msra.mxu0 0.0
        %2308 = vmatprep.subr.mxu0 0.0
        %2309 = vmatpush1.msra.mxu0 0.0
        %2310 = vmatprep.subr.mxu0 0.0
        %2311 = vmatpush1.msra.mxu0 0.0
        %2312 = vmatprep.subr.mxu0 0.0
        %2313 = vmatpush1.msra.mxu0 0.0
        %2314 = vmatprep.subr.mxu0 0.0
        %2315 = vmatpush1.msra.mxu0 0.0
        %2316 = vmatprep.subr.mxu0 0.0
        %2317 = vmatpush1.msra.mxu0 0.0
        %2318 = vmatprep.subr.mxu0 0.0
        %2319 = vmatpush1.msra.mxu0 0.0
        %2320 = vmatprep.subr.mxu0 0.0
        %2321 = vmatpush1.msra.mxu0 0.0
        %2322 = vmatprep.subr.mxu0 0.0
        %2323 = vmatpush1.msra.mxu0 0.0
        %2324 = vmatprep.subr.mxu0 0.0
        %2325 = vmatpush1.msra.mxu0 0.0
        %2326 = vmatprep.subr.mxu0 0.0
        %2327 = vmatpush1.msra.mxu0 0.0
        %2328 = vmatprep.subr.mxu0 0.0
        %2329 = vmatpush1.msra.mxu0 0.0
        %2330 = vmatprep.subr.mxu0 0.0
        %2331 = vmatpush1.msra.mxu0 0.0
        %2332 = vmatprep.subr.mxu0 0.0
        %2333 = vmatpush1.msra.mxu0 0.0
        %2334 = vmatprep.subr.mxu0 0.0
        %2335 = vmatpush1.msra.mxu0 0.0
        %2336 = vmatprep.subr.mxu0 0.0
        %2337 = vmatpush1.msra.mxu0 0.0
        %2338 = vmatprep.subr.mxu0 0.0
        %2339 = vmatpush1.msra.mxu0 0.0
        %2340 = vmatprep.subr.mxu0 0.0
        %2341 = vmatpush1.msra.mxu0 0.0
        %2342 = vmatprep.subr.mxu0 0.0
        %2343 = vmatpush1.msra.mxu0 0.0
        %2344 = vmatprep.subr.mxu0 0.0
        %2345 = vmatpush1.msra.mxu0 0.0
        %2346 = vmatprep.subr.mxu0 0.0
        %2347 = vmatpush1.msra.mxu0 0.0
        %2348 = vmatprep.mubr.f32.mxu0 0.0
        %2349 = vmatmul.mubr.f32.gmra.mrb[0].mxu0 %v2234
        %v2350 = vpop.f32.mrb[0].mxu0
        %v2351 = vadd.f32 0.0, %v2350
        %v2352 = vpop.f32.mrb[0].mxu0
        %2353 = vmatprep.mubr.f32.mxu0 0.0
        %2354 = vmatmul.mubr.f32.gmra.mrb[0].mxu0 %v2237
        %v2355 = vpop.f32.mrb[0].mxu0
        %v2356 = vadd.f32 0.0, %v2355
        %v2357 = vpop.f32.mrb[0].mxu0
        %2358 = vmatprep.mubr.f32.mxu0 0.0
        %2359 = vmatmul.mubr.f32.gmra.mrb[0].mxu0 %v2240
        %v2360 = vpop.f32.mrb[0].mxu0
        %v2361 = vadd.f32 0.0, %v2360
        %v2362 = vpop.f32.mrb[0].mxu0
        %2363 = vmatprep.mubr.f32.mxu0 0.0
        %2364 = vmatmul.mubr.f32.gmra.mrb[0].mxu0 %v2243
        %v2365 = vpop.f32.mrb[0].mxu0
        %v2366 = vadd.f32 0.0, %v2365
        %v2367 = vpop.f32.mrb[0].mxu0
        %2368 = vmatprep.mubr.f32.mxu0 0.0
        %2369 = vmatmul.mubr.f32.gmra.mrb[0].mxu0 %v2246
        %v2370 = vpop.f32.mrb[0].mxu0
        %v2371 = vadd.f32 0.0, %v2370
        %v2372 = vpop.f32.mrb[0].mxu0
        %2373 = vmatprep.mubr.f32.mxu0 0.0
        %2374 = vmatmul.mubr.f32.gmra.mrb[0].mxu0 %v2249
        %v2375 = vpop.f32.mrb[0].mxu0
        %v2376 = vadd.f32 0.0, %v2375
        %v2377 = vpop.f32.mrb[0].mxu0
        %2378 = vmatprep.mubr.f32.mxu0 0.0
        %2379 = vmatmul.mubr.f32.gmra.mrb[0].mxu0 %v2252
        %v2380 = vpop.f32.mrb[0].mxu0
        %v2381 = vadd.f32 0.0, %v2380
        %v2382 = vpop.f32.mrb[0].mxu0
        %2383 = vmatprep.mubr.f32.mxu0 0.0
        %2384 = vmatmul.mubr.f32.gmra.mrb[0].mxu0 %v2255
        %v2385 = vpop.f32.mrb[0].mxu0
        %v2386 = vadd.f32 0.0, %v2385
        %v2387 = vpop.f32.mrb[0].mxu0
        %2388 = vmatprep.mubr.f32.mxu0 0.0
        %2389 = vmatmul.mubr.f32.gmra.mrb[0].mxu0 %v2258
        %v2390 = vpop.f32.mrb[0].mxu0
        %v2391 = vadd.f32 0.0, %v2390
        %v2392 = vpop.f32.mrb[0].mxu0
        %2393 = vmatprep.mubr.f32.mxu0 0.0
        %2394 = vmatmul.mubr.f32.gmra.mrb[0].mxu0 %v2261
        %v2395 = vpop.f32.mrb[0].mxu0
        %v2396 = vadd.f32 0.0, %v2395
        %v2397 = vpop.f32.mrb[0].mxu0
        %2398 = vmatprep.mubr.f32.mxu0 0.0
        %2399 = vmatmul.mubr.f32.gmra.mrb[0].mxu0 %v2264
        %v2400 = vpop.f32.mrb[0].mxu0
        %v2401 = vadd.f32 0.0, %v2400
        %v2402 = vpop.f32.mrb[0].mxu0
        %2403 = vmatprep.mubr.f32.mxu0 0.0
        %2404 = vmatmul.mubr.f32.gmra.mrb[0].mxu0 %v2267
        %v2405 = vpop.f32.mrb[0].mxu0
        %v2406 = vadd.f32 0.0, %v2405
        %v2407 = vpop.f32.mrb[0].mxu0
        %2408 = vmatprep.mubr.f32.mxu0 0.0
        %2409 = vmatmul.mubr.f32.gmra.mrb[0].mxu0 %v2270
        %v2410 = vpop.f32.mrb[0].mxu0
        %v2411 = vadd.f32 0.0, %v2410
        %v2412 = vpop.f32.mrb[0].mxu0
        %2413 = vmatprep.mubr.f32.mxu0 0.0
        %2414 = vmatmul.mubr.f32.gmra.mrb[0].mxu0 %v2273
        %v2415 = vpop.f32.mrb[0].mxu0
        %v2416 = vadd.f32 0.0, %v2415
        %v2417 = vpop.f32.mrb[0].mxu0
        %2418 = vmatprep.mubr.f32.mxu0 0.0
        %2419 = vmatmul.mubr.f32.gmra.mrb[0].mxu0 %v2276
        %v2420 = vpop.f32.mrb[0].mxu0
        %v2421 = vadd.f32 0.0, %v2420
        %v2422 = vpop.f32.mrb[0].mxu0
        %2423 = vmatprep.mubr.f32.mxu0 0.0
        %2424 = vmatmul.mubr.f32.gmra.mrb[0].mxu0 %v2279
        %v2425 = vpop.f32.mrb[0].mxu0
        %v2426 = vadd.f32 0.0, %v2425
        %v2427 = vpop.f32.mrb[0].mxu0
        %2428 = vdwg.mxu0
        %v2429 = vadd.f32 %v2199, %v2351
        %v2430 = vadd.f32 %v2200, %v2356
        %v2431 = vadd.f32 %v2201, %v2361
        %v2432 = vadd.f32 %v2202, %v2366
        %v2433 = vadd.f32 %v2203, %v2371
        %v2434 = vadd.f32 %v2204, %v2376
        %v2435 = vadd.f32 %v2205, %v2381
        %v2436 = vadd.f32 %v2206, %v2386
        %v2437 = vadd.f32 %v2207, %v2391
        %v2438 = vadd.f32 %v2208, %v2396
        %v2439 = vadd.f32 %v2209, %v2401
        %v2440 = vadd.f32 %v2210, %v2406
        %v2441 = vadd.f32 %v2211, %v2411
        %v2442 = vadd.f32 %v2212, %v2416
        %v2443 = vadd.f32 %v2213, %v2421
        %v2444 = vadd.f32 %v2214, %v2426
        %v2445 = vld [vmem:[%s1984 + $0x18] sm:$0xff]
        %v2446 = vld [vmem:[%s1984 + $0x20] sm:$0xff]
        %v2447 = vld [vmem:[%s1984 + $0x50] sm:$0xff]
        %v2448 = vld [vmem:[%s1984 + $0x58] sm:$0xff]
        %v2449 = vld [vmem:[%s1984 + $0x88] sm:$0xff]
        %v2450 = vld [vmem:[%s1984 + $0x90] sm:$0xff]
        %v2451 = vld [vmem:[%s1984 + $0xc0] sm:$0xff]
        %v2452 = vld [vmem:[%s1984 + $0xc8] sm:$0xff]
        %v2453 = vld [vmem:[%s1984 + $0xf8] sm:$0xff]
        %v2454 = vld [vmem:[%s1984 + $0x100] sm:$0xff]
        %v2455 = vld [vmem:[%s1984 + $0x130] sm:$0xff]
        %v2456 = vld [vmem:[%s1984 + $0x138] sm:$0xff]
        %v2457 = vld [vmem:[%s1984 + $0x168] sm:$0xff]
        %v2458 = vld [vmem:[%s1984 + $0x170] sm:$0xff]
        %v2459 = vld [vmem:[%s1984 + $0x1a0] sm:$0xff]
        %v2460 = vld [vmem:[%s1984 + $0x1a8] sm:$0xff]
        %s2461 = scalar_lea.vmem %s2, 32
        %v2462 = vld [vmem:[%s2461] sm:$0xf]
        %v2464 = vsel %vm320, %v2445, 0
        %v2467 = vsel %vm320, %v2446, 0
        %v2470 = vsel %vm320, %v2447, 0
        %v2473 = vsel %vm320, %v2448, 0
        %v2476 = vsel %vm320, %v2449, 0
        %v2479 = vsel %vm320, %v2450, 0
        %v2482 = vsel %vm320, %v2451, 0
        %v2485 = vsel %vm320, %v2452, 0
        %v2488 = vsel %vm320, %v2453, 0
        %v2491 = vsel %vm320, %v2454, 0
        %v2494 = vsel %vm320, %v2455, 0
        %v2497 = vsel %vm320, %v2456, 0
        %v2500 = vsel %vm320, %v2457, 0
        %v2503 = vsel %vm320, %v2458, 0
        %v2506 = vsel %vm320, %v2459, 0
        %v2509 = vsel %vm320, %v2460, 0
        %v2512 = vsel %vm369, %v2462, 0
        %2514 = vmatprep.subr.mxu0 0.0
        %2515 = vmatpush1.msra.mxu0 %v2512
        %2516 = vmatprep.subr.mxu0 0.0
        %2517 = vmatpush1.msra.mxu0 0.0
        %2518 = vmatprep.subr.mxu0 0.0
        %2519 = vmatpush1.msra.mxu0 0.0
        %2520 = vmatprep.subr.mxu0 0.0
        %2521 = vmatpush1.msra.mxu0 0.0
        %2522 = vmatprep.subr.mxu0 0.0
        %2523 = vmatpush1.msra.mxu0 0.0
        %2524 = vmatprep.subr.mxu0 0.0
        %2525 = vmatpush1.msra.mxu0 0.0
        %2526 = vmatprep.subr.mxu0 0.0
        %2527 = vmatpush1.msra.mxu0 0.0
        %2528 = vmatprep.subr.mxu0 0.0
        %2529 = vmatpush1.msra.mxu0 0.0
        %2530 = vmatprep.subr.mxu0 0.0
        %2531 = vmatpush1.msra.mxu0 0.0
        %2532 = vmatprep.subr.mxu0 0.0
        %2533 = vmatpush1.msra.mxu0 0.0
        %2534 = vmatprep.subr.mxu0 0.0
        %2535 = vmatpush1.msra.mxu0 0.0
        %2536 = vmatprep.subr.mxu0 0.0
        %2537 = vmatpush1.msra.mxu0 0.0
        %2538 = vmatprep.subr.mxu0 0.0
        %2539 = vmatpush1.msra.mxu0 0.0
        %2540 = vmatprep.subr.mxu0 0.0
        %2541 = vmatpush1.msra.mxu0 0.0
        %2542 = vmatprep.subr.mxu0 0.0
        %2543 = vmatpush1.msra.mxu0 0.0
        %2544 = vmatprep.subr.mxu0 0.0
        %2545 = vmatpush1.msra.mxu0 0.0
        %2546 = vmatprep.subr.mxu0 0.0
        %2547 = vmatpush1.msra.mxu0 0.0
        %2548 = vmatprep.subr.mxu0 0.0
        %2549 = vmatpush1.msra.mxu0 0.0
        %2550 = vmatprep.subr.mxu0 0.0
        %2551 = vmatpush1.msra.mxu0 0.0
        %2552 = vmatprep.subr.mxu0 0.0
        %2553 = vmatpush1.msra.mxu0 0.0
        %2554 = vmatprep.subr.mxu0 0.0
        %2555 = vmatpush1.msra.mxu0 0.0
        %2556 = vmatprep.subr.mxu0 0.0
        %2557 = vmatpush1.msra.mxu0 0.0
        %2558 = vmatprep.subr.mxu0 0.0
        %2559 = vmatpush1.msra.mxu0 0.0
        %2560 = vmatprep.subr.mxu0 0.0
        %2561 = vmatpush1.msra.mxu0 0.0
        %2562 = vmatprep.subr.mxu0 0.0
        %2563 = vmatpush1.msra.mxu0 0.0
        %2564 = vmatprep.subr.mxu0 0.0
        %2565 = vmatpush1.msra.mxu0 0.0
        %2566 = vmatprep.subr.mxu0 0.0
        %2567 = vmatpush1.msra.mxu0 0.0
        %2568 = vmatprep.subr.mxu0 0.0
        %2569 = vmatpush1.msra.mxu0 0.0
        %2570 = vmatprep.subr.mxu0 0.0
        %2571 = vmatpush1.msra.mxu0 0.0
        %2572 = vmatprep.subr.mxu0 0.0
        %2573 = vmatpush1.msra.mxu0 0.0
        %2574 = vmatprep.subr.mxu0 0.0
        %2575 = vmatpush1.msra.mxu0 0.0
        %2576 = vmatprep.subr.mxu0 0.0
        %2577 = vmatpush1.msra.mxu0 0.0
        %2578 = vmatprep.mubr.f32.mxu0 0.0
        %2579 = vmatmul.mubr.f32.gmra.mrb[0].mxu0 %v2464
        %v2580 = vpop.f32.mrb[0].mxu0
        %v2581 = vadd.f32 0.0, %v2580
        %v2582 = vpop.f32.mrb[0].mxu0
        %2583 = vmatprep.mubr.f32.mxu0 0.0
        %2584 = vmatmul.mubr.f32.gmra.mrb[0].mxu0 %v2467
        %v2585 = vpop.f32.mrb[0].mxu0
        %v2586 = vadd.f32 0.0, %v2585
        %v2587 = vpop.f32.mrb[0].mxu0
        %2588 = vmatprep.mubr.f32.mxu0 0.0
        %2589 = vmatmul.mubr.f32.gmra.mrb[0].mxu0 %v2470
        %v2590 = vpop.f32.mrb[0].mxu0
        %v2591 = vadd.f32 0.0, %v2590
        %v2592 = vpop.f32.mrb[0].mxu0
        %2593 = vmatprep.mubr.f32.mxu0 0.0
        %2594 = vmatmul.mubr.f32.gmra.mrb[0].mxu0 %v2473
        %v2595 = vpop.f32.mrb[0].mxu0
        %v2596 = vadd.f32 0.0, %v2595
        %v2597 = vpop.f32.mrb[0].mxu0
        %2598 = vmatprep.mubr.f32.mxu0 0.0
        %2599 = vmatmul.mubr.f32.gmra.mrb[0].mxu0 %v2476
        %v2600 = vpop.f32.mrb[0].mxu0
        %v2601 = vadd.f32 0.0, %v2600
        %v2602 = vpop.f32.mrb[0].mxu0
        %2603 = vmatprep.mubr.f32.mxu0 0.0
        %2604 = vmatmul.mubr.f32.gmra.mrb[0].mxu0 %v2479
        %v2605 = vpop.f32.mrb[0].mxu0
        %v2606 = vadd.f32 0.0, %v2605
        %v2607 = vpop.f32.mrb[0].mxu0
        %2608 = vmatprep.mubr.f32.mxu0 0.0
        %2609 = vmatmul.mubr.f32.gmra.mrb[0].mxu0 %v2482
        %v2610 = vpop.f32.mrb[0].mxu0
        %v2611 = vadd.f32 0.0, %v2610
        %v2612 = vpop.f32.mrb[0].mxu0
        %2613 = vmatprep.mubr.f32.mxu0 0.0
        %2614 = vmatmul.mubr.f32.gmra.mrb[0].mxu0 %v2485
        %v2615 = vpop.f32.mrb[0].mxu0
        %v2616 = vadd.f32 0.0, %v2615
        %v2617 = vpop.f32.mrb[0].mxu0
        %2618 = vmatprep.mubr.f32.mxu0 0.0
        %2619 = vmatmul.mubr.f32.gmra.mrb[0].mxu0 %v2488
        %v2620 = vpop.f32.mrb[0].mxu0
        %v2621 = vadd.f32 0.0, %v2620
        %v2622 = vpop.f32.mrb[0].mxu0
        %2623 = vmatprep.mubr.f32.mxu0 0.0
        %2624 = vmatmul.mubr.f32.gmra.mrb[0].mxu0 %v2491
        %v2625 = vpop.f32.mrb[0].mxu0
        %v2626 = vadd.f32 0.0, %v2625
        %v2627 = vpop.f32.mrb[0].mxu0
        %2628 = vmatprep.mubr.f32.mxu0 0.0
        %2629 = vmatmul.mubr.f32.gmra.mrb[0].mxu0 %v2494
        %v2630 = vpop.f32.mrb[0].mxu0
        %v2631 = vadd.f32 0.0, %v2630
        %v2632 = vpop.f32.mrb[0].mxu0
        %2633 = vmatprep.mubr.f32.mxu0 0.0
        %2634 = vmatmul.mubr.f32.gmra.mrb[0].mxu0 %v2497
        %v2635 = vpop.f32.mrb[0].mxu0
        %v2636 = vadd.f32 0.0, %v2635
        %v2637 = vpop.f32.mrb[0].mxu0
        %2638 = vmatprep.mubr.f32.mxu0 0.0
        %2639 = vmatmul.mubr.f32.gmra.mrb[0].mxu0 %v2500
        %v2640 = vpop.f32.mrb[0].mxu0
        %v2641 = vadd.f32 0.0, %v2640
        %v2642 = vpop.f32.mrb[0].mxu0
        %2643 = vmatprep.mubr.f32.mxu0 0.0
        %2644 = vmatmul.mubr.f32.gmra.mrb[0].mxu0 %v2503
        %v2645 = vpop.f32.mrb[0].mxu0
        %v2646 = vadd.f32 0.0, %v2645
        %v2647 = vpop.f32.mrb[0].mxu0
        %2648 = vmatprep.mubr.f32.mxu0 0.0
        %2649 = vmatmul.mubr.f32.gmra.mrb[0].mxu0 %v2506
        %v2650 = vpop.f32.mrb[0].mxu0
        %v2651 = vadd.f32 0.0, %v2650
        %v2652 = vpop.f32.mrb[0].mxu0
        %2653 = vmatprep.mubr.f32.mxu0 0.0
        %2654 = vmatmul.mubr.f32.gmra.mrb[0].mxu0 %v2509
        %v2655 = vpop.f32.mrb[0].mxu0
        %v2656 = vadd.f32 0.0, %v2655
        %v2657 = vpop.f32.mrb[0].mxu0
        %2658 = vdwg.mxu0
        %v2659 = vadd.f32 %v2429, %v2581
        %v2660 = vadd.f32 %v2430, %v2586
        %v2661 = vadd.f32 %v2431, %v2591
        %v2662 = vadd.f32 %v2432, %v2596
        %v2663 = vadd.f32 %v2433, %v2601
        %v2664 = vadd.f32 %v2434, %v2606
        %v2665 = vadd.f32 %v2435, %v2611
        %v2666 = vadd.f32 %v2436, %v2616
        %v2667 = vadd.f32 %v2437, %v2621
        %v2668 = vadd.f32 %v2438, %v2626
        %v2669 = vadd.f32 %v2439, %v2631
        %v2670 = vadd.f32 %v2440, %v2636
        %v2671 = vadd.f32 %v2441, %v2641
        %v2672 = vadd.f32 %v2442, %v2646
        %v2673 = vadd.f32 %v2443, %v2651
        %v2674 = vadd.f32 %v2444, %v2656
        %v2675 = vlaneseq
        %v2676 = vshrl.u32 %v2675, 7
        %v2677 = vsub.s32 1, %v2676
        %v2678 = vrot.slane %v295, %v2677
        %v2679 = vadd.f32 %v2659, %v2678
        %v2680 = vadd.f32 %v2660, %v2678
        %v2681 = vadd.f32 %v2661, %v2678
        %v2682 = vadd.f32 %v2662, %v2678
        %v2683 = vadd.f32 %v2663, %v2678
        %v2684 = vadd.f32 %v2664, %v2678
        %v2685 = vadd.f32 %v2665, %v2678
        %v2686 = vadd.f32 %v2666, %v2678
        %v2687 = vadd.f32 %v2667, %v2678
        %v2688 = vadd.f32 %v2668, %v2678
        %v2689 = vadd.f32 %v2669, %v2678
        %v2690 = vadd.f32 %v2670, %v2678
        %v2691 = vadd.f32 %v2671, %v2678
        %v2692 = vadd.f32 %v2672, %v2678
        %v2693 = vadd.f32 %v2673, %v2678
        %v2694 = vadd.f32 %v2674, %v2678
        %s2695 = scalar_lea.vmem %s277, 128 [#allocation2]
        %2696 = vst.msk [vmem:[%s2695] sm:$0xff] %vm518, %v2679
        %2697 = vst.msk [vmem:[%s2695 + $0x8] sm:$0xff] %vm518, %v2680
        %2698 = vst.msk [vmem:[%s2695 + $0x10] sm:$0xff] %vm518, %v2681
        %2699 = vst.msk [vmem:[%s2695 + $0x18] sm:$0xff] %vm518, %v2682
        %2700 = vst.msk [vmem:[%s2695 + $0x20] sm:$0xff] %vm518, %v2683
        %2701 = vst.msk [vmem:[%s2695 + $0x28] sm:$0xff] %vm518, %v2684
        %2702 = vst.msk [vmem:[%s2695 + $0x30] sm:$0xff] %vm518, %v2685
        %2703 = vst.msk [vmem:[%s2695 + $0x38] sm:$0xff] %vm518, %v2686
        %2704 = vst.msk [vmem:[%s2695 + $0x40] sm:$0xff] %vm518, %v2687
        %2705 = vst.msk [vmem:[%s2695 + $0x48] sm:$0xff] %vm518, %v2688
        %2706 = vst.msk [vmem:[%s2695 + $0x50] sm:$0xff] %vm518, %v2689
        %2707 = vst.msk [vmem:[%s2695 + $0x58] sm:$0xff] %vm518, %v2690
        %2708 = vst.msk [vmem:[%s2695 + $0x60] sm:$0xff] %vm518, %v2691
        %2709 = vst.msk [vmem:[%s2695 + $0x68] sm:$0xff] %vm518, %v2692
        %2710 = vst.msk [vmem:[%s2695 + $0x70] sm:$0xff] %vm518, %v2693
        %2711 = vst.msk [vmem:[%s2695 + $0x78] sm:$0xff] %vm518, %v2694
        %v2712 = vld [vmem:[%s7 + $0x1] sm:$0x1]
        %v2713 = vsel %vm518, %v2679, 0.0
        %v2714 = vsel %vm518, %v2680, 0.0
        %v2715 = vadd.f32 %v2713, %v2714
        %v2716 = vsel %vm518, %v2681, 0.0
        %v2717 = vadd.f32 %v2715, %v2716
        %v2718 = vsel %vm518, %v2682, 0.0
        %v2719 = vadd.f32 %v2717, %v2718
        %v2720 = vsel %vm518, %v2683, 0.0
        %v2721 = vadd.f32 %v2719, %v2720
        %v2722 = vsel %vm518, %v2684, 0.0
        %v2723 = vadd.f32 %v2721, %v2722
        %v2724 = vsel %vm518, %v2685, 0.0
        %v2725 = vadd.f32 %v2723, %v2724
        %v2726 = vsel %vm518, %v2686, 0.0
        %v2727 = vadd.f32 %v2725, %v2726
        %v2728 = vsel %vm518, %v2687, 0.0
        %v2729 = vadd.f32 %v2727, %v2728
        %v2730 = vsel %vm518, %v2688, 0.0
        %v2731 = vadd.f32 %v2729, %v2730
        %v2732 = vsel %vm518, %v2689, 0.0
        %v2733 = vadd.f32 %v2731, %v2732
        %v2734 = vsel %vm518, %v2690, 0.0
        %v2735 = vadd.f32 %v2733, %v2734
        %v2736 = vsel %vm518, %v2691, 0.0
        %v2737 = vadd.f32 %v2735, %v2736
        %v2738 = vsel %vm518, %v2692, 0.0
        %v2739 = vadd.f32 %v2737, %v2738
        %v2740 = vsel %vm518, %v2693, 0.0
        %v2741 = vadd.f32 %v2739, %v2740
        %v2742 = vsel %vm518, %v2694, 0.0
        %v2743 = vadd.f32 %v2741, %v2742
        %v2744 = vrot.slane %v2743, 4
        %v2745 = vadd.f32 %v2743, %v2744
        %v2746 = vrot.slane %v2745, 2
        %v2747 = vadd.f32 %v2745, %v2746
        %v2748 = vrot.slane %v2747, 1
        %v2749 = vadd.f32 %v2747, %v2748
        %v2750 = vadd.f32 %v2712, %v2749
        %2751 = vst.msk [vmem:[%s7 + $0x1] sm:$0x1] %vm574, %v2750
        %v2752 = vld [vmem:[%s7 + $0x5] sm:$0x1]
        %v2753 = vmul.f32 %v2679, %v2679
        %v2754 = vmul.f32 %v2680, %v2680
        %v2755 = vmul.f32 %v2681, %v2681
        %v2756 = vmul.f32 %v2682, %v2682
        %v2757 = vmul.f32 %v2683, %v2683
        %v2758 = vmul.f32 %v2684, %v2684
        %v2759 = vmul.f32 %v2685, %v2685
        %v2760 = vmul.f32 %v2686, %v2686
        %v2761 = vmul.f32 %v2687, %v2687
        %v2762 = vmul.f32 %v2688, %v2688
        %v2763 = vmul.f32 %v2689, %v2689
        %v2764 = vmul.f32 %v2690, %v2690
        %v2765 = vmul.f32 %v2691, %v2691
        %v2766 = vmul.f32 %v2692, %v2692
        %v2767 = vmul.f32 %v2693, %v2693
        %v2768 = vmul.f32 %v2694, %v2694
        %v2769 = vsel %vm518, %v2753, 0.0
        %v2770 = vsel %vm518, %v2754, 0.0
        %v2771 = vadd.f32 %v2769, %v2770
        %v2772 = vsel %vm518, %v2755, 0.0
        %v2773 = vadd.f32 %v2771, %v2772
        %v2774 = vsel %vm518, %v2756, 0.0
        %v2775 = vadd.f32 %v2773, %v2774
        %v2776 = vsel %vm518, %v2757, 0.0
        %v2777 = vadd.f32 %v2775, %v2776
        %v2778 = vsel %vm518, %v2758, 0.0
        %v2779 = vadd.f32 %v2777, %v2778
        %v2780 = vsel %vm518, %v2759, 0.0
        %v2781 = vadd.f32 %v2779, %v2780
        %v2782 = vsel %vm518, %v2760, 0.0
        %v2783 = vadd.f32 %v2781, %v2782
        %v2784 = vsel %vm518, %v2761, 0.0
        %v2785 = vadd.f32 %v2783, %v2784
        %v2786 = vsel %vm518, %v2762, 0.0
        %v2787 = vadd.f32 %v2785, %v2786
        %v2788 = vsel %vm518, %v2763, 0.0
        %v2789 = vadd.f32 %v2787, %v2788
        %v2790 = vsel %vm518, %v2764, 0.0
        %v2791 = vadd.f32 %v2789, %v2790
        %v2792 = vsel %vm518, %v2765, 0.0
        %v2793 = vadd.f32 %v2791, %v2792
        %v2794 = vsel %vm518, %v2766, 0.0
        %v2795 = vadd.f32 %v2793, %v2794
        %v2796 = vsel %vm518, %v2767, 0.0
        %v2797 = vadd.f32 %v2795, %v2796
        %v2798 = vsel %vm518, %v2768, 0.0
        %v2799 = vadd.f32 %v2797, %v2798
        %v2800 = vrot.slane %v2799, 4
        %v2801 = vadd.f32 %v2799, %v2800
        %v2802 = vrot.slane %v2801, 2
        %v2803 = vadd.f32 %v2801, %v2802
        %v2804 = vrot.slane %v2803, 1
        %v2805 = vadd.f32 %v2803, %v2804
        %v2806 = vadd.f32 %v2752, %v2805
        %2807 = vst.msk [vmem:[%s7 + $0x5] sm:$0x1] %vm574, %v2806
        %s2808 = sadd.s32 %s294, 6
        %s2809 = smul.u32 %s2808, 56
        %s2810 = scalar_lea.vmem %s284, %s2809
        %v2811 = vld [vmem:[%s2810 + $0x6] sm:$0xff]
        %v2812 = vld [vmem:[%s2810 + $0xe] sm:$0xff]
        %v2813 = vld [vmem:[%s2810 + $0x3e] sm:$0xff]
        %v2814 = vld [vmem:[%s2810 + $0x46] sm:$0xff]
        %v2815 = vld [vmem:[%s2810 + $0x76] sm:$0xff]
        %v2816 = vld [vmem:[%s2810 + $0x7e] sm:$0xff]
        %v2817 = vld [vmem:[%s2810 + $0xae] sm:$0xff]
        %v2818 = vld [vmem:[%s2810 + $0xb6] sm:$0xff]
        %v2819 = vld [vmem:[%s2810 + $0xe6] sm:$0xff]
        %v2820 = vld [vmem:[%s2810 + $0xee] sm:$0xff]
        %v2821 = vld [vmem:[%s2810 + $0x11e] sm:$0xff]
        %v2822 = vld [vmem:[%s2810 + $0x126] sm:$0xff]
        %v2823 = vld [vmem:[%s2810 + $0x156] sm:$0xff]
        %v2824 = vld [vmem:[%s2810 + $0x15e] sm:$0xff]
        %v2825 = vld [vmem:[%s2810 + $0x18e] sm:$0xff]
        %v2826 = vld [vmem:[%s2810 + $0x196] sm:$0xff]
        %v2827 = vld [vmem:[%s3] sm:$0xf]
        %v2828 = vld [vmem:[%s2810 + $0x12] sm:$0xff]
        %v2829 = vld [vmem:[%s2810 + $0x1a] sm:$0xff]
        %v2830 = vld [vmem:[%s2810 + $0x4a] sm:$0xff]
        %v2831 = vld [vmem:[%s2810 + $0x52] sm:$0xff]
        %v2832 = vld [vmem:[%s2810 + $0x82] sm:$0xff]
        %v2833 = vld [vmem:[%s2810 + $0x8a] sm:$0xff]
        %v2834 = vld [vmem:[%s2810 + $0xba] sm:$0xff]
        %v2835 = vld [vmem:[%s2810 + $0xc2] sm:$0xff]
        %v2836 = vld [vmem:[%s2810 + $0xf2] sm:$0xff]
        %v2837 = vld [vmem:[%s2810 + $0xfa] sm:$0xff]
        %v2838 = vld [vmem:[%s2810 + $0x12a] sm:$0xff]
        %v2839 = vld [vmem:[%s2810 + $0x132] sm:$0xff]
        %v2840 = vld [vmem:[%s2810 + $0x162] sm:$0xff]
        %v2841 = vld [vmem:[%s2810 + $0x16a] sm:$0xff]
        %v2842 = vld [vmem:[%s2810 + $0x19a] sm:$0xff]
        %v2843 = vld [vmem:[%s2810 + $0x1a2] sm:$0xff]
        %s2844 = scalar_lea.vmem %s3, 4
        %v2845 = vld [vmem:[%s2844] sm:$0xf]
        %v2847 = vsel %vm320, %v2828, 0
        %v2850 = vsel %vm320, %v2829, 0
        %v2853 = vsel %vm320, %v2830, 0
        %v2856 = vsel %vm320, %v2831, 0
        %v2859 = vsel %vm320, %v2832, 0
        %v2862 = vsel %vm320, %v2833, 0
        %v2865 = vsel %vm320, %v2834, 0
        %v2868 = vsel %vm320, %v2835, 0
        %v2871 = vsel %vm320, %v2836, 0
        %v2874 = vsel %vm320, %v2837, 0
        %v2877 = vsel %vm320, %v2838, 0
        %v2880 = vsel %vm320, %v2839, 0
        %v2883 = vsel %vm320, %v2840, 0
        %v2886 = vsel %vm320, %v2841, 0
        %v2889 = vsel %vm320, %v2842, 0
        %v2892 = vsel %vm320, %v2843, 0
        %v2895 = vsel %vm369, %v2845, 0
        %2897 = vmatprep.subr.mxu0 0.0
        %2898 = vmatpush1.msra.mxu0 %v2895
        %2899 = vmatprep.subr.mxu0 0.0
        %2900 = vmatpush1.msra.mxu0 0.0
        %2901 = vmatprep.subr.mxu0 0.0
        %2902 = vmatpush1.msra.mxu0 0.0
        %2903 = vmatprep.subr.mxu0 0.0
        %2904 = vmatpush1.msra.mxu0 0.0
        %2905 = vmatprep.subr.mxu0 0.0
        %2906 = vmatpush1.msra.mxu0 0.0
        %2907 = vmatprep.subr.mxu0 0.0
        %2908 = vmatpush1.msra.mxu0 0.0
        %2909 = vmatprep.subr.mxu0 0.0
        %2910 = vmatpush1.msra.mxu0 0.0
        %2911 = vmatprep.subr.mxu0 0.0
        %2912 = vmatpush1.msra.mxu0 0.0
        %2913 = vmatprep.subr.mxu0 0.0
        %2914 = vmatpush1.msra.mxu0 0.0
        %2915 = vmatprep.subr.mxu0 0.0
        %2916 = vmatpush1.msra.mxu0 0.0
        %2917 = vmatprep.subr.mxu0 0.0
        %2918 = vmatpush1.msra.mxu0 0.0
        %2919 = vmatprep.subr.mxu0 0.0
        %2920 = vmatpush1.msra.mxu0 0.0
        %2921 = vmatprep.subr.mxu0 0.0
        %2922 = vmatpush1.msra.mxu0 0.0
        %2923 = vmatprep.subr.mxu0 0.0
        %2924 = vmatpush1.msra.mxu0 0.0
        %2925 = vmatprep.subr.mxu0 0.0
        %2926 = vmatpush1.msra.mxu0 0.0
        %2927 = vmatprep.subr.mxu0 0.0
        %2928 = vmatpush1.msra.mxu0 0.0
        %2929 = vmatprep.subr.mxu0 0.0
        %2930 = vmatpush1.msra.mxu0 0.0
        %2931 = vmatprep.subr.mxu0 0.0
        %2932 = vmatpush1.msra.mxu0 0.0
        %2933 = vmatprep.subr.mxu0 0.0
        %2934 = vmatpush1.msra.mxu0 0.0
        %2935 = vmatprep.subr.mxu0 0.0
        %2936 = vmatpush1.msra.mxu0 0.0
        %2937 = vmatprep.subr.mxu0 0.0
        %2938 = vmatpush1.msra.mxu0 0.0
        %2939 = vmatprep.subr.mxu0 0.0
        %2940 = vmatpush1.msra.mxu0 0.0
        %2941 = vmatprep.subr.mxu0 0.0
        %2942 = vmatpush1.msra.mxu0 0.0
        %2943 = vmatprep.subr.mxu0 0.0
        %2944 = vmatpush1.msra.mxu0 0.0
        %2945 = vmatprep.subr.mxu0 0.0
        %2946 = vmatpush1.msra.mxu0 0.0
        %2947 = vmatprep.subr.mxu0 0.0
        %2948 = vmatpush1.msra.mxu0 0.0
        %2949 = vmatprep.subr.mxu0 0.0
        %2950 = vmatpush1.msra.mxu0 0.0
        %2951 = vmatprep.subr.mxu0 0.0
        %2952 = vmatpush1.msra.mxu0 0.0
        %2953 = vmatprep.subr.mxu0 0.0
        %2954 = vmatpush1.msra.mxu0 0.0
        %2955 = vmatprep.subr.mxu0 0.0
        %2956 = vmatpush1.msra.mxu0 0.0
        %2957 = vmatprep.subr.mxu0 0.0
        %2958 = vmatpush1.msra.mxu0 0.0
        %2959 = vmatprep.subr.mxu0 0.0
        %2960 = vmatpush1.msra.mxu0 0.0
        %2961 = vmatprep.mubr.f32.mxu0 0.0
        %2962 = vmatmul.mubr.f32.gmra.mrb[0].mxu0 %v2847
        %v2963 = vpop.f32.mrb[0].mxu0
        %v2964 = vadd.f32 0.0, %v2963
        %v2965 = vpop.f32.mrb[0].mxu0
        %2966 = vmatprep.mubr.f32.mxu0 0.0
        %2967 = vmatmul.mubr.f32.gmra.mrb[0].mxu0 %v2850
        %v2968 = vpop.f32.mrb[0].mxu0
        %v2969 = vadd.f32 0.0, %v2968
        %v2970 = vpop.f32.mrb[0].mxu0
        %2971 = vmatprep.mubr.f32.mxu0 0.0
        %2972 = vmatmul.mubr.f32.gmra.mrb[0].mxu0 %v2853
        %v2973 = vpop.f32.mrb[0].mxu0
        %v2974 = vadd.f32 0.0, %v2973
        %v2975 = vpop.f32.mrb[0].mxu0
        %2976 = vmatprep.mubr.f32.mxu0 0.0
        %2977 = vmatmul.mubr.f32.gmra.mrb[0].mxu0 %v2856
        %v2978 = vpop.f32.mrb[0].mxu0
        %v2979 = vadd.f32 0.0, %v2978
        %v2980 = vpop.f32.mrb[0].mxu0
        %2981 = vmatprep.mubr.f32.mxu0 0.0
        %2982 = vmatmul.mubr.f32.gmra.mrb[0].mxu0 %v2859
        %v2983 = vpop.f32.mrb[0].mxu0
        %v2984 = vadd.f32 0.0, %v2983
        %v2985 = vpop.f32.mrb[0].mxu0
        %2986 = vmatprep.mubr.f32.mxu0 0.0
        %2987 = vmatmul.mubr.f32.gmra.mrb[0].mxu0 %v2862
        %v2988 = vpop.f32.mrb[0].mxu0
        %v2989 = vadd.f32 0.0, %v2988
        %v2990 = vpop.f32.mrb[0].mxu0
        %2991 = vmatprep.mubr.f32.mxu0 0.0
        %2992 = vmatmul.mubr.f32.gmra.mrb[0].mxu0 %v2865
        %v2993 = vpop.f32.mrb[0].mxu0
        %v2994 = vadd.f32 0.0, %v2993
        %v2995 = vpop.f32.mrb[0].mxu0
        %2996 = vmatprep.mubr.f32.mxu0 0.0
        %2997 = vmatmul.mubr.f32.gmra.mrb[0].mxu0 %v2868
        %v2998 = vpop.f32.mrb[0].mxu0
        %v2999 = vadd.f32 0.0, %v2998
        %v3000 = vpop.f32.mrb[0].mxu0
        %3001 = vmatprep.mubr.f32.mxu0 0.0
        %3002 = vmatmul.mubr.f32.gmra.mrb[0].mxu0 %v2871
        %v3003 = vpop.f32.mrb[0].mxu0
        %v3004 = vadd.f32 0.0, %v3003
        %v3005 = vpop.f32.mrb[0].mxu0
        %3006 = vmatprep.mubr.f32.mxu0 0.0
        %3007 = vmatmul.mubr.f32.gmra.mrb[0].mxu0 %v2874
        %v3008 = vpop.f32.mrb[0].mxu0
        %v3009 = vadd.f32 0.0, %v3008
        %v3010 = vpop.f32.mrb[0].mxu0
        %3011 = vmatprep.mubr.f32.mxu0 0.0
        %3012 = vmatmul.mubr.f32.gmra.mrb[0].mxu0 %v2877
        %v3013 = vpop.f32.mrb[0].mxu0
        %v3014 = vadd.f32 0.0, %v3013
        %v3015 = vpop.f32.mrb[0].mxu0
        %3016 = vmatprep.mubr.f32.mxu0 0.0
        %3017 = vmatmul.mubr.f32.gmra.mrb[0].mxu0 %v2880
        %v3018 = vpop.f32.mrb[0].mxu0
        %v3019 = vadd.f32 0.0, %v3018
        %v3020 = vpop.f32.mrb[0].mxu0
        %3021 = vmatprep.mubr.f32.mxu0 0.0
        %3022 = vmatmul.mubr.f32.gmra.mrb[0].mxu0 %v2883
        %v3023 = vpop.f32.mrb[0].mxu0
        %v3024 = vadd.f32 0.0, %v3023
        %v3025 = vpop.f32.mrb[0].mxu0
        %3026 = vmatprep.mubr.f32.mxu0 0.0
        %3027 = vmatmul.mubr.f32.gmra.mrb[0].mxu0 %v2886
        %v3028 = vpop.f32.mrb[0].mxu0
        %v3029 = vadd.f32 0.0, %v3028
        %v3030 = vpop.f32.mrb[0].mxu0
        %3031 = vmatprep.mubr.f32.mxu0 0.0
        %3032 = vmatmul.mubr.f32.gmra.mrb[0].mxu0 %v2889
        %v3033 = vpop.f32.mrb[0].mxu0
        %v3034 = vadd.f32 0.0, %v3033
        %v3035 = vpop.f32.mrb[0].mxu0
        %3036 = vmatprep.mubr.f32.mxu0 0.0
        %3037 = vmatmul.mubr.f32.gmra.mrb[0].mxu0 %v2892
        %v3038 = vpop.f32.mrb[0].mxu0
        %v3039 = vadd.f32 0.0, %v3038
        %v3040 = vpop.f32.mrb[0].mxu0
        %3041 = vdwg.mxu0
        %v3043 = vsel %vm320, %v2811, 0
        %v3046 = vsel %vm320, %v2812, 0
        %v3049 = vsel %vm320, %v2813, 0
        %v3052 = vsel %vm320, %v2814, 0
        %v3055 = vsel %vm320, %v2815, 0
        %v3058 = vsel %vm320, %v2816, 0
        %v3061 = vsel %vm320, %v2817, 0
        %v3064 = vsel %vm320, %v2818, 0
        %v3067 = vsel %vm320, %v2819, 0
        %v3070 = vsel %vm320, %v2820, 0
        %v3073 = vsel %vm320, %v2821, 0
        %v3076 = vsel %vm320, %v2822, 0
        %v3079 = vsel %vm320, %v2823, 0
        %v3082 = vsel %vm320, %v2824, 0
        %v3085 = vsel %vm320, %v2825, 0
        %v3088 = vsel %vm320, %v2826, 0
        %v3091 = vsel %vm369, %v2827, 0
        %3093 = vmatprep.subr.mxu0 0.0
        %3094 = vmatpush1.msra.mxu0 %v3091
        %3095 = vmatprep.subr.mxu0 0.0
        %3096 = vmatpush1.msra.mxu0 0.0
        %3097 = vmatprep.subr.mxu0 0.0
        %3098 = vmatpush1.msra.mxu0 0.0
        %3099 = vmatprep.subr.mxu0 0.0
        %3100 = vmatpush1.msra.mxu0 0.0
        %3101 = vmatprep.subr.mxu0 0.0
        %3102 = vmatpush1.msra.mxu0 0.0
        %3103 = vmatprep.subr.mxu0 0.0
        %3104 = vmatpush1.msra.mxu0 0.0
        %3105 = vmatprep.subr.mxu0 0.0
        %3106 = vmatpush1.msra.mxu0 0.0
        %3107 = vmatprep.subr.mxu0 0.0
        %3108 = vmatpush1.msra.mxu0 0.0
        %3109 = vmatprep.subr.mxu0 0.0
        %3110 = vmatpush1.msra.mxu0 0.0
        %3111 = vmatprep.subr.mxu0 0.0
        %3112 = vmatpush1.msra.mxu0 0.0
        %3113 = vmatprep.subr.mxu0 0.0
        %3114 = vmatpush1.msra.mxu0 0.0
        %3115 = vmatprep.subr.mxu0 0.0
        %3116 = vmatpush1.msra.mxu0 0.0
        %3117 = vmatprep.subr.mxu0 0.0
        %3118 = vmatpush1.msra.mxu0 0.0
        %3119 = vmatprep.subr.mxu0 0.0
        %3120 = vmatpush1.msra.mxu0 0.0
        %3121 = vmatprep.subr.mxu0 0.0
        %3122 = vmatpush1.msra.mxu0 0.0
        %3123 = vmatprep.subr.mxu0 0.0
        %3124 = vmatpush1.msra.mxu0 0.0
        %3125 = vmatprep.subr.mxu0 0.0
        %3126 = vmatpush1.msra.mxu0 0.0
        %3127 = vmatprep.subr.mxu0 0.0
        %3128 = vmatpush1.msra.mxu0 0.0
        %3129 = vmatprep.subr.mxu0 0.0
        %3130 = vmatpush1.msra.mxu0 0.0
        %3131 = vmatprep.subr.mxu0 0.0
        %3132 = vmatpush1.msra.mxu0 0.0
        %3133 = vmatprep.subr.mxu0 0.0
        %3134 = vmatpush1.msra.mxu0 0.0
        %3135 = vmatprep.subr.mxu0 0.0
        %3136 = vmatpush1.msra.mxu0 0.0
        %3137 = vmatprep.subr.mxu0 0.0
        %3138 = vmatpush1.msra.mxu0 0.0
        %3139 = vmatprep.subr.mxu0 0.0
        %3140 = vmatpush1.msra.mxu0 0.0
        %3141 = vmatprep.subr.mxu0 0.0
        %3142 = vmatpush1.msra.mxu0 0.0
        %3143 = vmatprep.subr.mxu0 0.0
        %3144 = vmatpush1.msra.mxu0 0.0
        %3145 = vmatprep.subr.mxu0 0.0
        %3146 = vmatpush1.msra.mxu0 0.0
        %3147 = vmatprep.subr.mxu0 0.0
        %3148 = vmatpush1.msra.mxu0 0.0
        %3149 = vmatprep.subr.mxu0 0.0
        %3150 = vmatpush1.msra.mxu0 0.0
        %3151 = vmatprep.subr.mxu0 0.0
        %3152 = vmatpush1.msra.mxu0 0.0
        %3153 = vmatprep.subr.mxu0 0.0
        %3154 = vmatpush1.msra.mxu0 0.0
        %3155 = vmatprep.subr.mxu0 0.0
        %3156 = vmatpush1.msra.mxu0 0.0
        %3157 = vmatprep.mubr.f32.mxu0 0.0
        %3158 = vmatmul.mubr.f32.gmra.mrb[0].mxu0 %v3043
        %v3159 = vpop.f32.mrb[0].mxu0
        %v3160 = vadd.f32 %v2964, %v3159
        %v3161 = vpop.f32.mrb[0].mxu0
        %3162 = vmatprep.mubr.f32.mxu0 0.0
        %3163 = vmatmul.mubr.f32.gmra.mrb[0].mxu0 %v3046
        %v3164 = vpop.f32.mrb[0].mxu0
        %v3165 = vadd.f32 %v2969, %v3164
        %v3166 = vpop.f32.mrb[0].mxu0
        %3167 = vmatprep.mubr.f32.mxu0 0.0
        %3168 = vmatmul.mubr.f32.gmra.mrb[0].mxu0 %v3049
        %v3169 = vpop.f32.mrb[0].mxu0
        %v3170 = vadd.f32 %v2974, %v3169
        %v3171 = vpop.f32.mrb[0].mxu0
        %3172 = vmatprep.mubr.f32.mxu0 0.0
        %3173 = vmatmul.mubr.f32.gmra.mrb[0].mxu0 %v3052
        %v3174 = vpop.f32.mrb[0].mxu0
        %v3175 = vadd.f32 %v2979, %v3174
        %v3176 = vpop.f32.mrb[0].mxu0
        %3177 = vmatprep.mubr.f32.mxu0 0.0
        %3178 = vmatmul.mubr.f32.gmra.mrb[0].mxu0 %v3055
        %v3179 = vpop.f32.mrb[0].mxu0
        %v3180 = vadd.f32 %v2984, %v3179
        %v3181 = vpop.f32.mrb[0].mxu0
        %3182 = vmatprep.mubr.f32.mxu0 0.0
        %3183 = vmatmul.mubr.f32.gmra.mrb[0].mxu0 %v3058
        %v3184 = vpop.f32.mrb[0].mxu0
        %v3185 = vadd.f32 %v2989, %v3184
        %v3186 = vpop.f32.mrb[0].mxu0
        %3187 = vmatprep.mubr.f32.mxu0 0.0
        %3188 = vmatmul.mubr.f32.gmra.mrb[0].mxu0 %v3061
        %v3189 = vpop.f32.mrb[0].mxu0
        %v3190 = vadd.f32 %v2994, %v3189
        %v3191 = vpop.f32.mrb[0].mxu0
        %3192 = vmatprep.mubr.f32.mxu0 0.0
        %3193 = vmatmul.mubr.f32.gmra.mrb[0].mxu0 %v3064
        %v3194 = vpop.f32.mrb[0].mxu0
        %v3195 = vadd.f32 %v2999, %v3194
        %v3196 = vpop.f32.mrb[0].mxu0
        %3197 = vmatprep.mubr.f32.mxu0 0.0
        %3198 = vmatmul.mubr.f32.gmra.mrb[0].mxu0 %v3067
        %v3199 = vpop.f32.mrb[0].mxu0
        %v3200 = vadd.f32 %v3004, %v3199
        %v3201 = vpop.f32.mrb[0].mxu0
        %3202 = vmatprep.mubr.f32.mxu0 0.0
        %3203 = vmatmul.mubr.f32.gmra.mrb[0].mxu0 %v3070
        %v3204 = vpop.f32.mrb[0].mxu0
        %v3205 = vadd.f32 %v3009, %v3204
        %v3206 = vpop.f32.mrb[0].mxu0
        %3207 = vmatprep.mubr.f32.mxu0 0.0
        %3208 = vmatmul.mubr.f32.gmra.mrb[0].mxu0 %v3073
        %v3209 = vpop.f32.mrb[0].mxu0
        %v3210 = vadd.f32 %v3014, %v3209
        %v3211 = vpop.f32.mrb[0].mxu0
        %3212 = vmatprep.mubr.f32.mxu0 0.0
        %3213 = vmatmul.mubr.f32.gmra.mrb[0].mxu0 %v3076
        %v3214 = vpop.f32.mrb[0].mxu0
        %v3215 = vadd.f32 %v3019, %v3214
        %v3216 = vpop.f32.mrb[0].mxu0
        %3217 = vmatprep.mubr.f32.mxu0 0.0
        %3218 = vmatmul.mubr.f32.gmra.mrb[0].mxu0 %v3079
        %v3219 = vpop.f32.mrb[0].mxu0
        %v3220 = vadd.f32 %v3024, %v3219
        %v3221 = vpop.f32.mrb[0].mxu0
        %3222 = vmatprep.mubr.f32.mxu0 0.0
        %3223 = vmatmul.mubr.f32.gmra.mrb[0].mxu0 %v3082
        %v3224 = vpop.f32.mrb[0].mxu0
        %v3225 = vadd.f32 %v3029, %v3224
        %v3226 = vpop.f32.mrb[0].mxu0
        %3227 = vmatprep.mubr.f32.mxu0 0.0
        %3228 = vmatmul.mubr.f32.gmra.mrb[0].mxu0 %v3085
        %v3229 = vpop.f32.mrb[0].mxu0
        %v3230 = vadd.f32 %v3034, %v3229
        %v3231 = vpop.f32.mrb[0].mxu0
        %3232 = vmatprep.mubr.f32.mxu0 0.0
        %3233 = vmatmul.mubr.f32.gmra.mrb[0].mxu0 %v3088
        %v3234 = vpop.f32.mrb[0].mxu0
        %v3235 = vadd.f32 %v3039, %v3234
        %v3236 = vpop.f32.mrb[0].mxu0
        %3237 = vdwg.mxu0
        %v3238 = vld [vmem:[%s2810 + $0x1e] sm:$0xff]
        %v3239 = vld [vmem:[%s2810 + $0x26] sm:$0xff]
        %v3240 = vld [vmem:[%s2810 + $0x56] sm:$0xff]
        %v3241 = vld [vmem:[%s2810 + $0x5e] sm:$0xff]
        %v3242 = vld [vmem:[%s2810 + $0x8e] sm:$0xff]
        %v3243 = vld [vmem:[%s2810 + $0x96] sm:$0xff]
        %v3244 = vld [vmem:[%s2810 + $0xc6] sm:$0xff]
        %v3245 = vld [vmem:[%s2810 + $0xce] sm:$0xff]
        %v3246 = vld [vmem:[%s2810 + $0xfe] sm:$0xff]
        %v3247 = vld [vmem:[%s2810 + $0x106] sm:$0xff]
        %v3248 = vld [vmem:[%s2810 + $0x136] sm:$0xff]
        %v3249 = vld [vmem:[%s2810 + $0x13e] sm:$0xff]
        %v3250 = vld [vmem:[%s2810 + $0x16e] sm:$0xff]
        %v3251 = vld [vmem:[%s2810 + $0x176] sm:$0xff]
        %v3252 = vld [vmem:[%s2810 + $0x1a6] sm:$0xff]
        %v3253 = vld [vmem:[%s2810 + $0x1ae] sm:$0xff]
        %s3254 = scalar_lea.vmem %s3, 8
        %v3255 = vld [vmem:[%s3254] sm:$0xf]
        %v3257 = vsel %vm320, %v3238, 0
        %v3260 = vsel %vm320, %v3239, 0
        %v3263 = vsel %vm320, %v3240, 0
        %v3266 = vsel %vm320, %v3241, 0
        %v3269 = vsel %vm320, %v3242, 0
        %v3272 = vsel %vm320, %v3243, 0
        %v3275 = vsel %vm320, %v3244, 0
        %v3278 = vsel %vm320, %v3245, 0
        %v3281 = vsel %vm320, %v3246, 0
        %v3284 = vsel %vm320, %v3247, 0
        %v3287 = vsel %vm320, %v3248, 0
        %v3290 = vsel %vm320, %v3249, 0
        %v3293 = vsel %vm320, %v3250, 0
        %v3296 = vsel %vm320, %v3251, 0
        %v3299 = vsel %vm320, %v3252, 0
        %v3302 = vsel %vm320, %v3253, 0
        %v3305 = vsel %vm369, %v3255, 0
        %3307 = vmatprep.subr.mxu0 0.0
        %3308 = vmatpush1.msra.mxu0 %v3305
        %3309 = vmatprep.subr.mxu0 0.0
        %3310 = vmatpush1.msra.mxu0 0.0
        %3311 = vmatprep.subr.mxu0 0.0
        %3312 = vmatpush1.msra.mxu0 0.0
        %3313 = vmatprep.subr.mxu0 0.0
        %3314 = vmatpush1.msra.mxu0 0.0
        %3315 = vmatprep.subr.mxu0 0.0
        %3316 = vmatpush1.msra.mxu0 0.0
        %3317 = vmatprep.subr.mxu0 0.0
        %3318 = vmatpush1.msra.mxu0 0.0
        %3319 = vmatprep.subr.mxu0 0.0
        %3320 = vmatpush1.msra.mxu0 0.0
        %3321 = vmatprep.subr.mxu0 0.0
        %3322 = vmatpush1.msra.mxu0 0.0
        %3323 = vmatprep.subr.mxu0 0.0
        %3324 = vmatpush1.msra.mxu0 0.0
        %3325 = vmatprep.subr.mxu0 0.0
        %3326 = vmatpush1.msra.mxu0 0.0
        %3327 = vmatprep.subr.mxu0 0.0
        %3328 = vmatpush1.msra.mxu0 0.0
        %3329 = vmatprep.subr.mxu0 0.0
        %3330 = vmatpush1.msra.mxu0 0.0
        %3331 = vmatprep.subr.mxu0 0.0
        %3332 = vmatpush1.msra.mxu0 0.0
        %3333 = vmatprep.subr.mxu0 0.0
        %3334 = vmatpush1.msra.mxu0 0.0
        %3335 = vmatprep.subr.mxu0 0.0
        %3336 = vmatpush1.msra.mxu0 0.0
        %3337 = vmatprep.subr.mxu0 0.0
        %3338 = vmatpush1.msra.mxu0 0.0
        %3339 = vmatprep.subr.mxu0 0.0
        %3340 = vmatpush1.msra.mxu0 0.0
        %3341 = vmatprep.subr.mxu0 0.0
        %3342 = vmatpush1.msra.mxu0 0.0
        %3343 = vmatprep.subr.mxu0 0.0
        %3344 = vmatpush1.msra.mxu0 0.0
        %3345 = vmatprep.subr.mxu0 0.0
        %3346 = vmatpush1.msra.mxu0 0.0
        %3347 = vmatprep.subr.mxu0 0.0
        %3348 = vmatpush1.msra.mxu0 0.0
        %3349 = vmatprep.subr.mxu0 0.0
        %3350 = vmatpush1.msra.mxu0 0.0
        %3351 = vmatprep.subr.mxu0 0.0
        %3352 = vmatpush1.msra.mxu0 0.0
        %3353 = vmatprep.subr.mxu0 0.0
        %3354 = vmatpush1.msra.mxu0 0.0
        %3355 = vmatprep.subr.mxu0 0.0
        %3356 = vmatpush1.msra.mxu0 0.0
        %3357 = vmatprep.subr.mxu0 0.0
        %3358 = vmatpush1.msra.mxu0 0.0
        %3359 = vmatprep.subr.mxu0 0.0
        %3360 = vmatpush1.msra.mxu0 0.0
        %3361 = vmatprep.subr.mxu0 0.0
        %3362 = vmatpush1.msra.mxu0 0.0
        %3363 = vmatprep.subr.mxu0 0.0
        %3364 = vmatpush1.msra.mxu0 0.0
        %3365 = vmatprep.subr.mxu0 0.0
        %3366 = vmatpush1.msra.mxu0 0.0
        %3367 = vmatprep.subr.mxu0 0.0
        %3368 = vmatpush1.msra.mxu0 0.0
        %3369 = vmatprep.subr.mxu0 0.0
        %3370 = vmatpush1.msra.mxu0 0.0
        %3371 = vmatprep.mubr.f32.mxu0 0.0
        %3372 = vmatmul.mubr.f32.gmra.mrb[0].mxu0 %v3257
        %v3373 = vpop.f32.mrb[0].mxu0
        %v3374 = vadd.f32 0.0, %v3373
        %v3375 = vpop.f32.mrb[0].mxu0
        %3376 = vmatprep.mubr.f32.mxu0 0.0
        %3377 = vmatmul.mubr.f32.gmra.mrb[0].mxu0 %v3260
        %v3378 = vpop.f32.mrb[0].mxu0
        %v3379 = vadd.f32 0.0, %v3378
        %v3380 = vpop.f32.mrb[0].mxu0
        %3381 = vmatprep.mubr.f32.mxu0 0.0
        %3382 = vmatmul.mubr.f32.gmra.mrb[0].mxu0 %v3263
        %v3383 = vpop.f32.mrb[0].mxu0
        %v3384 = vadd.f32 0.0, %v3383
        %v3385 = vpop.f32.mrb[0].mxu0
        %3386 = vmatprep.mubr.f32.mxu0 0.0
        %3387 = vmatmul.mubr.f32.gmra.mrb[0].mxu0 %v3266
        %v3388 = vpop.f32.mrb[0].mxu0
        %v3389 = vadd.f32 0.0, %v3388
        %v3390 = vpop.f32.mrb[0].mxu0
        %3391 = vmatprep.mubr.f32.mxu0 0.0
        %3392 = vmatmul.mubr.f32.gmra.mrb[0].mxu0 %v3269
        %v3393 = vpop.f32.mrb[0].mxu0
        %v3394 = vadd.f32 0.0, %v3393
        %v3395 = vpop.f32.mrb[0].mxu0
        %3396 = vmatprep.mubr.f32.mxu0 0.0
        %3397 = vmatmul.mubr.f32.gmra.mrb[0].mxu0 %v3272
        %v3398 = vpop.f32.mrb[0].mxu0
        %v3399 = vadd.f32 0.0, %v3398
        %v3400 = vpop.f32.mrb[0].mxu0
        %3401 = vmatprep.mubr.f32.mxu0 0.0
        %3402 = vmatmul.mubr.f32.gmra.mrb[0].mxu0 %v3275
        %v3403 = vpop.f32.mrb[0].mxu0
        %v3404 = vadd.f32 0.0, %v3403
        %v3405 = vpop.f32.mrb[0].mxu0
        %3406 = vmatprep.mubr.f32.mxu0 0.0
        %3407 = vmatmul.mubr.f32.gmra.mrb[0].mxu0 %v3278
        %v3408 = vpop.f32.mrb[0].mxu0
        %v3409 = vadd.f32 0.0, %v3408
        %v3410 = vpop.f32.mrb[0].mxu0
        %3411 = vmatprep.mubr.f32.mxu0 0.0
        %3412 = vmatmul.mubr.f32.gmra.mrb[0].mxu0 %v3281
        %v3413 = vpop.f32.mrb[0].mxu0
        %v3414 = vadd.f32 0.0, %v3413
        %v3415 = vpop.f32.mrb[0].mxu0
        %3416 = vmatprep.mubr.f32.mxu0 0.0
        %3417 = vmatmul.mubr.f32.gmra.mrb[0].mxu0 %v3284
        %v3418 = vpop.f32.mrb[0].mxu0
        %v3419 = vadd.f32 0.0, %v3418
        %v3420 = vpop.f32.mrb[0].mxu0
        %3421 = vmatprep.mubr.f32.mxu0 0.0
        %3422 = vmatmul.mubr.f32.gmra.mrb[0].mxu0 %v3287
        %v3423 = vpop.f32.mrb[0].mxu0
        %v3424 = vadd.f32 0.0, %v3423
        %v3425 = vpop.f32.mrb[0].mxu0
        %3426 = vmatprep.mubr.f32.mxu0 0.0
        %3427 = vmatmul.mubr.f32.gmra.mrb[0].mxu0 %v3290
        %v3428 = vpop.f32.mrb[0].mxu0
        %v3429 = vadd.f32 0.0, %v3428
        %v3430 = vpop.f32.mrb[0].mxu0
        %3431 = vmatprep.mubr.f32.mxu0 0.0
        %3432 = vmatmul.mubr.f32.gmra.mrb[0].mxu0 %v3293
        %v3433 = vpop.f32.mrb[0].mxu0
        %v3434 = vadd.f32 0.0, %v3433
        %v3435 = vpop.f32.mrb[0].mxu0
        %3436 = vmatprep.mubr.f32.mxu0 0.0
        %3437 = vmatmul.mubr.f32.gmra.mrb[0].mxu0 %v3296
        %v3438 = vpop.f32.mrb[0].mxu0
        %v3439 = vadd.f32 0.0, %v3438
        %v3440 = vpop.f32.mrb[0].mxu0
        %3441 = vmatprep.mubr.f32.mxu0 0.0
        %3442 = vmatmul.mubr.f32.gmra.mrb[0].mxu0 %v3299
        %v3443 = vpop.f32.mrb[0].mxu0
        %v3444 = vadd.f32 0.0, %v3443
        %v3445 = vpop.f32.mrb[0].mxu0
        %3446 = vmatprep.mubr.f32.mxu0 0.0
        %3447 = vmatmul.mubr.f32.gmra.mrb[0].mxu0 %v3302
        %v3448 = vpop.f32.mrb[0].mxu0
        %v3449 = vadd.f32 0.0, %v3448
        %v3450 = vpop.f32.mrb[0].mxu0
        %3451 = vdwg.mxu0
        %v3452 = vadd.f32 %v3160, %v3374
        %v3453 = vadd.f32 %v3165, %v3379
        %v3454 = vadd.f32 %v3170, %v3384
        %v3455 = vadd.f32 %v3175, %v3389
        %v3456 = vadd.f32 %v3180, %v3394
        %v3457 = vadd.f32 %v3185, %v3399
        %v3458 = vadd.f32 %v3190, %v3404
        %v3459 = vadd.f32 %v3195, %v3409
        %v3460 = vadd.f32 %v3200, %v3414
        %v3461 = vadd.f32 %v3205, %v3419
        %v3462 = vadd.f32 %v3210, %v3424
        %v3463 = vadd.f32 %v3215, %v3429
        %v3464 = vadd.f32 %v3220, %v3434
        %v3465 = vadd.f32 %v3225, %v3439
        %v3466 = vadd.f32 %v3230, %v3444
        %v3467 = vadd.f32 %v3235, %v3449
        %v3468 = vld [vmem:[%s298 + $0x6] sm:$0xff]
        %v3469 = vld [vmem:[%s298 + $0xe] sm:$0xff]
        %v3470 = vld [vmem:[%s298 + $0x3e] sm:$0xff]
        %v3471 = vld [vmem:[%s298 + $0x46] sm:$0xff]
        %v3472 = vld [vmem:[%s298 + $0x76] sm:$0xff]
        %v3473 = vld [vmem:[%s298 + $0x7e] sm:$0xff]
        %v3474 = vld [vmem:[%s298 + $0xae] sm:$0xff]
        %v3475 = vld [vmem:[%s298 + $0xb6] sm:$0xff]
        %v3476 = vld [vmem:[%s298 + $0xe6] sm:$0xff]
        %v3477 = vld [vmem:[%s298 + $0xee] sm:$0xff]
        %v3478 = vld [vmem:[%s298 + $0x11e] sm:$0xff]
        %v3479 = vld [vmem:[%s298 + $0x126] sm:$0xff]
        %v3480 = vld [vmem:[%s298 + $0x156] sm:$0xff]
        %v3481 = vld [vmem:[%s298 + $0x15e] sm:$0xff]
        %v3482 = vld [vmem:[%s298 + $0x18e] sm:$0xff]
        %v3483 = vld [vmem:[%s298 + $0x196] sm:$0xff]
        %s3484 = scalar_lea.vmem %s3, 12
        %v3485 = vld [vmem:[%s3484] sm:$0xf]
        %v3487 = vsel %vm320, %v3468, 0
        %v3490 = vsel %vm320, %v3469, 0
        %v3493 = vsel %vm320, %v3470, 0
        %v3496 = vsel %vm320, %v3471, 0
        %v3499 = vsel %vm320, %v3472, 0
        %v3502 = vsel %vm320, %v3473, 0
        %v3505 = vsel %vm320, %v3474, 0
        %v3508 = vsel %vm320, %v3475, 0
        %v3511 = vsel %vm320, %v3476, 0
        %v3514 = vsel %vm320, %v3477, 0
        %v3517 = vsel %vm320, %v3478, 0
        %v3520 = vsel %vm320, %v3479, 0
        %v3523 = vsel %vm320, %v3480, 0
        %v3526 = vsel %vm320, %v3481, 0
        %v3529 = vsel %vm320, %v3482, 0
        %v3532 = vsel %vm320, %v3483, 0
        %v3535 = vsel %vm369, %v3485, 0
        %3537 = vmatprep.subr.mxu0 0.0
        %3538 = vmatpush1.msra.mxu0 %v3535
        %3539 = vmatprep.subr.mxu0 0.0
        %3540 = vmatpush1.msra.mxu0 0.0
        %3541 = vmatprep.subr.mxu0 0.0
        %3542 = vmatpush1.msra.mxu0 0.0
        %3543 = vmatprep.subr.mxu0 0.0
        %3544 = vmatpush1.msra.mxu0 0.0
        %3545 = vmatprep.subr.mxu0 0.0
        %3546 = vmatpush1.msra.mxu0 0.0
        %3547 = vmatprep.subr.mxu0 0.0
        %3548 = vmatpush1.msra.mxu0 0.0
        %3549 = vmatprep.subr.mxu0 0.0
        %3550 = vmatpush1.msra.mxu0 0.0
        %3551 = vmatprep.subr.mxu0 0.0
        %3552 = vmatpush1.msra.mxu0 0.0
        %3553 = vmatprep.subr.mxu0 0.0
        %3554 = vmatpush1.msra.mxu0 0.0
        %3555 = vmatprep.subr.mxu0 0.0
        %3556 = vmatpush1.msra.mxu0 0.0
        %3557 = vmatprep.subr.mxu0 0.0
        %3558 = vmatpush1.msra.mxu0 0.0
        %3559 = vmatprep.subr.mxu0 0.0
        %3560 = vmatpush1.msra.mxu0 0.0
        %3561 = vmatprep.subr.mxu0 0.0
        %3562 = vmatpush1.msra.mxu0 0.0
        %3563 = vmatprep.subr.mxu0 0.0
        %3564 = vmatpush1.msra.mxu0 0.0
        %3565 = vmatprep.subr.mxu0 0.0
        %3566 = vmatpush1.msra.mxu0 0.0
        %3567 = vmatprep.subr.mxu0 0.0
        %3568 = vmatpush1.msra.mxu0 0.0
        %3569 = vmatprep.subr.mxu0 0.0
        %3570 = vmatpush1.msra.mxu0 0.0
        %3571 = vmatprep.subr.mxu0 0.0
        %3572 = vmatpush1.msra.mxu0 0.0
        %3573 = vmatprep.subr.mxu0 0.0
        %3574 = vmatpush1.msra.mxu0 0.0
        %3575 = vmatprep.subr.mxu0 0.0
        %3576 = vmatpush1.msra.mxu0 0.0
        %3577 = vmatprep.subr.mxu0 0.0
        %3578 = vmatpush1.msra.mxu0 0.0
        %3579 = vmatprep.subr.mxu0 0.0
        %3580 = vmatpush1.msra.mxu0 0.0
        %3581 = vmatprep.subr.mxu0 0.0
        %3582 = vmatpush1.msra.mxu0 0.0
        %3583 = vmatprep.subr.mxu0 0.0
        %3584 = vmatpush1.msra.mxu0 0.0
        %3585 = vmatprep.subr.mxu0 0.0
        %3586 = vmatpush1.msra.mxu0 0.0
        %3587 = vmatprep.subr.mxu0 0.0
        %3588 = vmatpush1.msra.mxu0 0.0
        %3589 = vmatprep.subr.mxu0 0.0
        %3590 = vmatpush1.msra.mxu0 0.0
        %3591 = vmatprep.subr.mxu0 0.0
        %3592 = vmatpush1.msra.mxu0 0.0
        %3593 = vmatprep.subr.mxu0 0.0
        %3594 = vmatpush1.msra.mxu0 0.0
        %3595 = vmatprep.subr.mxu0 0.0
        %3596 = vmatpush1.msra.mxu0 0.0
        %3597 = vmatprep.subr.mxu0 0.0
        %3598 = vmatpush1.msra.mxu0 0.0
        %3599 = vmatprep.subr.mxu0 0.0
        %3600 = vmatpush1.msra.mxu0 0.0
        %3601 = vmatprep.mubr.f32.mxu0 0.0
        %3602 = vmatmul.mubr.f32.gmra.mrb[0].mxu0 %v3487
        %v3603 = vpop.f32.mrb[0].mxu0
        %v3604 = vadd.f32 0.0, %v3603
        %v3605 = vpop.f32.mrb[0].mxu0
        %3606 = vmatprep.mubr.f32.mxu0 0.0
        %3607 = vmatmul.mubr.f32.gmra.mrb[0].mxu0 %v3490
        %v3608 = vpop.f32.mrb[0].mxu0
        %v3609 = vadd.f32 0.0, %v3608
        %v3610 = vpop.f32.mrb[0].mxu0
        %3611 = vmatprep.mubr.f32.mxu0 0.0
        %3612 = vmatmul.mubr.f32.gmra.mrb[0].mxu0 %v3493
        %v3613 = vpop.f32.mrb[0].mxu0
        %v3614 = vadd.f32 0.0, %v3613
        %v3615 = vpop.f32.mrb[0].mxu0
        %3616 = vmatprep.mubr.f32.mxu0 0.0
        %3617 = vmatmul.mubr.f32.gmra.mrb[0].mxu0 %v3496
        %v3618 = vpop.f32.mrb[0].mxu0
        %v3619 = vadd.f32 0.0, %v3618
        %v3620 = vpop.f32.mrb[0].mxu0
        %3621 = vmatprep.mubr.f32.mxu0 0.0
        %3622 = vmatmul.mubr.f32.gmra.mrb[0].mxu0 %v3499
        %v3623 = vpop.f32.mrb[0].mxu0
        %v3624 = vadd.f32 0.0, %v3623
        %v3625 = vpop.f32.mrb[0].mxu0
        %3626 = vmatprep.mubr.f32.mxu0 0.0
        %3627 = vmatmul.mubr.f32.gmra.mrb[0].mxu0 %v3502
        %v3628 = vpop.f32.mrb[0].mxu0
        %v3629 = vadd.f32 0.0, %v3628
        %v3630 = vpop.f32.mrb[0].mxu0
        %3631 = vmatprep.mubr.f32.mxu0 0.0
        %3632 = vmatmul.mubr.f32.gmra.mrb[0].mxu0 %v3505
        %v3633 = vpop.f32.mrb[0].mxu0
        %v3634 = vadd.f32 0.0, %v3633
        %v3635 = vpop.f32.mrb[0].mxu0
        %3636 = vmatprep.mubr.f32.mxu0 0.0
        %3637 = vmatmul.mubr.f32.gmra.mrb[0].mxu0 %v3508
        %v3638 = vpop.f32.mrb[0].mxu0
        %v3639 = vadd.f32 0.0, %v3638
        %v3640 = vpop.f32.mrb[0].mxu0
        %3641 = vmatprep.mubr.f32.mxu0 0.0
        %3642 = vmatmul.mubr.f32.gmra.mrb[0].mxu0 %v3511
        %v3643 = vpop.f32.mrb[0].mxu0
        %v3644 = vadd.f32 0.0, %v3643
        %v3645 = vpop.f32.mrb[0].mxu0
        %3646 = vmatprep.mubr.f32.mxu0 0.0
        %3647 = vmatmul.mubr.f32.gmra.mrb[0].mxu0 %v3514
        %v3648 = vpop.f32.mrb[0].mxu0
        %v3649 = vadd.f32 0.0, %v3648
        %v3650 = vpop.f32.mrb[0].mxu0
        %3651 = vmatprep.mubr.f32.mxu0 0.0
        %3652 = vmatmul.mubr.f32.gmra.mrb[0].mxu0 %v3517
        %v3653 = vpop.f32.mrb[0].mxu0
        %v3654 = vadd.f32 0.0, %v3653
        %v3655 = vpop.f32.mrb[0].mxu0
        %3656 = vmatprep.mubr.f32.mxu0 0.0
        %3657 = vmatmul.mubr.f32.gmra.mrb[0].mxu0 %v3520
        %v3658 = vpop.f32.mrb[0].mxu0
        %v3659 = vadd.f32 0.0, %v3658
        %v3660 = vpop.f32.mrb[0].mxu0
        %3661 = vmatprep.mubr.f32.mxu0 0.0
        %3662 = vmatmul.mubr.f32.gmra.mrb[0].mxu0 %v3523
        %v3663 = vpop.f32.mrb[0].mxu0
        %v3664 = vadd.f32 0.0, %v3663
        %v3665 = vpop.f32.mrb[0].mxu0
        %3666 = vmatprep.mubr.f32.mxu0 0.0
        %3667 = vmatmul.mubr.f32.gmra.mrb[0].mxu0 %v3526
        %v3668 = vpop.f32.mrb[0].mxu0
        %v3669 = vadd.f32 0.0, %v3668
        %v3670 = vpop.f32.mrb[0].mxu0
        %3671 = vmatprep.mubr.f32.mxu0 0.0
        %3672 = vmatmul.mubr.f32.gmra.mrb[0].mxu0 %v3529
        %v3673 = vpop.f32.mrb[0].mxu0
        %v3674 = vadd.f32 0.0, %v3673
        %v3675 = vpop.f32.mrb[0].mxu0
        %3676 = vmatprep.mubr.f32.mxu0 0.0
        %3677 = vmatmul.mubr.f32.gmra.mrb[0].mxu0 %v3532
        %v3678 = vpop.f32.mrb[0].mxu0
        %v3679 = vadd.f32 0.0, %v3678
        %v3680 = vpop.f32.mrb[0].mxu0
        %3681 = vdwg.mxu0
        %v3682 = vadd.f32 %v3452, %v3604
        %v3683 = vadd.f32 %v3453, %v3609
        %v3684 = vadd.f32 %v3454, %v3614
        %v3685 = vadd.f32 %v3455, %v3619
        %v3686 = vadd.f32 %v3456, %v3624
        %v3687 = vadd.f32 %v3457, %v3629
        %v3688 = vadd.f32 %v3458, %v3634
        %v3689 = vadd.f32 %v3459, %v3639
        %v3690 = vadd.f32 %v3460, %v3644
        %v3691 = vadd.f32 %v3461, %v3649
        %v3692 = vadd.f32 %v3462, %v3654
        %v3693 = vadd.f32 %v3463, %v3659
        %v3694 = vadd.f32 %v3464, %v3664
        %v3695 = vadd.f32 %v3465, %v3669
        %v3696 = vadd.f32 %v3466, %v3674
        %v3697 = vadd.f32 %v3467, %v3679
        %v3698 = vld [vmem:[%s298 + $0x12] sm:$0xff]
        %v3699 = vld [vmem:[%s298 + $0x1a] sm:$0xff]
        %v3700 = vld [vmem:[%s298 + $0x4a] sm:$0xff]
        %v3701 = vld [vmem:[%s298 + $0x52] sm:$0xff]
        %v3702 = vld [vmem:[%s298 + $0x82] sm:$0xff]
        %v3703 = vld [vmem:[%s298 + $0x8a] sm:$0xff]
        %v3704 = vld [vmem:[%s298 + $0xba] sm:$0xff]
        %v3705 = vld [vmem:[%s298 + $0xc2] sm:$0xff]
        %v3706 = vld [vmem:[%s298 + $0xf2] sm:$0xff]
        %v3707 = vld [vmem:[%s298 + $0xfa] sm:$0xff]
        %v3708 = vld [vmem:[%s298 + $0x12a] sm:$0xff]
        %v3709 = vld [vmem:[%s298 + $0x132] sm:$0xff]
        %v3710 = vld [vmem:[%s298 + $0x162] sm:$0xff]
        %v3711 = vld [vmem:[%s298 + $0x16a] sm:$0xff]
        %v3712 = vld [vmem:[%s298 + $0x19a] sm:$0xff]
        %v3713 = vld [vmem:[%s298 + $0x1a2] sm:$0xff]
        %s3714 = scalar_lea.vmem %s3, 16
        %v3715 = vld [vmem:[%s3714] sm:$0xf]
        %v3717 = vsel %vm320, %v3698, 0
        %v3720 = vsel %vm320, %v3699, 0
        %v3723 = vsel %vm320, %v3700, 0
        %v3726 = vsel %vm320, %v3701, 0
        %v3729 = vsel %vm320, %v3702, 0
        %v3732 = vsel %vm320, %v3703, 0
        %v3735 = vsel %vm320, %v3704, 0
        %v3738 = vsel %vm320, %v3705, 0
        %v3741 = vsel %vm320, %v3706, 0
        %v3744 = vsel %vm320, %v3707, 0
        %v3747 = vsel %vm320, %v3708, 0
        %v3750 = vsel %vm320, %v3709, 0
        %v3753 = vsel %vm320, %v3710, 0
        %v3756 = vsel %vm320, %v3711, 0
        %v3759 = vsel %vm320, %v3712, 0
        %v3762 = vsel %vm320, %v3713, 0
        %v3765 = vsel %vm369, %v3715, 0
        %3767 = vmatprep.subr.mxu0 0.0
        %3768 = vmatpush1.msra.mxu0 %v3765
        %3769 = vmatprep.subr.mxu0 0.0
        %3770 = vmatpush1.msra.mxu0 0.0
        %3771 = vmatprep.subr.mxu0 0.0
        %3772 = vmatpush1.msra.mxu0 0.0
        %3773 = vmatprep.subr.mxu0 0.0
        %3774 = vmatpush1.msra.mxu0 0.0
        %3775 = vmatprep.subr.mxu0 0.0
        %3776 = vmatpush1.msra.mxu0 0.0
        %3777 = vmatprep.subr.mxu0 0.0
        %3778 = vmatpush1.msra.mxu0 0.0
        %3779 = vmatprep.subr.mxu0 0.0
        %3780 = vmatpush1.msra.mxu0 0.0
        %3781 = vmatprep.subr.mxu0 0.0
        %3782 = vmatpush1.msra.mxu0 0.0
        %3783 = vmatprep.subr.mxu0 0.0
        %3784 = vmatpush1.msra.mxu0 0.0
        %3785 = vmatprep.subr.mxu0 0.0
        %3786 = vmatpush1.msra.mxu0 0.0
        %3787 = vmatprep.subr.mxu0 0.0
        %3788 = vmatpush1.msra.mxu0 0.0
        %3789 = vmatprep.subr.mxu0 0.0
        %3790 = vmatpush1.msra.mxu0 0.0
        %3791 = vmatprep.subr.mxu0 0.0
        %3792 = vmatpush1.msra.mxu0 0.0
        %3793 = vmatprep.subr.mxu0 0.0
        %3794 = vmatpush1.msra.mxu0 0.0
        %3795 = vmatprep.subr.mxu0 0.0
        %3796 = vmatpush1.msra.mxu0 0.0
        %3797 = vmatprep.subr.mxu0 0.0
        %3798 = vmatpush1.msra.mxu0 0.0
        %3799 = vmatprep.subr.mxu0 0.0
        %3800 = vmatpush1.msra.mxu0 0.0
        %3801 = vmatprep.subr.mxu0 0.0
        %3802 = vmatpush1.msra.mxu0 0.0
        %3803 = vmatprep.subr.mxu0 0.0
        %3804 = vmatpush1.msra.mxu0 0.0
        %3805 = vmatprep.subr.mxu0 0.0
        %3806 = vmatpush1.msra.mxu0 0.0
        %3807 = vmatprep.subr.mxu0 0.0
        %3808 = vmatpush1.msra.mxu0 0.0
        %3809 = vmatprep.subr.mxu0 0.0
        %3810 = vmatpush1.msra.mxu0 0.0
        %3811 = vmatprep.subr.mxu0 0.0
        %3812 = vmatpush1.msra.mxu0 0.0
        %3813 = vmatprep.subr.mxu0 0.0
        %3814 = vmatpush1.msra.mxu0 0.0
        %3815 = vmatprep.subr.mxu0 0.0
        %3816 = vmatpush1.msra.mxu0 0.0
        %3817 = vmatprep.subr.mxu0 0.0
        %3818 = vmatpush1.msra.mxu0 0.0
        %3819 = vmatprep.subr.mxu0 0.0
        %3820 = vmatpush1.msra.mxu0 0.0
        %3821 = vmatprep.subr.mxu0 0.0
        %3822 = vmatpush1.msra.mxu0 0.0
        %3823 = vmatprep.subr.mxu0 0.0
        %3824 = vmatpush1.msra.mxu0 0.0
        %3825 = vmatprep.subr.mxu0 0.0
        %3826 = vmatpush1.msra.mxu0 0.0
        %3827 = vmatprep.subr.mxu0 0.0
        %3828 = vmatpush1.msra.mxu0 0.0
        %3829 = vmatprep.subr.mxu0 0.0
        %3830 = vmatpush1.msra.mxu0 0.0
        %3831 = vmatprep.mubr.f32.mxu0 0.0
        %3832 = vmatmul.mubr.f32.gmra.mrb[0].mxu0 %v3717
        %v3833 = vpop.f32.mrb[0].mxu0
        %v3834 = vadd.f32 0.0, %v3833
        %v3835 = vpop.f32.mrb[0].mxu0
        %3836 = vmatprep.mubr.f32.mxu0 0.0
        %3837 = vmatmul.mubr.f32.gmra.mrb[0].mxu0 %v3720
        %v3838 = vpop.f32.mrb[0].mxu0
        %v3839 = vadd.f32 0.0, %v3838
        %v3840 = vpop.f32.mrb[0].mxu0
        %3841 = vmatprep.mubr.f32.mxu0 0.0
        %3842 = vmatmul.mubr.f32.gmra.mrb[0].mxu0 %v3723
        %v3843 = vpop.f32.mrb[0].mxu0
        %v3844 = vadd.f32 0.0, %v3843
        %v3845 = vpop.f32.mrb[0].mxu0
        %3846 = vmatprep.mubr.f32.mxu0 0.0
        %3847 = vmatmul.mubr.f32.gmra.mrb[0].mxu0 %v3726
        %v3848 = vpop.f32.mrb[0].mxu0
        %v3849 = vadd.f32 0.0, %v3848
        %v3850 = vpop.f32.mrb[0].mxu0
        %3851 = vmatprep.mubr.f32.mxu0 0.0
        %3852 = vmatmul.mubr.f32.gmra.mrb[0].mxu0 %v3729
        %v3853 = vpop.f32.mrb[0].mxu0
        %v3854 = vadd.f32 0.0, %v3853
        %v3855 = vpop.f32.mrb[0].mxu0
        %3856 = vmatprep.mubr.f32.mxu0 0.0
        %3857 = vmatmul.mubr.f32.gmra.mrb[0].mxu0 %v3732
        %v3858 = vpop.f32.mrb[0].mxu0
        %v3859 = vadd.f32 0.0, %v3858
        %v3860 = vpop.f32.mrb[0].mxu0
        %3861 = vmatprep.mubr.f32.mxu0 0.0
        %3862 = vmatmul.mubr.f32.gmra.mrb[0].mxu0 %v3735
        %v3863 = vpop.f32.mrb[0].mxu0
        %v3864 = vadd.f32 0.0, %v3863
        %v3865 = vpop.f32.mrb[0].mxu0
        %3866 = vmatprep.mubr.f32.mxu0 0.0
        %3867 = vmatmul.mubr.f32.gmra.mrb[0].mxu0 %v3738
        %v3868 = vpop.f32.mrb[0].mxu0
        %v3869 = vadd.f32 0.0, %v3868
        %v3870 = vpop.f32.mrb[0].mxu0
        %3871 = vmatprep.mubr.f32.mxu0 0.0
        %3872 = vmatmul.mubr.f32.gmra.mrb[0].mxu0 %v3741
        %v3873 = vpop.f32.mrb[0].mxu0
        %v3874 = vadd.f32 0.0, %v3873
        %v3875 = vpop.f32.mrb[0].mxu0
        %3876 = vmatprep.mubr.f32.mxu0 0.0
        %3877 = vmatmul.mubr.f32.gmra.mrb[0].mxu0 %v3744
        %v3878 = vpop.f32.mrb[0].mxu0
        %v3879 = vadd.f32 0.0, %v3878
        %v3880 = vpop.f32.mrb[0].mxu0
        %3881 = vmatprep.mubr.f32.mxu0 0.0
        %3882 = vmatmul.mubr.f32.gmra.mrb[0].mxu0 %v3747
        %v3883 = vpop.f32.mrb[0].mxu0
        %v3884 = vadd.f32 0.0, %v3883
        %v3885 = vpop.f32.mrb[0].mxu0
        %3886 = vmatprep.mubr.f32.mxu0 0.0
        %3887 = vmatmul.mubr.f32.gmra.mrb[0].mxu0 %v3750
        %v3888 = vpop.f32.mrb[0].mxu0
        %v3889 = vadd.f32 0.0, %v3888
        %v3890 = vpop.f32.mrb[0].mxu0
        %3891 = vmatprep.mubr.f32.mxu0 0.0
        %3892 = vmatmul.mubr.f32.gmra.mrb[0].mxu0 %v3753
        %v3893 = vpop.f32.mrb[0].mxu0
        %v3894 = vadd.f32 0.0, %v3893
        %v3895 = vpop.f32.mrb[0].mxu0
        %3896 = vmatprep.mubr.f32.mxu0 0.0
        %3897 = vmatmul.mubr.f32.gmra.mrb[0].mxu0 %v3756
        %v3898 = vpop.f32.mrb[0].mxu0
        %v3899 = vadd.f32 0.0, %v3898
        %v3900 = vpop.f32.mrb[0].mxu0
        %3901 = vmatprep.mubr.f32.mxu0 0.0
        %3902 = vmatmul.mubr.f32.gmra.mrb[0].mxu0 %v3759
        %v3903 = vpop.f32.mrb[0].mxu0
        %v3904 = vadd.f32 0.0, %v3903
        %v3905 = vpop.f32.mrb[0].mxu0
        %3906 = vmatprep.mubr.f32.mxu0 0.0
        %3907 = vmatmul.mubr.f32.gmra.mrb[0].mxu0 %v3762
        %v3908 = vpop.f32.mrb[0].mxu0
        %v3909 = vadd.f32 0.0, %v3908
        %v3910 = vpop.f32.mrb[0].mxu0
        %3911 = vdwg.mxu0
        %v3912 = vadd.f32 %v3682, %v3834
        %v3913 = vadd.f32 %v3683, %v3839
        %v3914 = vadd.f32 %v3684, %v3844
        %v3915 = vadd.f32 %v3685, %v3849
        %v3916 = vadd.f32 %v3686, %v3854
        %v3917 = vadd.f32 %v3687, %v3859
        %v3918 = vadd.f32 %v3688, %v3864
        %v3919 = vadd.f32 %v3689, %v3869
        %v3920 = vadd.f32 %v3690, %v3874
        %v3921 = vadd.f32 %v3691, %v3879
        %v3922 = vadd.f32 %v3692, %v3884
        %v3923 = vadd.f32 %v3693, %v3889
        %v3924 = vadd.f32 %v3694, %v3894
        %v3925 = vadd.f32 %v3695, %v3899
        %v3926 = vadd.f32 %v3696, %v3904
        %v3927 = vadd.f32 %v3697, %v3909
        %v3928 = vld [vmem:[%s298 + $0x1e] sm:$0xff]
        %v3929 = vld [vmem:[%s298 + $0x26] sm:$0xff]
        %v3930 = vld [vmem:[%s298 + $0x56] sm:$0xff]
        %v3931 = vld [vmem:[%s298 + $0x5e] sm:$0xff]
        %v3932 = vld [vmem:[%s298 + $0x8e] sm:$0xff]
        %v3933 = vld [vmem:[%s298 + $0x96] sm:$0xff]
        %v3934 = vld [vmem:[%s298 + $0xc6] sm:$0xff]
        %v3935 = vld [vmem:[%s298 + $0xce] sm:$0xff]
        %v3936 = vld [vmem:[%s298 + $0xfe] sm:$0xff]
        %v3937 = vld [vmem:[%s298 + $0x106] sm:$0xff]
        %v3938 = vld [vmem:[%s298 + $0x136] sm:$0xff]
        %v3939 = vld [vmem:[%s298 + $0x13e] sm:$0xff]
        %v3940 = vld [vmem:[%s298 + $0x16e] sm:$0xff]
        %v3941 = vld [vmem:[%s298 + $0x176] sm:$0xff]
        %v3942 = vld [vmem:[%s298 + $0x1a6] sm:$0xff]
        %v3943 = vld [vmem:[%s298 + $0x1ae] sm:$0xff]
        %s3944 = scalar_lea.vmem %s3, 20
        %v3945 = vld [vmem:[%s3944] sm:$0xf]
        %v3947 = vsel %vm320, %v3928, 0
        %v3950 = vsel %vm320, %v3929, 0
        %v3953 = vsel %vm320, %v3930, 0
        %v3956 = vsel %vm320, %v3931, 0
        %v3959 = vsel %vm320, %v3932, 0
        %v3962 = vsel %vm320, %v3933, 0
        %v3965 = vsel %vm320, %v3934, 0
        %v3968 = vsel %vm320, %v3935, 0
        %v3971 = vsel %vm320, %v3936, 0
        %v3974 = vsel %vm320, %v3937, 0
        %v3977 = vsel %vm320, %v3938, 0
        %v3980 = vsel %vm320, %v3939, 0
        %v3983 = vsel %vm320, %v3940, 0
        %v3986 = vsel %vm320, %v3941, 0
        %v3989 = vsel %vm320, %v3942, 0
        %v3992 = vsel %vm320, %v3943, 0
        %v3995 = vsel %vm369, %v3945, 0
        %3997 = vmatprep.subr.mxu0 0.0
        %3998 = vmatpush1.msra.mxu0 %v3995
        %3999 = vmatprep.subr.mxu0 0.0
        %4000 = vmatpush1.msra.mxu0 0.0
        %4001 = vmatprep.subr.mxu0 0.0
        %4002 = vmatpush1.msra.mxu0 0.0
        %4003 = vmatprep.subr.mxu0 0.0
        %4004 = vmatpush1.msra.mxu0 0.0
        %4005 = vmatprep.subr.mxu0 0.0
        %4006 = vmatpush1.msra.mxu0 0.0
        %4007 = vmatprep.subr.mxu0 0.0
        %4008 = vmatpush1.msra.mxu0 0.0
        %4009 = vmatprep.subr.mxu0 0.0
        %4010 = vmatpush1.msra.mxu0 0.0
        %4011 = vmatprep.subr.mxu0 0.0
        %4012 = vmatpush1.msra.mxu0 0.0
        %4013 = vmatprep.subr.mxu0 0.0
        %4014 = vmatpush1.msra.mxu0 0.0
        %4015 = vmatprep.subr.mxu0 0.0
        %4016 = vmatpush1.msra.mxu0 0.0
        %4017 = vmatprep.subr.mxu0 0.0
        %4018 = vmatpush1.msra.mxu0 0.0
        %4019 = vmatprep.subr.mxu0 0.0
        %4020 = vmatpush1.msra.mxu0 0.0
        %4021 = vmatprep.subr.mxu0 0.0
        %4022 = vmatpush1.msra.mxu0 0.0
        %4023 = vmatprep.subr.mxu0 0.0
        %4024 = vmatpush1.msra.mxu0 0.0
        %4025 = vmatprep.subr.mxu0 0.0
        %4026 = vmatpush1.msra.mxu0 0.0
        %4027 = vmatprep.subr.mxu0 0.0
        %4028 = vmatpush1.msra.mxu0 0.0
        %4029 = vmatprep.subr.mxu0 0.0
        %4030 = vmatpush1.msra.mxu0 0.0
        %4031 = vmatprep.subr.mxu0 0.0
        %4032 = vmatpush1.msra.mxu0 0.0
        %4033 = vmatprep.subr.mxu0 0.0
        %4034 = vmatpush1.msra.mxu0 0.0
        %4035 = vmatprep.subr.mxu0 0.0
        %4036 = vmatpush1.msra.mxu0 0.0
        %4037 = vmatprep.subr.mxu0 0.0
        %4038 = vmatpush1.msra.mxu0 0.0
        %4039 = vmatprep.subr.mxu0 0.0
        %4040 = vmatpush1.msra.mxu0 0.0
        %4041 = vmatprep.subr.mxu0 0.0
        %4042 = vmatpush1.msra.mxu0 0.0
        %4043 = vmatprep.subr.mxu0 0.0
        %4044 = vmatpush1.msra.mxu0 0.0
        %4045 = vmatprep.subr.mxu0 0.0
        %4046 = vmatpush1.msra.mxu0 0.0
        %4047 = vmatprep.subr.mxu0 0.0
        %4048 = vmatpush1.msra.mxu0 0.0
        %4049 = vmatprep.subr.mxu0 0.0
        %4050 = vmatpush1.msra.mxu0 0.0
        %4051 = vmatprep.subr.mxu0 0.0
        %4052 = vmatpush1.msra.mxu0 0.0
        %4053 = vmatprep.subr.mxu0 0.0
        %4054 = vmatpush1.msra.mxu0 0.0
        %4055 = vmatprep.subr.mxu0 0.0
        %4056 = vmatpush1.msra.mxu0 0.0
        %4057 = vmatprep.subr.mxu0 0.0
        %4058 = vmatpush1.msra.mxu0 0.0
        %4059 = vmatprep.subr.mxu0 0.0
        %4060 = vmatpush1.msra.mxu0 0.0
        %4061 = vmatprep.mubr.f32.mxu0 0.0
        %4062 = vmatmul.mubr.f32.gmra.mrb[0].mxu0 %v3947
        %v4063 = vpop.f32.mrb[0].mxu0
        %v4064 = vadd.f32 0.0, %v4063
        %v4065 = vpop.f32.mrb[0].mxu0
        %4066 = vmatprep.mubr.f32.mxu0 0.0
        %4067 = vmatmul.mubr.f32.gmra.mrb[0].mxu0 %v3950
        %v4068 = vpop.f32.mrb[0].mxu0
        %v4069 = vadd.f32 0.0, %v4068
        %v4070 = vpop.f32.mrb[0].mxu0
        %4071 = vmatprep.mubr.f32.mxu0 0.0
        %4072 = vmatmul.mubr.f32.gmra.mrb[0].mxu0 %v3953
        %v4073 = vpop.f32.mrb[0].mxu0
        %v4074 = vadd.f32 0.0, %v4073
        %v4075 = vpop.f32.mrb[0].mxu0
        %4076 = vmatprep.mubr.f32.mxu0 0.0
        %4077 = vmatmul.mubr.f32.gmra.mrb[0].mxu0 %v3956
        %v4078 = vpop.f32.mrb[0].mxu0
        %v4079 = vadd.f32 0.0, %v4078
        %v4080 = vpop.f32.mrb[0].mxu0
        %4081 = vmatprep.mubr.f32.mxu0 0.0
        %4082 = vmatmul.mubr.f32.gmra.mrb[0].mxu0 %v3959
        %v4083 = vpop.f32.mrb[0].mxu0
        %v4084 = vadd.f32 0.0, %v4083
        %v4085 = vpop.f32.mrb[0].mxu0
        %4086 = vmatprep.mubr.f32.mxu0 0.0
        %4087 = vmatmul.mubr.f32.gmra.mrb[0].mxu0 %v3962
        %v4088 = vpop.f32.mrb[0].mxu0
        %v4089 = vadd.f32 0.0, %v4088
        %v4090 = vpop.f32.mrb[0].mxu0
        %4091 = vmatprep.mubr.f32.mxu0 0.0
        %4092 = vmatmul.mubr.f32.gmra.mrb[0].mxu0 %v3965
        %v4093 = vpop.f32.mrb[0].mxu0
        %v4094 = vadd.f32 0.0, %v4093
        %v4095 = vpop.f32.mrb[0].mxu0
        %4096 = vmatprep.mubr.f32.mxu0 0.0
        %4097 = vmatmul.mubr.f32.gmra.mrb[0].mxu0 %v3968
        %v4098 = vpop.f32.mrb[0].mxu0
        %v4099 = vadd.f32 0.0, %v4098
        %v4100 = vpop.f32.mrb[0].mxu0
        %4101 = vmatprep.mubr.f32.mxu0 0.0
        %4102 = vmatmul.mubr.f32.gmra.mrb[0].mxu0 %v3971
        %v4103 = vpop.f32.mrb[0].mxu0
        %v4104 = vadd.f32 0.0, %v4103
        %v4105 = vpop.f32.mrb[0].mxu0
        %4106 = vmatprep.mubr.f32.mxu0 0.0
        %4107 = vmatmul.mubr.f32.gmra.mrb[0].mxu0 %v3974
        %v4108 = vpop.f32.mrb[0].mxu0
        %v4109 = vadd.f32 0.0, %v4108
        %v4110 = vpop.f32.mrb[0].mxu0
        %4111 = vmatprep.mubr.f32.mxu0 0.0
        %4112 = vmatmul.mubr.f32.gmra.mrb[0].mxu0 %v3977
        %v4113 = vpop.f32.mrb[0].mxu0
        %v4114 = vadd.f32 0.0, %v4113
        %v4115 = vpop.f32.mrb[0].mxu0
        %4116 = vmatprep.mubr.f32.mxu0 0.0
        %4117 = vmatmul.mubr.f32.gmra.mrb[0].mxu0 %v3980
        %v4118 = vpop.f32.mrb[0].mxu0
        %v4119 = vadd.f32 0.0, %v4118
        %v4120 = vpop.f32.mrb[0].mxu0
        %4121 = vmatprep.mubr.f32.mxu0 0.0
        %4122 = vmatmul.mubr.f32.gmra.mrb[0].mxu0 %v3983
        %v4123 = vpop.f32.mrb[0].mxu0
        %v4124 = vadd.f32 0.0, %v4123
        %v4125 = vpop.f32.mrb[0].mxu0
        %4126 = vmatprep.mubr.f32.mxu0 0.0
        %4127 = vmatmul.mubr.f32.gmra.mrb[0].mxu0 %v3986
        %v4128 = vpop.f32.mrb[0].mxu0
        %v4129 = vadd.f32 0.0, %v4128
        %v4130 = vpop.f32.mrb[0].mxu0
        %4131 = vmatprep.mubr.f32.mxu0 0.0
        %4132 = vmatmul.mubr.f32.gmra.mrb[0].mxu0 %v3989
        %v4133 = vpop.f32.mrb[0].mxu0
        %v4134 = vadd.f32 0.0, %v4133
        %v4135 = vpop.f32.mrb[0].mxu0
        %4136 = vmatprep.mubr.f32.mxu0 0.0
        %4137 = vmatmul.mubr.f32.gmra.mrb[0].mxu0 %v3992
        %v4138 = vpop.f32.mrb[0].mxu0
        %v4139 = vadd.f32 0.0, %v4138
        %v4140 = vpop.f32.mrb[0].mxu0
        %4141 = vdwg.mxu0
        %v4142 = vadd.f32 %v3912, %v4064
        %v4143 = vadd.f32 %v3913, %v4069
        %v4144 = vadd.f32 %v3914, %v4074
        %v4145 = vadd.f32 %v3915, %v4079
        %v4146 = vadd.f32 %v3916, %v4084
        %v4147 = vadd.f32 %v3917, %v4089
        %v4148 = vadd.f32 %v3918, %v4094
        %v4149 = vadd.f32 %v3919, %v4099
        %v4150 = vadd.f32 %v3920, %v4104
        %v4151 = vadd.f32 %v3921, %v4109
        %v4152 = vadd.f32 %v3922, %v4114
        %v4153 = vadd.f32 %v3923, %v4119
        %v4154 = vadd.f32 %v3924, %v4124
        %v4155 = vadd.f32 %v3925, %v4129
        %v4156 = vadd.f32 %v3926, %v4134
        %v4157 = vadd.f32 %v3927, %v4139
        %s4158 = sadd.s32 %s294, 30
        %s4159 = smul.u32 %s4158, 56
        %s4160 = scalar_lea.vmem %s284, %s4159
        %v4161 = vld [vmem:[%s4160 + $0x6] sm:$0xff]
        %v4162 = vld [vmem:[%s4160 + $0xe] sm:$0xff]
        %v4163 = vld [vmem:[%s4160 + $0x3e] sm:$0xff]
        %v4164 = vld [vmem:[%s4160 + $0x46] sm:$0xff]
        %v4165 = vld [vmem:[%s4160 + $0x76] sm:$0xff]
        %v4166 = vld [vmem:[%s4160 + $0x7e] sm:$0xff]
        %v4167 = vld [vmem:[%s4160 + $0xae] sm:$0xff]
        %v4168 = vld [vmem:[%s4160 + $0xb6] sm:$0xff]
        %v4169 = vld [vmem:[%s4160 + $0xe6] sm:$0xff]
        %v4170 = vld [vmem:[%s4160 + $0xee] sm:$0xff]
        %v4171 = vld [vmem:[%s4160 + $0x11e] sm:$0xff]
        %v4172 = vld [vmem:[%s4160 + $0x126] sm:$0xff]
        %v4173 = vld [vmem:[%s4160 + $0x156] sm:$0xff]
        %v4174 = vld [vmem:[%s4160 + $0x15e] sm:$0xff]
        %v4175 = vld [vmem:[%s4160 + $0x18e] sm:$0xff]
        %v4176 = vld [vmem:[%s4160 + $0x196] sm:$0xff]
        %s4177 = scalar_lea.vmem %s3, 24
        %v4178 = vld [vmem:[%s4177] sm:$0xf]
        %v4180 = vsel %vm320, %v4161, 0
        %v4183 = vsel %vm320, %v4162, 0
        %v4186 = vsel %vm320, %v4163, 0
        %v4189 = vsel %vm320, %v4164, 0
        %v4192 = vsel %vm320, %v4165, 0
        %v4195 = vsel %vm320, %v4166, 0
        %v4198 = vsel %vm320, %v4167, 0
        %v4201 = vsel %vm320, %v4168, 0
        %v4204 = vsel %vm320, %v4169, 0
        %v4207 = vsel %vm320, %v4170, 0
        %v4210 = vsel %vm320, %v4171, 0
        %v4213 = vsel %vm320, %v4172, 0
        %v4216 = vsel %vm320, %v4173, 0
        %v4219 = vsel %vm320, %v4174, 0
        %v4222 = vsel %vm320, %v4175, 0
        %v4225 = vsel %vm320, %v4176, 0
        %v4228 = vsel %vm369, %v4178, 0
        %4230 = vmatprep.subr.mxu0 0.0
        %4231 = vmatpush1.msra.mxu0 %v4228
        %4232 = vmatprep.subr.mxu0 0.0
        %4233 = vmatpush1.msra.mxu0 0.0
        %4234 = vmatprep.subr.mxu0 0.0
        %4235 = vmatpush1.msra.mxu0 0.0
        %4236 = vmatprep.subr.mxu0 0.0
        %4237 = vmatpush1.msra.mxu0 0.0
        %4238 = vmatprep.subr.mxu0 0.0
        %4239 = vmatpush1.msra.mxu0 0.0
        %4240 = vmatprep.subr.mxu0 0.0
        %4241 = vmatpush1.msra.mxu0 0.0
        %4242 = vmatprep.subr.mxu0 0.0
        %4243 = vmatpush1.msra.mxu0 0.0
        %4244 = vmatprep.subr.mxu0 0.0
        %4245 = vmatpush1.msra.mxu0 0.0
        %4246 = vmatprep.subr.mxu0 0.0
        %4247 = vmatpush1.msra.mxu0 0.0
        %4248 = vmatprep.subr.mxu0 0.0
        %4249 = vmatpush1.msra.mxu0 0.0
        %4250 = vmatprep.subr.mxu0 0.0
        %4251 = vmatpush1.msra.mxu0 0.0
        %4252 = vmatprep.subr.mxu0 0.0
        %4253 = vmatpush1.msra.mxu0 0.0
        %4254 = vmatprep.subr.mxu0 0.0
        %4255 = vmatpush1.msra.mxu0 0.0
        %4256 = vmatprep.subr.mxu0 0.0
        %4257 = vmatpush1.msra.mxu0 0.0
        %4258 = vmatprep.subr.mxu0 0.0
        %4259 = vmatpush1.msra.mxu0 0.0
        %4260 = vmatprep.subr.mxu0 0.0
        %4261 = vmatpush1.msra.mxu0 0.0
        %4262 = vmatprep.subr.mxu0 0.0
        %4263 = vmatpush1.msra.mxu0 0.0
        %4264 = vmatprep.subr.mxu0 0.0
        %4265 = vmatpush1.msra.mxu0 0.0
        %4266 = vmatprep.subr.mxu0 0.0
        %4267 = vmatpush1.msra.mxu0 0.0
        %4268 = vmatprep.subr.mxu0 0.0
        %4269 = vmatpush1.msra.mxu0 0.0
        %4270 = vmatprep.subr.mxu0 0.0
        %4271 = vmatpush1.msra.mxu0 0.0
        %4272 = vmatprep.subr.mxu0 0.0
        %4273 = vmatpush1.msra.mxu0 0.0
        %4274 = vmatprep.subr.mxu0 0.0
        %4275 = vmatpush1.msra.mxu0 0.0
        %4276 = vmatprep.subr.mxu0 0.0
        %4277 = vmatpush1.msra.mxu0 0.0
        %4278 = vmatprep.subr.mxu0 0.0
        %4279 = vmatpush1.msra.mxu0 0.0
        %4280 = vmatprep.subr.mxu0 0.0
        %4281 = vmatpush1.msra.mxu0 0.0
        %4282 = vmatprep.subr.mxu0 0.0
        %4283 = vmatpush1.msra.mxu0 0.0
        %4284 = vmatprep.subr.mxu0 0.0
        %4285 = vmatpush1.msra.mxu0 0.0
        %4286 = vmatprep.subr.mxu0 0.0
        %4287 = vmatpush1.msra.mxu0 0.0
        %4288 = vmatprep.subr.mxu0 0.0
        %4289 = vmatpush1.msra.mxu0 0.0
        %4290 = vmatprep.subr.mxu0 0.0
        %4291 = vmatpush1.msra.mxu0 0.0
        %4292 = vmatprep.subr.mxu0 0.0
        %4293 = vmatpush1.msra.mxu0 0.0
        %4294 = vmatprep.mubr.f32.mxu0 0.0
        %4295 = vmatmul.mubr.f32.gmra.mrb[0].mxu0 %v4180
        %v4296 = vpop.f32.mrb[0].mxu0
        %v4297 = vadd.f32 0.0, %v4296
        %v4298 = vpop.f32.mrb[0].mxu0
        %4299 = vmatprep.mubr.f32.mxu0 0.0
        %4300 = vmatmul.mubr.f32.gmra.mrb[0].mxu0 %v4183
        %v4301 = vpop.f32.mrb[0].mxu0
        %v4302 = vadd.f32 0.0, %v4301
        %v4303 = vpop.f32.mrb[0].mxu0
        %4304 = vmatprep.mubr.f32.mxu0 0.0
        %4305 = vmatmul.mubr.f32.gmra.mrb[0].mxu0 %v4186
        %v4306 = vpop.f32.mrb[0].mxu0
        %v4307 = vadd.f32 0.0, %v4306
        %v4308 = vpop.f32.mrb[0].mxu0
        %4309 = vmatprep.mubr.f32.mxu0 0.0
        %4310 = vmatmul.mubr.f32.gmra.mrb[0].mxu0 %v4189
        %v4311 = vpop.f32.mrb[0].mxu0
        %v4312 = vadd.f32 0.0, %v4311
        %v4313 = vpop.f32.mrb[0].mxu0
        %4314 = vmatprep.mubr.f32.mxu0 0.0
        %4315 = vmatmul.mubr.f32.gmra.mrb[0].mxu0 %v4192
        %v4316 = vpop.f32.mrb[0].mxu0
        %v4317 = vadd.f32 0.0, %v4316
        %v4318 = vpop.f32.mrb[0].mxu0
        %4319 = vmatprep.mubr.f32.mxu0 0.0
        %4320 = vmatmul.mubr.f32.gmra.mrb[0].mxu0 %v4195
        %v4321 = vpop.f32.mrb[0].mxu0
        %v4322 = vadd.f32 0.0, %v4321
        %v4323 = vpop.f32.mrb[0].mxu0
        %4324 = vmatprep.mubr.f32.mxu0 0.0
        %4325 = vmatmul.mubr.f32.gmra.mrb[0].mxu0 %v4198
        %v4326 = vpop.f32.mrb[0].mxu0
        %v4327 = vadd.f32 0.0, %v4326
        %v4328 = vpop.f32.mrb[0].mxu0
        %4329 = vmatprep.mubr.f32.mxu0 0.0
        %4330 = vmatmul.mubr.f32.gmra.mrb[0].mxu0 %v4201
        %v4331 = vpop.f32.mrb[0].mxu0
        %v4332 = vadd.f32 0.0, %v4331
        %v4333 = vpop.f32.mrb[0].mxu0
        %4334 = vmatprep.mubr.f32.mxu0 0.0
        %4335 = vmatmul.mubr.f32.gmra.mrb[0].mxu0 %v4204
        %v4336 = vpop.f32.mrb[0].mxu0
        %v4337 = vadd.f32 0.0, %v4336
        %v4338 = vpop.f32.mrb[0].mxu0
        %4339 = vmatprep.mubr.f32.mxu0 0.0
        %4340 = vmatmul.mubr.f32.gmra.mrb[0].mxu0 %v4207
        %v4341 = vpop.f32.mrb[0].mxu0
        %v4342 = vadd.f32 0.0, %v4341
        %v4343 = vpop.f32.mrb[0].mxu0
        %4344 = vmatprep.mubr.f32.mxu0 0.0
        %4345 = vmatmul.mubr.f32.gmra.mrb[0].mxu0 %v4210
        %v4346 = vpop.f32.mrb[0].mxu0
        %v4347 = vadd.f32 0.0, %v4346
        %v4348 = vpop.f32.mrb[0].mxu0
        %4349 = vmatprep.mubr.f32.mxu0 0.0
        %4350 = vmatmul.mubr.f32.gmra.mrb[0].mxu0 %v4213
        %v4351 = vpop.f32.mrb[0].mxu0
        %v4352 = vadd.f32 0.0, %v4351
        %v4353 = vpop.f32.mrb[0].mxu0
        %4354 = vmatprep.mubr.f32.mxu0 0.0
        %4355 = vmatmul.mubr.f32.gmra.mrb[0].mxu0 %v4216
        %v4356 = vpop.f32.mrb[0].mxu0
        %v4357 = vadd.f32 0.0, %v4356
        %v4358 = vpop.f32.mrb[0].mxu0
        %4359 = vmatprep.mubr.f32.mxu0 0.0
        %4360 = vmatmul.mubr.f32.gmra.mrb[0].mxu0 %v4219
        %v4361 = vpop.f32.mrb[0].mxu0
        %v4362 = vadd.f32 0.0, %v4361
        %v4363 = vpop.f32.mrb[0].mxu0
        %4364 = vmatprep.mubr.f32.mxu0 0.0
        %4365 = vmatmul.mubr.f32.gmra.mrb[0].mxu0 %v4222
        %v4366 = vpop.f32.mrb[0].mxu0
        %v4367 = vadd.f32 0.0, %v4366
        %v4368 = vpop.f32.mrb[0].mxu0
        %4369 = vmatprep.mubr.f32.mxu0 0.0
        %4370 = vmatmul.mubr.f32.gmra.mrb[0].mxu0 %v4225
        %v4371 = vpop.f32.mrb[0].mxu0
        %v4372 = vadd.f32 0.0, %v4371
        %v4373 = vpop.f32.mrb[0].mxu0
        %4374 = vdwg.mxu0
        %v4375 = vadd.f32 %v4142, %v4297
        %v4376 = vadd.f32 %v4143, %v4302
        %v4377 = vadd.f32 %v4144, %v4307
        %v4378 = vadd.f32 %v4145, %v4312
        %v4379 = vadd.f32 %v4146, %v4317
        %v4380 = vadd.f32 %v4147, %v4322
        %v4381 = vadd.f32 %v4148, %v4327
        %v4382 = vadd.f32 %v4149, %v4332
        %v4383 = vadd.f32 %v4150, %v4337
        %v4384 = vadd.f32 %v4151, %v4342
        %v4385 = vadd.f32 %v4152, %v4347
        %v4386 = vadd.f32 %v4153, %v4352
        %v4387 = vadd.f32 %v4154, %v4357
        %v4388 = vadd.f32 %v4155, %v4362
        %v4389 = vadd.f32 %v4156, %v4367
        %v4390 = vadd.f32 %v4157, %v4372
        %v4391 = vld [vmem:[%s4160 + $0x12] sm:$0xff]
        %v4392 = vld [vmem:[%s4160 + $0x1a] sm:$0xff]
        %v4393 = vld [vmem:[%s4160 + $0x4a] sm:$0xff]
        %v4394 = vld [vmem:[%s4160 + $0x52] sm:$0xff]
        %v4395 = vld [vmem:[%s4160 + $0x82] sm:$0xff]
        %v4396 = vld [vmem:[%s4160 + $0x8a] sm:$0xff]
        %v4397 = vld [vmem:[%s4160 + $0xba] sm:$0xff]
        %v4398 = vld [vmem:[%s4160 + $0xc2] sm:$0xff]
        %v4399 = vld [vmem:[%s4160 + $0xf2] sm:$0xff]
        %v4400 = vld [vmem:[%s4160 + $0xfa] sm:$0xff]
        %v4401 = vld [vmem:[%s4160 + $0x12a] sm:$0xff]
        %v4402 = vld [vmem:[%s4160 + $0x132] sm:$0xff]
        %v4403 = vld [vmem:[%s4160 + $0x162] sm:$0xff]
        %v4404 = vld [vmem:[%s4160 + $0x16a] sm:$0xff]
        %v4405 = vld [vmem:[%s4160 + $0x19a] sm:$0xff]
        %v4406 = vld [vmem:[%s4160 + $0x1a2] sm:$0xff]
        %s4407 = scalar_lea.vmem %s3, 28
        %v4408 = vld [vmem:[%s4407] sm:$0xf]
        %v4410 = vsel %vm320, %v4391, 0
        %v4413 = vsel %vm320, %v4392, 0
        %v4416 = vsel %vm320, %v4393, 0
        %v4419 = vsel %vm320, %v4394, 0
        %v4422 = vsel %vm320, %v4395, 0
        %v4425 = vsel %vm320, %v4396, 0
        %v4428 = vsel %vm320, %v4397, 0
        %v4431 = vsel %vm320, %v4398, 0
        %v4434 = vsel %vm320, %v4399, 0
        %v4437 = vsel %vm320, %v4400, 0
        %v4440 = vsel %vm320, %v4401, 0
        %v4443 = vsel %vm320, %v4402, 0
        %v4446 = vsel %vm320, %v4403, 0
        %v4449 = vsel %vm320, %v4404, 0
        %v4452 = vsel %vm320, %v4405, 0
        %v4455 = vsel %vm320, %v4406, 0
        %v4458 = vsel %vm369, %v4408, 0
        %4460 = vmatprep.subr.mxu0 0.0
        %4461 = vmatpush1.msra.mxu0 %v4458
        %4462 = vmatprep.subr.mxu0 0.0
        %4463 = vmatpush1.msra.mxu0 0.0
        %4464 = vmatprep.subr.mxu0 0.0
        %4465 = vmatpush1.msra.mxu0 0.0
        %4466 = vmatprep.subr.mxu0 0.0
        %4467 = vmatpush1.msra.mxu0 0.0
        %4468 = vmatprep.subr.mxu0 0.0
        %4469 = vmatpush1.msra.mxu0 0.0
        %4470 = vmatprep.subr.mxu0 0.0
        %4471 = vmatpush1.msra.mxu0 0.0
        %4472 = vmatprep.subr.mxu0 0.0
        %4473 = vmatpush1.msra.mxu0 0.0
        %4474 = vmatprep.subr.mxu0 0.0
        %4475 = vmatpush1.msra.mxu0 0.0
        %4476 = vmatprep.subr.mxu0 0.0
        %4477 = vmatpush1.msra.mxu0 0.0
        %4478 = vmatprep.subr.mxu0 0.0
        %4479 = vmatpush1.msra.mxu0 0.0
        %4480 = vmatprep.subr.mxu0 0.0
        %4481 = vmatpush1.msra.mxu0 0.0
        %4482 = vmatprep.subr.mxu0 0.0
        %4483 = vmatpush1.msra.mxu0 0.0
        %4484 = vmatprep.subr.mxu0 0.0
        %4485 = vmatpush1.msra.mxu0 0.0
        %4486 = vmatprep.subr.mxu0 0.0
        %4487 = vmatpush1.msra.mxu0 0.0
        %4488 = vmatprep.subr.mxu0 0.0
        %4489 = vmatpush1.msra.mxu0 0.0
        %4490 = vmatprep.subr.mxu0 0.0
        %4491 = vmatpush1.msra.mxu0 0.0
        %4492 = vmatprep.subr.mxu0 0.0
        %4493 = vmatpush1.msra.mxu0 0.0
        %4494 = vmatprep.subr.mxu0 0.0
        %4495 = vmatpush1.msra.mxu0 0.0
        %4496 = vmatprep.subr.mxu0 0.0
        %4497 = vmatpush1.msra.mxu0 0.0
        %4498 = vmatprep.subr.mxu0 0.0
        %4499 = vmatpush1.msra.mxu0 0.0
        %4500 = vmatprep.subr.mxu0 0.0
        %4501 = vmatpush1.msra.mxu0 0.0
        %4502 = vmatprep.subr.mxu0 0.0
        %4503 = vmatpush1.msra.mxu0 0.0
        %4504 = vmatprep.subr.mxu0 0.0
        %4505 = vmatpush1.msra.mxu0 0.0
        %4506 = vmatprep.subr.mxu0 0.0
        %4507 = vmatpush1.msra.mxu0 0.0
        %4508 = vmatprep.subr.mxu0 0.0
        %4509 = vmatpush1.msra.mxu0 0.0
        %4510 = vmatprep.subr.mxu0 0.0
        %4511 = vmatpush1.msra.mxu0 0.0
        %4512 = vmatprep.subr.mxu0 0.0
        %4513 = vmatpush1.msra.mxu0 0.0
        %4514 = vmatprep.subr.mxu0 0.0
        %4515 = vmatpush1.msra.mxu0 0.0
        %4516 = vmatprep.subr.mxu0 0.0
        %4517 = vmatpush1.msra.mxu0 0.0
        %4518 = vmatprep.subr.mxu0 0.0
        %4519 = vmatpush1.msra.mxu0 0.0
        %4520 = vmatprep.subr.mxu0 0.0
        %4521 = vmatpush1.msra.mxu0 0.0
        %4522 = vmatprep.subr.mxu0 0.0
        %4523 = vmatpush1.msra.mxu0 0.0
        %4524 = vmatprep.mubr.f32.mxu0 0.0
        %4525 = vmatmul.mubr.f32.gmra.mrb[0].mxu0 %v4410
        %v4526 = vpop.f32.mrb[0].mxu0
        %v4527 = vadd.f32 0.0, %v4526
        %v4528 = vpop.f32.mrb[0].mxu0
        %4529 = vmatprep.mubr.f32.mxu0 0.0
        %4530 = vmatmul.mubr.f32.gmra.mrb[0].mxu0 %v4413
        %v4531 = vpop.f32.mrb[0].mxu0
        %v4532 = vadd.f32 0.0, %v4531
        %v4533 = vpop.f32.mrb[0].mxu0
        %4534 = vmatprep.mubr.f32.mxu0 0.0
        %4535 = vmatmul.mubr.f32.gmra.mrb[0].mxu0 %v4416
        %v4536 = vpop.f32.mrb[0].mxu0
        %v4537 = vadd.f32 0.0, %v4536
        %v4538 = vpop.f32.mrb[0].mxu0
        %4539 = vmatprep.mubr.f32.mxu0 0.0
        %4540 = vmatmul.mubr.f32.gmra.mrb[0].mxu0 %v4419
        %v4541 = vpop.f32.mrb[0].mxu0
        %v4542 = vadd.f32 0.0, %v4541
        %v4543 = vpop.f32.mrb[0].mxu0
        %4544 = vmatprep.mubr.f32.mxu0 0.0
        %4545 = vmatmul.mubr.f32.gmra.mrb[0].mxu0 %v4422
        %v4546 = vpop.f32.mrb[0].mxu0
        %v4547 = vadd.f32 0.0, %v4546
        %v4548 = vpop.f32.mrb[0].mxu0
        %4549 = vmatprep.mubr.f32.mxu0 0.0
        %4550 = vmatmul.mubr.f32.gmra.mrb[0].mxu0 %v4425
        %v4551 = vpop.f32.mrb[0].mxu0
        %v4552 = vadd.f32 0.0, %v4551
        %v4553 = vpop.f32.mrb[0].mxu0
        %4554 = vmatprep.mubr.f32.mxu0 0.0
        %4555 = vmatmul.mubr.f32.gmra.mrb[0].mxu0 %v4428
        %v4556 = vpop.f32.mrb[0].mxu0
        %v4557 = vadd.f32 0.0, %v4556
        %v4558 = vpop.f32.mrb[0].mxu0
        %4559 = vmatprep.mubr.f32.mxu0 0.0
        %4560 = vmatmul.mubr.f32.gmra.mrb[0].mxu0 %v4431
        %v4561 = vpop.f32.mrb[0].mxu0
        %v4562 = vadd.f32 0.0, %v4561
        %v4563 = vpop.f32.mrb[0].mxu0
        %4564 = vmatprep.mubr.f32.mxu0 0.0
        %4565 = vmatmul.mubr.f32.gmra.mrb[0].mxu0 %v4434
        %v4566 = vpop.f32.mrb[0].mxu0
        %v4567 = vadd.f32 0.0, %v4566
        %v4568 = vpop.f32.mrb[0].mxu0
        %4569 = vmatprep.mubr.f32.mxu0 0.0
        %4570 = vmatmul.mubr.f32.gmra.mrb[0].mxu0 %v4437
        %v4571 = vpop.f32.mrb[0].mxu0
        %v4572 = vadd.f32 0.0, %v4571
        %v4573 = vpop.f32.mrb[0].mxu0
        %4574 = vmatprep.mubr.f32.mxu0 0.0
        %4575 = vmatmul.mubr.f32.gmra.mrb[0].mxu0 %v4440
        %v4576 = vpop.f32.mrb[0].mxu0
        %v4577 = vadd.f32 0.0, %v4576
        %v4578 = vpop.f32.mrb[0].mxu0
        %4579 = vmatprep.mubr.f32.mxu0 0.0
        %4580 = vmatmul.mubr.f32.gmra.mrb[0].mxu0 %v4443
        %v4581 = vpop.f32.mrb[0].mxu0
        %v4582 = vadd.f32 0.0, %v4581
        %v4583 = vpop.f32.mrb[0].mxu0
        %4584 = vmatprep.mubr.f32.mxu0 0.0
        %4585 = vmatmul.mubr.f32.gmra.mrb[0].mxu0 %v4446
        %v4586 = vpop.f32.mrb[0].mxu0
        %v4587 = vadd.f32 0.0, %v4586
        %v4588 = vpop.f32.mrb[0].mxu0
        %4589 = vmatprep.mubr.f32.mxu0 0.0
        %4590 = vmatmul.mubr.f32.gmra.mrb[0].mxu0 %v4449
        %v4591 = vpop.f32.mrb[0].mxu0
        %v4592 = vadd.f32 0.0, %v4591
        %v4593 = vpop.f32.mrb[0].mxu0
        %4594 = vmatprep.mubr.f32.mxu0 0.0
        %4595 = vmatmul.mubr.f32.gmra.mrb[0].mxu0 %v4452
        %v4596 = vpop.f32.mrb[0].mxu0
        %v4597 = vadd.f32 0.0, %v4596
        %v4598 = vpop.f32.mrb[0].mxu0
        %4599 = vmatprep.mubr.f32.mxu0 0.0
        %4600 = vmatmul.mubr.f32.gmra.mrb[0].mxu0 %v4455
        %v4601 = vpop.f32.mrb[0].mxu0
        %v4602 = vadd.f32 0.0, %v4601
        %v4603 = vpop.f32.mrb[0].mxu0
        %4604 = vdwg.mxu0
        %v4605 = vadd.f32 %v4375, %v4527
        %v4606 = vadd.f32 %v4376, %v4532
        %v4607 = vadd.f32 %v4377, %v4537
        %v4608 = vadd.f32 %v4378, %v4542
        %v4609 = vadd.f32 %v4379, %v4547
        %v4610 = vadd.f32 %v4380, %v4552
        %v4611 = vadd.f32 %v4381, %v4557
        %v4612 = vadd.f32 %v4382, %v4562
        %v4613 = vadd.f32 %v4383, %v4567
        %v4614 = vadd.f32 %v4384, %v4572
        %v4615 = vadd.f32 %v4385, %v4577
        %v4616 = vadd.f32 %v4386, %v4582
        %v4617 = vadd.f32 %v4387, %v4587
        %v4618 = vadd.f32 %v4388, %v4592
        %v4619 = vadd.f32 %v4389, %v4597
        %v4620 = vadd.f32 %v4390, %v4602
        %v4621 = vld [vmem:[%s4160 + $0x1e] sm:$0xff]
        %v4622 = vld [vmem:[%s4160 + $0x26] sm:$0xff]
        %v4623 = vld [vmem:[%s4160 + $0x56] sm:$0xff]
        %v4624 = vld [vmem:[%s4160 + $0x5e] sm:$0xff]
        %v4625 = vld [vmem:[%s4160 + $0x8e] sm:$0xff]
        %v4626 = vld [vmem:[%s4160 + $0x96] sm:$0xff]
        %v4627 = vld [vmem:[%s4160 + $0xc6] sm:$0xff]
        %v4628 = vld [vmem:[%s4160 + $0xce] sm:$0xff]
        %v4629 = vld [vmem:[%s4160 + $0xfe] sm:$0xff]
        %v4630 = vld [vmem:[%s4160 + $0x106] sm:$0xff]
        %v4631 = vld [vmem:[%s4160 + $0x136] sm:$0xff]
        %v4632 = vld [vmem:[%s4160 + $0x13e] sm:$0xff]
        %v4633 = vld [vmem:[%s4160 + $0x16e] sm:$0xff]
        %v4634 = vld [vmem:[%s4160 + $0x176] sm:$0xff]
        %v4635 = vld [vmem:[%s4160 + $0x1a6] sm:$0xff]
        %v4636 = vld [vmem:[%s4160 + $0x1ae] sm:$0xff]
        %s4637 = scalar_lea.vmem %s3, 32
        %v4638 = vld [vmem:[%s4637] sm:$0xf]
        %v4640 = vsel %vm320, %v4621, 0
        %v4643 = vsel %vm320, %v4622, 0
        %v4646 = vsel %vm320, %v4623, 0
        %v4649 = vsel %vm320, %v4624, 0
        %v4652 = vsel %vm320, %v4625, 0
        %v4655 = vsel %vm320, %v4626, 0
        %v4658 = vsel %vm320, %v4627, 0
        %v4661 = vsel %vm320, %v4628, 0
        %v4664 = vsel %vm320, %v4629, 0
        %v4667 = vsel %vm320, %v4630, 0
        %v4670 = vsel %vm320, %v4631, 0
        %v4673 = vsel %vm320, %v4632, 0
        %v4676 = vsel %vm320, %v4633, 0
        %v4679 = vsel %vm320, %v4634, 0
        %v4682 = vsel %vm320, %v4635, 0
        %v4685 = vsel %vm320, %v4636, 0
        %v4688 = vsel %vm369, %v4638, 0
        %4690 = vmatprep.subr.mxu0 0.0
        %4691 = vmatpush1.msra.mxu0 %v4688
        %4692 = vmatprep.subr.mxu0 0.0
        %4693 = vmatpush1.msra.mxu0 0.0
        %4694 = vmatprep.subr.mxu0 0.0
        %4695 = vmatpush1.msra.mxu0 0.0
        %4696 = vmatprep.subr.mxu0 0.0
        %4697 = vmatpush1.msra.mxu0 0.0
        %4698 = vmatprep.subr.mxu0 0.0
        %4699 = vmatpush1.msra.mxu0 0.0
        %4700 = vmatprep.subr.mxu0 0.0
        %4701 = vmatpush1.msra.mxu0 0.0
        %4702 = vmatprep.subr.mxu0 0.0
        %4703 = vmatpush1.msra.mxu0 0.0
        %4704 = vmatprep.subr.mxu0 0.0
        %4705 = vmatpush1.msra.mxu0 0.0
        %4706 = vmatprep.subr.mxu0 0.0
        %4707 = vmatpush1.msra.mxu0 0.0
        %4708 = vmatprep.subr.mxu0 0.0
        %4709 = vmatpush1.msra.mxu0 0.0
        %4710 = vmatprep.subr.mxu0 0.0
        %4711 = vmatpush1.msra.mxu0 0.0
        %4712 = vmatprep.subr.mxu0 0.0
        %4713 = vmatpush1.msra.mxu0 0.0
        %4714 = vmatprep.subr.mxu0 0.0
        %4715 = vmatpush1.msra.mxu0 0.0
        %4716 = vmatprep.subr.mxu0 0.0
        %4717 = vmatpush1.msra.mxu0 0.0
        %4718 = vmatprep.subr.mxu0 0.0
        %4719 = vmatpush1.msra.mxu0 0.0
        %4720 = vmatprep.subr.mxu0 0.0
        %4721 = vmatpush1.msra.mxu0 0.0
        %4722 = vmatprep.subr.mxu0 0.0
        %4723 = vmatpush1.msra.mxu0 0.0
        %4724 = vmatprep.subr.mxu0 0.0
        %4725 = vmatpush1.msra.mxu0 0.0
        %4726 = vmatprep.subr.mxu0 0.0
        %4727 = vmatpush1.msra.mxu0 0.0
        %4728 = vmatprep.subr.mxu0 0.0
        %4729 = vmatpush1.msra.mxu0 0.0
        %4730 = vmatprep.subr.mxu0 0.0
        %4731 = vmatpush1.msra.mxu0 0.0
        %4732 = vmatprep.subr.mxu0 0.0
        %4733 = vmatpush1.msra.mxu0 0.0
        %4734 = vmatprep.subr.mxu0 0.0
        %4735 = vmatpush1.msra.mxu0 0.0
        %4736 = vmatprep.subr.mxu0 0.0
        %4737 = vmatpush1.msra.mxu0 0.0
        %4738 = vmatprep.subr.mxu0 0.0
        %4739 = vmatpush1.msra.mxu0 0.0
        %4740 = vmatprep.subr.mxu0 0.0
        %4741 = vmatpush1.msra.mxu0 0.0
        %4742 = vmatprep.subr.mxu0 0.0
        %4743 = vmatpush1.msra.mxu0 0.0
        %4744 = vmatprep.subr.mxu0 0.0
        %4745 = vmatpush1.msra.mxu0 0.0
        %4746 = vmatprep.subr.mxu0 0.0
        %4747 = vmatpush1.msra.mxu0 0.0
        %4748 = vmatprep.subr.mxu0 0.0
        %4749 = vmatpush1.msra.mxu0 0.0
        %4750 = vmatprep.subr.mxu0 0.0
        %4751 = vmatpush1.msra.mxu0 0.0
        %4752 = vmatprep.subr.mxu0 0.0
        %4753 = vmatpush1.msra.mxu0 0.0
        %4754 = vmatprep.mubr.f32.mxu0 0.0
        %4755 = vmatmul.mubr.f32.gmra.mrb[0].mxu0 %v4640
        %v4756 = vpop.f32.mrb[0].mxu0
        %v4757 = vadd.f32 0.0, %v4756
        %v4758 = vpop.f32.mrb[0].mxu0
        %4759 = vmatprep.mubr.f32.mxu0 0.0
        %4760 = vmatmul.mubr.f32.gmra.mrb[0].mxu0 %v4643
        %v4761 = vpop.f32.mrb[0].mxu0
        %v4762 = vadd.f32 0.0, %v4761
        %v4763 = vpop.f32.mrb[0].mxu0
        %4764 = vmatprep.mubr.f32.mxu0 0.0
        %4765 = vmatmul.mubr.f32.gmra.mrb[0].mxu0 %v4646
        %v4766 = vpop.f32.mrb[0].mxu0
        %v4767 = vadd.f32 0.0, %v4766
        %v4768 = vpop.f32.mrb[0].mxu0
        %4769 = vmatprep.mubr.f32.mxu0 0.0
        %4770 = vmatmul.mubr.f32.gmra.mrb[0].mxu0 %v4649
        %v4771 = vpop.f32.mrb[0].mxu0
        %v4772 = vadd.f32 0.0, %v4771
        %v4773 = vpop.f32.mrb[0].mxu0
        %4774 = vmatprep.mubr.f32.mxu0 0.0
        %4775 = vmatmul.mubr.f32.gmra.mrb[0].mxu0 %v4652
        %v4776 = vpop.f32.mrb[0].mxu0
        %v4777 = vadd.f32 0.0, %v4776
        %v4778 = vpop.f32.mrb[0].mxu0
        %4779 = vmatprep.mubr.f32.mxu0 0.0
        %4780 = vmatmul.mubr.f32.gmra.mrb[0].mxu0 %v4655
        %v4781 = vpop.f32.mrb[0].mxu0
        %v4782 = vadd.f32 0.0, %v4781
        %v4783 = vpop.f32.mrb[0].mxu0
        %4784 = vmatprep.mubr.f32.mxu0 0.0
        %4785 = vmatmul.mubr.f32.gmra.mrb[0].mxu0 %v4658
        %v4786 = vpop.f32.mrb[0].mxu0
        %v4787 = vadd.f32 0.0, %v4786
        %v4788 = vpop.f32.mrb[0].mxu0
        %4789 = vmatprep.mubr.f32.mxu0 0.0
        %4790 = vmatmul.mubr.f32.gmra.mrb[0].mxu0 %v4661
        %v4791 = vpop.f32.mrb[0].mxu0
        %v4792 = vadd.f32 0.0, %v4791
        %v4793 = vpop.f32.mrb[0].mxu0
        %4794 = vmatprep.mubr.f32.mxu0 0.0
        %4795 = vmatmul.mubr.f32.gmra.mrb[0].mxu0 %v4664
        %v4796 = vpop.f32.mrb[0].mxu0
        %v4797 = vadd.f32 0.0, %v4796
        %v4798 = vpop.f32.mrb[0].mxu0
        %4799 = vmatprep.mubr.f32.mxu0 0.0
        %4800 = vmatmul.mubr.f32.gmra.mrb[0].mxu0 %v4667
        %v4801 = vpop.f32.mrb[0].mxu0
        %v4802 = vadd.f32 0.0, %v4801
        %v4803 = vpop.f32.mrb[0].mxu0
        %4804 = vmatprep.mubr.f32.mxu0 0.0
        %4805 = vmatmul.mubr.f32.gmra.mrb[0].mxu0 %v4670
        %v4806 = vpop.f32.mrb[0].mxu0
        %v4807 = vadd.f32 0.0, %v4806
        %v4808 = vpop.f32.mrb[0].mxu0
        %4809 = vmatprep.mubr.f32.mxu0 0.0
        %4810 = vmatmul.mubr.f32.gmra.mrb[0].mxu0 %v4673
        %v4811 = vpop.f32.mrb[0].mxu0
        %v4812 = vadd.f32 0.0, %v4811
        %v4813 = vpop.f32.mrb[0].mxu0
        %4814 = vmatprep.mubr.f32.mxu0 0.0
        %4815 = vmatmul.mubr.f32.gmra.mrb[0].mxu0 %v4676
        %v4816 = vpop.f32.mrb[0].mxu0
        %v4817 = vadd.f32 0.0, %v4816
        %v4818 = vpop.f32.mrb[0].mxu0
        %4819 = vmatprep.mubr.f32.mxu0 0.0
        %4820 = vmatmul.mubr.f32.gmra.mrb[0].mxu0 %v4679
        %v4821 = vpop.f32.mrb[0].mxu0
        %v4822 = vadd.f32 0.0, %v4821
        %v4823 = vpop.f32.mrb[0].mxu0
        %4824 = vmatprep.mubr.f32.mxu0 0.0
        %4825 = vmatmul.mubr.f32.gmra.mrb[0].mxu0 %v4682
        %v4826 = vpop.f32.mrb[0].mxu0
        %v4827 = vadd.f32 0.0, %v4826
        %v4828 = vpop.f32.mrb[0].mxu0
        %4829 = vmatprep.mubr.f32.mxu0 0.0
        %4830 = vmatmul.mubr.f32.gmra.mrb[0].mxu0 %v4685
        %v4831 = vpop.f32.mrb[0].mxu0
        %v4832 = vadd.f32 0.0, %v4831
        %v4833 = vpop.f32.mrb[0].mxu0
        %4834 = vdwg.mxu0
        %v4835 = vadd.f32 %v4605, %v4757
        %v4836 = vadd.f32 %v4606, %v4762
        %v4837 = vadd.f32 %v4607, %v4767
        %v4838 = vadd.f32 %v4608, %v4772
        %v4839 = vadd.f32 %v4609, %v4777
        %v4840 = vadd.f32 %v4610, %v4782
        %v4841 = vadd.f32 %v4611, %v4787
        %v4842 = vadd.f32 %v4612, %v4792
        %v4843 = vadd.f32 %v4613, %v4797
        %v4844 = vadd.f32 %v4614, %v4802
        %v4845 = vadd.f32 %v4615, %v4807
        %v4846 = vadd.f32 %v4616, %v4812
        %v4847 = vadd.f32 %v4617, %v4817
        %v4848 = vadd.f32 %v4618, %v4822
        %v4849 = vadd.f32 %v4619, %v4827
        %v4850 = vadd.f32 %v4620, %v4832
        %v4851 = vlaneseq
        %v4852 = vshrl.u32 %v4851, 7
        %v4853 = vsub.s32 2, %v4852
        %v4854 = vrot.slane %v295, %v4853
        %v4855 = vadd.f32 %v4835, %v4854
        %v4856 = vadd.f32 %v4836, %v4854
        %v4857 = vadd.f32 %v4837, %v4854
        %v4858 = vadd.f32 %v4838, %v4854
        %v4859 = vadd.f32 %v4839, %v4854
        %v4860 = vadd.f32 %v4840, %v4854
        %v4861 = vadd.f32 %v4841, %v4854
        %v4862 = vadd.f32 %v4842, %v4854
        %v4863 = vadd.f32 %v4843, %v4854
        %v4864 = vadd.f32 %v4844, %v4854
        %v4865 = vadd.f32 %v4845, %v4854
        %v4866 = vadd.f32 %v4846, %v4854
        %v4867 = vadd.f32 %v4847, %v4854
        %v4868 = vadd.f32 %v4848, %v4854
        %v4869 = vadd.f32 %v4849, %v4854
        %v4870 = vadd.f32 %v4850, %v4854
        %s4871 = scalar_lea.vmem %s277, 256 [#allocation2]
        %4872 = vst.msk [vmem:[%s4871] sm:$0xff] %vm518, %v4855
        %4873 = vst.msk [vmem:[%s4871 + $0x8] sm:$0xff] %vm518, %v4856
        %4874 = vst.msk [vmem:[%s4871 + $0x10] sm:$0xff] %vm518, %v4857
        %4875 = vst.msk [vmem:[%s4871 + $0x18] sm:$0xff] %vm518, %v4858
        %4876 = vst.msk [vmem:[%s4871 + $0x20] sm:$0xff] %vm518, %v4859
        %4877 = vst.msk [vmem:[%s4871 + $0x28] sm:$0xff] %vm518, %v4860
        %4878 = vst.msk [vmem:[%s4871 + $0x30] sm:$0xff] %vm518, %v4861
        %4879 = vst.msk [vmem:[%s4871 + $0x38] sm:$0xff] %vm518, %v4862
        %4880 = vst.msk [vmem:[%s4871 + $0x40] sm:$0xff] %vm518, %v4863
        %4881 = vst.msk [vmem:[%s4871 + $0x48] sm:$0xff] %vm518, %v4864
        %4882 = vst.msk [vmem:[%s4871 + $0x50] sm:$0xff] %vm518, %v4865
        %4883 = vst.msk [vmem:[%s4871 + $0x58] sm:$0xff] %vm518, %v4866
        %4884 = vst.msk [vmem:[%s4871 + $0x60] sm:$0xff] %vm518, %v4867
        %4885 = vst.msk [vmem:[%s4871 + $0x68] sm:$0xff] %vm518, %v4868
        %4886 = vst.msk [vmem:[%s4871 + $0x70] sm:$0xff] %vm518, %v4869
        %4887 = vst.msk [vmem:[%s4871 + $0x78] sm:$0xff] %vm518, %v4870
        %v4888 = vld [vmem:[%s7 + $0x2] sm:$0x1]
        %v4889 = vsel %vm518, %v4855, 0.0
        %v4890 = vsel %vm518, %v4856, 0.0
        %v4891 = vadd.f32 %v4889, %v4890
        %v4892 = vsel %vm518, %v4857, 0.0
        %v4893 = vadd.f32 %v4891, %v4892
        %v4894 = vsel %vm518, %v4858, 0.0
        %v4895 = vadd.f32 %v4893, %v4894
        %v4896 = vsel %vm518, %v4859, 0.0
        %v4897 = vadd.f32 %v4895, %v4896
        %v4898 = vsel %vm518, %v4860, 0.0
        %v4899 = vadd.f32 %v4897, %v4898
        %v4900 = vsel %vm518, %v4861, 0.0
        %v4901 = vadd.f32 %v4899, %v4900
        %v4902 = vsel %vm518, %v4862, 0.0
        %v4903 = vadd.f32 %v4901, %v4902
        %v4904 = vsel %vm518, %v4863, 0.0
        %v4905 = vadd.f32 %v4903, %v4904
        %v4906 = vsel %vm518, %v4864, 0.0
        %v4907 = vadd.f32 %v4905, %v4906
        %v4908 = vsel %vm518, %v4865, 0.0
        %v4909 = vadd.f32 %v4907, %v4908
        %v4910 = vsel %vm518, %v4866, 0.0
        %v4911 = vadd.f32 %v4909, %v4910
        %v4912 = vsel %vm518, %v4867, 0.0
        %v4913 = vadd.f32 %v4911, %v4912
        %v4914 = vsel %vm518, %v4868, 0.0
        %v4915 = vadd.f32 %v4913, %v4914
        %v4916 = vsel %vm518, %v4869, 0.0
        %v4917 = vadd.f32 %v4915, %v4916
        %v4918 = vsel %vm518, %v4870, 0.0
        %v4919 = vadd.f32 %v4917, %v4918
        %v4920 = vrot.slane %v4919, 4
        %v4921 = vadd.f32 %v4919, %v4920
        %v4922 = vrot.slane %v4921, 2
        %v4923 = vadd.f32 %v4921, %v4922
        %v4924 = vrot.slane %v4923, 1
        %v4925 = vadd.f32 %v4923, %v4924
        %v4926 = vadd.f32 %v4888, %v4925
        %4927 = vst.msk [vmem:[%s7 + $0x2] sm:$0x1] %vm574, %v4926
        %v4928 = vld [vmem:[%s7 + $0x6] sm:$0x1]
        %v4929 = vmul.f32 %v4855, %v4855
        %v4930 = vmul.f32 %v4856, %v4856
        %v4931 = vmul.f32 %v4857, %v4857
        %v4932 = vmul.f32 %v4858, %v4858
        %v4933 = vmul.f32 %v4859, %v4859
        %v4934 = vmul.f32 %v4860, %v4860
        %v4935 = vmul.f32 %v4861, %v4861
        %v4936 = vmul.f32 %v4862, %v4862
        %v4937 = vmul.f32 %v4863, %v4863
        %v4938 = vmul.f32 %v4864, %v4864
        %v4939 = vmul.f32 %v4865, %v4865
        %v4940 = vmul.f32 %v4866, %v4866
        %v4941 = vmul.f32 %v4867, %v4867
        %v4942 = vmul.f32 %v4868, %v4868
        %v4943 = vmul.f32 %v4869, %v4869
        %v4944 = vmul.f32 %v4870, %v4870
        %v4945 = vsel %vm518, %v4929, 0.0
        %v4946 = vsel %vm518, %v4930, 0.0
        %v4947 = vadd.f32 %v4945, %v4946
        %v4948 = vsel %vm518, %v4931, 0.0
        %v4949 = vadd.f32 %v4947, %v4948
        %v4950 = vsel %vm518, %v4932, 0.0
        %v4951 = vadd.f32 %v4949, %v4950
        %v4952 = vsel %vm518, %v4933, 0.0
        %v4953 = vadd.f32 %v4951, %v4952
        %v4954 = vsel %vm518, %v4934, 0.0
        %v4955 = vadd.f32 %v4953, %v4954
        %v4956 = vsel %vm518, %v4935, 0.0
        %v4957 = vadd.f32 %v4955, %v4956
        %v4958 = vsel %vm518, %v4936, 0.0
        %v4959 = vadd.f32 %v4957, %v4958
        %v4960 = vsel %vm518, %v4937, 0.0
        %v4961 = vadd.f32 %v4959, %v4960
        %v4962 = vsel %vm518, %v4938, 0.0
        %v4963 = vadd.f32 %v4961, %v4962
        %v4964 = vsel %vm518, %v4939, 0.0
        %v4965 = vadd.f32 %v4963, %v4964
        %v4966 = vsel %vm518, %v4940, 0.0
        %v4967 = vadd.f32 %v4965, %v4966
        %v4968 = vsel %vm518, %v4941, 0.0
        %v4969 = vadd.f32 %v4967, %v4968
        %v4970 = vsel %vm518, %v4942, 0.0
        %v4971 = vadd.f32 %v4969, %v4970
        %v4972 = vsel %vm518, %v4943, 0.0
        %v4973 = vadd.f32 %v4971, %v4972
        %v4974 = vsel %vm518, %v4944, 0.0
        %v4975 = vadd.f32 %v4973, %v4974
        %v4976 = vrot.slane %v4975, 4
        %v4977 = vadd.f32 %v4975, %v4976
        %v4978 = vrot.slane %v4977, 2
        %v4979 = vadd.f32 %v4977, %v4978
        %v4980 = vrot.slane %v4979, 1
        %v4981 = vadd.f32 %v4979, %v4980
        %v4982 = vadd.f32 %v4928, %v4981
        %4983 = vst.msk [vmem:[%s7 + $0x6] sm:$0x1] %vm574, %v4982
        %s4984 = smul.u32 %s294, 56
        %s4985 = scalar_lea.vmem %s284, %s4984
        %v4986 = vld [vmem:[%s4985] sm:$0xff]
        %v4987 = vld [vmem:[%s4985 + $0x8] sm:$0xff]
        %v4988 = vld [vmem:[%s4985 + $0x38] sm:$0xff]
        %v4989 = vld [vmem:[%s4985 + $0x40] sm:$0xff]
        %v4990 = vld [vmem:[%s4985 + $0x70] sm:$0xff]
        %v4991 = vld [vmem:[%s4985 + $0x78] sm:$0xff]
        %v4992 = vld [vmem:[%s4985 + $0xa8] sm:$0xff]
        %v4993 = vld [vmem:[%s4985 + $0xb0] sm:$0xff]
        %v4994 = vld [vmem:[%s4985 + $0xe0] sm:$0xff]
        %v4995 = vld [vmem:[%s4985 + $0xe8] sm:$0xff]
        %v4996 = vld [vmem:[%s4985 + $0x118] sm:$0xff]
        %v4997 = vld [vmem:[%s4985 + $0x120] sm:$0xff]
        %v4998 = vld [vmem:[%s4985 + $0x150] sm:$0xff]
        %v4999 = vld [vmem:[%s4985 + $0x158] sm:$0xff]
        %v5000 = vld [vmem:[%s4985 + $0x188] sm:$0xff]
        %v5001 = vld [vmem:[%s4985 + $0x190] sm:$0xff]
        %v5002 = vld [vmem:[%s4] sm:$0xf]
        %v5003 = vld [vmem:[%s4985 + $0x12] sm:$0xff]
        %v5004 = vld [vmem:[%s4985 + $0x1a] sm:$0xff]
        %v5005 = vld [vmem:[%s4985 + $0x4a] sm:$0xff]
        %v5006 = vld [vmem:[%s4985 + $0x52] sm:$0xff]
        %v5007 = vld [vmem:[%s4985 + $0x82] sm:$0xff]
        %v5008 = vld [vmem:[%s4985 + $0x8a] sm:$0xff]
        %v5009 = vld [vmem:[%s4985 + $0xba] sm:$0xff]
        %v5010 = vld [vmem:[%s4985 + $0xc2] sm:$0xff]
        %v5011 = vld [vmem:[%s4985 + $0xf2] sm:$0xff]
        %v5012 = vld [vmem:[%s4985 + $0xfa] sm:$0xff]
        %v5013 = vld [vmem:[%s4985 + $0x12a] sm:$0xff]
        %v5014 = vld [vmem:[%s4985 + $0x132] sm:$0xff]
        %v5015 = vld [vmem:[%s4985 + $0x162] sm:$0xff]
        %v5016 = vld [vmem:[%s4985 + $0x16a] sm:$0xff]
        %v5017 = vld [vmem:[%s4985 + $0x19a] sm:$0xff]
        %v5018 = vld [vmem:[%s4985 + $0x1a2] sm:$0xff]
        %s5019 = scalar_lea.vmem %s4, 4
        %v5020 = vld [vmem:[%s5019] sm:$0xf]
        %v5022 = vsel %vm320, %v5003, 0
        %v5025 = vsel %vm320, %v5004, 0
        %v5028 = vsel %vm320, %v5005, 0
        %v5031 = vsel %vm320, %v5006, 0
        %v5034 = vsel %vm320, %v5007, 0
        %v5037 = vsel %vm320, %v5008, 0
        %v5040 = vsel %vm320, %v5009, 0
        %v5043 = vsel %vm320, %v5010, 0
        %v5046 = vsel %vm320, %v5011, 0
        %v5049 = vsel %vm320, %v5012, 0
        %v5052 = vsel %vm320, %v5013, 0
        %v5055 = vsel %vm320, %v5014, 0
        %v5058 = vsel %vm320, %v5015, 0
        %v5061 = vsel %vm320, %v5016, 0
        %v5064 = vsel %vm320, %v5017, 0
        %v5067 = vsel %vm320, %v5018, 0
        %v5070 = vsel %vm369, %v5020, 0
        %5072 = vmatprep.subr.mxu0 0.0
        %5073 = vmatpush1.msra.mxu0 %v5070
        %5074 = vmatprep.subr.mxu0 0.0
        %5075 = vmatpush1.msra.mxu0 0.0
        %5076 = vmatprep.subr.mxu0 0.0
        %5077 = vmatpush1.msra.mxu0 0.0
        %5078 = vmatprep.subr.mxu0 0.0
        %5079 = vmatpush1.msra.mxu0 0.0
        %5080 = vmatprep.subr.mxu0 0.0
        %5081 = vmatpush1.msra.mxu0 0.0
        %5082 = vmatprep.subr.mxu0 0.0
        %5083 = vmatpush1.msra.mxu0 0.0
        %5084 = vmatprep.subr.mxu0 0.0
        %5085 = vmatpush1.msra.mxu0 0.0
        %5086 = vmatprep.subr.mxu0 0.0
        %5087 = vmatpush1.msra.mxu0 0.0
        %5088 = vmatprep.subr.mxu0 0.0
        %5089 = vmatpush1.msra.mxu0 0.0
        %5090 = vmatprep.subr.mxu0 0.0
        %5091 = vmatpush1.msra.mxu0 0.0
        %5092 = vmatprep.subr.mxu0 0.0
        %5093 = vmatpush1.msra.mxu0 0.0
        %5094 = vmatprep.subr.mxu0 0.0
        %5095 = vmatpush1.msra.mxu0 0.0
        %5096 = vmatprep.subr.mxu0 0.0
        %5097 = vmatpush1.msra.mxu0 0.0
        %5098 = vmatprep.subr.mxu0 0.0
        %5099 = vmatpush1.msra.mxu0 0.0
        %5100 = vmatprep.subr.mxu0 0.0
        %5101 = vmatpush1.msra.mxu0 0.0
        %5102 = vmatprep.subr.mxu0 0.0
        %5103 = vmatpush1.msra.mxu0 0.0
        %5104 = vmatprep.subr.mxu0 0.0
        %5105 = vmatpush1.msra.mxu0 0.0
        %5106 = vmatprep.subr.mxu0 0.0
        %5107 = vmatpush1.msra.mxu0 0.0
        %5108 = vmatprep.subr.mxu0 0.0
        %5109 = vmatpush1.msra.mxu0 0.0
        %5110 = vmatprep.subr.mxu0 0.0
        %5111 = vmatpush1.msra.mxu0 0.0
        %5112 = vmatprep.subr.mxu0 0.0
        %5113 = vmatpush1.msra.mxu0 0.0
        %5114 = vmatprep.subr.mxu0 0.0
        %5115 = vmatpush1.msra.mxu0 0.0
        %5116 = vmatprep.subr.mxu0 0.0
        %5117 = vmatpush1.msra.mxu0 0.0
        %5118 = vmatprep.subr.mxu0 0.0
        %5119 = vmatpush1.msra.mxu0 0.0
        %5120 = vmatprep.subr.mxu0 0.0
        %5121 = vmatpush1.msra.mxu0 0.0
        %5122 = vmatprep.subr.mxu0 0.0
        %5123 = vmatpush1.msra.mxu0 0.0
        %5124 = vmatprep.subr.mxu0 0.0
        %5125 = vmatpush1.msra.mxu0 0.0
        %5126 = vmatprep.subr.mxu0 0.0
        %5127 = vmatpush1.msra.mxu0 0.0
        %5128 = vmatprep.subr.mxu0 0.0
        %5129 = vmatpush1.msra.mxu0 0.0
        %5130 = vmatprep.subr.mxu0 0.0
        %5131 = vmatpush1.msra.mxu0 0.0
        %5132 = vmatprep.subr.mxu0 0.0
        %5133 = vmatpush1.msra.mxu0 0.0
        %5134 = vmatprep.subr.mxu0 0.0
        %5135 = vmatpush1.msra.mxu0 0.0
        %5136 = vmatprep.mubr.f32.mxu0 0.0
        %5137 = vmatmul.mubr.f32.gmra.mrb[0].mxu0 %v5022
        %v5138 = vpop.f32.mrb[0].mxu0
        %v5139 = vadd.f32 0.0, %v5138
        %v5140 = vpop.f32.mrb[0].mxu0
        %5141 = vmatprep.mubr.f32.mxu0 0.0
        %5142 = vmatmul.mubr.f32.gmra.mrb[0].mxu0 %v5025
        %v5143 = vpop.f32.mrb[0].mxu0
        %v5144 = vadd.f32 0.0, %v5143
        %v5145 = vpop.f32.mrb[0].mxu0
        %5146 = vmatprep.mubr.f32.mxu0 0.0
        %5147 = vmatmul.mubr.f32.gmra.mrb[0].mxu0 %v5028
        %v5148 = vpop.f32.mrb[0].mxu0
        %v5149 = vadd.f32 0.0, %v5148
        %v5150 = vpop.f32.mrb[0].mxu0
        %5151 = vmatprep.mubr.f32.mxu0 0.0
        %5152 = vmatmul.mubr.f32.gmra.mrb[0].mxu0 %v5031
        %v5153 = vpop.f32.mrb[0].mxu0
        %v5154 = vadd.f32 0.0, %v5153
        %v5155 = vpop.f32.mrb[0].mxu0
        %5156 = vmatprep.mubr.f32.mxu0 0.0
        %5157 = vmatmul.mubr.f32.gmra.mrb[0].mxu0 %v5034
        %v5158 = vpop.f32.mrb[0].mxu0
        %v5159 = vadd.f32 0.0, %v5158
        %v5160 = vpop.f32.mrb[0].mxu0
        %5161 = vmatprep.mubr.f32.mxu0 0.0
        %5162 = vmatmul.mubr.f32.gmra.mrb[0].mxu0 %v5037
        %v5163 = vpop.f32.mrb[0].mxu0
        %v5164 = vadd.f32 0.0, %v5163
        %v5165 = vpop.f32.mrb[0].mxu0
        %5166 = vmatprep.mubr.f32.mxu0 0.0
        %5167 = vmatmul.mubr.f32.gmra.mrb[0].mxu0 %v5040
        %v5168 = vpop.f32.mrb[0].mxu0
        %v5169 = vadd.f32 0.0, %v5168
        %v5170 = vpop.f32.mrb[0].mxu0
        %5171 = vmatprep.mubr.f32.mxu0 0.0
        %5172 = vmatmul.mubr.f32.gmra.mrb[0].mxu0 %v5043
        %v5173 = vpop.f32.mrb[0].mxu0
        %v5174 = vadd.f32 0.0, %v5173
        %v5175 = vpop.f32.mrb[0].mxu0
        %5176 = vmatprep.mubr.f32.mxu0 0.0
        %5177 = vmatmul.mubr.f32.gmra.mrb[0].mxu0 %v5046
        %v5178 = vpop.f32.mrb[0].mxu0
        %v5179 = vadd.f32 0.0, %v5178
        %v5180 = vpop.f32.mrb[0].mxu0
        %5181 = vmatprep.mubr.f32.mxu0 0.0
        %5182 = vmatmul.mubr.f32.gmra.mrb[0].mxu0 %v5049
        %v5183 = vpop.f32.mrb[0].mxu0
        %v5184 = vadd.f32 0.0, %v5183
        %v5185 = vpop.f32.mrb[0].mxu0
        %5186 = vmatprep.mubr.f32.mxu0 0.0
        %5187 = vmatmul.mubr.f32.gmra.mrb[0].mxu0 %v5052
        %v5188 = vpop.f32.mrb[0].mxu0
        %v5189 = vadd.f32 0.0, %v5188
        %v5190 = vpop.f32.mrb[0].mxu0
        %5191 = vmatprep.mubr.f32.mxu0 0.0
        %5192 = vmatmul.mubr.f32.gmra.mrb[0].mxu0 %v5055
        %v5193 = vpop.f32.mrb[0].mxu0
        %v5194 = vadd.f32 0.0, %v5193
        %v5195 = vpop.f32.mrb[0].mxu0
        %5196 = vmatprep.mubr.f32.mxu0 0.0
        %5197 = vmatmul.mubr.f32.gmra.mrb[0].mxu0 %v5058
        %v5198 = vpop.f32.mrb[0].mxu0
        %v5199 = vadd.f32 0.0, %v5198
        %v5200 = vpop.f32.mrb[0].mxu0
        %5201 = vmatprep.mubr.f32.mxu0 0.0
        %5202 = vmatmul.mubr.f32.gmra.mrb[0].mxu0 %v5061
        %v5203 = vpop.f32.mrb[0].mxu0
        %v5204 = vadd.f32 0.0, %v5203
        %v5205 = vpop.f32.mrb[0].mxu0
        %5206 = vmatprep.mubr.f32.mxu0 0.0
        %5207 = vmatmul.mubr.f32.gmra.mrb[0].mxu0 %v5064
        %v5208 = vpop.f32.mrb[0].mxu0
        %v5209 = vadd.f32 0.0, %v5208
        %v5210 = vpop.f32.mrb[0].mxu0
        %5211 = vmatprep.mubr.f32.mxu0 0.0
        %5212 = vmatmul.mubr.f32.gmra.mrb[0].mxu0 %v5067
        %v5213 = vpop.f32.mrb[0].mxu0
        %v5214 = vadd.f32 0.0, %v5213
        %v5215 = vpop.f32.mrb[0].mxu0
        %5216 = vdwg.mxu0
        %v5218 = vsel %vm320, %v4986, 0
        %v5221 = vsel %vm320, %v4987, 0
        %v5224 = vsel %vm320, %v4988, 0
        %v5227 = vsel %vm320, %v4989, 0
        %v5230 = vsel %vm320, %v4990, 0
        %v5233 = vsel %vm320, %v4991, 0
        %v5236 = vsel %vm320, %v4992, 0
        %v5239 = vsel %vm320, %v4993, 0
        %v5242 = vsel %vm320, %v4994, 0
        %v5245 = vsel %vm320, %v4995, 0
        %v5248 = vsel %vm320, %v4996, 0
        %v5251 = vsel %vm320, %v4997, 0
        %v5254 = vsel %vm320, %v4998, 0
        %v5257 = vsel %vm320, %v4999, 0
        %v5260 = vsel %vm320, %v5000, 0
        %v5263 = vsel %vm320, %v5001, 0
        %v5266 = vsel %vm369, %v5002, 0
        %5268 = vmatprep.subr.mxu0 0.0
        %5269 = vmatpush1.msra.mxu0 %v5266
        %5270 = vmatprep.subr.mxu0 0.0
        %5271 = vmatpush1.msra.mxu0 0.0
        %5272 = vmatprep.subr.mxu0 0.0
        %5273 = vmatpush1.msra.mxu0 0.0
        %5274 = vmatprep.subr.mxu0 0.0
        %5275 = vmatpush1.msra.mxu0 0.0
        %5276 = vmatprep.subr.mxu0 0.0
        %5277 = vmatpush1.msra.mxu0 0.0
        %5278 = vmatprep.subr.mxu0 0.0
        %5279 = vmatpush1.msra.mxu0 0.0
        %5280 = vmatprep.subr.mxu0 0.0
        %5281 = vmatpush1.msra.mxu0 0.0
        %5282 = vmatprep.subr.mxu0 0.0
        %5283 = vmatpush1.msra.mxu0 0.0
        %5284 = vmatprep.subr.mxu0 0.0
        %5285 = vmatpush1.msra.mxu0 0.0
        %5286 = vmatprep.subr.mxu0 0.0
        %5287 = vmatpush1.msra.mxu0 0.0
        %5288 = vmatprep.subr.mxu0 0.0
        %5289 = vmatpush1.msra.mxu0 0.0
        %5290 = vmatprep.subr.mxu0 0.0
        %5291 = vmatpush1.msra.mxu0 0.0
        %5292 = vmatprep.subr.mxu0 0.0
        %5293 = vmatpush1.msra.mxu0 0.0
        %5294 = vmatprep.subr.mxu0 0.0
        %5295 = vmatpush1.msra.mxu0 0.0
        %5296 = vmatprep.subr.mxu0 0.0
        %5297 = vmatpush1.msra.mxu0 0.0
        %5298 = vmatprep.subr.mxu0 0.0
        %5299 = vmatpush1.msra.mxu0 0.0
        %5300 = vmatprep.subr.mxu0 0.0
        %5301 = vmatpush1.msra.mxu0 0.0
        %5302 = vmatprep.subr.mxu0 0.0
        %5303 = vmatpush1.msra.mxu0 0.0
        %5304 = vmatprep.subr.mxu0 0.0
        %5305 = vmatpush1.msra.mxu0 0.0
        %5306 = vmatprep.subr.mxu0 0.0
        %5307 = vmatpush1.msra.mxu0 0.0
        %5308 = vmatprep.subr.mxu0 0.0
        %5309 = vmatpush1.msra.mxu0 0.0
        %5310 = vmatprep.subr.mxu0 0.0
        %5311 = vmatpush1.msra.mxu0 0.0
        %5312 = vmatprep.subr.mxu0 0.0
        %5313 = vmatpush1.msra.mxu0 0.0
        %5314 = vmatprep.subr.mxu0 0.0
        %5315 = vmatpush1.msra.mxu0 0.0
        %5316 = vmatprep.subr.mxu0 0.0
        %5317 = vmatpush1.msra.mxu0 0.0
        %5318 = vmatprep.subr.mxu0 0.0
        %5319 = vmatpush1.msra.mxu0 0.0
        %5320 = vmatprep.subr.mxu0 0.0
        %5321 = vmatpush1.msra.mxu0 0.0
        %5322 = vmatprep.subr.mxu0 0.0
        %5323 = vmatpush1.msra.mxu0 0.0
        %5324 = vmatprep.subr.mxu0 0.0
        %5325 = vmatpush1.msra.mxu0 0.0
        %5326 = vmatprep.subr.mxu0 0.0
        %5327 = vmatpush1.msra.mxu0 0.0
        %5328 = vmatprep.subr.mxu0 0.0
        %5329 = vmatpush1.msra.mxu0 0.0
        %5330 = vmatprep.subr.mxu0 0.0
        %5331 = vmatpush1.msra.mxu0 0.0
        %5332 = vmatprep.mubr.f32.mxu0 0.0
        %5333 = vmatmul.mubr.f32.gmra.mrb[0].mxu0 %v5218
        %v5334 = vpop.f32.mrb[0].mxu0
        %v5335 = vadd.f32 %v5139, %v5334
        %v5336 = vpop.f32.mrb[0].mxu0
        %5337 = vmatprep.mubr.f32.mxu0 0.0
        %5338 = vmatmul.mubr.f32.gmra.mrb[0].mxu0 %v5221
        %v5339 = vpop.f32.mrb[0].mxu0
        %v5340 = vadd.f32 %v5144, %v5339
        %v5341 = vpop.f32.mrb[0].mxu0
        %5342 = vmatprep.mubr.f32.mxu0 0.0
        %5343 = vmatmul.mubr.f32.gmra.mrb[0].mxu0 %v5224
        %v5344 = vpop.f32.mrb[0].mxu0
        %v5345 = vadd.f32 %v5149, %v5344
        %v5346 = vpop.f32.mrb[0].mxu0
        %5347 = vmatprep.mubr.f32.mxu0 0.0
        %5348 = vmatmul.mubr.f32.gmra.mrb[0].mxu0 %v5227
        %v5349 = vpop.f32.mrb[0].mxu0
        %v5350 = vadd.f32 %v5154, %v5349
        %v5351 = vpop.f32.mrb[0].mxu0
        %5352 = vmatprep.mubr.f32.mxu0 0.0
        %5353 = vmatmul.mubr.f32.gmra.mrb[0].mxu0 %v5230
        %v5354 = vpop.f32.mrb[0].mxu0
        %v5355 = vadd.f32 %v5159, %v5354
        %v5356 = vpop.f32.mrb[0].mxu0
        %5357 = vmatprep.mubr.f32.mxu0 0.0
        %5358 = vmatmul.mubr.f32.gmra.mrb[0].mxu0 %v5233
        %v5359 = vpop.f32.mrb[0].mxu0
        %v5360 = vadd.f32 %v5164, %v5359
        %v5361 = vpop.f32.mrb[0].mxu0
        %5362 = vmatprep.mubr.f32.mxu0 0.0
        %5363 = vmatmul.mubr.f32.gmra.mrb[0].mxu0 %v5236
        %v5364 = vpop.f32.mrb[0].mxu0
        %v5365 = vadd.f32 %v5169, %v5364
        %v5366 = vpop.f32.mrb[0].mxu0
        %5367 = vmatprep.mubr.f32.mxu0 0.0
        %5368 = vmatmul.mubr.f32.gmra.mrb[0].mxu0 %v5239
        %v5369 = vpop.f32.mrb[0].mxu0
        %v5370 = vadd.f32 %v5174, %v5369
        %v5371 = vpop.f32.mrb[0].mxu0
        %5372 = vmatprep.mubr.f32.mxu0 0.0
        %5373 = vmatmul.mubr.f32.gmra.mrb[0].mxu0 %v5242
        %v5374 = vpop.f32.mrb[0].mxu0
        %v5375 = vadd.f32 %v5179, %v5374
        %v5376 = vpop.f32.mrb[0].mxu0
        %5377 = vmatprep.mubr.f32.mxu0 0.0
        %5378 = vmatmul.mubr.f32.gmra.mrb[0].mxu0 %v5245
        %v5379 = vpop.f32.mrb[0].mxu0
        %v5380 = vadd.f32 %v5184, %v5379
        %v5381 = vpop.f32.mrb[0].mxu0
        %5382 = vmatprep.mubr.f32.mxu0 0.0
        %5383 = vmatmul.mubr.f32.gmra.mrb[0].mxu0 %v5248
        %v5384 = vpop.f32.mrb[0].mxu0
        %v5385 = vadd.f32 %v5189, %v5384
        %v5386 = vpop.f32.mrb[0].mxu0
        %5387 = vmatprep.mubr.f32.mxu0 0.0
        %5388 = vmatmul.mubr.f32.gmra.mrb[0].mxu0 %v5251
        %v5389 = vpop.f32.mrb[0].mxu0
        %v5390 = vadd.f32 %v5194, %v5389
        %v5391 = vpop.f32.mrb[0].mxu0
        %5392 = vmatprep.mubr.f32.mxu0 0.0
        %5393 = vmatmul.mubr.f32.gmra.mrb[0].mxu0 %v5254
        %v5394 = vpop.f32.mrb[0].mxu0
        %v5395 = vadd.f32 %v5199, %v5394
        %v5396 = vpop.f32.mrb[0].mxu0
        %5397 = vmatprep.mubr.f32.mxu0 0.0
        %5398 = vmatmul.mubr.f32.gmra.mrb[0].mxu0 %v5257
        %v5399 = vpop.f32.mrb[0].mxu0
        %v5400 = vadd.f32 %v5204, %v5399
        %v5401 = vpop.f32.mrb[0].mxu0
        %5402 = vmatprep.mubr.f32.mxu0 0.0
        %5403 = vmatmul.mubr.f32.gmra.mrb[0].mxu0 %v5260
        %v5404 = vpop.f32.mrb[0].mxu0
        %v5405 = vadd.f32 %v5209, %v5404
        %v5406 = vpop.f32.mrb[0].mxu0
        %5407 = vmatprep.mubr.f32.mxu0 0.0
        %5408 = vmatmul.mubr.f32.gmra.mrb[0].mxu0 %v5263
        %v5409 = vpop.f32.mrb[0].mxu0
        %v5410 = vadd.f32 %v5214, %v5409
        %v5411 = vpop.f32.mrb[0].mxu0
        %5412 = vdwg.mxu0
        %v5413 = vld [vmem:[%s4985 + $0x24] sm:$0xff]
        %v5414 = vld [vmem:[%s4985 + $0x2c] sm:$0xff]
        %v5415 = vld [vmem:[%s4985 + $0x5c] sm:$0xff]
        %v5416 = vld [vmem:[%s4985 + $0x64] sm:$0xff]
        %v5417 = vld [vmem:[%s4985 + $0x94] sm:$0xff]
        %v5418 = vld [vmem:[%s4985 + $0x9c] sm:$0xff]
        %v5419 = vld [vmem:[%s4985 + $0xcc] sm:$0xff]
        %v5420 = vld [vmem:[%s4985 + $0xd4] sm:$0xff]
        %v5421 = vld [vmem:[%s4985 + $0x104] sm:$0xff]
        %v5422 = vld [vmem:[%s4985 + $0x10c] sm:$0xff]
        %v5423 = vld [vmem:[%s4985 + $0x13c] sm:$0xff]
        %v5424 = vld [vmem:[%s4985 + $0x144] sm:$0xff]
        %v5425 = vld [vmem:[%s4985 + $0x174] sm:$0xff]
        %v5426 = vld [vmem:[%s4985 + $0x17c] sm:$0xff]
        %v5427 = vld [vmem:[%s4985 + $0x1ac] sm:$0xff]
        %v5428 = vld [vmem:[%s4985 + $0x1b4] sm:$0xff]
        %s5429 = scalar_lea.vmem %s4, 8
        %v5430 = vld [vmem:[%s5429] sm:$0xf]
        %v5432 = vsel %vm320, %v5413, 0
        %v5435 = vsel %vm320, %v5414, 0
        %v5438 = vsel %vm320, %v5415, 0
        %v5441 = vsel %vm320, %v5416, 0
        %v5444 = vsel %vm320, %v5417, 0
        %v5447 = vsel %vm320, %v5418, 0
        %v5450 = vsel %vm320, %v5419, 0
        %v5453 = vsel %vm320, %v5420, 0
        %v5456 = vsel %vm320, %v5421, 0
        %v5459 = vsel %vm320, %v5422, 0
        %v5462 = vsel %vm320, %v5423, 0
        %v5465 = vsel %vm320, %v5424, 0
        %v5468 = vsel %vm320, %v5425, 0
        %v5471 = vsel %vm320, %v5426, 0
        %v5474 = vsel %vm320, %v5427, 0
        %v5477 = vsel %vm320, %v5428, 0
        %v5480 = vsel %vm369, %v5430, 0
        %5482 = vmatprep.subr.mxu0 0.0
        %5483 = vmatpush1.msra.mxu0 %v5480
        %5484 = vmatprep.subr.mxu0 0.0
        %5485 = vmatpush1.msra.mxu0 0.0
        %5486 = vmatprep.subr.mxu0 0.0
        %5487 = vmatpush1.msra.mxu0 0.0
        %5488 = vmatprep.subr.mxu0 0.0
        %5489 = vmatpush1.msra.mxu0 0.0
        %5490 = vmatprep.subr.mxu0 0.0
        %5491 = vmatpush1.msra.mxu0 0.0
        %5492 = vmatprep.subr.mxu0 0.0
        %5493 = vmatpush1.msra.mxu0 0.0
        %5494 = vmatprep.subr.mxu0 0.0
        %5495 = vmatpush1.msra.mxu0 0.0
        %5496 = vmatprep.subr.mxu0 0.0
        %5497 = vmatpush1.msra.mxu0 0.0
        %5498 = vmatprep.subr.mxu0 0.0
        %5499 = vmatpush1.msra.mxu0 0.0
        %5500 = vmatprep.subr.mxu0 0.0
        %5501 = vmatpush1.msra.mxu0 0.0
        %5502 = vmatprep.subr.mxu0 0.0
        %5503 = vmatpush1.msra.mxu0 0.0
        %5504 = vmatprep.subr.mxu0 0.0
        %5505 = vmatpush1.msra.mxu0 0.0
        %5506 = vmatprep.subr.mxu0 0.0
        %5507 = vmatpush1.msra.mxu0 0.0
        %5508 = vmatprep.subr.mxu0 0.0
        %5509 = vmatpush1.msra.mxu0 0.0
        %5510 = vmatprep.subr.mxu0 0.0
        %5511 = vmatpush1.msra.mxu0 0.0
        %5512 = vmatprep.subr.mxu0 0.0
        %5513 = vmatpush1.msra.mxu0 0.0
        %5514 = vmatprep.subr.mxu0 0.0
        %5515 = vmatpush1.msra.mxu0 0.0
        %5516 = vmatprep.subr.mxu0 0.0
        %5517 = vmatpush1.msra.mxu0 0.0
        %5518 = vmatprep.subr.mxu0 0.0
        %5519 = vmatpush1.msra.mxu0 0.0
        %5520 = vmatprep.subr.mxu0 0.0
        %5521 = vmatpush1.msra.mxu0 0.0
        %5522 = vmatprep.subr.mxu0 0.0
        %5523 = vmatpush1.msra.mxu0 0.0
        %5524 = vmatprep.subr.mxu0 0.0
        %5525 = vmatpush1.msra.mxu0 0.0
        %5526 = vmatprep.subr.mxu0 0.0
        %5527 = vmatpush1.msra.mxu0 0.0
        %5528 = vmatprep.subr.mxu0 0.0
        %5529 = vmatpush1.msra.mxu0 0.0
        %5530 = vmatprep.subr.mxu0 0.0
        %5531 = vmatpush1.msra.mxu0 0.0
        %5532 = vmatprep.subr.mxu0 0.0
        %5533 = vmatpush1.msra.mxu0 0.0
        %5534 = vmatprep.subr.mxu0 0.0
        %5535 = vmatpush1.msra.mxu0 0.0
        %5536 = vmatprep.subr.mxu0 0.0
        %5537 = vmatpush1.msra.mxu0 0.0
        %5538 = vmatprep.subr.mxu0 0.0
        %5539 = vmatpush1.msra.mxu0 0.0
        %5540 = vmatprep.subr.mxu0 0.0
        %5541 = vmatpush1.msra.mxu0 0.0
        %5542 = vmatprep.subr.mxu0 0.0
        %5543 = vmatpush1.msra.mxu0 0.0
        %5544 = vmatprep.subr.mxu0 0.0
        %5545 = vmatpush1.msra.mxu0 0.0
        %5546 = vmatprep.mubr.f32.mxu0 0.0
        %5547 = vmatmul.mubr.f32.gmra.mrb[0].mxu0 %v5432
        %v5548 = vpop.f32.mrb[0].mxu0
        %v5549 = vadd.f32 0.0, %v5548
        %v5550 = vpop.f32.mrb[0].mxu0
        %5551 = vmatprep.mubr.f32.mxu0 0.0
        %5552 = vmatmul.mubr.f32.gmra.mrb[0].mxu0 %v5435
        %v5553 = vpop.f32.mrb[0].mxu0
        %v5554 = vadd.f32 0.0, %v5553
        %v5555 = vpop.f32.mrb[0].mxu0
        %5556 = vmatprep.mubr.f32.mxu0 0.0
        %5557 = vmatmul.mubr.f32.gmra.mrb[0].mxu0 %v5438
        %v5558 = vpop.f32.mrb[0].mxu0
        %v5559 = vadd.f32 0.0, %v5558
        %v5560 = vpop.f32.mrb[0].mxu0
        %5561 = vmatprep.mubr.f32.mxu0 0.0
        %5562 = vmatmul.mubr.f32.gmra.mrb[0].mxu0 %v5441
        %v5563 = vpop.f32.mrb[0].mxu0
        %v5564 = vadd.f32 0.0, %v5563
        %v5565 = vpop.f32.mrb[0].mxu0
        %5566 = vmatprep.mubr.f32.mxu0 0.0
        %5567 = vmatmul.mubr.f32.gmra.mrb[0].mxu0 %v5444
        %v5568 = vpop.f32.mrb[0].mxu0
        %v5569 = vadd.f32 0.0, %v5568
        %v5570 = vpop.f32.mrb[0].mxu0
        %5571 = vmatprep.mubr.f32.mxu0 0.0
        %5572 = vmatmul.mubr.f32.gmra.mrb[0].mxu0 %v5447
        %v5573 = vpop.f32.mrb[0].mxu0
        %v5574 = vadd.f32 0.0, %v5573
        %v5575 = vpop.f32.mrb[0].mxu0
        %5576 = vmatprep.mubr.f32.mxu0 0.0
        %5577 = vmatmul.mubr.f32.gmra.mrb[0].mxu0 %v5450
        %v5578 = vpop.f32.mrb[0].mxu0
        %v5579 = vadd.f32 0.0, %v5578
        %v5580 = vpop.f32.mrb[0].mxu0
        %5581 = vmatprep.mubr.f32.mxu0 0.0
        %5582 = vmatmul.mubr.f32.gmra.mrb[0].mxu0 %v5453
        %v5583 = vpop.f32.mrb[0].mxu0
        %v5584 = vadd.f32 0.0, %v5583
        %v5585 = vpop.f32.mrb[0].mxu0
        %5586 = vmatprep.mubr.f32.mxu0 0.0
        %5587 = vmatmul.mubr.f32.gmra.mrb[0].mxu0 %v5456
        %v5588 = vpop.f32.mrb[0].mxu0
        %v5589 = vadd.f32 0.0, %v5588
        %v5590 = vpop.f32.mrb[0].mxu0
        %5591 = vmatprep.mubr.f32.mxu0 0.0
        %5592 = vmatmul.mubr.f32.gmra.mrb[0].mxu0 %v5459
        %v5593 = vpop.f32.mrb[0].mxu0
        %v5594 = vadd.f32 0.0, %v5593
        %v5595 = vpop.f32.mrb[0].mxu0
        %5596 = vmatprep.mubr.f32.mxu0 0.0
        %5597 = vmatmul.mubr.f32.gmra.mrb[0].mxu0 %v5462
        %v5598 = vpop.f32.mrb[0].mxu0
        %v5599 = vadd.f32 0.0, %v5598
        %v5600 = vpop.f32.mrb[0].mxu0
        %5601 = vmatprep.mubr.f32.mxu0 0.0
        %5602 = vmatmul.mubr.f32.gmra.mrb[0].mxu0 %v5465
        %v5603 = vpop.f32.mrb[0].mxu0
        %v5604 = vadd.f32 0.0, %v5603
        %v5605 = vpop.f32.mrb[0].mxu0
        %5606 = vmatprep.mubr.f32.mxu0 0.0
        %5607 = vmatmul.mubr.f32.gmra.mrb[0].mxu0 %v5468
        %v5608 = vpop.f32.mrb[0].mxu0
        %v5609 = vadd.f32 0.0, %v5608
        %v5610 = vpop.f32.mrb[0].mxu0
        %5611 = vmatprep.mubr.f32.mxu0 0.0
        %5612 = vmatmul.mubr.f32.gmra.mrb[0].mxu0 %v5471
        %v5613 = vpop.f32.mrb[0].mxu0
        %v5614 = vadd.f32 0.0, %v5613
        %v5615 = vpop.f32.mrb[0].mxu0
        %5616 = vmatprep.mubr.f32.mxu0 0.0
        %5617 = vmatmul.mubr.f32.gmra.mrb[0].mxu0 %v5474
        %v5618 = vpop.f32.mrb[0].mxu0
        %v5619 = vadd.f32 0.0, %v5618
        %v5620 = vpop.f32.mrb[0].mxu0
        %5621 = vmatprep.mubr.f32.mxu0 0.0
        %5622 = vmatmul.mubr.f32.gmra.mrb[0].mxu0 %v5477
        %v5623 = vpop.f32.mrb[0].mxu0
        %v5624 = vadd.f32 0.0, %v5623
        %v5625 = vpop.f32.mrb[0].mxu0
        %5626 = vdwg.mxu0
        %v5627 = vadd.f32 %v5335, %v5549
        %v5628 = vadd.f32 %v5340, %v5554
        %v5629 = vadd.f32 %v5345, %v5559
        %v5630 = vadd.f32 %v5350, %v5564
        %v5631 = vadd.f32 %v5355, %v5569
        %v5632 = vadd.f32 %v5360, %v5574
        %v5633 = vadd.f32 %v5365, %v5579
        %v5634 = vadd.f32 %v5370, %v5584
        %v5635 = vadd.f32 %v5375, %v5589
        %v5636 = vadd.f32 %v5380, %v5594
        %v5637 = vadd.f32 %v5385, %v5599
        %v5638 = vadd.f32 %v5390, %v5604
        %v5639 = vadd.f32 %v5395, %v5609
        %v5640 = vadd.f32 %v5400, %v5614
        %v5641 = vadd.f32 %v5405, %v5619
        %v5642 = vadd.f32 %v5410, %v5624
        %v5643 = vld [vmem:[%s298] sm:$0xff]
        %v5644 = vld [vmem:[%s298 + $0x8] sm:$0xff]
        %v5645 = vld [vmem:[%s298 + $0x38] sm:$0xff]
        %v5646 = vld [vmem:[%s298 + $0x40] sm:$0xff]
        %v5647 = vld [vmem:[%s298 + $0x70] sm:$0xff]
        %v5648 = vld [vmem:[%s298 + $0x78] sm:$0xff]
        %v5649 = vld [vmem:[%s298 + $0xa8] sm:$0xff]
        %v5650 = vld [vmem:[%s298 + $0xb0] sm:$0xff]
        %v5651 = vld [vmem:[%s298 + $0xe0] sm:$0xff]
        %v5652 = vld [vmem:[%s298 + $0xe8] sm:$0xff]
        %v5653 = vld [vmem:[%s298 + $0x118] sm:$0xff]
        %v5654 = vld [vmem:[%s298 + $0x120] sm:$0xff]
        %v5655 = vld [vmem:[%s298 + $0x150] sm:$0xff]
        %v5656 = vld [vmem:[%s298 + $0x158] sm:$0xff]
        %v5657 = vld [vmem:[%s298 + $0x188] sm:$0xff]
        %v5658 = vld [vmem:[%s298 + $0x190] sm:$0xff]
        %s5659 = scalar_lea.vmem %s4, 12
        %v5660 = vld [vmem:[%s5659] sm:$0xf]
        %v5662 = vsel %vm320, %v5643, 0
        %v5665 = vsel %vm320, %v5644, 0
        %v5668 = vsel %vm320, %v5645, 0
        %v5671 = vsel %vm320, %v5646, 0
        %v5674 = vsel %vm320, %v5647, 0
        %v5677 = vsel %vm320, %v5648, 0
        %v5680 = vsel %vm320, %v5649, 0
        %v5683 = vsel %vm320, %v5650, 0
        %v5686 = vsel %vm320, %v5651, 0
        %v5689 = vsel %vm320, %v5652, 0
        %v5692 = vsel %vm320, %v5653, 0
        %v5695 = vsel %vm320, %v5654, 0
        %v5698 = vsel %vm320, %v5655, 0
        %v5701 = vsel %vm320, %v5656, 0
        %v5704 = vsel %vm320, %v5657, 0
        %v5707 = vsel %vm320, %v5658, 0
        %v5710 = vsel %vm369, %v5660, 0
        %5712 = vmatprep.subr.mxu0 0.0
        %5713 = vmatpush1.msra.mxu0 %v5710
        %5714 = vmatprep.subr.mxu0 0.0
        %5715 = vmatpush1.msra.mxu0 0.0
        %5716 = vmatprep.subr.mxu0 0.0
        %5717 = vmatpush1.msra.mxu0 0.0
        %5718 = vmatprep.subr.mxu0 0.0
        %5719 = vmatpush1.msra.mxu0 0.0
        %5720 = vmatprep.subr.mxu0 0.0
        %5721 = vmatpush1.msra.mxu0 0.0
        %5722 = vmatprep.subr.mxu0 0.0
        %5723 = vmatpush1.msra.mxu0 0.0
        %5724 = vmatprep.subr.mxu0 0.0
        %5725 = vmatpush1.msra.mxu0 0.0
        %5726 = vmatprep.subr.mxu0 0.0
        %5727 = vmatpush1.msra.mxu0 0.0
        %5728 = vmatprep.subr.mxu0 0.0
        %5729 = vmatpush1.msra.mxu0 0.0
        %5730 = vmatprep.subr.mxu0 0.0
        %5731 = vmatpush1.msra.mxu0 0.0
        %5732 = vmatprep.subr.mxu0 0.0
        %5733 = vmatpush1.msra.mxu0 0.0
        %5734 = vmatprep.subr.mxu0 0.0
        %5735 = vmatpush1.msra.mxu0 0.0
        %5736 = vmatprep.subr.mxu0 0.0
        %5737 = vmatpush1.msra.mxu0 0.0
        %5738 = vmatprep.subr.mxu0 0.0
        %5739 = vmatpush1.msra.mxu0 0.0
        %5740 = vmatprep.subr.mxu0 0.0
        %5741 = vmatpush1.msra.mxu0 0.0
        %5742 = vmatprep.subr.mxu0 0.0
        %5743 = vmatpush1.msra.mxu0 0.0
        %5744 = vmatprep.subr.mxu0 0.0
        %5745 = vmatpush1.msra.mxu0 0.0
        %5746 = vmatprep.subr.mxu0 0.0
        %5747 = vmatpush1.msra.mxu0 0.0
        %5748 = vmatprep.subr.mxu0 0.0
        %5749 = vmatpush1.msra.mxu0 0.0
        %5750 = vmatprep.subr.mxu0 0.0
        %5751 = vmatpush1.msra.mxu0 0.0
        %5752 = vmatprep.subr.mxu0 0.0
        %5753 = vmatpush1.msra.mxu0 0.0
        %5754 = vmatprep.subr.mxu0 0.0
        %5755 = vmatpush1.msra.mxu0 0.0
        %5756 = vmatprep.subr.mxu0 0.0
        %5757 = vmatpush1.msra.mxu0 0.0
        %5758 = vmatprep.subr.mxu0 0.0
        %5759 = vmatpush1.msra.mxu0 0.0
        %5760 = vmatprep.subr.mxu0 0.0
        %5761 = vmatpush1.msra.mxu0 0.0
        %5762 = vmatprep.subr.mxu0 0.0
        %5763 = vmatpush1.msra.mxu0 0.0
        %5764 = vmatprep.subr.mxu0 0.0
        %5765 = vmatpush1.msra.mxu0 0.0
        %5766 = vmatprep.subr.mxu0 0.0
        %5767 = vmatpush1.msra.mxu0 0.0
        %5768 = vmatprep.subr.mxu0 0.0
        %5769 = vmatpush1.msra.mxu0 0.0
        %5770 = vmatprep.subr.mxu0 0.0
        %5771 = vmatpush1.msra.mxu0 0.0
        %5772 = vmatprep.subr.mxu0 0.0
        %5773 = vmatpush1.msra.mxu0 0.0
        %5774 = vmatprep.subr.mxu0 0.0
        %5775 = vmatpush1.msra.mxu0 0.0
        %5776 = vmatprep.mubr.f32.mxu0 0.0
        %5777 = vmatmul.mubr.f32.gmra.mrb[0].mxu0 %v5662
        %v5778 = vpop.f32.mrb[0].mxu0
        %v5779 = vadd.f32 0.0, %v5778
        %v5780 = vpop.f32.mrb[0].mxu0
        %5781 = vmatprep.mubr.f32.mxu0 0.0
        %5782 = vmatmul.mubr.f32.gmra.mrb[0].mxu0 %v5665
        %v5783 = vpop.f32.mrb[0].mxu0
        %v5784 = vadd.f32 0.0, %v5783
        %v5785 = vpop.f32.mrb[0].mxu0
        %5786 = vmatprep.mubr.f32.mxu0 0.0
        %5787 = vmatmul.mubr.f32.gmra.mrb[0].mxu0 %v5668
        %v5788 = vpop.f32.mrb[0].mxu0
        %v5789 = vadd.f32 0.0, %v5788
        %v5790 = vpop.f32.mrb[0].mxu0
        %5791 = vmatprep.mubr.f32.mxu0 0.0
        %5792 = vmatmul.mubr.f32.gmra.mrb[0].mxu0 %v5671
        %v5793 = vpop.f32.mrb[0].mxu0
        %v5794 = vadd.f32 0.0, %v5793
        %v5795 = vpop.f32.mrb[0].mxu0
        %5796 = vmatprep.mubr.f32.mxu0 0.0
        %5797 = vmatmul.mubr.f32.gmra.mrb[0].mxu0 %v5674
        %v5798 = vpop.f32.mrb[0].mxu0
        %v5799 = vadd.f32 0.0, %v5798
        %v5800 = vpop.f32.mrb[0].mxu0
        %5801 = vmatprep.mubr.f32.mxu0 0.0
        %5802 = vmatmul.mubr.f32.gmra.mrb[0].mxu0 %v5677
        %v5803 = vpop.f32.mrb[0].mxu0
        %v5804 = vadd.f32 0.0, %v5803
        %v5805 = vpop.f32.mrb[0].mxu0
        %5806 = vmatprep.mubr.f32.mxu0 0.0
        %5807 = vmatmul.mubr.f32.gmra.mrb[0].mxu0 %v5680
        %v5808 = vpop.f32.mrb[0].mxu0
        %v5809 = vadd.f32 0.0, %v5808
        %v5810 = vpop.f32.mrb[0].mxu0
        %5811 = vmatprep.mubr.f32.mxu0 0.0
        %5812 = vmatmul.mubr.f32.gmra.mrb[0].mxu0 %v5683
        %v5813 = vpop.f32.mrb[0].mxu0
        %v5814 = vadd.f32 0.0, %v5813
        %v5815 = vpop.f32.mrb[0].mxu0
        %5816 = vmatprep.mubr.f32.mxu0 0.0
        %5817 = vmatmul.mubr.f32.gmra.mrb[0].mxu0 %v5686
        %v5818 = vpop.f32.mrb[0].mxu0
        %v5819 = vadd.f32 0.0, %v5818
        %v5820 = vpop.f32.mrb[0].mxu0
        %5821 = vmatprep.mubr.f32.mxu0 0.0
        %5822 = vmatmul.mubr.f32.gmra.mrb[0].mxu0 %v5689
        %v5823 = vpop.f32.mrb[0].mxu0
        %v5824 = vadd.f32 0.0, %v5823
        %v5825 = vpop.f32.mrb[0].mxu0
        %5826 = vmatprep.mubr.f32.mxu0 0.0
        %5827 = vmatmul.mubr.f32.gmra.mrb[0].mxu0 %v5692
        %v5828 = vpop.f32.mrb[0].mxu0
        %v5829 = vadd.f32 0.0, %v5828
        %v5830 = vpop.f32.mrb[0].mxu0
        %5831 = vmatprep.mubr.f32.mxu0 0.0
        %5832 = vmatmul.mubr.f32.gmra.mrb[0].mxu0 %v5695
        %v5833 = vpop.f32.mrb[0].mxu0
        %v5834 = vadd.f32 0.0, %v5833
        %v5835 = vpop.f32.mrb[0].mxu0
        %5836 = vmatprep.mubr.f32.mxu0 0.0
        %5837 = vmatmul.mubr.f32.gmra.mrb[0].mxu0 %v5698
        %v5838 = vpop.f32.mrb[0].mxu0
        %v5839 = vadd.f32 0.0, %v5838
        %v5840 = vpop.f32.mrb[0].mxu0
        %5841 = vmatprep.mubr.f32.mxu0 0.0
        %5842 = vmatmul.mubr.f32.gmra.mrb[0].mxu0 %v5701
        %v5843 = vpop.f32.mrb[0].mxu0
        %v5844 = vadd.f32 0.0, %v5843
        %v5845 = vpop.f32.mrb[0].mxu0
        %5846 = vmatprep.mubr.f32.mxu0 0.0
        %5847 = vmatmul.mubr.f32.gmra.mrb[0].mxu0 %v5704
        %v5848 = vpop.f32.mrb[0].mxu0
        %v5849 = vadd.f32 0.0, %v5848
        %v5850 = vpop.f32.mrb[0].mxu0
        %5851 = vmatprep.mubr.f32.mxu0 0.0
        %5852 = vmatmul.mubr.f32.gmra.mrb[0].mxu0 %v5707
        %v5853 = vpop.f32.mrb[0].mxu0
        %v5854 = vadd.f32 0.0, %v5853
        %v5855 = vpop.f32.mrb[0].mxu0
        %5856 = vdwg.mxu0
        %v5857 = vadd.f32 %v5627, %v5779
        %v5858 = vadd.f32 %v5628, %v5784
        %v5859 = vadd.f32 %v5629, %v5789
        %v5860 = vadd.f32 %v5630, %v5794
        %v5861 = vadd.f32 %v5631, %v5799
        %v5862 = vadd.f32 %v5632, %v5804
        %v5863 = vadd.f32 %v5633, %v5809
        %v5864 = vadd.f32 %v5634, %v5814
        %v5865 = vadd.f32 %v5635, %v5819
        %v5866 = vadd.f32 %v5636, %v5824
        %v5867 = vadd.f32 %v5637, %v5829
        %v5868 = vadd.f32 %v5638, %v5834
        %v5869 = vadd.f32 %v5639, %v5839
        %v5870 = vadd.f32 %v5640, %v5844
        %v5871 = vadd.f32 %v5641, %v5849
        %v5872 = vadd.f32 %v5642, %v5854
        %v5873 = vld [vmem:[%s298 + $0x12] sm:$0xff]
        %v5874 = vld [vmem:[%s298 + $0x1a] sm:$0xff]
        %v5875 = vld [vmem:[%s298 + $0x4a] sm:$0xff]
        %v5876 = vld [vmem:[%s298 + $0x52] sm:$0xff]
        %v5877 = vld [vmem:[%s298 + $0x82] sm:$0xff]
        %v5878 = vld [vmem:[%s298 + $0x8a] sm:$0xff]
        %v5879 = vld [vmem:[%s298 + $0xba] sm:$0xff]
        %v5880 = vld [vmem:[%s298 + $0xc2] sm:$0xff]
        %v5881 = vld [vmem:[%s298 + $0xf2] sm:$0xff]
        %v5882 = vld [vmem:[%s298 + $0xfa] sm:$0xff]
        %v5883 = vld [vmem:[%s298 + $0x12a] sm:$0xff]
        %v5884 = vld [vmem:[%s298 + $0x132] sm:$0xff]
        %v5885 = vld [vmem:[%s298 + $0x162] sm:$0xff]
        %v5886 = vld [vmem:[%s298 + $0x16a] sm:$0xff]
        %v5887 = vld [vmem:[%s298 + $0x19a] sm:$0xff]
        %v5888 = vld [vmem:[%s298 + $0x1a2] sm:$0xff]
        %s5889 = scalar_lea.vmem %s4, 16
        %v5890 = vld [vmem:[%s5889] sm:$0xf]
        %v5892 = vsel %vm320, %v5873, 0
        %v5895 = vsel %vm320, %v5874, 0
        %v5898 = vsel %vm320, %v5875, 0
        %v5901 = vsel %vm320, %v5876, 0
        %v5904 = vsel %vm320, %v5877, 0
        %v5907 = vsel %vm320, %v5878, 0
        %v5910 = vsel %vm320, %v5879, 0
        %v5913 = vsel %vm320, %v5880, 0
        %v5916 = vsel %vm320, %v5881, 0
        %v5919 = vsel %vm320, %v5882, 0
        %v5922 = vsel %vm320, %v5883, 0
        %v5925 = vsel %vm320, %v5884, 0
        %v5928 = vsel %vm320, %v5885, 0
        %v5931 = vsel %vm320, %v5886, 0
        %v5934 = vsel %vm320, %v5887, 0
        %v5937 = vsel %vm320, %v5888, 0
        %v5940 = vsel %vm369, %v5890, 0
        %5942 = vmatprep.subr.mxu0 0.0
        %5943 = vmatpush1.msra.mxu0 %v5940
        %5944 = vmatprep.subr.mxu0 0.0
        %5945 = vmatpush1.msra.mxu0 0.0
        %5946 = vmatprep.subr.mxu0 0.0
        %5947 = vmatpush1.msra.mxu0 0.0
        %5948 = vmatprep.subr.mxu0 0.0
        %5949 = vmatpush1.msra.mxu0 0.0
        %5950 = vmatprep.subr.mxu0 0.0
        %5951 = vmatpush1.msra.mxu0 0.0
        %5952 = vmatprep.subr.mxu0 0.0
        %5953 = vmatpush1.msra.mxu0 0.0
        %5954 = vmatprep.subr.mxu0 0.0
        %5955 = vmatpush1.msra.mxu0 0.0
        %5956 = vmatprep.subr.mxu0 0.0
        %5957 = vmatpush1.msra.mxu0 0.0
        %5958 = vmatprep.subr.mxu0 0.0
        %5959 = vmatpush1.msra.mxu0 0.0
        %5960 = vmatprep.subr.mxu0 0.0
        %5961 = vmatpush1.msra.mxu0 0.0
        %5962 = vmatprep.subr.mxu0 0.0
        %5963 = vmatpush1.msra.mxu0 0.0
        %5964 = vmatprep.subr.mxu0 0.0
        %5965 = vmatpush1.msra.mxu0 0.0
        %5966 = vmatprep.subr.mxu0 0.0
        %5967 = vmatpush1.msra.mxu0 0.0
        %5968 = vmatprep.subr.mxu0 0.0
        %5969 = vmatpush1.msra.mxu0 0.0
        %5970 = vmatprep.subr.mxu0 0.0
        %5971 = vmatpush1.msra.mxu0 0.0
        %5972 = vmatprep.subr.mxu0 0.0
        %5973 = vmatpush1.msra.mxu0 0.0
        %5974 = vmatprep.subr.mxu0 0.0
        %5975 = vmatpush1.msra.mxu0 0.0
        %5976 = vmatprep.subr.mxu0 0.0
        %5977 = vmatpush1.msra.mxu0 0.0
        %5978 = vmatprep.subr.mxu0 0.0
        %5979 = vmatpush1.msra.mxu0 0.0
        %5980 = vmatprep.subr.mxu0 0.0
        %5981 = vmatpush1.msra.mxu0 0.0
        %5982 = vmatprep.subr.mxu0 0.0
        %5983 = vmatpush1.msra.mxu0 0.0
        %5984 = vmatprep.subr.mxu0 0.0
        %5985 = vmatpush1.msra.mxu0 0.0
        %5986 = vmatprep.subr.mxu0 0.0
        %5987 = vmatpush1.msra.mxu0 0.0
        %5988 = vmatprep.subr.mxu0 0.0
        %5989 = vmatpush1.msra.mxu0 0.0
        %5990 = vmatprep.subr.mxu0 0.0
        %5991 = vmatpush1.msra.mxu0 0.0
        %5992 = vmatprep.subr.mxu0 0.0
        %5993 = vmatpush1.msra.mxu0 0.0
        %5994 = vmatprep.subr.mxu0 0.0
        %5995 = vmatpush1.msra.mxu0 0.0
        %5996 = vmatprep.subr.mxu0 0.0
        %5997 = vmatpush1.msra.mxu0 0.0
        %5998 = vmatprep.subr.mxu0 0.0
        %5999 = vmatpush1.msra.mxu0 0.0
        %6000 = vmatprep.subr.mxu0 0.0
        %6001 = vmatpush1.msra.mxu0 0.0
        %6002 = vmatprep.subr.mxu0 0.0
        %6003 = vmatpush1.msra.mxu0 0.0
        %6004 = vmatprep.subr.mxu0 0.0
        %6005 = vmatpush1.msra.mxu0 0.0
        %6006 = vmatprep.mubr.f32.mxu0 0.0
        %6007 = vmatmul.mubr.f32.gmra.mrb[0].mxu0 %v5892
        %v6008 = vpop.f32.mrb[0].mxu0
        %v6009 = vadd.f32 0.0, %v6008
        %v6010 = vpop.f32.mrb[0].mxu0
        %6011 = vmatprep.mubr.f32.mxu0 0.0
        %6012 = vmatmul.mubr.f32.gmra.mrb[0].mxu0 %v5895
        %v6013 = vpop.f32.mrb[0].mxu0
        %v6014 = vadd.f32 0.0, %v6013
        %v6015 = vpop.f32.mrb[0].mxu0
        %6016 = vmatprep.mubr.f32.mxu0 0.0
        %6017 = vmatmul.mubr.f32.gmra.mrb[0].mxu0 %v5898
        %v6018 = vpop.f32.mrb[0].mxu0
        %v6019 = vadd.f32 0.0, %v6018
        %v6020 = vpop.f32.mrb[0].mxu0
        %6021 = vmatprep.mubr.f32.mxu0 0.0
        %6022 = vmatmul.mubr.f32.gmra.mrb[0].mxu0 %v5901
        %v6023 = vpop.f32.mrb[0].mxu0
        %v6024 = vadd.f32 0.0, %v6023
        %v6025 = vpop.f32.mrb[0].mxu0
        %6026 = vmatprep.mubr.f32.mxu0 0.0
        %6027 = vmatmul.mubr.f32.gmra.mrb[0].mxu0 %v5904
        %v6028 = vpop.f32.mrb[0].mxu0
        %v6029 = vadd.f32 0.0, %v6028
        %v6030 = vpop.f32.mrb[0].mxu0
        %6031 = vmatprep.mubr.f32.mxu0 0.0
        %6032 = vmatmul.mubr.f32.gmra.mrb[0].mxu0 %v5907
        %v6033 = vpop.f32.mrb[0].mxu0
        %v6034 = vadd.f32 0.0, %v6033
        %v6035 = vpop.f32.mrb[0].mxu0
        %6036 = vmatprep.mubr.f32.mxu0 0.0
        %6037 = vmatmul.mubr.f32.gmra.mrb[0].mxu0 %v5910
        %v6038 = vpop.f32.mrb[0].mxu0
        %v6039 = vadd.f32 0.0, %v6038
        %v6040 = vpop.f32.mrb[0].mxu0
        %6041 = vmatprep.mubr.f32.mxu0 0.0
        %6042 = vmatmul.mubr.f32.gmra.mrb[0].mxu0 %v5913
        %v6043 = vpop.f32.mrb[0].mxu0
        %v6044 = vadd.f32 0.0, %v6043
        %v6045 = vpop.f32.mrb[0].mxu0
        %6046 = vmatprep.mubr.f32.mxu0 0.0
        %6047 = vmatmul.mubr.f32.gmra.mrb[0].mxu0 %v5916
        %v6048 = vpop.f32.mrb[0].mxu0
        %v6049 = vadd.f32 0.0, %v6048
        %v6050 = vpop.f32.mrb[0].mxu0
        %6051 = vmatprep.mubr.f32.mxu0 0.0
        %6052 = vmatmul.mubr.f32.gmra.mrb[0].mxu0 %v5919
        %v6053 = vpop.f32.mrb[0].mxu0
        %v6054 = vadd.f32 0.0, %v6053
        %v6055 = vpop.f32.mrb[0].mxu0
        %6056 = vmatprep.mubr.f32.mxu0 0.0
        %6057 = vmatmul.mubr.f32.gmra.mrb[0].mxu0 %v5922
        %v6058 = vpop.f32.mrb[0].mxu0
        %v6059 = vadd.f32 0.0, %v6058
        %v6060 = vpop.f32.mrb[0].mxu0
        %6061 = vmatprep.mubr.f32.mxu0 0.0
        %6062 = vmatmul.mubr.f32.gmra.mrb[0].mxu0 %v5925
        %v6063 = vpop.f32.mrb[0].mxu0
        %v6064 = vadd.f32 0.0, %v6063
        %v6065 = vpop.f32.mrb[0].mxu0
        %6066 = vmatprep.mubr.f32.mxu0 0.0
        %6067 = vmatmul.mubr.f32.gmra.mrb[0].mxu0 %v5928
        %v6068 = vpop.f32.mrb[0].mxu0
        %v6069 = vadd.f32 0.0, %v6068
        %v6070 = vpop.f32.mrb[0].mxu0
        %6071 = vmatprep.mubr.f32.mxu0 0.0
        %6072 = vmatmul.mubr.f32.gmra.mrb[0].mxu0 %v5931
        %v6073 = vpop.f32.mrb[0].mxu0
        %v6074 = vadd.f32 0.0, %v6073
        %v6075 = vpop.f32.mrb[0].mxu0
        %6076 = vmatprep.mubr.f32.mxu0 0.0
        %6077 = vmatmul.mubr.f32.gmra.mrb[0].mxu0 %v5934
        %v6078 = vpop.f32.mrb[0].mxu0
        %v6079 = vadd.f32 0.0, %v6078
        %v6080 = vpop.f32.mrb[0].mxu0
        %6081 = vmatprep.mubr.f32.mxu0 0.0
        %6082 = vmatmul.mubr.f32.gmra.mrb[0].mxu0 %v5937
        %v6083 = vpop.f32.mrb[0].mxu0
        %v6084 = vadd.f32 0.0, %v6083
        %v6085 = vpop.f32.mrb[0].mxu0
        %6086 = vdwg.mxu0
        %v6087 = vadd.f32 %v5857, %v6009
        %v6088 = vadd.f32 %v5858, %v6014
        %v6089 = vadd.f32 %v5859, %v6019
        %v6090 = vadd.f32 %v5860, %v6024
        %v6091 = vadd.f32 %v5861, %v6029
        %v6092 = vadd.f32 %v5862, %v6034
        %v6093 = vadd.f32 %v5863, %v6039
        %v6094 = vadd.f32 %v5864, %v6044
        %v6095 = vadd.f32 %v5865, %v6049
        %v6096 = vadd.f32 %v5866, %v6054
        %v6097 = vadd.f32 %v5867, %v6059
        %v6098 = vadd.f32 %v5868, %v6064
        %v6099 = vadd.f32 %v5869, %v6069
        %v6100 = vadd.f32 %v5870, %v6074
        %v6101 = vadd.f32 %v5871, %v6079
        %v6102 = vadd.f32 %v5872, %v6084
        %v6103 = vld [vmem:[%s298 + $0x24] sm:$0xff]
        %v6104 = vld [vmem:[%s298 + $0x2c] sm:$0xff]
        %v6105 = vld [vmem:[%s298 + $0x5c] sm:$0xff]
        %v6106 = vld [vmem:[%s298 + $0x64] sm:$0xff]
        %v6107 = vld [vmem:[%s298 + $0x94] sm:$0xff]
        %v6108 = vld [vmem:[%s298 + $0x9c] sm:$0xff]
        %v6109 = vld [vmem:[%s298 + $0xcc] sm:$0xff]
        %v6110 = vld [vmem:[%s298 + $0xd4] sm:$0xff]
        %v6111 = vld [vmem:[%s298 + $0x104] sm:$0xff]
        %v6112 = vld [vmem:[%s298 + $0x10c] sm:$0xff]
        %v6113 = vld [vmem:[%s298 + $0x13c] sm:$0xff]
        %v6114 = vld [vmem:[%s298 + $0x144] sm:$0xff]
        %v6115 = vld [vmem:[%s298 + $0x174] sm:$0xff]
        %v6116 = vld [vmem:[%s298 + $0x17c] sm:$0xff]
        %v6117 = vld [vmem:[%s298 + $0x1ac] sm:$0xff]
        %v6118 = vld [vmem:[%s298 + $0x1b4] sm:$0xff]
        %s6119 = scalar_lea.vmem %s4, 20
        %v6120 = vld [vmem:[%s6119] sm:$0xf]
        %v6122 = vsel %vm320, %v6103, 0
        %v6125 = vsel %vm320, %v6104, 0
        %v6128 = vsel %vm320, %v6105, 0
        %v6131 = vsel %vm320, %v6106, 0
        %v6134 = vsel %vm320, %v6107, 0
        %v6137 = vsel %vm320, %v6108, 0
        %v6140 = vsel %vm320, %v6109, 0
        %v6143 = vsel %vm320, %v6110, 0
        %v6146 = vsel %vm320, %v6111, 0
        %v6149 = vsel %vm320, %v6112, 0
        %v6152 = vsel %vm320, %v6113, 0
        %v6155 = vsel %vm320, %v6114, 0
        %v6158 = vsel %vm320, %v6115, 0
        %v6161 = vsel %vm320, %v6116, 0
        %v6164 = vsel %vm320, %v6117, 0
        %v6167 = vsel %vm320, %v6118, 0
        %v6170 = vsel %vm369, %v6120, 0
        %6172 = vmatprep.subr.mxu0 0.0
        %6173 = vmatpush1.msra.mxu0 %v6170
        %6174 = vmatprep.subr.mxu0 0.0
        %6175 = vmatpush1.msra.mxu0 0.0
        %6176 = vmatprep.subr.mxu0 0.0
        %6177 = vmatpush1.msra.mxu0 0.0
        %6178 = vmatprep.subr.mxu0 0.0
        %6179 = vmatpush1.msra.mxu0 0.0
        %6180 = vmatprep.subr.mxu0 0.0
        %6181 = vmatpush1.msra.mxu0 0.0
        %6182 = vmatprep.subr.mxu0 0.0
        %6183 = vmatpush1.msra.mxu0 0.0
        %6184 = vmatprep.subr.mxu0 0.0
        %6185 = vmatpush1.msra.mxu0 0.0
        %6186 = vmatprep.subr.mxu0 0.0
        %6187 = vmatpush1.msra.mxu0 0.0
        %6188 = vmatprep.subr.mxu0 0.0
        %6189 = vmatpush1.msra.mxu0 0.0
        %6190 = vmatprep.subr.mxu0 0.0
        %6191 = vmatpush1.msra.mxu0 0.0
        %6192 = vmatprep.subr.mxu0 0.0
        %6193 = vmatpush1.msra.mxu0 0.0
        %6194 = vmatprep.subr.mxu0 0.0
        %6195 = vmatpush1.msra.mxu0 0.0
        %6196 = vmatprep.subr.mxu0 0.0
        %6197 = vmatpush1.msra.mxu0 0.0
        %6198 = vmatprep.subr.mxu0 0.0
        %6199 = vmatpush1.msra.mxu0 0.0
        %6200 = vmatprep.subr.mxu0 0.0
        %6201 = vmatpush1.msra.mxu0 0.0
        %6202 = vmatprep.subr.mxu0 0.0
        %6203 = vmatpush1.msra.mxu0 0.0
        %6204 = vmatprep.subr.mxu0 0.0
        %6205 = vmatpush1.msra.mxu0 0.0
        %6206 = vmatprep.subr.mxu0 0.0
        %6207 = vmatpush1.msra.mxu0 0.0
        %6208 = vmatprep.subr.mxu0 0.0
        %6209 = vmatpush1.msra.mxu0 0.0
        %6210 = vmatprep.subr.mxu0 0.0
        %6211 = vmatpush1.msra.mxu0 0.0
        %6212 = vmatprep.subr.mxu0 0.0
        %6213 = vmatpush1.msra.mxu0 0.0
        %6214 = vmatprep.subr.mxu0 0.0
        %6215 = vmatpush1.msra.mxu0 0.0
        %6216 = vmatprep.subr.mxu0 0.0
        %6217 = vmatpush1.msra.mxu0 0.0
        %6218 = vmatprep.subr.mxu0 0.0
        %6219 = vmatpush1.msra.mxu0 0.0
        %6220 = vmatprep.subr.mxu0 0.0
        %6221 = vmatpush1.msra.mxu0 0.0
        %6222 = vmatprep.subr.mxu0 0.0
        %6223 = vmatpush1.msra.mxu0 0.0
        %6224 = vmatprep.subr.mxu0 0.0
        %6225 = vmatpush1.msra.mxu0 0.0
        %6226 = vmatprep.subr.mxu0 0.0
        %6227 = vmatpush1.msra.mxu0 0.0
        %6228 = vmatprep.subr.mxu0 0.0
        %6229 = vmatpush1.msra.mxu0 0.0
        %6230 = vmatprep.subr.mxu0 0.0
        %6231 = vmatpush1.msra.mxu0 0.0
        %6232 = vmatprep.subr.mxu0 0.0
        %6233 = vmatpush1.msra.mxu0 0.0
        %6234 = vmatprep.subr.mxu0 0.0
        %6235 = vmatpush1.msra.mxu0 0.0
        %6236 = vmatprep.mubr.f32.mxu0 0.0
        %6237 = vmatmul.mubr.f32.gmra.mrb[0].mxu0 %v6122
        %v6238 = vpop.f32.mrb[0].mxu0
        %v6239 = vadd.f32 0.0, %v6238
        %v6240 = vpop.f32.mrb[0].mxu0
        %6241 = vmatprep.mubr.f32.mxu0 0.0
        %6242 = vmatmul.mubr.f32.gmra.mrb[0].mxu0 %v6125
        %v6243 = vpop.f32.mrb[0].mxu0
        %v6244 = vadd.f32 0.0, %v6243
        %v6245 = vpop.f32.mrb[0].mxu0
        %6246 = vmatprep.mubr.f32.mxu0 0.0
        %6247 = vmatmul.mubr.f32.gmra.mrb[0].mxu0 %v6128
        %v6248 = vpop.f32.mrb[0].mxu0
        %v6249 = vadd.f32 0.0, %v6248
        %v6250 = vpop.f32.mrb[0].mxu0
        %6251 = vmatprep.mubr.f32.mxu0 0.0
        %6252 = vmatmul.mubr.f32.gmra.mrb[0].mxu0 %v6131
        %v6253 = vpop.f32.mrb[0].mxu0
        %v6254 = vadd.f32 0.0, %v6253
        %v6255 = vpop.f32.mrb[0].mxu0
        %6256 = vmatprep.mubr.f32.mxu0 0.0
        %6257 = vmatmul.mubr.f32.gmra.mrb[0].mxu0 %v6134
        %v6258 = vpop.f32.mrb[0].mxu0
        %v6259 = vadd.f32 0.0, %v6258
        %v6260 = vpop.f32.mrb[0].mxu0
        %6261 = vmatprep.mubr.f32.mxu0 0.0
        %6262 = vmatmul.mubr.f32.gmra.mrb[0].mxu0 %v6137
        %v6263 = vpop.f32.mrb[0].mxu0
        %v6264 = vadd.f32 0.0, %v6263
        %v6265 = vpop.f32.mrb[0].mxu0
        %6266 = vmatprep.mubr.f32.mxu0 0.0
        %6267 = vmatmul.mubr.f32.gmra.mrb[0].mxu0 %v6140
        %v6268 = vpop.f32.mrb[0].mxu0
        %v6269 = vadd.f32 0.0, %v6268
        %v6270 = vpop.f32.mrb[0].mxu0
        %6271 = vmatprep.mubr.f32.mxu0 0.0
        %6272 = vmatmul.mubr.f32.gmra.mrb[0].mxu0 %v6143
        %v6273 = vpop.f32.mrb[0].mxu0
        %v6274 = vadd.f32 0.0, %v6273
        %v6275 = vpop.f32.mrb[0].mxu0
        %6276 = vmatprep.mubr.f32.mxu0 0.0
        %6277 = vmatmul.mubr.f32.gmra.mrb[0].mxu0 %v6146
        %v6278 = vpop.f32.mrb[0].mxu0
        %v6279 = vadd.f32 0.0, %v6278
        %v6280 = vpop.f32.mrb[0].mxu0
        %6281 = vmatprep.mubr.f32.mxu0 0.0
        %6282 = vmatmul.mubr.f32.gmra.mrb[0].mxu0 %v6149
        %v6283 = vpop.f32.mrb[0].mxu0
        %v6284 = vadd.f32 0.0, %v6283
        %v6285 = vpop.f32.mrb[0].mxu0
        %6286 = vmatprep.mubr.f32.mxu0 0.0
        %6287 = vmatmul.mubr.f32.gmra.mrb[0].mxu0 %v6152
        %v6288 = vpop.f32.mrb[0].mxu0
        %v6289 = vadd.f32 0.0, %v6288
        %v6290 = vpop.f32.mrb[0].mxu0
        %6291 = vmatprep.mubr.f32.mxu0 0.0
        %6292 = vmatmul.mubr.f32.gmra.mrb[0].mxu0 %v6155
        %v6293 = vpop.f32.mrb[0].mxu0
        %v6294 = vadd.f32 0.0, %v6293
        %v6295 = vpop.f32.mrb[0].mxu0
        %6296 = vmatprep.mubr.f32.mxu0 0.0
        %6297 = vmatmul.mubr.f32.gmra.mrb[0].mxu0 %v6158
        %v6298 = vpop.f32.mrb[0].mxu0
        %v6299 = vadd.f32 0.0, %v6298
        %v6300 = vpop.f32.mrb[0].mxu0
        %6301 = vmatprep.mubr.f32.mxu0 0.0
        %6302 = vmatmul.mubr.f32.gmra.mrb[0].mxu0 %v6161
        %v6303 = vpop.f32.mrb[0].mxu0
        %v6304 = vadd.f32 0.0, %v6303
        %v6305 = vpop.f32.mrb[0].mxu0
        %6306 = vmatprep.mubr.f32.mxu0 0.0
        %6307 = vmatmul.mubr.f32.gmra.mrb[0].mxu0 %v6164
        %v6308 = vpop.f32.mrb[0].mxu0
        %v6309 = vadd.f32 0.0, %v6308
        %v6310 = vpop.f32.mrb[0].mxu0
        %6311 = vmatprep.mubr.f32.mxu0 0.0
        %6312 = vmatmul.mubr.f32.gmra.mrb[0].mxu0 %v6167
        %v6313 = vpop.f32.mrb[0].mxu0
        %v6314 = vadd.f32 0.0, %v6313
        %v6315 = vpop.f32.mrb[0].mxu0
        %6316 = vdwg.mxu0
        %v6317 = vadd.f32 %v6087, %v6239
        %v6318 = vadd.f32 %v6088, %v6244
        %v6319 = vadd.f32 %v6089, %v6249
        %v6320 = vadd.f32 %v6090, %v6254
        %v6321 = vadd.f32 %v6091, %v6259
        %v6322 = vadd.f32 %v6092, %v6264
        %v6323 = vadd.f32 %v6093, %v6269
        %v6324 = vadd.f32 %v6094, %v6274
        %v6325 = vadd.f32 %v6095, %v6279
        %v6326 = vadd.f32 %v6096, %v6284
        %v6327 = vadd.f32 %v6097, %v6289
        %v6328 = vadd.f32 %v6098, %v6294
        %v6329 = vadd.f32 %v6099, %v6299
        %v6330 = vadd.f32 %v6100, %v6304
        %v6331 = vadd.f32 %v6101, %v6309
        %v6332 = vadd.f32 %v6102, %v6314
        %s6333 = sadd.s32 %s294, 36
        %s6334 = smul.u32 %s6333, 56
        %s6335 = scalar_lea.vmem %s284, %s6334
        %v6336 = vld [vmem:[%s6335] sm:$0xff]
        %v6337 = vld [vmem:[%s6335 + $0x8] sm:$0xff]
        %v6338 = vld [vmem:[%s6335 + $0x38] sm:$0xff]
        %v6339 = vld [vmem:[%s6335 + $0x40] sm:$0xff]
        %v6340 = vld [vmem:[%s6335 + $0x70] sm:$0xff]
        %v6341 = vld [vmem:[%s6335 + $0x78] sm:$0xff]
        %v6342 = vld [vmem:[%s6335 + $0xa8] sm:$0xff]
        %v6343 = vld [vmem:[%s6335 + $0xb0] sm:$0xff]
        %v6344 = vld [vmem:[%s6335 + $0xe0] sm:$0xff]
        %v6345 = vld [vmem:[%s6335 + $0xe8] sm:$0xff]
        %v6346 = vld [vmem:[%s6335 + $0x118] sm:$0xff]
        %v6347 = vld [vmem:[%s6335 + $0x120] sm:$0xff]
        %v6348 = vld [vmem:[%s6335 + $0x150] sm:$0xff]
        %v6349 = vld [vmem:[%s6335 + $0x158] sm:$0xff]
        %v6350 = vld [vmem:[%s6335 + $0x188] sm:$0xff]
        %v6351 = vld [vmem:[%s6335 + $0x190] sm:$0xff]
        %s6352 = scalar_lea.vmem %s4, 24
        %v6353 = vld [vmem:[%s6352] sm:$0xf]
        %v6355 = vsel %vm320, %v6336, 0
        %v6358 = vsel %vm320, %v6337, 0
        %v6361 = vsel %vm320, %v6338, 0
        %v6364 = vsel %vm320, %v6339, 0
        %v6367 = vsel %vm320, %v6340, 0
        %v6370 = vsel %vm320, %v6341, 0
        %v6373 = vsel %vm320, %v6342, 0
        %v6376 = vsel %vm320, %v6343, 0
        %v6379 = vsel %vm320, %v6344, 0
        %v6382 = vsel %vm320, %v6345, 0
        %v6385 = vsel %vm320, %v6346, 0
        %v6388 = vsel %vm320, %v6347, 0
        %v6391 = vsel %vm320, %v6348, 0
        %v6394 = vsel %vm320, %v6349, 0
        %v6397 = vsel %vm320, %v6350, 0
        %v6400 = vsel %vm320, %v6351, 0
        %v6403 = vsel %vm369, %v6353, 0
        %6405 = vmatprep.subr.mxu0 0.0
        %6406 = vmatpush1.msra.mxu0 %v6403
        %6407 = vmatprep.subr.mxu0 0.0
        %6408 = vmatpush1.msra.mxu0 0.0
        %6409 = vmatprep.subr.mxu0 0.0
        %6410 = vmatpush1.msra.mxu0 0.0
        %6411 = vmatprep.subr.mxu0 0.0
        %6412 = vmatpush1.msra.mxu0 0.0
        %6413 = vmatprep.subr.mxu0 0.0
        %6414 = vmatpush1.msra.mxu0 0.0
        %6415 = vmatprep.subr.mxu0 0.0
        %6416 = vmatpush1.msra.mxu0 0.0
        %6417 = vmatprep.subr.mxu0 0.0
        %6418 = vmatpush1.msra.mxu0 0.0
        %6419 = vmatprep.subr.mxu0 0.0
        %6420 = vmatpush1.msra.mxu0 0.0
        %6421 = vmatprep.subr.mxu0 0.0
        %6422 = vmatpush1.msra.mxu0 0.0
        %6423 = vmatprep.subr.mxu0 0.0
        %6424 = vmatpush1.msra.mxu0 0.0
        %6425 = vmatprep.subr.mxu0 0.0
        %6426 = vmatpush1.msra.mxu0 0.0
        %6427 = vmatprep.subr.mxu0 0.0
        %6428 = vmatpush1.msra.mxu0 0.0
        %6429 = vmatprep.subr.mxu0 0.0
        %6430 = vmatpush1.msra.mxu0 0.0
        %6431 = vmatprep.subr.mxu0 0.0
        %6432 = vmatpush1.msra.mxu0 0.0
        %6433 = vmatprep.subr.mxu0 0.0
        %6434 = vmatpush1.msra.mxu0 0.0
        %6435 = vmatprep.subr.mxu0 0.0
        %6436 = vmatpush1.msra.mxu0 0.0
        %6437 = vmatprep.subr.mxu0 0.0
        %6438 = vmatpush1.msra.mxu0 0.0
        %6439 = vmatprep.subr.mxu0 0.0
        %6440 = vmatpush1.msra.mxu0 0.0
        %6441 = vmatprep.subr.mxu0 0.0
        %6442 = vmatpush1.msra.mxu0 0.0
        %6443 = vmatprep.subr.mxu0 0.0
        %6444 = vmatpush1.msra.mxu0 0.0
        %6445 = vmatprep.subr.mxu0 0.0
        %6446 = vmatpush1.msra.mxu0 0.0
        %6447 = vmatprep.subr.mxu0 0.0
        %6448 = vmatpush1.msra.mxu0 0.0
        %6449 = vmatprep.subr.mxu0 0.0
        %6450 = vmatpush1.msra.mxu0 0.0
        %6451 = vmatprep.subr.mxu0 0.0
        %6452 = vmatpush1.msra.mxu0 0.0
        %6453 = vmatprep.subr.mxu0 0.0
        %6454 = vmatpush1.msra.mxu0 0.0
        %6455 = vmatprep.subr.mxu0 0.0
        %6456 = vmatpush1.msra.mxu0 0.0
        %6457 = vmatprep.subr.mxu0 0.0
        %6458 = vmatpush1.msra.mxu0 0.0
        %6459 = vmatprep.subr.mxu0 0.0
        %6460 = vmatpush1.msra.mxu0 0.0
        %6461 = vmatprep.subr.mxu0 0.0
        %6462 = vmatpush1.msra.mxu0 0.0
        %6463 = vmatprep.subr.mxu0 0.0
        %6464 = vmatpush1.msra.mxu0 0.0
        %6465 = vmatprep.subr.mxu0 0.0
        %6466 = vmatpush1.msra.mxu0 0.0
        %6467 = vmatprep.subr.mxu0 0.0
        %6468 = vmatpush1.msra.mxu0 0.0
        %6469 = vmatprep.mubr.f32.mxu0 0.0
        %6470 = vmatmul.mubr.f32.gmra.mrb[0].mxu0 %v6355
        %v6471 = vpop.f32.mrb[0].mxu0
        %v6472 = vadd.f32 0.0, %v6471
        %v6473 = vpop.f32.mrb[0].mxu0
        %6474 = vmatprep.mubr.f32.mxu0 0.0
        %6475 = vmatmul.mubr.f32.gmra.mrb[0].mxu0 %v6358
        %v6476 = vpop.f32.mrb[0].mxu0
        %v6477 = vadd.f32 0.0, %v6476
        %v6478 = vpop.f32.mrb[0].mxu0
        %6479 = vmatprep.mubr.f32.mxu0 0.0
        %6480 = vmatmul.mubr.f32.gmra.mrb[0].mxu0 %v6361
        %v6481 = vpop.f32.mrb[0].mxu0
        %v6482 = vadd.f32 0.0, %v6481
        %v6483 = vpop.f32.mrb[0].mxu0
        %6484 = vmatprep.mubr.f32.mxu0 0.0
        %6485 = vmatmul.mubr.f32.gmra.mrb[0].mxu0 %v6364
        %v6486 = vpop.f32.mrb[0].mxu0
        %v6487 = vadd.f32 0.0, %v6486
        %v6488 = vpop.f32.mrb[0].mxu0
        %6489 = vmatprep.mubr.f32.mxu0 0.0
        %6490 = vmatmul.mubr.f32.gmra.mrb[0].mxu0 %v6367
        %v6491 = vpop.f32.mrb[0].mxu0
        %v6492 = vadd.f32 0.0, %v6491
        %v6493 = vpop.f32.mrb[0].mxu0
        %6494 = vmatprep.mubr.f32.mxu0 0.0
        %6495 = vmatmul.mubr.f32.gmra.mrb[0].mxu0 %v6370
        %v6496 = vpop.f32.mrb[0].mxu0
        %v6497 = vadd.f32 0.0, %v6496
        %v6498 = vpop.f32.mrb[0].mxu0
        %6499 = vmatprep.mubr.f32.mxu0 0.0
        %6500 = vmatmul.mubr.f32.gmra.mrb[0].mxu0 %v6373
        %v6501 = vpop.f32.mrb[0].mxu0
        %v6502 = vadd.f32 0.0, %v6501
        %v6503 = vpop.f32.mrb[0].mxu0
        %6504 = vmatprep.mubr.f32.mxu0 0.0
        %6505 = vmatmul.mubr.f32.gmra.mrb[0].mxu0 %v6376
        %v6506 = vpop.f32.mrb[0].mxu0
        %v6507 = vadd.f32 0.0, %v6506
        %v6508 = vpop.f32.mrb[0].mxu0
        %6509 = vmatprep.mubr.f32.mxu0 0.0
        %6510 = vmatmul.mubr.f32.gmra.mrb[0].mxu0 %v6379
        %v6511 = vpop.f32.mrb[0].mxu0
        %v6512 = vadd.f32 0.0, %v6511
        %v6513 = vpop.f32.mrb[0].mxu0
        %6514 = vmatprep.mubr.f32.mxu0 0.0
        %6515 = vmatmul.mubr.f32.gmra.mrb[0].mxu0 %v6382
        %v6516 = vpop.f32.mrb[0].mxu0
        %v6517 = vadd.f32 0.0, %v6516
        %v6518 = vpop.f32.mrb[0].mxu0
        %6519 = vmatprep.mubr.f32.mxu0 0.0
        %6520 = vmatmul.mubr.f32.gmra.mrb[0].mxu0 %v6385
        %v6521 = vpop.f32.mrb[0].mxu0
        %v6522 = vadd.f32 0.0, %v6521
        %v6523 = vpop.f32.mrb[0].mxu0
        %6524 = vmatprep.mubr.f32.mxu0 0.0
        %6525 = vmatmul.mubr.f32.gmra.mrb[0].mxu0 %v6388
        %v6526 = vpop.f32.mrb[0].mxu0
        %v6527 = vadd.f32 0.0, %v6526
        %v6528 = vpop.f32.mrb[0].mxu0
        %6529 = vmatprep.mubr.f32.mxu0 0.0
        %6530 = vmatmul.mubr.f32.gmra.mrb[0].mxu0 %v6391
        %v6531 = vpop.f32.mrb[0].mxu0
        %v6532 = vadd.f32 0.0, %v6531
        %v6533 = vpop.f32.mrb[0].mxu0
        %6534 = vmatprep.mubr.f32.mxu0 0.0
        %6535 = vmatmul.mubr.f32.gmra.mrb[0].mxu0 %v6394
        %v6536 = vpop.f32.mrb[0].mxu0
        %v6537 = vadd.f32 0.0, %v6536
        %v6538 = vpop.f32.mrb[0].mxu0
        %6539 = vmatprep.mubr.f32.mxu0 0.0
        %6540 = vmatmul.mubr.f32.gmra.mrb[0].mxu0 %v6397
        %v6541 = vpop.f32.mrb[0].mxu0
        %v6542 = vadd.f32 0.0, %v6541
        %v6543 = vpop.f32.mrb[0].mxu0
        %6544 = vmatprep.mubr.f32.mxu0 0.0
        %6545 = vmatmul.mubr.f32.gmra.mrb[0].mxu0 %v6400
        %v6546 = vpop.f32.mrb[0].mxu0
        %v6547 = vadd.f32 0.0, %v6546
        %v6548 = vpop.f32.mrb[0].mxu0
        %6549 = vdwg.mxu0
        %v6550 = vadd.f32 %v6317, %v6472
        %v6551 = vadd.f32 %v6318, %v6477
        %v6552 = vadd.f32 %v6319, %v6482
        %v6553 = vadd.f32 %v6320, %v6487
        %v6554 = vadd.f32 %v6321, %v6492
        %v6555 = vadd.f32 %v6322, %v6497
        %v6556 = vadd.f32 %v6323, %v6502
        %v6557 = vadd.f32 %v6324, %v6507
        %v6558 = vadd.f32 %v6325, %v6512
        %v6559 = vadd.f32 %v6326, %v6517
        %v6560 = vadd.f32 %v6327, %v6522
        %v6561 = vadd.f32 %v6328, %v6527
        %v6562 = vadd.f32 %v6329, %v6532
        %v6563 = vadd.f32 %v6330, %v6537
        %v6564 = vadd.f32 %v6331, %v6542
        %v6565 = vadd.f32 %v6332, %v6547
        %v6566 = vld [vmem:[%s6335 + $0x12] sm:$0xff]
        %v6567 = vld [vmem:[%s6335 + $0x1a] sm:$0xff]
        %v6568 = vld [vmem:[%s6335 + $0x4a] sm:$0xff]
        %v6569 = vld [vmem:[%s6335 + $0x52] sm:$0xff]
        %v6570 = vld [vmem:[%s6335 + $0x82] sm:$0xff]
        %v6571 = vld [vmem:[%s6335 + $0x8a] sm:$0xff]
        %v6572 = vld [vmem:[%s6335 + $0xba] sm:$0xff]
        %v6573 = vld [vmem:[%s6335 + $0xc2] sm:$0xff]
        %v6574 = vld [vmem:[%s6335 + $0xf2] sm:$0xff]
        %v6575 = vld [vmem:[%s6335 + $0xfa] sm:$0xff]
        %v6576 = vld [vmem:[%s6335 + $0x12a] sm:$0xff]
        %v6577 = vld [vmem:[%s6335 + $0x132] sm:$0xff]
        %v6578 = vld [vmem:[%s6335 + $0x162] sm:$0xff]
        %v6579 = vld [vmem:[%s6335 + $0x16a] sm:$0xff]
        %v6580 = vld [vmem:[%s6335 + $0x19a] sm:$0xff]
        %v6581 = vld [vmem:[%s6335 + $0x1a2] sm:$0xff]
        %s6582 = scalar_lea.vmem %s4, 28
        %v6583 = vld [vmem:[%s6582] sm:$0xf]
        %v6585 = vsel %vm320, %v6566, 0
        %v6588 = vsel %vm320, %v6567, 0
        %v6591 = vsel %vm320, %v6568, 0
        %v6594 = vsel %vm320, %v6569, 0
        %v6597 = vsel %vm320, %v6570, 0
        %v6600 = vsel %vm320, %v6571, 0
        %v6603 = vsel %vm320, %v6572, 0
        %v6606 = vsel %vm320, %v6573, 0
        %v6609 = vsel %vm320, %v6574, 0
        %v6612 = vsel %vm320, %v6575, 0
        %v6615 = vsel %vm320, %v6576, 0
        %v6618 = vsel %vm320, %v6577, 0
        %v6621 = vsel %vm320, %v6578, 0
        %v6624 = vsel %vm320, %v6579, 0
        %v6627 = vsel %vm320, %v6580, 0
        %v6630 = vsel %vm320, %v6581, 0
        %v6633 = vsel %vm369, %v6583, 0
        %6635 = vmatprep.subr.mxu0 0.0
        %6636 = vmatpush1.msra.mxu0 %v6633
        %6637 = vmatprep.subr.mxu0 0.0
        %6638 = vmatpush1.msra.mxu0 0.0
        %6639 = vmatprep.subr.mxu0 0.0
        %6640 = vmatpush1.msra.mxu0 0.0
        %6641 = vmatprep.subr.mxu0 0.0
        %6642 = vmatpush1.msra.mxu0 0.0
        %6643 = vmatprep.subr.mxu0 0.0
        %6644 = vmatpush1.msra.mxu0 0.0
        %6645 = vmatprep.subr.mxu0 0.0
        %6646 = vmatpush1.msra.mxu0 0.0
        %6647 = vmatprep.subr.mxu0 0.0
        %6648 = vmatpush1.msra.mxu0 0.0
        %6649 = vmatprep.subr.mxu0 0.0
        %6650 = vmatpush1.msra.mxu0 0.0
        %6651 = vmatprep.subr.mxu0 0.0
        %6652 = vmatpush1.msra.mxu0 0.0
        %6653 = vmatprep.subr.mxu0 0.0
        %6654 = vmatpush1.msra.mxu0 0.0
        %6655 = vmatprep.subr.mxu0 0.0
        %6656 = vmatpush1.msra.mxu0 0.0
        %6657 = vmatprep.subr.mxu0 0.0
        %6658 = vmatpush1.msra.mxu0 0.0
        %6659 = vmatprep.subr.mxu0 0.0
        %6660 = vmatpush1.msra.mxu0 0.0
        %6661 = vmatprep.subr.mxu0 0.0
        %6662 = vmatpush1.msra.mxu0 0.0
        %6663 = vmatprep.subr.mxu0 0.0
        %6664 = vmatpush1.msra.mxu0 0.0
        %6665 = vmatprep.subr.mxu0 0.0
        %6666 = vmatpush1.msra.mxu0 0.0
        %6667 = vmatprep.subr.mxu0 0.0
        %6668 = vmatpush1.msra.mxu0 0.0
        %6669 = vmatprep.subr.mxu0 0.0
        %6670 = vmatpush1.msra.mxu0 0.0
        %6671 = vmatprep.subr.mxu0 0.0
        %6672 = vmatpush1.msra.mxu0 0.0
        %6673 = vmatprep.subr.mxu0 0.0
        %6674 = vmatpush1.msra.mxu0 0.0
        %6675 = vmatprep.subr.mxu0 0.0
        %6676 = vmatpush1.msra.mxu0 0.0
        %6677 = vmatprep.subr.mxu0 0.0
        %6678 = vmatpush1.msra.mxu0 0.0
        %6679 = vmatprep.subr.mxu0 0.0
        %6680 = vmatpush1.msra.mxu0 0.0
        %6681 = vmatprep.subr.mxu0 0.0
        %6682 = vmatpush1.msra.mxu0 0.0
        %6683 = vmatprep.subr.mxu0 0.0
        %6684 = vmatpush1.msra.mxu0 0.0
        %6685 = vmatprep.subr.mxu0 0.0
        %6686 = vmatpush1.msra.mxu0 0.0
        %6687 = vmatprep.subr.mxu0 0.0
        %6688 = vmatpush1.msra.mxu0 0.0
        %6689 = vmatprep.subr.mxu0 0.0
        %6690 = vmatpush1.msra.mxu0 0.0
        %6691 = vmatprep.subr.mxu0 0.0
        %6692 = vmatpush1.msra.mxu0 0.0
        %6693 = vmatprep.subr.mxu0 0.0
        %6694 = vmatpush1.msra.mxu0 0.0
        %6695 = vmatprep.subr.mxu0 0.0
        %6696 = vmatpush1.msra.mxu0 0.0
        %6697 = vmatprep.subr.mxu0 0.0
        %6698 = vmatpush1.msra.mxu0 0.0
        %6699 = vmatprep.mubr.f32.mxu0 0.0
        %6700 = vmatmul.mubr.f32.gmra.mrb[0].mxu0 %v6585
        %v6701 = vpop.f32.mrb[0].mxu0
        %v6702 = vadd.f32 0.0, %v6701
        %v6703 = vpop.f32.mrb[0].mxu0
        %6704 = vmatprep.mubr.f32.mxu0 0.0
        %6705 = vmatmul.mubr.f32.gmra.mrb[0].mxu0 %v6588
        %v6706 = vpop.f32.mrb[0].mxu0
        %v6707 = vadd.f32 0.0, %v6706
        %v6708 = vpop.f32.mrb[0].mxu0
        %6709 = vmatprep.mubr.f32.mxu0 0.0
        %6710 = vmatmul.mubr.f32.gmra.mrb[0].mxu0 %v6591
        %v6711 = vpop.f32.mrb[0].mxu0
        %v6712 = vadd.f32 0.0, %v6711
        %v6713 = vpop.f32.mrb[0].mxu0
        %6714 = vmatprep.mubr.f32.mxu0 0.0
        %6715 = vmatmul.mubr.f32.gmra.mrb[0].mxu0 %v6594
        %v6716 = vpop.f32.mrb[0].mxu0
        %v6717 = vadd.f32 0.0, %v6716
        %v6718 = vpop.f32.mrb[0].mxu0
        %6719 = vmatprep.mubr.f32.mxu0 0.0
        %6720 = vmatmul.mubr.f32.gmra.mrb[0].mxu0 %v6597
        %v6721 = vpop.f32.mrb[0].mxu0
        %v6722 = vadd.f32 0.0, %v6721
        %v6723 = vpop.f32.mrb[0].mxu0
        %6724 = vmatprep.mubr.f32.mxu0 0.0
        %6725 = vmatmul.mubr.f32.gmra.mrb[0].mxu0 %v6600
        %v6726 = vpop.f32.mrb[0].mxu0
        %v6727 = vadd.f32 0.0, %v6726
        %v6728 = vpop.f32.mrb[0].mxu0
        %6729 = vmatprep.mubr.f32.mxu0 0.0
        %6730 = vmatmul.mubr.f32.gmra.mrb[0].mxu0 %v6603
        %v6731 = vpop.f32.mrb[0].mxu0
        %v6732 = vadd.f32 0.0, %v6731
        %v6733 = vpop.f32.mrb[0].mxu0
        %6734 = vmatprep.mubr.f32.mxu0 0.0
        %6735 = vmatmul.mubr.f32.gmra.mrb[0].mxu0 %v6606
        %v6736 = vpop.f32.mrb[0].mxu0
        %v6737 = vadd.f32 0.0, %v6736
        %v6738 = vpop.f32.mrb[0].mxu0
        %6739 = vmatprep.mubr.f32.mxu0 0.0
        %6740 = vmatmul.mubr.f32.gmra.mrb[0].mxu0 %v6609
        %v6741 = vpop.f32.mrb[0].mxu0
        %v6742 = vadd.f32 0.0, %v6741
        %v6743 = vpop.f32.mrb[0].mxu0
        %6744 = vmatprep.mubr.f32.mxu0 0.0
        %6745 = vmatmul.mubr.f32.gmra.mrb[0].mxu0 %v6612
        %v6746 = vpop.f32.mrb[0].mxu0
        %v6747 = vadd.f32 0.0, %v6746
        %v6748 = vpop.f32.mrb[0].mxu0
        %6749 = vmatprep.mubr.f32.mxu0 0.0
        %6750 = vmatmul.mubr.f32.gmra.mrb[0].mxu0 %v6615
        %v6751 = vpop.f32.mrb[0].mxu0
        %v6752 = vadd.f32 0.0, %v6751
        %v6753 = vpop.f32.mrb[0].mxu0
        %6754 = vmatprep.mubr.f32.mxu0 0.0
        %6755 = vmatmul.mubr.f32.gmra.mrb[0].mxu0 %v6618
        %v6756 = vpop.f32.mrb[0].mxu0
        %v6757 = vadd.f32 0.0, %v6756
        %v6758 = vpop.f32.mrb[0].mxu0
        %6759 = vmatprep.mubr.f32.mxu0 0.0
        %6760 = vmatmul.mubr.f32.gmra.mrb[0].mxu0 %v6621
        %v6761 = vpop.f32.mrb[0].mxu0
        %v6762 = vadd.f32 0.0, %v6761
        %v6763 = vpop.f32.mrb[0].mxu0
        %6764 = vmatprep.mubr.f32.mxu0 0.0
        %6765 = vmatmul.mubr.f32.gmra.mrb[0].mxu0 %v6624
        %v6766 = vpop.f32.mrb[0].mxu0
        %v6767 = vadd.f32 0.0, %v6766
        %v6768 = vpop.f32.mrb[0].mxu0
        %6769 = vmatprep.mubr.f32.mxu0 0.0
        %6770 = vmatmul.mubr.f32.gmra.mrb[0].mxu0 %v6627
        %v6771 = vpop.f32.mrb[0].mxu0
        %v6772 = vadd.f32 0.0, %v6771
        %v6773 = vpop.f32.mrb[0].mxu0
        %6774 = vmatprep.mubr.f32.mxu0 0.0
        %6775 = vmatmul.mubr.f32.gmra.mrb[0].mxu0 %v6630
        %v6776 = vpop.f32.mrb[0].mxu0
        %v6777 = vadd.f32 0.0, %v6776
        %v6778 = vpop.f32.mrb[0].mxu0
        %6779 = vdwg.mxu0
        %v6780 = vadd.f32 %v6550, %v6702
        %v6781 = vadd.f32 %v6551, %v6707
        %v6782 = vadd.f32 %v6552, %v6712
        %v6783 = vadd.f32 %v6553, %v6717
        %v6784 = vadd.f32 %v6554, %v6722
        %v6785 = vadd.f32 %v6555, %v6727
        %v6786 = vadd.f32 %v6556, %v6732
        %v6787 = vadd.f32 %v6557, %v6737
        %v6788 = vadd.f32 %v6558, %v6742
        %v6789 = vadd.f32 %v6559, %v6747
        %v6790 = vadd.f32 %v6560, %v6752
        %v6791 = vadd.f32 %v6561, %v6757
        %v6792 = vadd.f32 %v6562, %v6762
        %v6793 = vadd.f32 %v6563, %v6767
        %v6794 = vadd.f32 %v6564, %v6772
        %v6795 = vadd.f32 %v6565, %v6777
        %v6796 = vld [vmem:[%s6335 + $0x24] sm:$0xff]
        %v6797 = vld [vmem:[%s6335 + $0x2c] sm:$0xff]
        %v6798 = vld [vmem:[%s6335 + $0x5c] sm:$0xff]
        %v6799 = vld [vmem:[%s6335 + $0x64] sm:$0xff]
        %v6800 = vld [vmem:[%s6335 + $0x94] sm:$0xff]
        %v6801 = vld [vmem:[%s6335 + $0x9c] sm:$0xff]
        %v6802 = vld [vmem:[%s6335 + $0xcc] sm:$0xff]
        %v6803 = vld [vmem:[%s6335 + $0xd4] sm:$0xff]
        %v6804 = vld [vmem:[%s6335 + $0x104] sm:$0xff]
        %v6805 = vld [vmem:[%s6335 + $0x10c] sm:$0xff]
        %v6806 = vld [vmem:[%s6335 + $0x13c] sm:$0xff]
        %v6807 = vld [vmem:[%s6335 + $0x144] sm:$0xff]
        %v6808 = vld [vmem:[%s6335 + $0x174] sm:$0xff]
        %v6809 = vld [vmem:[%s6335 + $0x17c] sm:$0xff]
        %v6810 = vld [vmem:[%s6335 + $0x1ac] sm:$0xff]
        %v6811 = vld [vmem:[%s6335 + $0x1b4] sm:$0xff]
        %s6812 = scalar_lea.vmem %s4, 32
        %v6813 = vld [vmem:[%s6812] sm:$0xf]
        %v6815 = vsel %vm320, %v6796, 0
        %v6818 = vsel %vm320, %v6797, 0
        %v6821 = vsel %vm320, %v6798, 0
        %v6824 = vsel %vm320, %v6799, 0
        %v6827 = vsel %vm320, %v6800, 0
        %v6830 = vsel %vm320, %v6801, 0
        %v6833 = vsel %vm320, %v6802, 0
        %v6836 = vsel %vm320, %v6803, 0
        %v6839 = vsel %vm320, %v6804, 0
        %v6842 = vsel %vm320, %v6805, 0
        %v6845 = vsel %vm320, %v6806, 0
        %v6848 = vsel %vm320, %v6807, 0
        %v6851 = vsel %vm320, %v6808, 0
        %v6854 = vsel %vm320, %v6809, 0
        %v6857 = vsel %vm320, %v6810, 0
        %v6860 = vsel %vm320, %v6811, 0
        %v6863 = vsel %vm369, %v6813, 0
        %6865 = vmatprep.subr.mxu0 0.0
        %6866 = vmatpush1.msra.mxu0 %v6863
        %6867 = vmatprep.subr.mxu0 0.0
        %6868 = vmatpush1.msra.mxu0 0.0
        %6869 = vmatprep.subr.mxu0 0.0
        %6870 = vmatpush1.msra.mxu0 0.0
        %6871 = vmatprep.subr.mxu0 0.0
        %6872 = vmatpush1.msra.mxu0 0.0
        %6873 = vmatprep.subr.mxu0 0.0
        %6874 = vmatpush1.msra.mxu0 0.0
        %6875 = vmatprep.subr.mxu0 0.0
        %6876 = vmatpush1.msra.mxu0 0.0
        %6877 = vmatprep.subr.mxu0 0.0
        %6878 = vmatpush1.msra.mxu0 0.0
        %6879 = vmatprep.subr.mxu0 0.0
        %6880 = vmatpush1.msra.mxu0 0.0
        %6881 = vmatprep.subr.mxu0 0.0
        %6882 = vmatpush1.msra.mxu0 0.0
        %6883 = vmatprep.subr.mxu0 0.0
        %6884 = vmatpush1.msra.mxu0 0.0
        %6885 = vmatprep.subr.mxu0 0.0
        %6886 = vmatpush1.msra.mxu0 0.0
        %6887 = vmatprep.subr.mxu0 0.0
        %6888 = vmatpush1.msra.mxu0 0.0
        %6889 = vmatprep.subr.mxu0 0.0
        %6890 = vmatpush1.msra.mxu0 0.0
        %6891 = vmatprep.subr.mxu0 0.0
        %6892 = vmatpush1.msra.mxu0 0.0
        %6893 = vmatprep.subr.mxu0 0.0
        %6894 = vmatpush1.msra.mxu0 0.0
        %6895 = vmatprep.subr.mxu0 0.0
        %6896 = vmatpush1.msra.mxu0 0.0
        %6897 = vmatprep.subr.mxu0 0.0
        %6898 = vmatpush1.msra.mxu0 0.0
        %6899 = vmatprep.subr.mxu0 0.0
        %6900 = vmatpush1.msra.mxu0 0.0
        %6901 = vmatprep.subr.mxu0 0.0
        %6902 = vmatpush1.msra.mxu0 0.0
        %6903 = vmatprep.subr.mxu0 0.0
        %6904 = vmatpush1.msra.mxu0 0.0
        %6905 = vmatprep.subr.mxu0 0.0
        %6906 = vmatpush1.msra.mxu0 0.0
        %6907 = vmatprep.subr.mxu0 0.0
        %6908 = vmatpush1.msra.mxu0 0.0
        %6909 = vmatprep.subr.mxu0 0.0
        %6910 = vmatpush1.msra.mxu0 0.0
        %6911 = vmatprep.subr.mxu0 0.0
        %6912 = vmatpush1.msra.mxu0 0.0
        %6913 = vmatprep.subr.mxu0 0.0
        %6914 = vmatpush1.msra.mxu0 0.0
        %6915 = vmatprep.subr.mxu0 0.0
        %6916 = vmatpush1.msra.mxu0 0.0
        %6917 = vmatprep.subr.mxu0 0.0
        %6918 = vmatpush1.msra.mxu0 0.0
        %6919 = vmatprep.subr.mxu0 0.0
        %6920 = vmatpush1.msra.mxu0 0.0
        %6921 = vmatprep.subr.mxu0 0.0
        %6922 = vmatpush1.msra.mxu0 0.0
        %6923 = vmatprep.subr.mxu0 0.0
        %6924 = vmatpush1.msra.mxu0 0.0
        %6925 = vmatprep.subr.mxu0 0.0
        %6926 = vmatpush1.msra.mxu0 0.0
        %6927 = vmatprep.subr.mxu0 0.0
        %6928 = vmatpush1.msra.mxu0 0.0
        %6929 = vmatprep.mubr.f32.mxu0 0.0
        %6930 = vmatmul.mubr.f32.gmra.mrb[0].mxu0 %v6815
        %v6931 = vpop.f32.mrb[0].mxu0
        %v6932 = vadd.f32 0.0, %v6931
        %v6933 = vpop.f32.mrb[0].mxu0
        %6934 = vmatprep.mubr.f32.mxu0 0.0
        %6935 = vmatmul.mubr.f32.gmra.mrb[0].mxu0 %v6818
        %v6936 = vpop.f32.mrb[0].mxu0
        %v6937 = vadd.f32 0.0, %v6936
        %v6938 = vpop.f32.mrb[0].mxu0
        %6939 = vmatprep.mubr.f32.mxu0 0.0
        %6940 = vmatmul.mubr.f32.gmra.mrb[0].mxu0 %v6821
        %v6941 = vpop.f32.mrb[0].mxu0
        %v6942 = vadd.f32 0.0, %v6941
        %v6943 = vpop.f32.mrb[0].mxu0
        %6944 = vmatprep.mubr.f32.mxu0 0.0
        %6945 = vmatmul.mubr.f32.gmra.mrb[0].mxu0 %v6824
        %v6946 = vpop.f32.mrb[0].mxu0
        %v6947 = vadd.f32 0.0, %v6946
        %v6948 = vpop.f32.mrb[0].mxu0
        %6949 = vmatprep.mubr.f32.mxu0 0.0
        %6950 = vmatmul.mubr.f32.gmra.mrb[0].mxu0 %v6827
        %v6951 = vpop.f32.mrb[0].mxu0
        %v6952 = vadd.f32 0.0, %v6951
        %v6953 = vpop.f32.mrb[0].mxu0
        %6954 = vmatprep.mubr.f32.mxu0 0.0
        %6955 = vmatmul.mubr.f32.gmra.mrb[0].mxu0 %v6830
        %v6956 = vpop.f32.mrb[0].mxu0
        %v6957 = vadd.f32 0.0, %v6956
        %v6958 = vpop.f32.mrb[0].mxu0
        %6959 = vmatprep.mubr.f32.mxu0 0.0
        %6960 = vmatmul.mubr.f32.gmra.mrb[0].mxu0 %v6833
        %v6961 = vpop.f32.mrb[0].mxu0
        %v6962 = vadd.f32 0.0, %v6961
        %v6963 = vpop.f32.mrb[0].mxu0
        %6964 = vmatprep.mubr.f32.mxu0 0.0
        %6965 = vmatmul.mubr.f32.gmra.mrb[0].mxu0 %v6836
        %v6966 = vpop.f32.mrb[0].mxu0
        %v6967 = vadd.f32 0.0, %v6966
        %v6968 = vpop.f32.mrb[0].mxu0
        %6969 = vmatprep.mubr.f32.mxu0 0.0
        %6970 = vmatmul.mubr.f32.gmra.mrb[0].mxu0 %v6839
        %v6971 = vpop.f32.mrb[0].mxu0
        %v6972 = vadd.f32 0.0, %v6971
        %v6973 = vpop.f32.mrb[0].mxu0
        %6974 = vmatprep.mubr.f32.mxu0 0.0
        %6975 = vmatmul.mubr.f32.gmra.mrb[0].mxu0 %v6842
        %v6976 = vpop.f32.mrb[0].mxu0
        %v6977 = vadd.f32 0.0, %v6976
        %v6978 = vpop.f32.mrb[0].mxu0
        %6979 = vmatprep.mubr.f32.mxu0 0.0
        %6980 = vmatmul.mubr.f32.gmra.mrb[0].mxu0 %v6845
        %v6981 = vpop.f32.mrb[0].mxu0
        %v6982 = vadd.f32 0.0, %v6981
        %v6983 = vpop.f32.mrb[0].mxu0
        %6984 = vmatprep.mubr.f32.mxu0 0.0
        %6985 = vmatmul.mubr.f32.gmra.mrb[0].mxu0 %v6848
        %v6986 = vpop.f32.mrb[0].mxu0
        %v6987 = vadd.f32 0.0, %v6986
        %v6988 = vpop.f32.mrb[0].mxu0
        %6989 = vmatprep.mubr.f32.mxu0 0.0
        %6990 = vmatmul.mubr.f32.gmra.mrb[0].mxu0 %v6851
        %v6991 = vpop.f32.mrb[0].mxu0
        %v6992 = vadd.f32 0.0, %v6991
        %v6993 = vpop.f32.mrb[0].mxu0
        %6994 = vmatprep.mubr.f32.mxu0 0.0
        %6995 = vmatmul.mubr.f32.gmra.mrb[0].mxu0 %v6854
        %v6996 = vpop.f32.mrb[0].mxu0
        %v6997 = vadd.f32 0.0, %v6996
        %v6998 = vpop.f32.mrb[0].mxu0
        %6999 = vmatprep.mubr.f32.mxu0 0.0
        %7000 = vmatmul.mubr.f32.gmra.mrb[0].mxu0 %v6857
        %v7001 = vpop.f32.mrb[0].mxu0
        %v7002 = vadd.f32 0.0, %v7001
        %v7003 = vpop.f32.mrb[0].mxu0
        %7004 = vmatprep.mubr.f32.mxu0 0.0
        %7005 = vmatmul.mubr.f32.gmra.mrb[0].mxu0 %v6860
        %v7006 = vpop.f32.mrb[0].mxu0
        %v7007 = vadd.f32 0.0, %v7006
        %v7008 = vpop.f32.mrb[0].mxu0
        %7009 = vdwg.mxu0
        %v7010 = vadd.f32 %v6780, %v6932
        %v7011 = vadd.f32 %v6781, %v6937
        %v7012 = vadd.f32 %v6782, %v6942
        %v7013 = vadd.f32 %v6783, %v6947
        %v7014 = vadd.f32 %v6784, %v6952
        %v7015 = vadd.f32 %v6785, %v6957
        %v7016 = vadd.f32 %v6786, %v6962
        %v7017 = vadd.f32 %v6787, %v6967
        %v7018 = vadd.f32 %v6788, %v6972
        %v7019 = vadd.f32 %v6789, %v6977
        %v7020 = vadd.f32 %v6790, %v6982
        %v7021 = vadd.f32 %v6791, %v6987
        %v7022 = vadd.f32 %v6792, %v6992
        %v7023 = vadd.f32 %v6793, %v6997
        %v7024 = vadd.f32 %v6794, %v7002
        %v7025 = vadd.f32 %v6795, %v7007
        %v7026 = vlaneseq
        %v7027 = vshrl.u32 %v7026, 7
        %v7028 = vsub.s32 3, %v7027
        %v7029 = vrot.slane %v295, %v7028
        %v7030 = vadd.f32 %v7010, %v7029
        %v7031 = vadd.f32 %v7011, %v7029
        %v7032 = vadd.f32 %v7012, %v7029
        %v7033 = vadd.f32 %v7013, %v7029
        %v7034 = vadd.f32 %v7014, %v7029
        %v7035 = vadd.f32 %v7015, %v7029
        %v7036 = vadd.f32 %v7016, %v7029
        %v7037 = vadd.f32 %v7017, %v7029
        %v7038 = vadd.f32 %v7018, %v7029
        %v7039 = vadd.f32 %v7019, %v7029
        %v7040 = vadd.f32 %v7020, %v7029
        %v7041 = vadd.f32 %v7021, %v7029
        %v7042 = vadd.f32 %v7022, %v7029
        %v7043 = vadd.f32 %v7023, %v7029
        %v7044 = vadd.f32 %v7024, %v7029
        %v7045 = vadd.f32 %v7025, %v7029
        %s7046 = scalar_lea.vmem %s277, 384 [#allocation2]
        %7047 = vst.msk [vmem:[%s7046] sm:$0xff] %vm518, %v7030
        %7048 = vst.msk [vmem:[%s7046 + $0x8] sm:$0xff] %vm518, %v7031
        %7049 = vst.msk [vmem:[%s7046 + $0x10] sm:$0xff] %vm518, %v7032
        %7050 = vst.msk [vmem:[%s7046 + $0x18] sm:$0xff] %vm518, %v7033
        %7051 = vst.msk [vmem:[%s7046 + $0x20] sm:$0xff] %vm518, %v7034
        %7052 = vst.msk [vmem:[%s7046 + $0x28] sm:$0xff] %vm518, %v7035
        %7053 = vst.msk [vmem:[%s7046 + $0x30] sm:$0xff] %vm518, %v7036
        %7054 = vst.msk [vmem:[%s7046 + $0x38] sm:$0xff] %vm518, %v7037
        %7055 = vst.msk [vmem:[%s7046 + $0x40] sm:$0xff] %vm518, %v7038
        %7056 = vst.msk [vmem:[%s7046 + $0x48] sm:$0xff] %vm518, %v7039
        %7057 = vst.msk [vmem:[%s7046 + $0x50] sm:$0xff] %vm518, %v7040
        %7058 = vst.msk [vmem:[%s7046 + $0x58] sm:$0xff] %vm518, %v7041
        %7059 = vst.msk [vmem:[%s7046 + $0x60] sm:$0xff] %vm518, %v7042
        %7060 = vst.msk [vmem:[%s7046 + $0x68] sm:$0xff] %vm518, %v7043
        %7061 = vst.msk [vmem:[%s7046 + $0x70] sm:$0xff] %vm518, %v7044
        %7062 = vst.msk [vmem:[%s7046 + $0x78] sm:$0xff] %vm518, %v7045
        %v7063 = vld [vmem:[%s7 + $0x3] sm:$0x1]
        %v7064 = vsel %vm518, %v7030, 0.0
        %v7065 = vsel %vm518, %v7031, 0.0
        %v7066 = vadd.f32 %v7064, %v7065
        %v7067 = vsel %vm518, %v7032, 0.0
        %v7068 = vadd.f32 %v7066, %v7067
        %v7069 = vsel %vm518, %v7033, 0.0
        %v7070 = vadd.f32 %v7068, %v7069
        %v7071 = vsel %vm518, %v7034, 0.0
        %v7072 = vadd.f32 %v7070, %v7071
        %v7073 = vsel %vm518, %v7035, 0.0
        %v7074 = vadd.f32 %v7072, %v7073
        %v7075 = vsel %vm518, %v7036, 0.0
        %v7076 = vadd.f32 %v7074, %v7075
        %v7077 = vsel %vm518, %v7037, 0.0
        %v7078 = vadd.f32 %v7076, %v7077
        %v7079 = vsel %vm518, %v7038, 0.0
        %v7080 = vadd.f32 %v7078, %v7079
        %v7081 = vsel %vm518, %v7039, 0.0
        %v7082 = vadd.f32 %v7080, %v7081
        %v7083 = vsel %vm518, %v7040, 0.0
        %v7084 = vadd.f32 %v7082, %v7083
        %v7085 = vsel %vm518, %v7041, 0.0
        %v7086 = vadd.f32 %v7084, %v7085
        %v7087 = vsel %vm518, %v7042, 0.0
        %v7088 = vadd.f32 %v7086, %v7087
        %v7089 = vsel %vm518, %v7043, 0.0
        %v7090 = vadd.f32 %v7088, %v7089
        %v7091 = vsel %vm518, %v7044, 0.0
        %v7092 = vadd.f32 %v7090, %v7091
        %v7093 = vsel %vm518, %v7045, 0.0
        %v7094 = vadd.f32 %v7092, %v7093
        %v7095 = vrot.slane %v7094, 4
        %v7096 = vadd.f32 %v7094, %v7095
        %v7097 = vrot.slane %v7096, 2
        %v7098 = vadd.f32 %v7096, %v7097
        %v7099 = vrot.slane %v7098, 1
        %v7100 = vadd.f32 %v7098, %v7099
        %v7101 = vadd.f32 %v7063, %v7100
        %7102 = vst.msk [vmem:[%s7 + $0x3] sm:$0x1] %vm574, %v7101
        %v7103 = vld [vmem:[%s7 + $0x7] sm:$0x1]
        %v7104 = vmul.f32 %v7030, %v7030
        %v7105 = vmul.f32 %v7031, %v7031
        %v7106 = vmul.f32 %v7032, %v7032
        %v7107 = vmul.f32 %v7033, %v7033
        %v7108 = vmul.f32 %v7034, %v7034
        %v7109 = vmul.f32 %v7035, %v7035
        %v7110 = vmul.f32 %v7036, %v7036
        %v7111 = vmul.f32 %v7037, %v7037
        %v7112 = vmul.f32 %v7038, %v7038
        %v7113 = vmul.f32 %v7039, %v7039
        %v7114 = vmul.f32 %v7040, %v7040
        %v7115 = vmul.f32 %v7041, %v7041
        %v7116 = vmul.f32 %v7042, %v7042
        %v7117 = vmul.f32 %v7043, %v7043
        %v7118 = vmul.f32 %v7044, %v7044
        %v7119 = vmul.f32 %v7045, %v7045
        %v7120 = vsel %vm518, %v7104, 0.0
        %v7121 = vsel %vm518, %v7105, 0.0
        %v7122 = vadd.f32 %v7120, %v7121
        %v7123 = vsel %vm518, %v7106, 0.0
        %v7124 = vadd.f32 %v7122, %v7123
        %v7125 = vsel %vm518, %v7107, 0.0
        %v7126 = vadd.f32 %v7124, %v7125
        %v7127 = vsel %vm518, %v7108, 0.0
        %v7128 = vadd.f32 %v7126, %v7127
        %v7129 = vsel %vm518, %v7109, 0.0
        %v7130 = vadd.f32 %v7128, %v7129
        %v7131 = vsel %vm518, %v7110, 0.0
        %v7132 = vadd.f32 %v7130, %v7131
        %v7133 = vsel %vm518, %v7111, 0.0
        %v7134 = vadd.f32 %v7132, %v7133
        %v7135 = vsel %vm518, %v7112, 0.0
        %v7136 = vadd.f32 %v7134, %v7135
        %v7137 = vsel %vm518, %v7113, 0.0
        %v7138 = vadd.f32 %v7136, %v7137
        %v7139 = vsel %vm518, %v7114, 0.0
        %v7140 = vadd.f32 %v7138, %v7139
        %v7141 = vsel %vm518, %v7115, 0.0
        %v7142 = vadd.f32 %v7140, %v7141
        %v7143 = vsel %vm518, %v7116, 0.0
        %v7144 = vadd.f32 %v7142, %v7143
        %v7145 = vsel %vm518, %v7117, 0.0
        %v7146 = vadd.f32 %v7144, %v7145
        %v7147 = vsel %vm518, %v7118, 0.0
        %v7148 = vadd.f32 %v7146, %v7147
        %v7149 = vsel %vm518, %v7119, 0.0
        %v7150 = vadd.f32 %v7148, %v7149
        %v7151 = vrot.slane %v7150, 4
        %v7152 = vadd.f32 %v7150, %v7151
        %v7153 = vrot.slane %v7152, 2
        %v7154 = vadd.f32 %v7152, %v7153
        %v7155 = vrot.slane %v7154, 1
        %v7156 = vadd.f32 %v7154, %v7155
        %v7157 = vadd.f32 %v7103, %v7156
        %7158 = vst.msk [vmem:[%s7 + $0x7] sm:$0x1] %vm574, %v7157
        %s7159 = sand.u32 %s172, 1
        %s7160 = sand.u32 %s172, 1
        %s7161 = smul.addr %s7160, 512
        %s7162 = scalar_lea.vmem [#allocation2], %s7161
        // Predicated region
        $region49: #{aspp_forward.3} parent=43 // pred_check
          %p7163 = pneg %p182
        $region50: #{aspp_forward.3} parent=43 // pred_check_branch
          %7165 = sbr.rel (%p7163) target = $region52
        $region51: #{aspp_forward.3} parent=43 // pred_region
          %s7166 = smul.u32 8, %s24
          %s7167 = smul.addr %s7166, 2
          %s7168 = smul.addr %s23, 32
          %s7169 = sadd.s32 %s7167, %s7168
          %s7170 = smul.addr %s7169, 8
          %s7171 = scalar_lea.vmem %s6, %s7170
          // Predicated region
          $region53: #{aspp_forward.3} parent=51 // pred_check
            _
          $region54: #{aspp_forward.3} parent=51 // pred_check_branch
            %7173 = sbr.rel (0) target = $region56
          $region55: #{aspp_forward.3} parent=51 // pred_region
            // Predicated region
            $region57: #{aspp_forward.3} parent=55 // pred_check
              _
            $region58: #{aspp_forward.3} parent=55 // pred_check_branch
              %7175 = sbr.rel (0) target = $region60
            $region59: #{aspp_forward.3} parent=55 // pred_region
              // Predicated region
              $region72: #{aspp_forward.3} parent=59 // pred_check
                _
              $region73: #{aspp_forward.3} parent=59 // pred_check_branch
                %7316 = sbr.rel (0) target = $region75
              $region74: #{aspp_forward.3} parent=59 // pred_region
                loop: start=0, step=1, limit=1
                $region76: #{aspp_forward.3} parent=74 // loop_pre_header
                  _
                $region77: #{aspp_forward.3} parent=74 // loop_header
                  %s7318 = sphi 0, %s7322
                  %p7319 = scmp.ge.s32.totalorder %s7318, 1
                  %s7323 = sphi %s7162, %s7162
                  %s7324 = sphi %s7171, %s7171
                $region78: #{aspp_forward.3} parent=74 // loop_header_branch
                  %7321 = sbr.rel (%p7319) target = $region82
                $region79: #{aspp_forward.3} parent=74 // loop_body
                  %v7325 = vld [vmem:[%s7323] sm:$0xff]
                  %7326 = vst [vmem:[%s7324] sm:$0xff] %v7325
                  %v7327 = vld [vmem:[%s7323 + $0x8] sm:$0xff]
                  %7328 = vst [vmem:[%s7324 + $0x8] sm:$0xff] %v7327
                  %v7329 = vld [vmem:[%s7323 + $0x10] sm:$0xff]
                  %7330 = vst [vmem:[%s7324 + $0x10] sm:$0xff] %v7329
                  %v7331 = vld [vmem:[%s7323 + $0x18] sm:$0xff]
                  %7332 = vst [vmem:[%s7324 + $0x18] sm:$0xff] %v7331
                  %v7333 = vld [vmem:[%s7323 + $0x20] sm:$0xff]
                  %7334 = vst [vmem:[%s7324 + $0x20] sm:$0xff] %v7333
                  %v7335 = vld [vmem:[%s7323 + $0x28] sm:$0xff]
                  %7336 = vst [vmem:[%s7324 + $0x28] sm:$0xff] %v7335
                  %v7337 = vld [vmem:[%s7323 + $0x30] sm:$0xff]
                  %7338 = vst [vmem:[%s7324 + $0x30] sm:$0xff] %v7337
                  %v7339 = vld [vmem:[%s7323 + $0x38] sm:$0xff]
                  %7340 = vst [vmem:[%s7324 + $0x38] sm:$0xff] %v7339
                  %v7341 = vld [vmem:[%s7323 + $0x40] sm:$0xff]
                  %7342 = vst [vmem:[%s7324 + $0x40] sm:$0xff] %v7341
                  %v7343 = vld [vmem:[%s7323 + $0x48] sm:$0xff]
                  %7344 = vst [vmem:[%s7324 + $0x48] sm:$0xff] %v7343
                  %v7345 = vld [vmem:[%s7323 + $0x50] sm:$0xff]
                  %7346 = vst [vmem:[%s7324 + $0x50] sm:$0xff] %v7345
                  %v7347 = vld [vmem:[%s7323 + $0x58] sm:$0xff]
                  %7348 = vst [vmem:[%s7324 + $0x58] sm:$0xff] %v7347
                  %v7349 = vld [vmem:[%s7323 + $0x60] sm:$0xff]
                  %7350 = vst [vmem:[%s7324 + $0x60] sm:$0xff] %v7349
                  %v7351 = vld [vmem:[%s7323 + $0x68] sm:$0xff]
                  %7352 = vst [vmem:[%s7324 + $0x68] sm:$0xff] %v7351
                  %v7353 = vld [vmem:[%s7323 + $0x70] sm:$0xff]
                  %7354 = vst [vmem:[%s7324 + $0x70] sm:$0xff] %v7353
                  %v7355 = vld [vmem:[%s7323 + $0x78] sm:$0xff]
                  %7356 = vst [vmem:[%s7324 + $0x78] sm:$0xff] %v7355
                  %v7357 = vld [vmem:[%s7323 + $0x80] sm:$0xff]
                  %7358 = vst [vmem:[%s7324 + $0x200] sm:$0xff] %v7357
                  %v7359 = vld [vmem:[%s7323 + $0x88] sm:$0xff]
                  %7360 = vst [vmem:[%s7324 + $0x208] sm:$0xff] %v7359
                  %v7361 = vld [vmem:[%s7323 + $0x90] sm:$0xff]
                  %7362 = vst [vmem:[%s7324 + $0x210] sm:$0xff] %v7361
                  %v7363 = vld [vmem:[%s7323 + $0x98] sm:$0xff]
                  %7364 = vst [vmem:[%s7324 + $0x218] sm:$0xff] %v7363
                  %v7365 = vld [vmem:[%s7323 + $0xa0] sm:$0xff]
                  %7366 = vst [vmem:[%s7324 + $0x220] sm:$0xff] %v7365
                  %v7367 = vld [vmem:[%s7323 + $0xa8] sm:$0xff]
                  %7368 = vst [vmem:[%s7324 + $0x228] sm:$0xff] %v7367
                  %v7369 = vld [vmem:[%s7323 + $0xb0] sm:$0xff]
                  %7370 = vst [vmem:[%s7324 + $0x230] sm:$0xff] %v7369
                  %v7371 = vld [vmem:[%s7323 + $0xb8] sm:$0xff]
                  %7372 = vst [vmem:[%s7324 + $0x238] sm:$0xff] %v7371
                  %v7373 = vld [vmem:[%s7323 + $0xc0] sm:$0xff]
                  %7374 = vst [vmem:[%s7324 + $0x240] sm:$0xff] %v7373
                  %v7375 = vld [vmem:[%s7323 + $0xc8] sm:$0xff]
                  %7376 = vst [vmem:[%s7324 + $0x248] sm:$0xff] %v7375
                  %v7377 = vld [vmem:[%s7323 + $0xd0] sm:$0xff]
                  %7378 = vst [vmem:[%s7324 + $0x250] sm:$0xff] %v7377
                  %v7379 = vld [vmem:[%s7323 + $0xd8] sm:$0xff]
                  %7380 = vst [vmem:[%s7324 + $0x258] sm:$0xff] %v7379
                  %v7381 = vld [vmem:[%s7323 + $0xe0] sm:$0xff]
                  %7382 = vst [vmem:[%s7324 + $0x260] sm:$0xff] %v7381
                  %v7383 = vld [vmem:[%s7323 + $0xe8] sm:$0xff]
                  %7384 = vst [vmem:[%s7324 + $0x268] sm:$0xff] %v7383
                  %v7385 = vld [vmem:[%s7323 + $0xf0] sm:$0xff]
                  %7386 = vst [vmem:[%s7324 + $0x270] sm:$0xff] %v7385
                  %v7387 = vld [vmem:[%s7323 + $0xf8] sm:$0xff]
                  %7388 = vst [vmem:[%s7324 + $0x278] sm:$0xff] %v7387
                  %v7389 = vld [vmem:[%s7323 + $0x100] sm:$0xff]
                  %7390 = vst [vmem:[%s7324 + $0x400] sm:$0xff] %v7389
                  %v7391 = vld [vmem:[%s7323 + $0x108] sm:$0xff]
                  %7392 = vst [vmem:[%s7324 + $0x408] sm:$0xff] %v7391
                  %v7393 = vld [vmem:[%s7323 + $0x110] sm:$0xff]
                  %7394 = vst [vmem:[%s7324 + $0x410] sm:$0xff] %v7393
                  %v7395 = vld [vmem:[%s7323 + $0x118] sm:$0xff]
                  %7396 = vst [vmem:[%s7324 + $0x418] sm:$0xff] %v7395
                  %v7397 = vld [vmem:[%s7323 + $0x120] sm:$0xff]
                  %7398 = vst [vmem:[%s7324 + $0x420] sm:$0xff] %v7397
                  %v7399 = vld [vmem:[%s7323 + $0x128] sm:$0xff]
                  %7400 = vst [vmem:[%s7324 + $0x428] sm:$0xff] %v7399
                  %v7401 = vld [vmem:[%s7323 + $0x130] sm:$0xff]
                  %7402 = vst [vmem:[%s7324 + $0x430] sm:$0xff] %v7401
                  %v7403 = vld [vmem:[%s7323 + $0x138] sm:$0xff]
                  %7404 = vst [vmem:[%s7324 + $0x438] sm:$0xff] %v7403
                  %v7405 = vld [vmem:[%s7323 + $0x140] sm:$0xff]
                  %7406 = vst [vmem:[%s7324 + $0x440] sm:$0xff] %v7405
                  %v7407 = vld [vmem:[%s7323 + $0x148] sm:$0xff]
                  %7408 = vst [vmem:[%s7324 + $0x448] sm:$0xff] %v7407
                  %v7409 = vld [vmem:[%s7323 + $0x150] sm:$0xff]
                  %7410 = vst [vmem:[%s7324 + $0x450] sm:$0xff] %v7409
                  %v7411 = vld [vmem:[%s7323 + $0x158] sm:$0xff]
                  %7412 = vst [vmem:[%s7324 + $0x458] sm:$0xff] %v7411
                  %v7413 = vld [vmem:[%s7323 + $0x160] sm:$0xff]
                  %7414 = vst [vmem:[%s7324 + $0x460] sm:$0xff] %v7413
                  %v7415 = vld [vmem:[%s7323 + $0x168] sm:$0xff]
                  %7416 = vst [vmem:[%s7324 + $0x468] sm:$0xff] %v7415
                  %v7417 = vld [vmem:[%s7323 + $0x170] sm:$0xff]
                  %7418 = vst [vmem:[%s7324 + $0x470] sm:$0xff] %v7417
                  %v7419 = vld [vmem:[%s7323 + $0x178] sm:$0xff]
                  %7420 = vst [vmem:[%s7324 + $0x478] sm:$0xff] %v7419
                  %v7421 = vld [vmem:[%s7323 + $0x180] sm:$0xff]
                  %7422 = vst [vmem:[%s7324 + $0x600] sm:$0xff] %v7421
                  %v7423 = vld [vmem:[%s7323 + $0x188] sm:$0xff]
                  %7424 = vst [vmem:[%s7324 + $0x608] sm:$0xff] %v7423
                  %v7425 = vld [vmem:[%s7323 + $0x190] sm:$0xff]
                  %7426 = vst [vmem:[%s7324 + $0x610] sm:$0xff] %v7425
                  %v7427 = vld [vmem:[%s7323 + $0x198] sm:$0xff]
                  %7428 = vst [vmem:[%s7324 + $0x618] sm:$0xff] %v7427
                  %v7429 = vld [vmem:[%s7323 + $0x1a0] sm:$0xff]
                  %7430 = vst [vmem:[%s7324 + $0x620] sm:$0xff] %v7429
                  %v7431 = vld [vmem:[%s7323 + $0x1a8] sm:$0xff]
                  %7432 = vst [vmem:[%s7324 + $0x628] sm:$0xff] %v7431
                  %v7433 = vld [vmem:[%s7323 + $0x1b0] sm:$0xff]
                  %7434 = vst [vmem:[%s7324 + $0x630] sm:$0xff] %v7433
                  %v7435 = vld [vmem:[%s7323 + $0x1b8] sm:$0xff]
                  %7436 = vst [vmem:[%s7324 + $0x638] sm:$0xff] %v7435
                  %v7437 = vld [vmem:[%s7323 + $0x1c0] sm:$0xff]
                  %7438 = vst [vmem:[%s7324 + $0x640] sm:$0xff] %v7437
                  %v7439 = vld [vmem:[%s7323 + $0x1c8] sm:$0xff]
                  %7440 = vst [vmem:[%s7324 + $0x648] sm:$0xff] %v7439
                  %v7441 = vld [vmem:[%s7323 + $0x1d0] sm:$0xff]
                  %7442 = vst [vmem:[%s7324 + $0x650] sm:$0xff] %v7441
                  %v7443 = vld [vmem:[%s7323 + $0x1d8] sm:$0xff]
                  %7444 = vst [vmem:[%s7324 + $0x658] sm:$0xff] %v7443
                  %v7445 = vld [vmem:[%s7323 + $0x1e0] sm:$0xff]
                  %7446 = vst [vmem:[%s7324 + $0x660] sm:$0xff] %v7445
                  %v7447 = vld [vmem:[%s7323 + $0x1e8] sm:$0xff]
                  %7448 = vst [vmem:[%s7324 + $0x668] sm:$0xff] %v7447
                  %v7449 = vld [vmem:[%s7323 + $0x1f0] sm:$0xff]
                  %7450 = vst [vmem:[%s7324 + $0x670] sm:$0xff] %v7449
                  %v7451 = vld [vmem:[%s7323 + $0x1f8] sm:$0xff]
                  %7452 = vst [vmem:[%s7324 + $0x678] sm:$0xff] %v7451
                $region80: #{aspp_forward.3} parent=74 // loop_footer
                  %s7322 = sadd.s32 1, %s7318
                $region81: #{aspp_forward.3} parent=74 // loop_footer_branch
                  %7317 = sbr.rel target = $region77
                $region82: #{aspp_forward.3} parent=74 // loop_exit
                  _
              $region75: #{aspp_forward.3} parent=59 // pred_fallthru
                _
              // Predicated region
              $region83: #{aspp_forward.3} parent=59 // pred_check
                _
              $region84: #{aspp_forward.3} parent=59 // pred_check_branch
                %7454 = sbr.rel target = $region86
              $region85: #{aspp_forward.3} parent=59 // pred_region
                _
              $region86: #{aspp_forward.3} parent=59 // pred_fallthru
                _
            $region60: #{aspp_forward.3} parent=55 // pred_fallthru
              _
            // Predicated region
            $region61: #{aspp_forward.3} parent=55 // pred_check
              _
            $region62: #{aspp_forward.3} parent=55 // pred_check_branch
              %7177 = sbr.rel target = $region64
            $region63: #{aspp_forward.3} parent=55 // pred_region
              loop: start=0, step=1, limit=1
              $region65: #{aspp_forward.3} parent=63 // loop_pre_header
                _
              $region66: #{aspp_forward.3} parent=63 // loop_header
                %s7180 = sphi 0, %s7184
                %p7181 = scmp.ge.s32.totalorder %s7180, 1
                %s7185 = sphi %s7162, %s7162
                %s7186 = sphi %s7171, %s7171
              $region67: #{aspp_forward.3} parent=63 // loop_header_branch
                %7183 = sbr.rel (%p7181) target = $region71
              $region68: #{aspp_forward.3} parent=63 // loop_body
                %v7187 = vld [vmem:[%s7185] sm:$0xff]
                %7188 = vst [vmem:[%s7186] sm:$0xff] %v7187
                %v7189 = vld [vmem:[%s7185 + $0x8] sm:$0xff]
                %7190 = vst [vmem:[%s7186 + $0x8] sm:$0xff] %v7189
                %v7191 = vld [vmem:[%s7185 + $0x10] sm:$0xff]
                %7192 = vst [vmem:[%s7186 + $0x10] sm:$0xff] %v7191
                %v7193 = vld [vmem:[%s7185 + $0x18] sm:$0xff]
                %7194 = vst [vmem:[%s7186 + $0x18] sm:$0xff] %v7193
                %v7195 = vld [vmem:[%s7185 + $0x20] sm:$0xff]
                %7196 = vst [vmem:[%s7186 + $0x20] sm:$0xff] %v7195
                %v7197 = vld [vmem:[%s7185 + $0x28] sm:$0xff]
                %7198 = vst [vmem:[%s7186 + $0x28] sm:$0xff] %v7197
                %v7199 = vld [vmem:[%s7185 + $0x30] sm:$0xff]
                %7200 = vst [vmem:[%s7186 + $0x30] sm:$0xff] %v7199
                %v7201 = vld [vmem:[%s7185 + $0x38] sm:$0xff]
                %7202 = vst [vmem:[%s7186 + $0x38] sm:$0xff] %v7201
                %v7203 = vld [vmem:[%s7185 + $0x40] sm:$0xff]
                %7204 = vst [vmem:[%s7186 + $0x40] sm:$0xff] %v7203
                %v7205 = vld [vmem:[%s7185 + $0x48] sm:$0xff]
                %7206 = vst [vmem:[%s7186 + $0x48] sm:$0xff] %v7205
                %v7207 = vld [vmem:[%s7185 + $0x50] sm:$0xff]
                %7208 = vst [vmem:[%s7186 + $0x50] sm:$0xff] %v7207
                %v7209 = vld [vmem:[%s7185 + $0x58] sm:$0xff]
                %7210 = vst [vmem:[%s7186 + $0x58] sm:$0xff] %v7209
                %v7211 = vld [vmem:[%s7185 + $0x60] sm:$0xff]
                %7212 = vst [vmem:[%s7186 + $0x60] sm:$0xff] %v7211
                %v7213 = vld [vmem:[%s7185 + $0x68] sm:$0xff]
                %7214 = vst [vmem:[%s7186 + $0x68] sm:$0xff] %v7213
                %v7215 = vld [vmem:[%s7185 + $0x70] sm:$0xff]
                %7216 = vst [vmem:[%s7186 + $0x70] sm:$0xff] %v7215
                %v7217 = vld [vmem:[%s7185 + $0x78] sm:$0xff]
                %7218 = vst [vmem:[%s7186 + $0x78] sm:$0xff] %v7217
                %v7219 = vld [vmem:[%s7185 + $0x80] sm:$0xff]
                %7220 = vst [vmem:[%s7186 + $0x200] sm:$0xff] %v7219
                %v7221 = vld [vmem:[%s7185 + $0x88] sm:$0xff]
                %7222 = vst [vmem:[%s7186 + $0x208] sm:$0xff] %v7221
                %v7223 = vld [vmem:[%s7185 + $0x90] sm:$0xff]
                %7224 = vst [vmem:[%s7186 + $0x210] sm:$0xff] %v7223
                %v7225 = vld [vmem:[%s7185 + $0x98] sm:$0xff]
                %7226 = vst [vmem:[%s7186 + $0x218] sm:$0xff] %v7225
                %v7227 = vld [vmem:[%s7185 + $0xa0] sm:$0xff]
                %7228 = vst [vmem:[%s7186 + $0x220] sm:$0xff] %v7227
                %v7229 = vld [vmem:[%s7185 + $0xa8] sm:$0xff]
                %7230 = vst [vmem:[%s7186 + $0x228] sm:$0xff] %v7229
                %v7231 = vld [vmem:[%s7185 + $0xb0] sm:$0xff]
                %7232 = vst [vmem:[%s7186 + $0x230] sm:$0xff] %v7231
                %v7233 = vld [vmem:[%s7185 + $0xb8] sm:$0xff]
                %7234 = vst [vmem:[%s7186 + $0x238] sm:$0xff] %v7233
                %v7235 = vld [vmem:[%s7185 + $0xc0] sm:$0xff]
                %7236 = vst [vmem:[%s7186 + $0x240] sm:$0xff] %v7235
                %v7237 = vld [vmem:[%s7185 + $0xc8] sm:$0xff]
                %7238 = vst [vmem:[%s7186 + $0x248] sm:$0xff] %v7237
                %v7239 = vld [vmem:[%s7185 + $0xd0] sm:$0xff]
                %7240 = vst [vmem:[%s7186 + $0x250] sm:$0xff] %v7239
                %v7241 = vld [vmem:[%s7185 + $0xd8] sm:$0xff]
                %7242 = vst [vmem:[%s7186 + $0x258] sm:$0xff] %v7241
                %v7243 = vld [vmem:[%s7185 + $0xe0] sm:$0xff]
                %7244 = vst [vmem:[%s7186 + $0x260] sm:$0xff] %v7243
                %v7245 = vld [vmem:[%s7185 + $0xe8] sm:$0xff]
                %7246 = vst [vmem:[%s7186 + $0x268] sm:$0xff] %v7245
                %v7247 = vld [vmem:[%s7185 + $0xf0] sm:$0xff]
                %7248 = vst [vmem:[%s7186 + $0x270] sm:$0xff] %v7247
                %v7249 = vld [vmem:[%s7185 + $0xf8] sm:$0xff]
                %7250 = vst [vmem:[%s7186 + $0x278] sm:$0xff] %v7249
                %v7251 = vld [vmem:[%s7185 + $0x100] sm:$0xff]
                %7252 = vst [vmem:[%s7186 + $0x400] sm:$0xff] %v7251
                %v7253 = vld [vmem:[%s7185 + $0x108] sm:$0xff]
                %7254 = vst [vmem:[%s7186 + $0x408] sm:$0xff] %v7253
                %v7255 = vld [vmem:[%s7185 + $0x110] sm:$0xff]
                %7256 = vst [vmem:[%s7186 + $0x410] sm:$0xff] %v7255
                %v7257 = vld [vmem:[%s7185 + $0x118] sm:$0xff]
                %7258 = vst [vmem:[%s7186 + $0x418] sm:$0xff] %v7257
                %v7259 = vld [vmem:[%s7185 + $0x120] sm:$0xff]
                %7260 = vst [vmem:[%s7186 + $0x420] sm:$0xff] %v7259
                %v7261 = vld [vmem:[%s7185 + $0x128] sm:$0xff]
                %7262 = vst [vmem:[%s7186 + $0x428] sm:$0xff] %v7261
                %v7263 = vld [vmem:[%s7185 + $0x130] sm:$0xff]
                %7264 = vst [vmem:[%s7186 + $0x430] sm:$0xff] %v7263
                %v7265 = vld [vmem:[%s7185 + $0x138] sm:$0xff]
                %7266 = vst [vmem:[%s7186 + $0x438] sm:$0xff] %v7265
                %v7267 = vld [vmem:[%s7185 + $0x140] sm:$0xff]
                %7268 = vst [vmem:[%s7186 + $0x440] sm:$0xff] %v7267
                %v7269 = vld [vmem:[%s7185 + $0x148] sm:$0xff]
                %7270 = vst [vmem:[%s7186 + $0x448] sm:$0xff] %v7269
                %v7271 = vld [vmem:[%s7185 + $0x150] sm:$0xff]
                %7272 = vst [vmem:[%s7186 + $0x450] sm:$0xff] %v7271
                %v7273 = vld [vmem:[%s7185 + $0x158] sm:$0xff]
                %7274 = vst [vmem:[%s7186 + $0x458] sm:$0xff] %v7273
                %v7275 = vld [vmem:[%s7185 + $0x160] sm:$0xff]
                %7276 = vst [vmem:[%s7186 + $0x460] sm:$0xff] %v7275
                %v7277 = vld [vmem:[%s7185 + $0x168] sm:$0xff]
                %7278 = vst [vmem:[%s7186 + $0x468] sm:$0xff] %v7277
                %v7279 = vld [vmem:[%s7185 + $0x170] sm:$0xff]
                %7280 = vst [vmem:[%s7186 + $0x470] sm:$0xff] %v7279
                %v7281 = vld [vmem:[%s7185 + $0x178] sm:$0xff]
                %7282 = vst [vmem:[%s7186 + $0x478] sm:$0xff] %v7281
                %v7283 = vld [vmem:[%s7185 + $0x180] sm:$0xff]
                %7284 = vst [vmem:[%s7186 + $0x600] sm:$0xff] %v7283
                %v7285 = vld [vmem:[%s7185 + $0x188] sm:$0xff]
                %7286 = vst [vmem:[%s7186 + $0x608] sm:$0xff] %v7285
                %v7287 = vld [vmem:[%s7185 + $0x190] sm:$0xff]
                %7288 = vst [vmem:[%s7186 + $0x610] sm:$0xff] %v7287
                %v7289 = vld [vmem:[%s7185 + $0x198] sm:$0xff]
                %7290 = vst [vmem:[%s7186 + $0x618] sm:$0xff] %v7289
                %v7291 = vld [vmem:[%s7185 + $0x1a0] sm:$0xff]
                %7292 = vst [vmem:[%s7186 + $0x620] sm:$0xff] %v7291
                %v7293 = vld [vmem:[%s7185 + $0x1a8] sm:$0xff]
                %7294 = vst [vmem:[%s7186 + $0x628] sm:$0xff] %v7293
                %v7295 = vld [vmem:[%s7185 + $0x1b0] sm:$0xff]
                %7296 = vst [vmem:[%s7186 + $0x630] sm:$0xff] %v7295
                %v7297 = vld [vmem:[%s7185 + $0x1b8] sm:$0xff]
                %7298 = vst [vmem:[%s7186 + $0x638] sm:$0xff] %v7297
                %v7299 = vld [vmem:[%s7185 + $0x1c0] sm:$0xff]
                %7300 = vst [vmem:[%s7186 + $0x640] sm:$0xff] %v7299
                %v7301 = vld [vmem:[%s7185 + $0x1c8] sm:$0xff]
                %7302 = vst [vmem:[%s7186 + $0x648] sm:$0xff] %v7301
                %v7303 = vld [vmem:[%s7185 + $0x1d0] sm:$0xff]
                %7304 = vst [vmem:[%s7186 + $0x650] sm:$0xff] %v7303
                %v7305 = vld [vmem:[%s7185 + $0x1d8] sm:$0xff]
                %7306 = vst [vmem:[%s7186 + $0x658] sm:$0xff] %v7305
                %v7307 = vld [vmem:[%s7185 + $0x1e0] sm:$0xff]
                %7308 = vst [vmem:[%s7186 + $0x660] sm:$0xff] %v7307
                %v7309 = vld [vmem:[%s7185 + $0x1e8] sm:$0xff]
                %7310 = vst [vmem:[%s7186 + $0x668] sm:$0xff] %v7309
                %v7311 = vld [vmem:[%s7185 + $0x1f0] sm:$0xff]
                %7312 = vst [vmem:[%s7186 + $0x670] sm:$0xff] %v7311
                %v7313 = vld [vmem:[%s7185 + $0x1f8] sm:$0xff]
                %7314 = vst [vmem:[%s7186 + $0x678] sm:$0xff] %v7313
              $region69: #{aspp_forward.3} parent=63 // loop_footer
                %s7184 = sadd.s32 1, %s7180
              $region70: #{aspp_forward.3} parent=63 // loop_footer_branch
                %7179 = sbr.rel target = $region66
              $region71: #{aspp_forward.3} parent=63 // loop_exit
                _
            $region64: #{aspp_forward.3} parent=55 // pred_fallthru
              _
          $region56: #{aspp_forward.3} parent=51 // pred_fallthru
            _
          %7455 = vnop
        $region52: #{aspp_forward.3} parent=43 // pred_fallthru
          _
        // Predicated region
        $region87: #{aspp_forward.3} parent=43 // pred_check
          %p7456 = pneg %p203
        $region88: #{aspp_forward.3} parent=43 // pred_check_branch
          %7458 = sbr.rel (%p7456) target = $region90
        $region89: #{aspp_forward.3} parent=43 // pred_region
          _
        $region90: #{aspp_forward.3} parent=43 // pred_fallthru
          _
        // Predicated region
        $region91: #{aspp_forward.3} parent=43 // pred_check
          %p7459 = pneg %p203
        $region92: #{aspp_forward.3} parent=43 // pred_check_branch
          %7461 = sbr.rel (%p7459) target = $region94
        $region93: #{aspp_forward.3} parent=43 // pred_region
          _
        $region94: #{aspp_forward.3} parent=43 // pred_fallthru
          _
      $region44: #{aspp_forward.3} parent=5 // pred_fallthru
        _
      %p7462 = scmp.le.s32.totalorder 2, %s14
      // Predicated region
      $region95: #{aspp_forward.3} parent=5 // pred_check
        %p7463 = pneg %p7462
      $region96: #{aspp_forward.3} parent=5 // pred_check_branch
        %7465 = sbr.rel (%p7463) target = $region98
      $region97: #{aspp_forward.3} parent=5 // pred_region
        %s7466 = ssub.s32 %s14, 2
        // Predicated region
        $region99: #{aspp_forward.3} parent=97 // pred_check
          %p7467 = pneg %p188
        $region100: #{aspp_forward.3} parent=97 // pred_check_branch
          %7469 = sbr.rel (%p7467) target = $region102
        $region101: #{aspp_forward.3} parent=97 // pred_region
          %s7470 = sand.u32 %s173, 1
          %s7471 = sand.u32 %s173, 1
          %s7472 = smul.addr %s7471, 512
          %s7473 = scalar_lea.vmem [#allocation2], %s7472
        $region102: #{aspp_forward.3} parent=97 // pred_fallthru
          _
      $region98: #{aspp_forward.3} parent=5 // pred_fallthru
        _
    $region6: #{aspp_forward.3} parent=1 // loop_footer
      %s18 = sadd.s32 1, %s14
    $region7: #{aspp_forward.3} parent=1 // loop_footer_branch
      %13 = sbr.rel target = $region3
    $region8: #{aspp_forward.3} parent=1 // loop_exit
      _

</llo_original>
